<compile_context>
chip_gen: v6e
topology: v6e:2x2x1
jax: 0.10.0
libtpu: 0.0.40
codegen_flags: <defaults>
</compile_context>

<pallas_src>
import functools

import jax
import jax.numpy as jnp
from jax import lax
from jax.experimental import pallas as pl
from jax.experimental.pallas import tpu as pltpu

_BN_EPS = 1e-5
_MAX_TILE = 256            # v6e/v7x MXU is 2x256x256; set 128 for a v5e-tuned build
_VMEM_LIMIT = 32 << 20     # explicit scoped-VMEM budget (v7x physical = 64 MiB)


def _round_up(n, m):
    return ((n + m - 1) // m) * m


def _pick_tile(n):
    # Lane-dense output-channel tile: fill the 256-wide MXU when padded N allows.
    return _MAX_TILE if (n >= _MAX_TILE and n % _MAX_TILE == 0) else 128


# ----------------------------------------------------------------------------
# Pallas kernel: one output-channel tile of  matmul + bias + ReLU + BN(train).
# ----------------------------------------------------------------------------
def _gemm_bias_relu_bn_kernel(*refs, inv_n, eps, pooled):
    # refs = (x, w, sb[, pool], out)
    #   x   : (M, K)    bf16  im2col'd activations (same block every grid step)
    #   w   : (K, T)    bf16  this step's output-channel tile of the weights
    #   sb  : (8, T)    f32   row0 = conv bias, row1 = BN gamma, row2 = BN beta
    #   pool: (T, T)    f32   (deconv only) 4x4 blocks pooling subpixel phases
    #   out : (M, T)    bf16/f32, written exactly once
    if pooled:
        x_ref, w_ref, sb_ref, p_ref, o_ref = refs
    else:
        x_ref, w_ref, sb_ref, o_ref = refs

    y = jnp.dot(x_ref[...], w_ref[...], preferred_element_type=jnp.float32)
    sb = sb_ref[...]
    y = jnp.maximum(y + sb[0:1, :], 0.0)                     # bias + ReLU (f32)

    s = jnp.sum(y, axis=0, keepdims=True)                    # (1, T) f32
    ss = jnp.sum(y * y, axis=0, keepdims=True)
    if pooled:                                               # pool 4 subpixel phases
        s = jnp.dot(s, p_ref[...], preferred_element_type=jnp.float32)
        ss = jnp.dot(ss, p_ref[...], preferred_element_type=jnp.float32)
    mean = s * inv_n
    var = jnp.maximum(ss * inv_n - mean * mean, 0.0)         # cancellation guard
    inv = sb[1:2, :] * lax.rsqrt(var + eps)
    o_ref[...] = (y * inv + (sb[2:3, :] - mean * inv)).astype(o_ref.dtype)


def _fused_gemm_bn(x2d, w2d, sb, *, n_stat, pool=None, out_dtype=jnp.bfloat16):
    # x2d: (M, K) bf16 ; w2d: (K, N) bf16 ; sb: (8, N) f32 ; pool: (T, T) f32 | None
    M, K = x2d.shape
    N = w2d.shape[1]
    tile = _pick_tile(N)
    assert N % tile == 0 and w2d.shape[0] == K and sb.shape == (8, N)
    pooled = pool is not None

    kernel = functools.partial(_gemm_bias_relu_bn_kernel,
                               inv_n=1.0 / float(n_stat), eps=_BN_EPS,
                               pooled=pooled)
    # NOTE: x / pool have constant index maps; at these tiny shapes the wasted
    # second buffer is ~1 MiB, so pl.Buffered(1) / an M grid axis is left as a
    # scaling TODO rather than added complexity here.
    in_specs = [
        pl.BlockSpec((M, K), lambda j: (0, 0)),              # reused every step
        pl.BlockSpec((K, tile), lambda j: (0, j)),
        pl.BlockSpec((8, tile), lambda j: (0, j)),           # packed bias/gamma/beta
    ]
    args = [x2d.astype(jnp.bfloat16), w2d, sb]
    if pooled:
        in_specs.append(pl.BlockSpec((tile, tile), lambda j: (0, 0)))
        args.append(pool)

    out_bytes = M * tile * jnp.dtype(out_dtype).itemsize
    need = 2 * (M * K * 2 + K * tile * 2 + 8 * tile * 4
                + (tile * tile * 4 if pooled else 0) + out_bytes)
    assert need < _VMEM_LIMIT, (need, _VMEM_LIMIT)

    return pl.pallas_call(
        kernel,
        out_shape=jax.ShapeDtypeStruct((M, N), out_dtype),
        grid=(N // tile,),
        in_specs=in_specs,
        out_specs=pl.BlockSpec((M, tile), lambda j: (0, j)),
        compiler_params=pltpu.CompilerParams(
            dimension_semantics=("parallel",),
            vmem_limit_bytes=_VMEM_LIMIT),
    )(*args)


# ----------------------------------------------------------------------------
# One-time weight packing (outside the per-forward trace).
# ----------------------------------------------------------------------------
def _pack_conv(p):
    Cout, Cin = p["w"].shape[0], p["w"].shape[1]
    Np = _round_up(Cout, 128)
    w2d = jnp.transpose(p["w"], (2, 3, 1, 0)).reshape(9 * Cin, Cout)
    w2d = jnp.pad(w2d, ((0, 0), (0, Np - Cout))).astype(jnp.bfloat16)
    sb = jnp.zeros((8, Np), jnp.float32)
    sb = (sb.at[0, :Cout].set(p["b"])
            .at[1, :Cout].set(p["gamma"])
            .at[2, :Cout].set(p["beta"]))        # padded lanes: w=b=gamma=beta=0 -> out 0
    return {"w2d": w2d, "sb": sb}, {"cout": Cout, "n": Np}


def _pack_deconv(p):
    # ConvTranspose2d(k=3, s=2, pad=1, out_pad=1) as 4-phase subpixel GEMM:
    # rows = (di, dj, cin) over the 2x2 input neighbourhood, cols = c*4 + phase.
    Cin, Cout = p["w"].shape[0], p["w"].shape[1]
    Cp = _round_up(4 * Cout, 128) // 4
    tile = _pick_tile(4 * Cp)
    w = p["w"]
    zero = jnp.zeros((Cin, Cout), w.dtype)
    blocks = []
    for di in range(2):
        for dj in range(2):
            phase = []
            for py in range(2):
                for px in range(2):
                    if (py == 0 and di == 1) or (px == 0 and dj == 1):
                        phase.append(zero)               # tap unused by this phase
                    else:
                        ky = 1 if py == 0 else (2 if di == 0 else 0)
                        kx = 1 if px == 0 else (2 if dj == 0 else 0)
                        phase.append(w[:, :, ky, kx])
            blk = jnp.stack(phase, axis=-1)              # (Cin, Cout, 4)
            blk = jnp.pad(blk, ((0, 0), (0, Cp - Cout), (0, 0)))
            blocks.append(blk.reshape(Cin, 4 * Cp))
    w2d = jnp.concatenate(blocks, axis=0).astype(jnp.bfloat16)      # (4*Cin, 4*Cp)

    def rep4(v):
        return jnp.repeat(jnp.pad(v, (0, Cp - Cout)), 4)

    sb = jnp.zeros((8, 4 * Cp), jnp.float32)
    sb = sb.at[0].set(rep4(p["b"])).at[1].set(rep4(p["gamma"])).at[2].set(rep4(p["beta"]))
    # BN-stats pooling matrix: 4x4 blocks pool the 4 subpixel phases of a channel.
    pool = jnp.kron(jnp.eye(tile // 4, dtype=jnp.float32),
                    jnp.ones((4, 4), jnp.float32))
    return {"w2d": w2d, "sb": sb, "pool": pool}, {"cout": Cout, "cp": Cp, "n": 4 * Cp}


def pack_decoder_params(params):
    packed, meta = {}, {}
    for name in ("upcat2", "upcat1"):
        packed[name], meta[name] = _pack_conv(params[name])
    for name in ("deconv3", "deconv2", "deconv1"):
        packed[name], meta[name] = _pack_deconv(params[name])
    return packed, meta


# ----------------------------------------------------------------------------
# Pallas layer wrappers (NHWC).  Layout glue (upsample/concat/im2col) stays in XLA.
# ----------------------------------------------------------------------------
def conv3x3_relu_bn(x, lp, meta, out_dtype):
    B, H, W, _ = x.shape
    x = x.astype(jnp.bfloat16)                       # bf16 im2col: halves HBM glue
    xp = jnp.pad(x, ((0, 0), (1, 1), (1, 1), (0, 0)))
    cols = [xp[:, dy:dy + H, dx:dx + W, :] for dy in range(3) for dx in range(3)]
    x2d = jnp.concatenate(cols, axis=-1).reshape(B * H * W, -1)
    y2d = _fused_gemm_bn(x2d, lp["w2d"], lp["sb"], n_stat=B * H * W,
                         out_dtype=out_dtype)
    return y2d.reshape(B, H, W, meta["n"])[..., :meta["cout"]]


def deconv3x3_s2_relu_bn(x, lp, meta, out_dtype):
    B, H, W, _ = x.shape
    x = x.astype(jnp.bfloat16)
    xp = jnp.pad(x, ((0, 0), (0, 1), (0, 1), (0, 0)))
    cols = [xp[:, di:di + H, dj:dj + W, :] for di in range(2) for dj in range(2)]
    x2d = jnp.concatenate(cols, axis=-1).reshape(B * H * W, -1)
    y2d = _fused_gemm_bn(x2d, lp["w2d"], lp["sb"], n_stat=4 * B * H * W,
                         pool=lp["pool"], out_dtype=out_dtype)
    Cp = meta["cp"]
    y = y2d.reshape(B, H, W, Cp, 2, 2)
    y = jnp.transpose(y, (0, 1, 4, 2, 5, 3)).reshape(B, 2 * H, 2 * W, Cp)
    return y[..., :meta["cout"]]


def upconcat_forward(msi, hsi, lp, meta, out_dtype):
    sx = msi.shape[1] // hsi.shape[1]
    sy = msi.shape[2] // hsi.shape[2]
    hsi_up = jnp.repeat(jnp.repeat(hsi, sx, axis=1), sy, axis=2)   # nearest interp
    x = jnp.concatenate([hsi_up, msi], axis=-1)
    return conv3x3_relu_bn(x, lp, meta, out_dtype)


def segmentation_decoder_forward(z_nchw, hsi_out, msi_out, packed, meta):
    to_nhwc = lambda t: jnp.transpose(t, (0, 2, 3, 1))
    z = to_nhwc(z_nchw)
    hsi = [to_nhwc(t) for t in hsi_out]
    msi = [to_nhwc(t) for t in msi_out]
    out2 = upconcat_forward(msi[1], hsi[1], packed["upcat2"], meta["upcat2"], jnp.bfloat16)
    out1 = upconcat_forward(msi[0], hsi[0], packed["upcat1"], meta["upcat1"], jnp.bfloat16)
    x = deconv3x3_s2_relu_bn(z, packed["deconv3"], meta["deconv3"], jnp.bfloat16)
    x = jnp.concatenate([x, out2], axis=-1)
    x = deconv3x3_s2_relu_bn(x, packed["deconv2"], meta["deconv2"], jnp.bfloat16)
    x = jnp.concatenate([x, out1], axis=-1)
    x = deconv3x3_s2_relu_bn(x, packed["deconv1"], meta["deconv1"], jnp.float32)
    return jnp.transpose(x, (0, 3, 1, 2))                           # back to NCHW


# ----------------------------------------------------------------------------
# Pure-JAX reference (lax convs, f32 BN tail) for correctness checking.
# ----------------------------------------------------------------------------
def _ref_bias_relu_bn(y, b, g, bt):
    y = jnp.maximum(y + b.reshape(1, 1, 1, -1), 0.0)
    mean = jnp.mean(y, axis=(0, 1, 2), keepdims=True)
    var = jnp.mean((y - mean) ** 2, axis=(0, 1, 2), keepdims=True)
    yn = (y - mean) * lax.rsqrt(var + _BN_EPS)
    return yn * g.reshape(1, 1, 1, -1) + bt.reshape(1, 1, 1, -1)


def _ref_conv3x3(x, p):
    wb = jnp.transpose(p["w"], (2, 3, 1, 0)).astype(jnp.bfloat16)
    y = lax.conv_general_dilated(
        x.astype(jnp.bfloat16), wb, (1, 1), ((1, 1), (1, 1)),
        dimension_numbers=("NHWC", "HWIO", "NHWC"),
        preferred_element_type=jnp.float32)
    return _ref_bias_relu_bn(y, p["b"], p["gamma"], p["beta"])


def _ref_deconv3x3_s2(x, p):
    wf = p["w"][:, :, ::-1, ::-1]
    wb = jnp.transpose(wf, (2, 3, 0, 1)).astype(jnp.bfloat16)
    y = lax.conv_general_dilated(
        x.astype(jnp.bfloat16), wb, (1, 1), ((1, 2), (1, 2)),
        lhs_dilation=(2, 2),
        dimension_numbers=("NHWC", "HWIO", "NHWC"),
        preferred_element_type=jnp.float32)
    return _ref_bias_relu_bn(y, p["b"], p["gamma"], p["beta"])


def segmentation_decoder_forward_ref(z_nchw, hsi_out, msi_out, params):
    to_nhwc = lambda t: jnp.transpose(t, (0, 2, 3, 1))
    z = to_nhwc(z_nchw)
    hsi = [to_nhwc(t) for t in hsi_out]
    msi = [to_nhwc(t) for t in msi_out]

    def upcat(m, h, p):
        sx, sy = m.shape[1] // h.shape[1], m.shape[2] // h.shape[2]
        hu = jnp.repeat(jnp.repeat(h, sx, axis=1), sy, axis=2)
        return _ref_conv3x3(jnp.concatenate([hu, m], axis=-1), p)

    out2 = upcat(msi[1], hsi[1], params["upcat2"])
    out1 = upcat(msi[0], hsi[0], params["upcat1"])
    x = _ref_deconv3x3_s2(z, params["deconv3"])
    x = jnp.concatenate([x, out2], axis=-1)
    x = _ref_deconv3x3_s2(x, params["deconv2"])
    x = jnp.concatenate([x, out1], axis=-1)
    x = _ref_deconv3x3_s2(x, params["deconv1"])
    return jnp.transpose(x, (0, 3, 1, 2))


# ----------------------------------------------------------------------------
# Deterministic parameter init (shapes from the module's __init__).
# ----------------------------------------------------------------------------
def init_params(key, latent_dim=256, out_channels=4):
    ks = jax.random.split(key, 5)

    def _block(k, w_shape, cin, cout):
        kw, kb = jax.random.split(k)
        scale = 1.0 / (cin * 9) ** 0.5
        return dict(
            w=jax.random.uniform(kw, w_shape, jnp.float32, -scale, scale),
            b=jax.random.uniform(kb, (cout,), jnp.float32, -scale, scale),
            gamma=jnp.ones((cout,), jnp.float32),
            beta=jnp.zeros((cout,), jnp.float32),
        )

    def conv_p(k, cout, cin):      # Conv2d weight layout (Cout, Cin, 3, 3)
        return _block(k, (cout, cin, 3, 3), cin, cout)

    def deconv_p(k, cin, cout):    # ConvTranspose2d weight layout (Cin, Cout, 3, 3)
        return _block(k, (cin, cout, 3, 3), cin, cout)

    return dict(
        upcat2=conv_p(ks[0], latent_dim // 2, latent_dim),
        upcat1=conv_p(ks[1], latent_dim // 4, latent_dim // 2),
        deconv3=deconv_p(ks[2], latent_dim, 128),
        deconv2=deconv_p(ks[3], 128 * 2, 64),
        deconv1=deconv_p(ks[4], 64 * 2, out_channels),
    )


if __name__ == "__main__":
    # Architecture hard-codes 128 / 64 channel skips in Up, so latent_dim = 256.
    latent_dim, out_channels, B = 256, 4, 2

    key = jax.random.PRNGKey(0)
    kz, kh0, kh1, km0, km1, kp = jax.random.split(key, 6)

    z = jax.random.normal(kz, (B, latent_dim, 4, 4), jnp.float32)
    hsi_out = [jax.random.normal(kh0, (B, latent_dim // 4, 8, 8), jnp.float32),
               jax.random.normal(kh1, (B, latent_dim // 2, 4, 4), jnp.float32)]
    msi_out = [jax.random.normal(km0, (B, latent_dim // 4, 16, 16), jnp.float32),
               jax.random.normal(km1, (B, latent_dim // 2, 8, 8), jnp.float32)]
    params = init_params(kp, latent_dim, out_channels)

    # One-time packing (transpose / pad / deconv phase interleave) OUTSIDE the
    # per-forward trace; `meta` is static Python ints captured by closure.
    packed, meta = pack_decoder_params(params)

    fwd = jax.jit(lambda z_, h_, m_, pk: segmentation_decoder_forward(z_, h_, m_, pk, meta))
    ref_fwd = jax.jit(segmentation_decoder_forward_ref)

    out = jax.block_until_ready(fwd(z, hsi_out, msi_out, packed))
    assert out.shape == (B, out_channels, 32, 32), out.shape

    # Reference uses the same bf16 matmul operands / f32 accumulation via lax convs.
    ref = jax.block_until_ready(ref_fwd(z, hsi_out, msi_out, params))
    max_err = float(jnp.max(jnp.abs(out - ref)))
    assert max_err < 1e-2, f"mismatch vs JAX reference: {max_err}"

    print("KERNEL_OK")
</pallas_src>

<mosaic_0001>
module attributes {stable_mosaic.version = 11 : i64} {
  func.func @_gemm_bias_relu_bn_kernel(%arg0: i32, %arg1: memref<32x1024xbf16, #tpu.memory_space<vmem>>, %arg2: memref<1024x256xbf16, #tpu.memory_space<vmem>>, %arg3: memref<8x256xf32, #tpu.memory_space<vmem>>, %arg4: memref<256x256xf32, #tpu.memory_space<vmem>>, %arg5: memref<32x256xbf16, #tpu.memory_space<vmem>>) attributes {dimension_semantics = [#tpu.dimension_semantics<parallel>], iteration_bounds = array<i64: 2>, scalar_prefetch = 0 : i64, scratch_operands = 0 : i64, tpu.core_type = #tpu.core_type<tc>, window_params = [{pipeline_mode = #tpu.pipeline_mode<synchronous>, transform_indices = @transform_0, window_bounds = array<i64: 32, 1024>}, {transform_indices = @transform_1, window_bounds = array<i64: 1024, 256>}, {transform_indices = @transform_2, window_bounds = array<i64: 8, 256>}, {pipeline_mode = #tpu.pipeline_mode<synchronous>, transform_indices = @transform_3, window_bounds = array<i64: 256, 256>}, {transform_indices = @transform_4, window_bounds = array<i64: 32, 256>}]} {
    %c0 = arith.constant 0 : index
    %c0_0 = arith.constant 0 : index
    %0 = vector.load %arg1[%c0, %c0_0] : memref<32x1024xbf16, #tpu.memory_space<vmem>>, vector<32x1024xbf16>
    %c0_1 = arith.constant 0 : index
    %c0_2 = arith.constant 0 : index
    %1 = vector.load %arg2[%c0_1, %c0_2] : memref<1024x256xbf16, #tpu.memory_space<vmem>>, vector<1024x256xbf16>
    %cst = arith.constant dense<0.000000e+00> : vector<32x256xf32>
    %2 = tpu.matmul %0, %1, %cst {dimension_numbers = #tpu.dot_dimension_numbers<[1], [0], [0], [1], [0, 0, 1, 1], [], []>} : vector<32x1024xbf16>, vector<1024x256xbf16>, vector<32x256xf32> -> vector<32x256xf32>
    %c0_3 = arith.constant 0 : index
    %c0_4 = arith.constant 0 : index
    %3 = vector.load %arg3[%c0_3, %c0_4] : memref<8x256xf32, #tpu.memory_space<vmem>>, vector<8x256xf32>
    %4 = vector.extract_strided_slice %3 {offsets = [0, 0], sizes = [1, 256], strides = [1, 1]} : vector<8x256xf32> to vector<1x256xf32>
    %5 = vector.broadcast %4 : vector<1x256xf32> to vector<32x256xf32>
    %6 = arith.addf %2, %5 : vector<32x256xf32>
    %cst_5 = arith.constant 0.000000e+00 : f32
    %7 = vector.broadcast %cst_5 : f32 to vector<32x256xf32>
    %8 = arith.maximumf %6, %7 : vector<32x256xf32>
    %cst_6 = arith.constant dense<0.000000e+00> : vector<256xf32>
    %9 = vector.multi_reduction <add>, %8, %cst_6 [0] : vector<32x256xf32> to vector<256xf32>
    %10 = vector.shape_cast %9 : vector<256xf32> to vector<1x256xf32>
    %11 = arith.mulf %8, %8 : vector<32x256xf32>
    %cst_7 = arith.constant dense<0.000000e+00> : vector<256xf32>
    %12 = vector.multi_reduction <add>, %11, %cst_7 [0] : vector<32x256xf32> to vector<256xf32>
    %13 = vector.shape_cast %12 : vector<256xf32> to vector<1x256xf32>
    %c0_8 = arith.constant 0 : index
    %c0_9 = arith.constant 0 : index
    %14 = vector.load %arg4[%c0_8, %c0_9] : memref<256x256xf32, #tpu.memory_space<vmem>>, vector<256x256xf32>
    %cst_10 = arith.constant dense<0.000000e+00> : vector<1x256xf32>
    %15 = tpu.matmul %10, %14, %cst_10 {dimension_numbers = #tpu.dot_dimension_numbers<[1], [0], [0], [1], [0, 0, 1, 1], [], []>} : vector<1x256xf32>, vector<256x256xf32>, vector<1x256xf32> -> vector<1x256xf32>
    %c0_11 = arith.constant 0 : index
    %c0_12 = arith.constant 0 : index
    %16 = vector.load %arg4[%c0_11, %c0_12] : memref<256x256xf32, #tpu.memory_space<vmem>>, vector<256x256xf32>
    %cst_13 = arith.constant dense<0.000000e+00> : vector<1x256xf32>
    %17 = tpu.matmul %13, %16, %cst_13 {dimension_numbers = #tpu.dot_dimension_numbers<[1], [0], [0], [1], [0, 0, 1, 1], [], []>} : vector<1x256xf32>, vector<256x256xf32>, vector<1x256xf32> -> vector<1x256xf32>
    %cst_14 = arith.constant 7.812500e-03 : f32
    %18 = vector.broadcast %cst_14 : f32 to vector<1x256xf32>
    %19 = arith.mulf %15, %18 : vector<1x256xf32>
    %cst_15 = arith.constant 7.812500e-03 : f32
    %20 = vector.broadcast %cst_15 : f32 to vector<1x256xf32>
    %21 = arith.mulf %17, %20 : vector<1x256xf32>
    %22 = arith.mulf %19, %19 : vector<1x256xf32>
    %23 = arith.subf %21, %22 : vector<1x256xf32>
    %cst_16 = arith.constant 0.000000e+00 : f32
    %24 = vector.broadcast %cst_16 : f32 to vector<1x256xf32>
    %25 = arith.maximumf %23, %24 : vector<1x256xf32>
    %26 = vector.extract_strided_slice %3 {offsets = [1, 0], sizes = [1, 256], strides = [1, 1]} : vector<8x256xf32> to vector<1x256xf32>
    %cst_17 = arith.constant 9.99999974E-6 : f32
    %27 = vector.broadcast %cst_17 : f32 to vector<1x256xf32>
    %28 = arith.addf %25, %27 : vector<1x256xf32>
    %29 = math.rsqrt %28 : vector<1x256xf32>
    %30 = arith.mulf %26, %29 : vector<1x256xf32>
    %31 = vector.broadcast %30 : vector<1x256xf32> to vector<32x256xf32>
    %32 = arith.mulf %8, %31 : vector<32x256xf32>
    %33 = vector.extract_strided_slice %3 {offsets = [2, 0], sizes = [1, 256], strides = [1, 1]} : vector<8x256xf32> to vector<1x256xf32>
    %34 = arith.mulf %19, %30 : vector<1x256xf32>
    %35 = arith.subf %33, %34 : vector<1x256xf32>
    %36 = vector.broadcast %35 : vector<1x256xf32> to vector<32x256xf32>
    %37 = arith.addf %32, %36 : vector<32x256xf32>
    %38 = arith.truncf %37 : vector<32x256xf32> to vector<32x256xbf16>
    %c0_18 = arith.constant 0 : index
    %c0_19 = arith.constant 0 : index
    %39 = vector.load %arg5[%c0_18, %c0_19] : memref<32x256xbf16, #tpu.memory_space<vmem>>, vector<32x256xbf16>
    tpu.vector_store %arg5[%c0_18, %c0_19], %38 {strides = array<i32>} : memref<32x256xbf16, #tpu.memory_space<vmem>>, vector<32x256xbf16>,
    return
  }
  func.func @transform_0(%arg0: i32) -> (i32, i32) {
    %c0_i32 = arith.constant 0 : i32
    %c0_i32_0 = arith.constant 0 : i32
    %c0_i32_1 = arith.constant 0 : i32
    return %c0_i32, %c0_i32_0 : i32, i32
  }
  func.func @transform_1(%arg0: i32) -> (i32, i32) {
    %c0_i32 = arith.constant 0 : i32
    %c0_i32_0 = arith.constant 0 : i32
    return %c0_i32, %arg0 : i32, i32
  }
  func.func @transform_2(%arg0: i32) -> (i32, i32) {
    %c0_i32 = arith.constant 0 : i32
    %c0_i32_0 = arith.constant 0 : i32
    return %c0_i32, %arg0 : i32, i32
  }
  func.func @transform_3(%arg0: i32) -> (i32, i32) {
    %c0_i32 = arith.constant 0 : i32
    %c0_i32_0 = arith.constant 0 : i32
    %c0_i32_1 = arith.constant 0 : i32
    return %c0_i32, %c0_i32_0 : i32, i32
  }
  func.func @transform_4(%arg0: i32) -> (i32, i32) {
    %c0_i32 = arith.constant 0 : i32
    %c0_i32_0 = arith.constant 0 : i32
    return %c0_i32, %arg0 : i32, i32
  }
}

module attributes {stable_mosaic.version = 11 : i64} {
  func.func @_gemm_bias_relu_bn_kernel(%arg0: i32, %arg1: memref<128x2304xbf16, #tpu.memory_space<vmem>>, %arg2: memref<2304x128xbf16, #tpu.memory_space<vmem>>, %arg3: memref<8x128xf32, #tpu.memory_space<vmem>>, %arg4: memref<128x128xbf16, #tpu.memory_space<vmem>>) attributes {dimension_semantics = [#tpu.dimension_semantics<parallel>], iteration_bounds = array<i64: 1>, scalar_prefetch = 0 : i64, scratch_operands = 0 : i64, tpu.core_type = #tpu.core_type<tc>, window_params = [{pipeline_mode = #tpu.pipeline_mode<synchronous>, transform_indices = @transform_0, window_bounds = array<i64: 128, 2304>}, {transform_indices = @transform_1, window_bounds = array<i64: 2304, 128>}, {transform_indices = @transform_2, window_bounds = array<i64: 8, 128>}, {transform_indices = @transform_3, window_bounds = array<i64: 128, 128>}]} {
    %c0 = arith.constant 0 : index
    %c0_0 = arith.constant 0 : index
    %0 = vector.load %arg1[%c0, %c0_0] : memref<128x2304xbf16, #tpu.memory_space<vmem>>, vector<128x2304xbf16>
    %c0_1 = arith.constant 0 : index
    %c0_2 = arith.constant 0 : index
    %1 = vector.load %arg2[%c0_1, %c0_2] : memref<2304x128xbf16, #tpu.memory_space<vmem>>, vector<2304x128xbf16>
    %cst = arith.constant dense<0.000000e+00> : vector<128x128xf32>
    %2 = tpu.matmul %0, %1, %cst {dimension_numbers = #tpu.dot_dimension_numbers<[1], [0], [0], [1], [0, 0, 1, 1], [], []>} : vector<128x2304xbf16>, vector<2304x128xbf16>, vector<128x128xf32> -> vector<128x128xf32>
    %c0_3 = arith.constant 0 : index
    %c0_4 = arith.constant 0 : index
    %3 = vector.load %arg3[%c0_3, %c0_4] : memref<8x128xf32, #tpu.memory_space<vmem>>, vector<8x128xf32>
    %4 = vector.extract_strided_slice %3 {offsets = [0, 0], sizes = [1, 128], strides = [1, 1]} : vector<8x128xf32> to vector<1x128xf32>
    %5 = vector.broadcast %4 : vector<1x128xf32> to vector<128x128xf32>
    %6 = arith.addf %2, %5 : vector<128x128xf32>
    %cst_5 = arith.constant 0.000000e+00 : f32
    %7 = vector.broadcast %cst_5 : f32 to vector<128x128xf32>
    %8 = arith.maximumf %6, %7 : vector<128x128xf32>
    %cst_6 = arith.constant dense<0.000000e+00> : vector<128xf32>
    %9 = vector.multi_reduction <add>, %8, %cst_6 [0] : vector<128x128xf32> to vector<128xf32>
    %10 = vector.shape_cast %9 : vector<128xf32> to vector<1x128xf32>
    %11 = arith.mulf %8, %8 : vector<128x128xf32>
    %cst_7 = arith.constant dense<0.000000e+00> : vector<128xf32>
    %12 = vector.multi_reduction <add>, %11, %cst_7 [0] : vector<128x128xf32> to vector<128xf32>
    %13 = vector.shape_cast %12 : vector<128xf32> to vector<1x128xf32>
    %cst_8 = arith.constant 7.812500e-03 : f32
    %14 = vector.broadcast %cst_8 : f32 to vector<1x128xf32>
    %15 = arith.mulf %10, %14 : vector<1x128xf32>
    %cst_9 = arith.constant 7.812500e-03 : f32
    %16 = vector.broadcast %cst_9 : f32 to vector<1x128xf32>
    %17 = arith.mulf %13, %16 : vector<1x128xf32>
    %18 = arith.mulf %15, %15 : vector<1x128xf32>
    %19 = arith.subf %17, %18 : vector<1x128xf32>
    %cst_10 = arith.constant 0.000000e+00 : f32
    %20 = vector.broadcast %cst_10 : f32 to vector<1x128xf32>
    %21 = arith.maximumf %19, %20 : vector<1x128xf32>
    %22 = vector.extract_strided_slice %3 {offsets = [1, 0], sizes = [1, 128], strides = [1, 1]} : vector<8x128xf32> to vector<1x128xf32>
    %cst_11 = arith.constant 9.99999974E-6 : f32
    %23 = vector.broadcast %cst_11 : f32 to vector<1x128xf32>
    %24 = arith.addf %21, %23 : vector<1x128xf32>
    %25 = math.rsqrt %24 : vector<1x128xf32>
    %26 = arith.mulf %22, %25 : vector<1x128xf32>
    %27 = vector.broadcast %26 : vector<1x128xf32> to vector<128x128xf32>
    %28 = arith.mulf %8, %27 : vector<128x128xf32>
    %29 = vector.extract_strided_slice %3 {offsets = [2, 0], sizes = [1, 128], strides = [1, 1]} : vector<8x128xf32> to vector<1x128xf32>
    %30 = arith.mulf %15, %26 : vector<1x128xf32>
    %31 = arith.subf %29, %30 : vector<1x128xf32>
    %32 = vector.broadcast %31 : vector<1x128xf32> to vector<128x128xf32>
    %33 = arith.addf %28, %32 : vector<128x128xf32>
    %34 = arith.truncf %33 : vector<128x128xf32> to vector<128x128xbf16>
    %c0_12 = arith.constant 0 : index
    %c0_13 = arith.constant 0 : index
    %35 = vector.load %arg4[%c0_12, %c0_13] : memref<128x128xbf16, #tpu.memory_space<vmem>>, vector<128x128xbf16>
    tpu.vector_store %arg4[%c0_12, %c0_13], %34 {strides = array<i32>} : memref<128x128xbf16, #tpu.memory_space<vmem>>, vector<128x128xbf16>,
    return
  }
  func.func @transform_0(%arg0: i32) -> (i32, i32) {
    %c0_i32 = arith.constant 0 : i32
    %c0_i32_0 = arith.constant 0 : i32
    %c0_i32_1 = arith.constant 0 : i32
    return %c0_i32, %c0_i32_0 : i32, i32
  }
  func.func @transform_1(%arg0: i32) -> (i32, i32) {
    %c0_i32 = arith.constant 0 : i32
    %c0_i32_0 = arith.constant 0 : i32
    return %c0_i32, %arg0 : i32, i32
  }
  func.func @transform_2(%arg0: i32) -> (i32, i32) {
    %c0_i32 = arith.constant 0 : i32
    %c0_i32_0 = arith.constant 0 : i32
    return %c0_i32, %arg0 : i32, i32
  }
  func.func @transform_3(%arg0: i32) -> (i32, i32) {
    %c0_i32 = arith.constant 0 : i32
    %c0_i32_0 = arith.constant 0 : i32
    return %c0_i32, %arg0 : i32, i32
  }
}

module attributes {stable_mosaic.version = 11 : i64} {
  func.func @_gemm_bias_relu_bn_kernel(%arg0: i32, %arg1: memref<512x1152xbf16, #tpu.memory_space<vmem>>, %arg2: memref<1152x128xbf16, #tpu.memory_space<vmem>>, %arg3: memref<8x128xf32, #tpu.memory_space<vmem>>, %arg4: memref<512x128xbf16, #tpu.memory_space<vmem>>) attributes {dimension_semantics = [#tpu.dimension_semantics<parallel>], iteration_bounds = array<i64: 1>, scalar_prefetch = 0 : i64, scratch_operands = 0 : i64, tpu.core_type = #tpu.core_type<tc>, window_params = [{pipeline_mode = #tpu.pipeline_mode<synchronous>, transform_indices = @transform_0, window_bounds = array<i64: 512, 1152>}, {transform_indices = @transform_1, window_bounds = array<i64: 1152, 128>}, {transform_indices = @transform_2, window_bounds = array<i64: 8, 128>}, {transform_indices = @transform_3, window_bounds = array<i64: 512, 128>}]} {
    %c0 = arith.constant 0 : index
    %c0_0 = arith.constant 0 : index
    %0 = vector.load %arg1[%c0, %c0_0] : memref<512x1152xbf16, #tpu.memory_space<vmem>>, vector<512x1152xbf16>
    %c0_1 = arith.constant 0 : index
    %c0_2 = arith.constant 0 : index
    %1 = vector.load %arg2[%c0_1, %c0_2] : memref<1152x128xbf16, #tpu.memory_space<vmem>>, vector<1152x128xbf16>
    %cst = arith.constant dense<0.000000e+00> : vector<512x128xf32>
    %2 = tpu.matmul %0, %1, %cst {dimension_numbers = #tpu.dot_dimension_numbers<[1], [0], [0], [1], [0, 0, 1, 1], [], []>} : vector<512x1152xbf16>, vector<1152x128xbf16>, vector<512x128xf32> -> vector<512x128xf32>
    %c0_3 = arith.constant 0 : index
    %c0_4 = arith.constant 0 : index
    %3 = vector.load %arg3[%c0_3, %c0_4] : memref<8x128xf32, #tpu.memory_space<vmem>>, vector<8x128xf32>
    %4 = vector.extract_strided_slice %3 {offsets = [0, 0], sizes = [1, 128], strides = [1, 1]} : vector<8x128xf32> to vector<1x128xf32>
    %5 = vector.broadcast %4 : vector<1x128xf32> to vector<512x128xf32>
    %6 = arith.addf %2, %5 : vector<512x128xf32>
    %cst_5 = arith.constant 0.000000e+00 : f32
    %7 = vector.broadcast %cst_5 : f32 to vector<512x128xf32>
    %8 = arith.maximumf %6, %7 : vector<512x128xf32>
    %cst_6 = arith.constant dense<0.000000e+00> : vector<128xf32>
    %9 = vector.multi_reduction <add>, %8, %cst_6 [0] : vector<512x128xf32> to vector<128xf32>
    %10 = vector.shape_cast %9 : vector<128xf32> to vector<1x128xf32>
    %11 = arith.mulf %8, %8 : vector<512x128xf32>
    %cst_7 = arith.constant dense<0.000000e+00> : vector<128xf32>
    %12 = vector.multi_reduction <add>, %11, %cst_7 [0] : vector<512x128xf32> to vector<128xf32>
    %13 = vector.shape_cast %12 : vector<128xf32> to vector<1x128xf32>
    %cst_8 = arith.constant 0.001953125 : f32
    %14 = vector.broadcast %cst_8 : f32 to vector<1x128xf32>
    %15 = arith.mulf %10, %14 : vector<1x128xf32>
    %cst_9 = arith.constant 0.001953125 : f32
    %16 = vector.broadcast %cst_9 : f32 to vector<1x128xf32>
    %17 = arith.mulf %13, %16 : vector<1x128xf32>
    %18 = arith.mulf %15, %15 : vector<1x128xf32>
    %19 = arith.subf %17, %18 : vector<1x128xf32>
    %cst_10 = arith.constant 0.000000e+00 : f32
    %20 = vector.broadcast %cst_10 : f32 to vector<1x128xf32>
    %21 = arith.maximumf %19, %20 : vector<1x128xf32>
    %22 = vector.extract_strided_slice %3 {offsets = [1, 0], sizes = [1, 128], strides = [1, 1]} : vector<8x128xf32> to vector<1x128xf32>
    %cst_11 = arith.constant 9.99999974E-6 : f32
    %23 = vector.broadcast %cst_11 : f32 to vector<1x128xf32>
    %24 = arith.addf %21, %23 : vector<1x128xf32>
    %25 = math.rsqrt %24 : vector<1x128xf32>
    %26 = arith.mulf %22, %25 : vector<1x128xf32>
    %27 = vector.broadcast %26 : vector<1x128xf32> to vector<512x128xf32>
    %28 = arith.mulf %8, %27 : vector<512x128xf32>
    %29 = vector.extract_strided_slice %3 {offsets = [2, 0], sizes = [1, 128], strides = [1, 1]} : vector<8x128xf32> to vector<1x128xf32>
    %30 = arith.mulf %15, %26 : vector<1x128xf32>
    %31 = arith.subf %29, %30 : vector<1x128xf32>
    %32 = vector.broadcast %31 : vector<1x128xf32> to vector<512x128xf32>
    %33 = arith.addf %28, %32 : vector<512x128xf32>
    %34 = arith.truncf %33 : vector<512x128xf32> to vector<512x128xbf16>
    %c0_12 = arith.constant 0 : index
    %c0_13 = arith.constant 0 : index
    %35 = vector.load %arg4[%c0_12, %c0_13] : memref<512x128xbf16, #tpu.memory_space<vmem>>, vector<512x128xbf16>
    tpu.vector_store %arg4[%c0_12, %c0_13], %34 {strides = array<i32>} : memref<512x128xbf16, #tpu.memory_space<vmem>>, vector<512x128xbf16>,
    return
  }
  func.func @transform_0(%arg0: i32) -> (i32, i32) {
    %c0_i32 = arith.constant 0 : i32
    %c0_i32_0 = arith.constant 0 : i32
    %c0_i32_1 = arith.constant 0 : i32
    return %c0_i32, %c0_i32_0 : i32, i32
  }
  func.func @transform_1(%arg0: i32) -> (i32, i32) {
    %c0_i32 = arith.constant 0 : i32
    %c0_i32_0 = arith.constant 0 : i32
    return %c0_i32, %arg0 : i32, i32
  }
  func.func @transform_2(%arg0: i32) -> (i32, i32) {
    %c0_i32 = arith.constant 0 : i32
    %c0_i32_0 = arith.constant 0 : i32
    return %c0_i32, %arg0 : i32, i32
  }
  func.func @transform_3(%arg0: i32) -> (i32, i32) {
    %c0_i32 = arith.constant 0 : i32
    %c0_i32_0 = arith.constant 0 : i32
    return %c0_i32, %arg0 : i32, i32
  }
}

module attributes {stable_mosaic.version = 11 : i64} {
  func.func @_gemm_bias_relu_bn_kernel(%arg0: i32, %arg1: memref<128x1024xbf16, #tpu.memory_space<vmem>>, %arg2: memref<1024x256xbf16, #tpu.memory_space<vmem>>, %arg3: memref<8x256xf32, #tpu.memory_space<vmem>>, %arg4: memref<256x256xf32, #tpu.memory_space<vmem>>, %arg5: memref<128x256xbf16, #tpu.memory_space<vmem>>) attributes {dimension_semantics = [#tpu.dimension_semantics<parallel>], iteration_bounds = array<i64: 1>, scalar_prefetch = 0 : i64, scratch_operands = 0 : i64, tpu.core_type = #tpu.core_type<tc>, window_params = [{pipeline_mode = #tpu.pipeline_mode<synchronous>, transform_indices = @transform_0, window_bounds = array<i64: 128, 1024>}, {transform_indices = @transform_1, window_bounds = array<i64: 1024, 256>}, {transform_indices = @transform_2, window_bounds = array<i64: 8, 256>}, {pipeline_mode = #tpu.pipeline_mode<synchronous>, transform_indices = @transform_3, window_bounds = array<i64: 256, 256>}, {transform_indices = @transform_4, window_bounds = array<i64: 128, 256>}]} {
    %c0 = arith.constant 0 : index
    %c0_0 = arith.constant 0 : index
    %0 = vector.load %arg1[%c0, %c0_0] : memref<128x1024xbf16, #tpu.memory_space<vmem>>, vector<128x1024xbf16>
    %c0_1 = arith.constant 0 : index
    %c0_2 = arith.constant 0 : index
    %1 = vector.load %arg2[%c0_1, %c0_2] : memref<1024x256xbf16, #tpu.memory_space<vmem>>, vector<1024x256xbf16>
    %cst = arith.constant dense<0.000000e+00> : vector<128x256xf32>
    %2 = tpu.matmul %0, %1, %cst {dimension_numbers = #tpu.dot_dimension_numbers<[1], [0], [0], [1], [0, 0, 1, 1], [], []>} : vector<128x1024xbf16>, vector<1024x256xbf16>, vector<128x256xf32> -> vector<128x256xf32>
    %c0_3 = arith.constant 0 : index
    %c0_4 = arith.constant 0 : index
    %3 = vector.load %arg3[%c0_3, %c0_4] : memref<8x256xf32, #tpu.memory_space<vmem>>, vector<8x256xf32>
    %4 = vector.extract_strided_slice %3 {offsets = [0, 0], sizes = [1, 256], strides = [1, 1]} : vector<8x256xf32> to vector<1x256xf32>
    %5 = vector.broadcast %4 : vector<1x256xf32> to vector<128x256xf32>
    %6 = arith.addf %2, %5 : vector<128x256xf32>
    %cst_5 = arith.constant 0.000000e+00 : f32
    %7 = vector.broadcast %cst_5 : f32 to vector<128x256xf32>
    %8 = arith.maximumf %6, %7 : vector<128x256xf32>
    %cst_6 = arith.constant dense<0.000000e+00> : vector<256xf32>
    %9 = vector.multi_reduction <add>, %8, %cst_6 [0] : vector<128x256xf32> to vector<256xf32>
    %10 = vector.shape_cast %9 : vector<256xf32> to vector<1x256xf32>
    %11 = arith.mulf %8, %8 : vector<128x256xf32>
    %cst_7 = arith.constant dense<0.000000e+00> : vector<256xf32>
    %12 = vector.multi_reduction <add>, %11, %cst_7 [0] : vector<128x256xf32> to vector<256xf32>
    %13 = vector.shape_cast %12 : vector<256xf32> to vector<1x256xf32>
    %c0_8 = arith.constant 0 : index
    %c0_9 = arith.constant 0 : index
    %14 = vector.load %arg4[%c0_8, %c0_9] : memref<256x256xf32, #tpu.memory_space<vmem>>, vector<256x256xf32>
    %cst_10 = arith.constant dense<0.000000e+00> : vector<1x256xf32>
    %15 = tpu.matmul %10, %14, %cst_10 {dimension_numbers = #tpu.dot_dimension_numbers<[1], [0], [0], [1], [0, 0, 1, 1], [], []>} : vector<1x256xf32>, vector<256x256xf32>, vector<1x256xf32> -> vector<1x256xf32>
    %c0_11 = arith.constant 0 : index
    %c0_12 = arith.constant 0 : index
    %16 = vector.load %arg4[%c0_11, %c0_12] : memref<256x256xf32, #tpu.memory_space<vmem>>, vector<256x256xf32>
    %cst_13 = arith.constant dense<0.000000e+00> : vector<1x256xf32>
    %17 = tpu.matmul %13, %16, %cst_13 {dimension_numbers = #tpu.dot_dimension_numbers<[1], [0], [0], [1], [0, 0, 1, 1], [], []>} : vector<1x256xf32>, vector<256x256xf32>, vector<1x256xf32> -> vector<1x256xf32>
    %cst_14 = arith.constant 0.001953125 : f32
    %18 = vector.broadcast %cst_14 : f32 to vector<1x256xf32>
    %19 = arith.mulf %15, %18 : vector<1x256xf32>
    %cst_15 = arith.constant 0.001953125 : f32
    %20 = vector.broadcast %cst_15 : f32 to vector<1x256xf32>
    %21 = arith.mulf %17, %20 : vector<1x256xf32>
    %22 = arith.mulf %19, %19 : vector<1x256xf32>
    %23 = arith.subf %21, %22 : vector<1x256xf32>
    %cst_16 = arith.constant 0.000000e+00 : f32
    %24 = vector.broadcast %cst_16 : f32 to vector<1x256xf32>
    %25 = arith.maximumf %23, %24 : vector<1x256xf32>
    %26 = vector.extract_strided_slice %3 {offsets = [1, 0], sizes = [1, 256], strides = [1, 1]} : vector<8x256xf32> to vector<1x256xf32>
    %cst_17 = arith.constant 9.99999974E-6 : f32
    %27 = vector.broadcast %cst_17 : f32 to vector<1x256xf32>
    %28 = arith.addf %25, %27 : vector<1x256xf32>
    %29 = math.rsqrt %28 : vector<1x256xf32>
    %30 = arith.mulf %26, %29 : vector<1x256xf32>
    %31 = vector.broadcast %30 : vector<1x256xf32> to vector<128x256xf32>
    %32 = arith.mulf %8, %31 : vector<128x256xf32>
    %33 = vector.extract_strided_slice %3 {offsets = [2, 0], sizes = [1, 256], strides = [1, 1]} : vector<8x256xf32> to vector<1x256xf32>
    %34 = arith.mulf %19, %30 : vector<1x256xf32>
    %35 = arith.subf %33, %34 : vector<1x256xf32>
    %36 = vector.broadcast %35 : vector<1x256xf32> to vector<128x256xf32>
    %37 = arith.addf %32, %36 : vector<128x256xf32>
    %38 = arith.truncf %37 : vector<128x256xf32> to vector<128x256xbf16>
    %c0_18 = arith.constant 0 : index
    %c0_19 = arith.constant 0 : index
    %39 = vector.load %arg5[%c0_18, %c0_19] : memref<128x256xbf16, #tpu.memory_space<vmem>>, vector<128x256xbf16>
    tpu.vector_store %arg5[%c0_18, %c0_19], %38 {strides = array<i32>} : memref<128x256xbf16, #tpu.memory_space<vmem>>, vector<128x256xbf16>,
    return
  }
  func.func @transform_0(%arg0: i32) -> (i32, i32) {
    %c0_i32 = arith.constant 0 : i32
    %c0_i32_0 = arith.constant 0 : i32
    %c0_i32_1 = arith.constant 0 : i32
    return %c0_i32, %c0_i32_0 : i32, i32
  }
  func.func @transform_1(%arg0: i32) -> (i32, i32) {
    %c0_i32 = arith.constant 0 : i32
    %c0_i32_0 = arith.constant 0 : i32
    return %c0_i32, %arg0 : i32, i32
  }
  func.func @transform_2(%arg0: i32) -> (i32, i32) {
    %c0_i32 = arith.constant 0 : i32
    %c0_i32_0 = arith.constant 0 : i32
    return %c0_i32, %arg0 : i32, i32
  }
  func.func @transform_3(%arg0: i32) -> (i32, i32) {
    %c0_i32 = arith.constant 0 : i32
    %c0_i32_0 = arith.constant 0 : i32
    %c0_i32_1 = arith.constant 0 : i32
    return %c0_i32, %c0_i32_0 : i32, i32
  }
  func.func @transform_4(%arg0: i32) -> (i32, i32) {
    %c0_i32 = arith.constant 0 : i32
    %c0_i32_0 = arith.constant 0 : i32
    return %c0_i32, %arg0 : i32, i32
  }
}

module attributes {stable_mosaic.version = 11 : i64} {
  func.func @_gemm_bias_relu_bn_kernel(%arg0: i32, %arg1: memref<512x512xbf16, #tpu.memory_space<vmem>>, %arg2: memref<512x128xbf16, #tpu.memory_space<vmem>>, %arg3: memref<8x128xf32, #tpu.memory_space<vmem>>, %arg4: memref<128x128xf32, #tpu.memory_space<vmem>>, %arg5: memref<512x128xf32, #tpu.memory_space<vmem>>) attributes {dimension_semantics = [#tpu.dimension_semantics<parallel>], iteration_bounds = array<i64: 1>, scalar_prefetch = 0 : i64, scratch_operands = 0 : i64, tpu.core_type = #tpu.core_type<tc>, window_params = [{pipeline_mode = #tpu.pipeline_mode<synchronous>, transform_indices = @transform_0, window_bounds = array<i64: 512, 512>}, {transform_indices = @transform_1, window_bounds = array<i64: 512, 128>}, {transform_indices = @transform_2, window_bounds = array<i64: 8, 128>}, {pipeline_mode = #tpu.pipeline_mode<synchronous>, transform_indices = @transform_3, window_bounds = array<i64: 128, 128>}, {transform_indices = @transform_4, window_bounds = array<i64: 512, 128>}]} {
    %c0 = arith.constant 0 : index
    %c0_0 = arith.constant 0 : index
    %0 = vector.load %arg1[%c0, %c0_0] : memref<512x512xbf16, #tpu.memory_space<vmem>>, vector<512x512xbf16>
    %c0_1 = arith.constant 0 : index
    %c0_2 = arith.constant 0 : index
    %1 = vector.load %arg2[%c0_1, %c0_2] : memref<512x128xbf16, #tpu.memory_space<vmem>>, vector<512x128xbf16>
    %cst = arith.constant dense<0.000000e+00> : vector<512x128xf32>
    %2 = tpu.matmul %0, %1, %cst {dimension_numbers = #tpu.dot_dimension_numbers<[1], [0], [0], [1], [0, 0, 1, 1], [], []>} : vector<512x512xbf16>, vector<512x128xbf16>, vector<512x128xf32> -> vector<512x128xf32>
    %c0_3 = arith.constant 0 : index
    %c0_4 = arith.constant 0 : index
    %3 = vector.load %arg3[%c0_3, %c0_4] : memref<8x128xf32, #tpu.memory_space<vmem>>, vector<8x128xf32>
    %4 = vector.extract_strided_slice %3 {offsets = [0, 0], sizes = [1, 128], strides = [1, 1]} : vector<8x128xf32> to vector<1x128xf32>
    %5 = vector.broadcast %4 : vector<1x128xf32> to vector<512x128xf32>
    %6 = arith.addf %2, %5 : vector<512x128xf32>
    %cst_5 = arith.constant 0.000000e+00 : f32
    %7 = vector.broadcast %cst_5 : f32 to vector<512x128xf32>
    %8 = arith.maximumf %6, %7 : vector<512x128xf32>
    %cst_6 = arith.constant dense<0.000000e+00> : vector<128xf32>
    %9 = vector.multi_reduction <add>, %8, %cst_6 [0] : vector<512x128xf32> to vector<128xf32>
    %10 = vector.shape_cast %9 : vector<128xf32> to vector<1x128xf32>
    %11 = arith.mulf %8, %8 : vector<512x128xf32>
    %cst_7 = arith.constant dense<0.000000e+00> : vector<128xf32>
    %12 = vector.multi_reduction <add>, %11, %cst_7 [0] : vector<512x128xf32> to vector<128xf32>
    %13 = vector.shape_cast %12 : vector<128xf32> to vector<1x128xf32>
    %c0_8 = arith.constant 0 : index
    %c0_9 = arith.constant 0 : index
    %14 = vector.load %arg4[%c0_8, %c0_9] : memref<128x128xf32, #tpu.memory_space<vmem>>, vector<128x128xf32>
    %cst_10 = arith.constant dense<0.000000e+00> : vector<1x128xf32>
    %15 = tpu.matmul %10, %14, %cst_10 {dimension_numbers = #tpu.dot_dimension_numbers<[1], [0], [0], [1], [0, 0, 1, 1], [], []>} : vector<1x128xf32>, vector<128x128xf32>, vector<1x128xf32> -> vector<1x128xf32>
    %c0_11 = arith.constant 0 : index
    %c0_12 = arith.constant 0 : index
    %16 = vector.load %arg4[%c0_11, %c0_12] : memref<128x128xf32, #tpu.memory_space<vmem>>, vector<128x128xf32>
    %cst_13 = arith.constant dense<0.000000e+00> : vector<1x128xf32>
    %17 = tpu.matmul %13, %16, %cst_13 {dimension_numbers = #tpu.dot_dimension_numbers<[1], [0], [0], [1], [0, 0, 1, 1], [], []>} : vector<1x128xf32>, vector<128x128xf32>, vector<1x128xf32> -> vector<1x128xf32>
    %cst_14 = arith.constant 4.8828125E-4 : f32
    %18 = vector.broadcast %cst_14 : f32 to vector<1x128xf32>
    %19 = arith.mulf %15, %18 : vector<1x128xf32>
    %cst_15 = arith.constant 4.8828125E-4 : f32
    %20 = vector.broadcast %cst_15 : f32 to vector<1x128xf32>
    %21 = arith.mulf %17, %20 : vector<1x128xf32>
    %22 = arith.mulf %19, %19 : vector<1x128xf32>
    %23 = arith.subf %21, %22 : vector<1x128xf32>
    %cst_16 = arith.constant 0.000000e+00 : f32
    %24 = vector.broadcast %cst_16 : f32 to vector<1x128xf32>
    %25 = arith.maximumf %23, %24 : vector<1x128xf32>
    %26 = vector.extract_strided_slice %3 {offsets = [1, 0], sizes = [1, 128], strides = [1, 1]} : vector<8x128xf32> to vector<1x128xf32>
    %cst_17 = arith.constant 9.99999974E-6 : f32
    %27 = vector.broadcast %cst_17 : f32 to vector<1x128xf32>
    %28 = arith.addf %25, %27 : vector<1x128xf32>
    %29 = math.rsqrt %28 : vector<1x128xf32>
    %30 = arith.mulf %26, %29 : vector<1x128xf32>
    %31 = vector.broadcast %30 : vector<1x128xf32> to vector<512x128xf32>
    %32 = arith.mulf %8, %31 : vector<512x128xf32>
    %33 = vector.extract_strided_slice %3 {offsets = [2, 0], sizes = [1, 128], strides = [1, 1]} : vector<8x128xf32> to vector<1x128xf32>
    %34 = arith.mulf %19, %30 : vector<1x128xf32>
    %35 = arith.subf %33, %34 : vector<1x128xf32>
    %36 = vector.broadcast %35 : vector<1x128xf32> to vector<512x128xf32>
    %37 = arith.addf %32, %36 : vector<512x128xf32>
    %c0_18 = arith.constant 0 : index
    %c0_19 = arith.constant 0 : index
    %38 = vector.load %arg5[%c0_18, %c0_19] : memref<512x128xf32, #tpu.memory_space<vmem>>, vector<512x128xf32>
    tpu.vector_store %arg5[%c0_18, %c0_19], %37 {strides = array<i32>} : memref<512x128xf32, #tpu.memory_space<vmem>>, vector<512x128xf32>,
    return
  }
  func.func @transform_0(%arg0: i32) -> (i32, i32) {
    %c0_i32 = arith.constant 0 : i32
    %c0_i32_0 = arith.constant 0 : i32
    %c0_i32_1 = arith.constant 0 : i32
    return %c0_i32, %c0_i32_0 : i32, i32
  }
  func.func @transform_1(%arg0: i32) -> (i32, i32) {
    %c0_i32 = arith.constant 0 : i32
    %c0_i32_0 = arith.constant 0 : i32
    return %c0_i32, %arg0 : i32, i32
  }
  func.func @transform_2(%arg0: i32) -> (i32, i32) {
    %c0_i32 = arith.constant 0 : i32
    %c0_i32_0 = arith.constant 0 : i32
    return %c0_i32, %arg0 : i32, i32
  }
  func.func @transform_3(%arg0: i32) -> (i32, i32) {
    %c0_i32 = arith.constant 0 : i32
    %c0_i32_0 = arith.constant 0 : i32
    %c0_i32_1 = arith.constant 0 : i32
    return %c0_i32, %c0_i32_0 : i32, i32
  }
  func.func @transform_4(%arg0: i32) -> (i32, i32) {
    %c0_i32 = arith.constant 0 : i32
    %c0_i32_0 = arith.constant 0 : i32
    return %c0_i32, %arg0 : i32, i32
  }
}

</mosaic_0001>

<llo_original>
// kernel: _lambda_.7
$region0: #{_lambda_.7}
  #allocation0 [shape = 'u32[]', space=smem, size = 0x4, offset = 0x4, fixed_abs, tag = 'smem constant byte address 0x4 - core index']
  #allocation1 [shape = 'u32[144,128]{1,0:T(1,128)}', space=vmem, size = 0x12000, scoped, tag = 'internal scratch']
  %s0 = inlined_call_operand.vmem [shape: bf16[32,1024], index: 0, kind: input, shape index: {}]
  %s1 = inlined_call_operand.hbm [shape: bf16[1024,512], index: 1, kind: input, shape index: {}]
  %s2 = inlined_call_operand.hbm [shape: f32[8,512], index: 2, kind: input, shape index: {}]
  %s3 = inlined_call_operand.hbm [shape: f32[256,256], index: 3, kind: input, shape index: {}]
  %s4 = inlined_call_operand.vmem [shape: bf16[32,512], index: 4, kind: output, shape index: {}]
  %s5 = sld [smem:[#allocation0]]
  $region95: #{_lambda_.7} parent=0
    _
  %s7 = ssub.s32 1, %s5
  %s8 = scalar_select 0, %s7, %s5
  $region1: #{_lambda_.7} parent=0
    #allocation2 [shape = 'u8[1048576]{0}', space=vmem, size = 0x100000, scoped, tag = 'input window, operand 1']
    #allocation3 [shape = 's32[2]{0}', space=sflag, size = 0x8, scoped, tag = 'scoped memory for _lambda_.7']
    #allocation4 [shape = 'u8[16384]{0}', space=vmem, size = 0x4000, scoped, tag = 'input window, operand 2']
    #allocation5 [shape = 's32[2]{0}', space=sflag, size = 0x8, scoped, tag = 'scoped memory for _lambda_.7']
    #allocation6 [shape = 'u8[262144]{0}', space=vmem, size = 0x40000, scoped, tag = 'input window, operand 3, single buffered']
    #allocation7 [shape = 'u8[32768]{0}', space=vmem, size = 0x8000, scoped, tag = 'output window, operand 0']
    %9 = vsyncpa [#allocation3], 0
    %s10 = scalar_lea.sflag [#allocation3], 1
    %11 = vsyncpa %s10, 0
    %12 = vsyncpa [#allocation5], 0
    %s13 = scalar_lea.sflag [#allocation5], 1
    %14 = vsyncpa %s13, 0
    loop: start=0, step=1, limit=4
    $region2: #{_lambda_.7} parent=1 // loop_pre_header
      _
    $region3: #{_lambda_.7} parent=1 // loop_header
      %s16 = sphi 0, %s20
      %p17 = scmp.ge.s32.totalorder %s16, 4
      %s24 = sphi 0, %s24
      %s26 = sphi 0, %s24
      %s27 = sphi 0, %s26
      %s41 = sphi 0, %s27
      %s47 = sphi 0, %s49
      %s50 = sphi 0, %s47
      %s51 = sphi 0, %s50
      %s67 = sphi 0, %s51
      %s73 = sphi 0, %s75
      %s76 = sphi 0, %s73
      %s77 = sphi 0, %s76
      %s93 = sphi 0, %s77
      %s97 = sphi 0, %s97
      %s99 = sphi 0, %s97
      %s100 = sphi 0, %s99
      %s114 = sphi 0, %s100
      %s120 = sphi 0, %s122
      %s123 = sphi 0, %s120
      %s124 = sphi 0, %s123
      %s140 = sphi 0, %s124
    $region4: #{_lambda_.7} parent=1 // loop_header_branch
      %19 = sbr.rel (%p17) target = $region8
    $region5: #{_lambda_.7} parent=1 // loop_body
      %s21 = ssub.s32 %s16, 1
      %s22 = ssub.s32 %s16, 2
      %s23 = sadd.s32 %s16, 1
      %s25 = sadd.s32 %s24, 1
      %p28 = scmp.eq.s32.totalorder %s16, 1
      %p29 = scmp.ne.s32.totalorder %s24, %s26
      %p30 = scmp.eq.s32.totalorder %s16, 0
      %p31 = por %p29, %p30
      %p32 = scmp.ne.s32.totalorder %s24, %s26
      %p33 = scmp.eq.s32.totalorder %s21, 1
      %p34 = por %p32, %p33
      %p35 = scmp.ne.s32.totalorder %s26, %s27
      %p36 = scmp.eq.s32.totalorder %s21, 0
      %p37 = por %p35, %p36
      %p38 = scmp.ne.s32.totalorder %s26, %s27
      %p39 = scmp.eq.s32.totalorder %s22, 1
      %p40 = por %p38, %p39
      %p42 = scmp.ne.s32.totalorder %s27, %s41
      %p43 = scmp.eq.s32.totalorder %s22, 0
      %p44 = por %p42, %p43
      %s45 = ssub.s32 %s16, %s23
      %p46 = scmp.eq.s32.totalorder %s45, 0
      %s48 = sadd.s32 %s47, 1
      %s49 = scalar_select %p46, %s47, %s48
      %p52 = pneg %p46
      %p53 = scmp.eq.s32.totalorder %s16, 1
      %p54 = por %p52, %p53
      %p55 = scmp.ne.s32.totalorder %s47, %s50
      %p56 = scmp.eq.s32.totalorder %s16, 0
      %p57 = por %p55, %p56
      %p58 = scmp.ne.s32.totalorder %s47, %s50
      %p59 = scmp.eq.s32.totalorder %s21, 1
      %p60 = por %p58, %p59
      %p61 = scmp.ne.s32.totalorder %s50, %s51
      %p62 = scmp.eq.s32.totalorder %s21, 0
      %p63 = por %p61, %p62
      %p64 = scmp.ne.s32.totalorder %s50, %s51
      %p65 = scmp.eq.s32.totalorder %s22, 1
      %p66 = por %p64, %p65
      %p68 = scmp.ne.s32.totalorder %s51, %s67
      %p69 = scmp.eq.s32.totalorder %s22, 0
      %p70 = por %p68, %p69
      %s71 = ssub.s32 %s16, %s23
      %p72 = scmp.eq.s32.totalorder %s71, 0
      %s74 = sadd.s32 %s73, 1
      %s75 = scalar_select %p72, %s73, %s74
      %p78 = pneg %p72
      %p79 = scmp.eq.s32.totalorder %s16, 1
      %p80 = por %p78, %p79
      %p81 = scmp.ne.s32.totalorder %s73, %s76
      %p82 = scmp.eq.s32.totalorder %s16, 0
      %p83 = por %p81, %p82
      %p84 = scmp.ne.s32.totalorder %s73, %s76
      %p85 = scmp.eq.s32.totalorder %s21, 1
      %p86 = por %p84, %p85
      %p87 = scmp.ne.s32.totalorder %s76, %s77
      %p88 = scmp.eq.s32.totalorder %s21, 0
      %p89 = por %p87, %p88
      %p90 = scmp.ne.s32.totalorder %s76, %s77
      %p91 = scmp.eq.s32.totalorder %s22, 1
      %p92 = por %p90, %p91
      %p94 = scmp.ne.s32.totalorder %s77, %s93
      %p95 = scmp.eq.s32.totalorder %s22, 0
      %p96 = por %p94, %p95
      %s98 = sadd.s32 %s97, 1
      %p101 = scmp.eq.s32.totalorder %s16, 1
      %p102 = scmp.ne.s32.totalorder %s97, %s99
      %p103 = scmp.eq.s32.totalorder %s16, 0
      %p104 = por %p102, %p103
      %p105 = scmp.ne.s32.totalorder %s97, %s99
      %p106 = scmp.eq.s32.totalorder %s21, 1
      %p107 = por %p105, %p106
      %p108 = scmp.ne.s32.totalorder %s99, %s100
      %p109 = scmp.eq.s32.totalorder %s21, 0
      %p110 = por %p108, %p109
      %p111 = scmp.ne.s32.totalorder %s99, %s100
      %p112 = scmp.eq.s32.totalorder %s22, 1
      %p113 = por %p111, %p112
      %p115 = scmp.ne.s32.totalorder %s100, %s114
      %p116 = scmp.eq.s32.totalorder %s22, 0
      %p117 = por %p115, %p116
      %s118 = ssub.s32 %s16, %s23
      %p119 = scmp.eq.s32.totalorder %s118, 0
      %s121 = sadd.s32 %s120, 1
      %s122 = scalar_select %p119, %s120, %s121
      %p125 = pneg %p119
      %p126 = scmp.eq.s32.totalorder %s16, 1
      %p127 = por %p125, %p126
      %p128 = scmp.ne.s32.totalorder %s120, %s123
      %p129 = scmp.eq.s32.totalorder %s16, 0
      %p130 = por %p128, %p129
      %p131 = scmp.ne.s32.totalorder %s120, %s123
      %p132 = scmp.eq.s32.totalorder %s21, 1
      %p133 = por %p131, %p132
      %p134 = scmp.ne.s32.totalorder %s123, %s124
      %p135 = scmp.eq.s32.totalorder %s21, 0
      %p136 = por %p134, %p135
      %p137 = scmp.ne.s32.totalorder %s123, %s124
      %p138 = scmp.eq.s32.totalorder %s22, 1
      %p139 = por %p137, %p138
      %p141 = scmp.ne.s32.totalorder %s124, %s140
      %p142 = scmp.eq.s32.totalorder %s22, 0
      %p143 = por %p141, %p142
      %p144 = scmp.le.s32.totalorder 1, %s16
      %p145 = scmp.lt.s32.totalorder %s16, 3
      %p146 = pnand %p144, %p145
      %p147 = pneg %p146
      // Predicated region
      $region9: #{_lambda_.7} parent=5 // pred_check
        _
      $region10: #{_lambda_.7} parent=5 // pred_check_branch
        %149 = sbr.rel (%p146) target = $region12
      $region11: #{_lambda_.7} parent=5 // pred_region
        %s150 = ssub.s32 %s16, 1
        // Predicated region
        $region13: #{_lambda_.7} parent=11 // pred_check
          %p151 = pneg %p37
        $region14: #{_lambda_.7} parent=11 // pred_check_branch
          %153 = sbr.rel (%p151) target = $region16
        $region15: #{_lambda_.7} parent=11 // pred_region
          _
        $region16: #{_lambda_.7} parent=11 // pred_fallthru
          _
        // Predicated region
        $region17: #{_lambda_.7} parent=11 // pred_check
          %p154 = pneg %p110
        $region18: #{_lambda_.7} parent=11 // pred_check_branch
          %156 = sbr.rel (%p154) target = $region20
        $region19: #{_lambda_.7} parent=11 // pred_region
          %s158 = ssub.s32 8192, 8192
          %159 = vsyncadd [#allocation5], %s158
          %s160 = sshll.u32 [#allocation6], 4
          %s161 = int_to_ptr.vmem [resolvable:$true] %s160
          %166 = dma.hbm_to_vmem [thread:$0]  %s3, 8192, %s161, [#allocation5], 256, 256, 16
        $region20: #{_lambda_.7} parent=11 // pred_fallthru
          _
      $region12: #{_lambda_.7} parent=5 // pred_fallthru
        _
      %p167 = scmp.lt.s32.totalorder %s16, 2
      // Predicated region
      $region21: #{_lambda_.7} parent=5 // pred_check
        %p168 = pneg %p167
      $region22: #{_lambda_.7} parent=5 // pred_check_branch
        %170 = sbr.rel (%p168) target = $region24
      $region23: #{_lambda_.7} parent=5 // pred_region
        // Predicated region
        $region25: #{_lambda_.7} parent=23 // pred_check
          %p171 = pneg %p57
        $region26: #{_lambda_.7} parent=23 // pred_check_branch
          %173 = sbr.rel (%p171) target = $region28
        $region27: #{_lambda_.7} parent=23 // pred_region
          %s174 = sand.u32 %s47, 1
          %s175 = scalar_lea.sflag [#allocation3], %s174
          %s176 = sand.u32 %s47, 1
          %s177 = smul.addr %s176, 1024
          %s178 = scalar_lea.vmem [#allocation2], %s177
          %s179 = smul.u32 2, %s16
          %s181 = ssub.s32 16384, 16384
          %182 = vsyncadd %s175, %s181
          %s183 = smul.addr %s179, 64
          %s184 = scalar_lea.hbm %s1, %s183
          %s185 = sshll.u32 %s178, 4
          %s186 = int_to_ptr.vmem [resolvable:$true] %s185
          %191 = dma.hbm_to_vmem [thread:$0]  %s184, 16384, %s186, %s175, 256, 128, 8
        $region28: #{_lambda_.7} parent=23 // pred_fallthru
          _
        // Predicated region
        $region29: #{_lambda_.7} parent=23 // pred_check
          %p192 = pneg %p83
        $region30: #{_lambda_.7} parent=23 // pred_check_branch
          %194 = sbr.rel (%p192) target = $region32
        $region31: #{_lambda_.7} parent=23 // pred_region
          %s195 = sand.u32 %s16, 1
          %s196 = scalar_lea.sflag [#allocation5], %s195
          %s197 = sand.u32 %s73, 1
          %s198 = smul.addr %s197, 16
          %s199 = scalar_lea.vmem [#allocation4], %s198
          %s200 = smul.u32 2, %s16
          %s202 = ssub.s32 256, 256
          %203 = vsyncadd %s196, %s202
          %s204 = smul.addr %s200, 128
          %s205 = scalar_lea.hbm %s2, %s204
          %s207 = sshll.u32 %s199, 4
          %s208 = int_to_ptr.vmem [resolvable:$true] %s207
          %210 = dma.hbm_to_vmem [thread:$0]  %s205, 256, %s208, %s196
        $region32: #{_lambda_.7} parent=23 // pred_fallthru
          _
      $region24: #{_lambda_.7} parent=5 // pred_fallthru
        _
      %p211 = scmp.le.s32.totalorder 1, %s16
      %p212 = scmp.lt.s32.totalorder %s16, 3
      %p213 = pnand %p211, %p212
      %p214 = pneg %p213
      // Predicated region
      $region33: #{_lambda_.7} parent=5 // pred_check
        _
      $region34: #{_lambda_.7} parent=5 // pred_check_branch
        %216 = sbr.rel (%p213) target = $region36
      $region35: #{_lambda_.7} parent=5 // pred_region
        %s217 = ssub.s32 %s16, 1
        %s218 = sand.u32 %s50, 1
        %s219 = scalar_lea.sflag [#allocation3], %s218
        %s220 = sand.u32 %s50, 1
        %s221 = smul.addr %s220, 1024
        %s222 = scalar_lea.vmem [#allocation2], %s221
        // Predicated region
        $region37: #{_lambda_.7} parent=35 // pred_check
          %p223 = pneg %p63
        $region38: #{_lambda_.7} parent=35 // pred_check_branch
          %225 = sbr.rel (%p223) target = $region40
        $region39: #{_lambda_.7} parent=35 // pred_region
          %226 = dma.done %s219, 16384
        $region40: #{_lambda_.7} parent=35 // pred_fallthru
          _
        %s227 = sand.u32 %s21, 1
        %s228 = scalar_lea.sflag [#allocation5], %s227
        %s229 = sand.u32 %s76, 1
        %s230 = smul.addr %s229, 16
        %s231 = scalar_lea.vmem [#allocation4], %s230
        // Predicated region
        $region41: #{_lambda_.7} parent=35 // pred_check
          %p232 = pneg %p89
        $region42: #{_lambda_.7} parent=35 // pred_check_branch
          %234 = sbr.rel (%p232) target = $region44
        $region43: #{_lambda_.7} parent=35 // pred_region
          %235 = dma.done %s228, 256
        $region44: #{_lambda_.7} parent=35 // pred_fallthru
          _
        // Predicated region
        $region45: #{_lambda_.7} parent=35 // pred_check
          %p236 = pneg %p110
        $region46: #{_lambda_.7} parent=35 // pred_check_branch
          %238 = sbr.rel (%p236) target = $region48
        $region47: #{_lambda_.7} parent=35 // pred_region
          %239 = dma.done [#allocation5], 8192
        $region48: #{_lambda_.7} parent=35 // pred_fallthru
          _
        %p240 = pneg %p37
        %p241 = pneg %p34
        %s242 = sand.u32 %s50, 1
        %s243 = scalar_lea.sflag [#allocation3], %s242
        %s244 = sand.u32 %s50, 1
        %s245 = smul.addr %s244, 1024
        %s246 = scalar_lea.vmem [#allocation2], %s245
        %p247 = pneg %p63
        %p248 = pneg %p60
        %s249 = sand.u32 %s21, 1
        %s250 = scalar_lea.sflag [#allocation5], %s249
        %s251 = sand.u32 %s76, 1
        %s252 = smul.addr %s251, 16
        %s253 = scalar_lea.vmem [#allocation4], %s252
        %p254 = pneg %p89
        %p255 = pneg %p86
        %p256 = pneg %p110
        %p257 = pneg %p107
        %p258 = pneg %p136
        %p259 = pneg %p133
        %s260 = sand.u32 %s123, 1
        %s261 = sand.u32 %s123, 1
        %s262 = smul.addr %s261, 32
        %s263 = scalar_lea.vmem [#allocation7], %s262
        %s264 = smul.u32 2, %s21
        %s265 = smul.u32 2, %s21
        %s266 = smul.u32 2, %s21
        %v267 = vld [vmem:[%s0] sm:$0xff]
        %v268 = vld [vmem:[%s0 + $0x8] sm:$0xff]
        %v269 = vld [vmem:[%s0 + $0x10] sm:$0xff]
        %v270 = vld [vmem:[%s0 + $0x18] sm:$0xff]
        %v271 = vld [vmem:[%s0 + $0x20] sm:$0xff]
        %v272 = vld [vmem:[%s0 + $0x28] sm:$0xff]
        %v273 = vld [vmem:[%s0 + $0x30] sm:$0xff]
        %v274 = vld [vmem:[%s0 + $0x38] sm:$0xff]
        %v275 = vld [vmem:[%s0 + $0x40] sm:$0xff]
        %v276 = vld [vmem:[%s0 + $0x48] sm:$0xff]
        %v277 = vld [vmem:[%s0 + $0x50] sm:$0xff]
        %v278 = vld [vmem:[%s0 + $0x58] sm:$0xff]
        %v279 = vld [vmem:[%s0 + $0x60] sm:$0xff]
        %v280 = vld [vmem:[%s0 + $0x68] sm:$0xff]
        %v281 = vld [vmem:[%s0 + $0x70] sm:$0xff]
        %v282 = vld [vmem:[%s0 + $0x78] sm:$0xff]
        %v283 = vld [vmem:[%s222] sm:$0xff]
        %v284 = vld [vmem:[%s222 + $0x8] sm:$0xff]
        %v285 = vld [vmem:[%s222 + $0x10] sm:$0xff]
        %v286 = vld [vmem:[%s222 + $0x18] sm:$0xff]
        %v287 = vld [vmem:[%s222 + $0x20] sm:$0xff]
        %v288 = vld [vmem:[%s222 + $0x28] sm:$0xff]
        %v289 = vld [vmem:[%s222 + $0x30] sm:$0xff]
        %v290 = vld [vmem:[%s222 + $0x38] sm:$0xff]
        %v291 = vld [vmem:[%s222 + $0x40] sm:$0xff]
        %v292 = vld [vmem:[%s222 + $0x48] sm:$0xff]
        %v293 = vld [vmem:[%s222 + $0x50] sm:$0xff]
        %v294 = vld [vmem:[%s222 + $0x58] sm:$0xff]
        %v295 = vld [vmem:[%s222 + $0x60] sm:$0xff]
        %v296 = vld [vmem:[%s222 + $0x68] sm:$0xff]
        %v297 = vld [vmem:[%s222 + $0x70] sm:$0xff]
        %v298 = vld [vmem:[%s222 + $0x78] sm:$0xff]
        %v299 = vld [vmem:[%s222 + $0x80] sm:$0xff]
        %v300 = vld [vmem:[%s222 + $0x88] sm:$0xff]
        %v301 = vld [vmem:[%s222 + $0x90] sm:$0xff]
        %v302 = vld [vmem:[%s222 + $0x98] sm:$0xff]
        %v303 = vld [vmem:[%s222 + $0xa0] sm:$0xff]
        %v304 = vld [vmem:[%s222 + $0xa8] sm:$0xff]
        %v305 = vld [vmem:[%s222 + $0xb0] sm:$0xff]
        %v306 = vld [vmem:[%s222 + $0xb8] sm:$0xff]
        %v307 = vld [vmem:[%s222 + $0xc0] sm:$0xff]
        %v308 = vld [vmem:[%s222 + $0xc8] sm:$0xff]
        %v309 = vld [vmem:[%s222 + $0xd0] sm:$0xff]
        %v310 = vld [vmem:[%s222 + $0xd8] sm:$0xff]
        %v311 = vld [vmem:[%s222 + $0xe0] sm:$0xff]
        %v312 = vld [vmem:[%s222 + $0xe8] sm:$0xff]
        %v313 = vld [vmem:[%s222 + $0xf0] sm:$0xff]
        %v314 = vld [vmem:[%s222 + $0xf8] sm:$0xff]
        %v315 = vld [vmem:[%s222 + $0x100] sm:$0xff]
        %v316 = vld [vmem:[%s222 + $0x108] sm:$0xff]
        %v317 = vld [vmem:[%s222 + $0x110] sm:$0xff]
        %v318 = vld [vmem:[%s222 + $0x118] sm:$0xff]
        %v319 = vld [vmem:[%s222 + $0x120] sm:$0xff]
        %v320 = vld [vmem:[%s222 + $0x128] sm:$0xff]
        %v321 = vld [vmem:[%s222 + $0x130] sm:$0xff]
        %v322 = vld [vmem:[%s222 + $0x138] sm:$0xff]
        %v323 = vld [vmem:[%s222 + $0x140] sm:$0xff]
        %v324 = vld [vmem:[%s222 + $0x148] sm:$0xff]
        %v325 = vld [vmem:[%s222 + $0x150] sm:$0xff]
        %v326 = vld [vmem:[%s222 + $0x158] sm:$0xff]
        %v327 = vld [vmem:[%s222 + $0x160] sm:$0xff]
        %v328 = vld [vmem:[%s222 + $0x168] sm:$0xff]
        %v329 = vld [vmem:[%s222 + $0x170] sm:$0xff]
        %v330 = vld [vmem:[%s222 + $0x178] sm:$0xff]
        %v331 = vld [vmem:[%s222 + $0x180] sm:$0xff]
        %v332 = vld [vmem:[%s222 + $0x188] sm:$0xff]
        %v333 = vld [vmem:[%s222 + $0x190] sm:$0xff]
        %v334 = vld [vmem:[%s222 + $0x198] sm:$0xff]
        %v335 = vld [vmem:[%s222 + $0x1a0] sm:$0xff]
        %v336 = vld [vmem:[%s222 + $0x1a8] sm:$0xff]
        %v337 = vld [vmem:[%s222 + $0x1b0] sm:$0xff]
        %v338 = vld [vmem:[%s222 + $0x1b8] sm:$0xff]
        %v339 = vld [vmem:[%s222 + $0x1c0] sm:$0xff]
        %v340 = vld [vmem:[%s222 + $0x1c8] sm:$0xff]
        %v341 = vld [vmem:[%s222 + $0x1d0] sm:$0xff]
        %v342 = vld [vmem:[%s222 + $0x1d8] sm:$0xff]
        %v343 = vld [vmem:[%s222 + $0x1e0] sm:$0xff]
        %v344 = vld [vmem:[%s222 + $0x1e8] sm:$0xff]
        %v345 = vld [vmem:[%s222 + $0x1f0] sm:$0xff]
        %v346 = vld [vmem:[%s222 + $0x1f8] sm:$0xff]
        %v347 = vld [vmem:[%s222 + $0x200] sm:$0xff]
        %v348 = vld [vmem:[%s222 + $0x208] sm:$0xff]
        %v349 = vld [vmem:[%s222 + $0x210] sm:$0xff]
        %v350 = vld [vmem:[%s222 + $0x218] sm:$0xff]
        %v351 = vld [vmem:[%s222 + $0x220] sm:$0xff]
        %v352 = vld [vmem:[%s222 + $0x228] sm:$0xff]
        %v353 = vld [vmem:[%s222 + $0x230] sm:$0xff]
        %v354 = vld [vmem:[%s222 + $0x238] sm:$0xff]
        %v355 = vld [vmem:[%s222 + $0x240] sm:$0xff]
        %v356 = vld [vmem:[%s222 + $0x248] sm:$0xff]
        %v357 = vld [vmem:[%s222 + $0x250] sm:$0xff]
        %v358 = vld [vmem:[%s222 + $0x258] sm:$0xff]
        %v359 = vld [vmem:[%s222 + $0x260] sm:$0xff]
        %v360 = vld [vmem:[%s222 + $0x268] sm:$0xff]
        %v361 = vld [vmem:[%s222 + $0x270] sm:$0xff]
        %v362 = vld [vmem:[%s222 + $0x278] sm:$0xff]
        %v363 = vld [vmem:[%s222 + $0x280] sm:$0xff]
        %v364 = vld [vmem:[%s222 + $0x288] sm:$0xff]
        %v365 = vld [vmem:[%s222 + $0x290] sm:$0xff]
        %v366 = vld [vmem:[%s222 + $0x298] sm:$0xff]
        %v367 = vld [vmem:[%s222 + $0x2a0] sm:$0xff]
        %v368 = vld [vmem:[%s222 + $0x2a8] sm:$0xff]
        %v369 = vld [vmem:[%s222 + $0x2b0] sm:$0xff]
        %v370 = vld [vmem:[%s222 + $0x2b8] sm:$0xff]
        %v371 = vld [vmem:[%s222 + $0x2c0] sm:$0xff]
        %v372 = vld [vmem:[%s222 + $0x2c8] sm:$0xff]
        %v373 = vld [vmem:[%s222 + $0x2d0] sm:$0xff]
        %v374 = vld [vmem:[%s222 + $0x2d8] sm:$0xff]
        %v375 = vld [vmem:[%s222 + $0x2e0] sm:$0xff]
        %v376 = vld [vmem:[%s222 + $0x2e8] sm:$0xff]
        %v377 = vld [vmem:[%s222 + $0x2f0] sm:$0xff]
        %v378 = vld [vmem:[%s222 + $0x2f8] sm:$0xff]
        %v379 = vld [vmem:[%s222 + $0x300] sm:$0xff]
        %v380 = vld [vmem:[%s222 + $0x308] sm:$0xff]
        %v381 = vld [vmem:[%s222 + $0x310] sm:$0xff]
        %v382 = vld [vmem:[%s222 + $0x318] sm:$0xff]
        %v383 = vld [vmem:[%s222 + $0x320] sm:$0xff]
        %v384 = vld [vmem:[%s222 + $0x328] sm:$0xff]
        %v385 = vld [vmem:[%s222 + $0x330] sm:$0xff]
        %v386 = vld [vmem:[%s222 + $0x338] sm:$0xff]
        %v387 = vld [vmem:[%s222 + $0x340] sm:$0xff]
        %v388 = vld [vmem:[%s222 + $0x348] sm:$0xff]
        %v389 = vld [vmem:[%s222 + $0x350] sm:$0xff]
        %v390 = vld [vmem:[%s222 + $0x358] sm:$0xff]
        %v391 = vld [vmem:[%s222 + $0x360] sm:$0xff]
        %v392 = vld [vmem:[%s222 + $0x368] sm:$0xff]
        %v393 = vld [vmem:[%s222 + $0x370] sm:$0xff]
        %v394 = vld [vmem:[%s222 + $0x378] sm:$0xff]
        %v395 = vld [vmem:[%s222 + $0x380] sm:$0xff]
        %v396 = vld [vmem:[%s222 + $0x388] sm:$0xff]
        %v397 = vld [vmem:[%s222 + $0x390] sm:$0xff]
        %v398 = vld [vmem:[%s222 + $0x398] sm:$0xff]
        %v399 = vld [vmem:[%s222 + $0x3a0] sm:$0xff]
        %v400 = vld [vmem:[%s222 + $0x3a8] sm:$0xff]
        %v401 = vld [vmem:[%s222 + $0x3b0] sm:$0xff]
        %v402 = vld [vmem:[%s222 + $0x3b8] sm:$0xff]
        %v403 = vld [vmem:[%s222 + $0x3c0] sm:$0xff]
        %v404 = vld [vmem:[%s222 + $0x3c8] sm:$0xff]
        %v405 = vld [vmem:[%s222 + $0x3d0] sm:$0xff]
        %v406 = vld [vmem:[%s222 + $0x3d8] sm:$0xff]
        %v407 = vld [vmem:[%s222 + $0x3e0] sm:$0xff]
        %v408 = vld [vmem:[%s222 + $0x3e8] sm:$0xff]
        %v409 = vld [vmem:[%s222 + $0x3f0] sm:$0xff]
        %v410 = vld [vmem:[%s222 + $0x3f8] sm:$0xff]
        %v411 = vld [vmem:[%s231] sm:$0xff]
        %v412 = vld [vmem:[%s231 + $0x8] sm:$0xff]
        %v413 = vlaneseq
        %v414 = vshrl.u32 %v413, 7
        %v415 = vsub.s32 0, %v414
        %v416 = vrot.slane %v411, %v415
        %v417 = vlaneseq
        %v418 = vshrl.u32 %v417, 7
        %v419 = vsub.s32 0, %v418
        %v420 = vrot.slane %v412, %v419
        %v437 = vunpack.c.l.b16 %v267
        %v438 = vunpack.c.h.b16 %v267
        %v439 = vunpack.c.l.b16 %v268
        %v440 = vunpack.c.h.b16 %v268
        %v441 = vunpack.c.l.b16 %v269
        %v442 = vunpack.c.h.b16 %v269
        %v443 = vunpack.c.l.b16 %v270
        %v444 = vunpack.c.h.b16 %v270
        %v445 = vunpack.c.l.b16 %v271
        %v446 = vunpack.c.h.b16 %v271
        %v447 = vunpack.c.l.b16 %v272
        %v448 = vunpack.c.h.b16 %v272
        %v449 = vunpack.c.l.b16 %v273
        %v450 = vunpack.c.h.b16 %v273
        %v451 = vunpack.c.l.b16 %v274
        %v452 = vunpack.c.h.b16 %v274
        %v453 = vunpack.c.l.b16 %v275
        %v454 = vunpack.c.h.b16 %v275
        %v455 = vunpack.c.l.b16 %v276
        %v456 = vunpack.c.h.b16 %v276
        %v457 = vunpack.c.l.b16 %v277
        %v458 = vunpack.c.h.b16 %v277
        %v459 = vunpack.c.l.b16 %v278
        %v460 = vunpack.c.h.b16 %v278
        %v461 = vunpack.c.l.b16 %v279
        %v462 = vunpack.c.h.b16 %v279
        %v463 = vunpack.c.l.b16 %v280
        %v464 = vunpack.c.h.b16 %v280
        %v465 = vunpack.c.l.b16 %v281
        %v466 = vunpack.c.h.b16 %v281
        %v467 = vunpack.c.l.b16 %v282
        %v468 = vunpack.c.h.b16 %v282
        %v469 = vpack.c.b16 %v445, %v437
        %v470 = vpack.c.b16 %v446, %v438
        %v471 = vpack.c.b16 %v447, %v439
        %v472 = vpack.c.b16 %v448, %v440
        %v473 = vpack.c.b16 %v449, %v441
        %v474 = vpack.c.b16 %v450, %v442
        %v475 = vpack.c.b16 %v451, %v443
        %v476 = vpack.c.b16 %v452, %v444
        %v477 = vpack.c.b16 %v461, %v453
        %v478 = vpack.c.b16 %v462, %v454
        %v479 = vpack.c.b16 %v463, %v455
        %v480 = vpack.c.b16 %v464, %v456
        %v481 = vpack.c.b16 %v465, %v457
        %v482 = vpack.c.b16 %v466, %v458
        %v483 = vpack.c.b16 %v467, %v459
        %v484 = vpack.c.b16 %v468, %v460
        %v629 = vunpack.c.l.b16 %v283
        %v630 = vunpack.c.h.b16 %v283
        %v631 = vunpack.c.l.b16 %v284
        %v632 = vunpack.c.h.b16 %v284
        %v633 = vunpack.c.l.b16 %v285
        %v634 = vunpack.c.h.b16 %v285
        %v635 = vunpack.c.l.b16 %v286
        %v636 = vunpack.c.h.b16 %v286
        %v637 = vunpack.c.l.b16 %v287
        %v638 = vunpack.c.h.b16 %v287
        %v639 = vunpack.c.l.b16 %v288
        %v640 = vunpack.c.h.b16 %v288
        %v641 = vunpack.c.l.b16 %v289
        %v642 = vunpack.c.h.b16 %v289
        %v643 = vunpack.c.l.b16 %v290
        %v644 = vunpack.c.h.b16 %v290
        %v645 = vunpack.c.l.b16 %v291
        %v646 = vunpack.c.h.b16 %v291
        %v647 = vunpack.c.l.b16 %v292
        %v648 = vunpack.c.h.b16 %v292
        %v649 = vunpack.c.l.b16 %v293
        %v650 = vunpack.c.h.b16 %v293
        %v651 = vunpack.c.l.b16 %v294
        %v652 = vunpack.c.h.b16 %v294
        %v653 = vunpack.c.l.b16 %v295
        %v654 = vunpack.c.h.b16 %v295
        %v655 = vunpack.c.l.b16 %v296
        %v656 = vunpack.c.h.b16 %v296
        %v657 = vunpack.c.l.b16 %v297
        %v658 = vunpack.c.h.b16 %v297
        %v659 = vunpack.c.l.b16 %v298
        %v660 = vunpack.c.h.b16 %v298
        %v661 = vunpack.c.l.b16 %v299
        %v662 = vunpack.c.h.b16 %v299
        %v663 = vunpack.c.l.b16 %v300
        %v664 = vunpack.c.h.b16 %v300
        %v665 = vunpack.c.l.b16 %v301
        %v666 = vunpack.c.h.b16 %v301
        %v667 = vunpack.c.l.b16 %v302
        %v668 = vunpack.c.h.b16 %v302
        %v669 = vunpack.c.l.b16 %v303
        %v670 = vunpack.c.h.b16 %v303
        %v671 = vunpack.c.l.b16 %v304
        %v672 = vunpack.c.h.b16 %v304
        %v673 = vunpack.c.l.b16 %v305
        %v674 = vunpack.c.h.b16 %v305
        %v675 = vunpack.c.l.b16 %v306
        %v676 = vunpack.c.h.b16 %v306
        %v677 = vunpack.c.l.b16 %v307
        %v678 = vunpack.c.h.b16 %v307
        %v679 = vunpack.c.l.b16 %v308
        %v680 = vunpack.c.h.b16 %v308
        %v681 = vunpack.c.l.b16 %v309
        %v682 = vunpack.c.h.b16 %v309
        %v683 = vunpack.c.l.b16 %v310
        %v684 = vunpack.c.h.b16 %v310
        %v685 = vunpack.c.l.b16 %v311
        %v686 = vunpack.c.h.b16 %v311
        %v687 = vunpack.c.l.b16 %v312
        %v688 = vunpack.c.h.b16 %v312
        %v689 = vunpack.c.l.b16 %v313
        %v690 = vunpack.c.h.b16 %v313
        %v691 = vunpack.c.l.b16 %v314
        %v692 = vunpack.c.h.b16 %v314
        %v693 = vunpack.c.l.b16 %v315
        %v694 = vunpack.c.h.b16 %v315
        %v695 = vunpack.c.l.b16 %v316
        %v696 = vunpack.c.h.b16 %v316
        %v697 = vunpack.c.l.b16 %v317
        %v698 = vunpack.c.h.b16 %v317
        %v699 = vunpack.c.l.b16 %v318
        %v700 = vunpack.c.h.b16 %v318
        %v701 = vunpack.c.l.b16 %v319
        %v702 = vunpack.c.h.b16 %v319
        %v703 = vunpack.c.l.b16 %v320
        %v704 = vunpack.c.h.b16 %v320
        %v705 = vunpack.c.l.b16 %v321
        %v706 = vunpack.c.h.b16 %v321
        %v707 = vunpack.c.l.b16 %v322
        %v708 = vunpack.c.h.b16 %v322
        %v709 = vunpack.c.l.b16 %v323
        %v710 = vunpack.c.h.b16 %v323
        %v711 = vunpack.c.l.b16 %v324
        %v712 = vunpack.c.h.b16 %v324
        %v713 = vunpack.c.l.b16 %v325
        %v714 = vunpack.c.h.b16 %v325
        %v715 = vunpack.c.l.b16 %v326
        %v716 = vunpack.c.h.b16 %v326
        %v717 = vunpack.c.l.b16 %v327
        %v718 = vunpack.c.h.b16 %v327
        %v719 = vunpack.c.l.b16 %v328
        %v720 = vunpack.c.h.b16 %v328
        %v721 = vunpack.c.l.b16 %v329
        %v722 = vunpack.c.h.b16 %v329
        %v723 = vunpack.c.l.b16 %v330
        %v724 = vunpack.c.h.b16 %v330
        %v725 = vunpack.c.l.b16 %v331
        %v726 = vunpack.c.h.b16 %v331
        %v727 = vunpack.c.l.b16 %v332
        %v728 = vunpack.c.h.b16 %v332
        %v729 = vunpack.c.l.b16 %v333
        %v730 = vunpack.c.h.b16 %v333
        %v731 = vunpack.c.l.b16 %v334
        %v732 = vunpack.c.h.b16 %v334
        %v733 = vunpack.c.l.b16 %v335
        %v734 = vunpack.c.h.b16 %v335
        %v735 = vunpack.c.l.b16 %v336
        %v736 = vunpack.c.h.b16 %v336
        %v737 = vunpack.c.l.b16 %v337
        %v738 = vunpack.c.h.b16 %v337
        %v739 = vunpack.c.l.b16 %v338
        %v740 = vunpack.c.h.b16 %v338
        %v741 = vunpack.c.l.b16 %v339
        %v742 = vunpack.c.h.b16 %v339
        %v743 = vunpack.c.l.b16 %v340
        %v744 = vunpack.c.h.b16 %v340
        %v745 = vunpack.c.l.b16 %v341
        %v746 = vunpack.c.h.b16 %v341
        %v747 = vunpack.c.l.b16 %v342
        %v748 = vunpack.c.h.b16 %v342
        %v749 = vunpack.c.l.b16 %v343
        %v750 = vunpack.c.h.b16 %v343
        %v751 = vunpack.c.l.b16 %v344
        %v752 = vunpack.c.h.b16 %v344
        %v753 = vunpack.c.l.b16 %v345
        %v754 = vunpack.c.h.b16 %v345
        %v755 = vunpack.c.l.b16 %v346
        %v756 = vunpack.c.h.b16 %v346
        %v757 = vunpack.c.l.b16 %v347
        %v758 = vunpack.c.h.b16 %v347
        %v759 = vunpack.c.l.b16 %v348
        %v760 = vunpack.c.h.b16 %v348
        %v761 = vunpack.c.l.b16 %v349
        %v762 = vunpack.c.h.b16 %v349
        %v763 = vunpack.c.l.b16 %v350
        %v764 = vunpack.c.h.b16 %v350
        %v765 = vunpack.c.l.b16 %v351
        %v766 = vunpack.c.h.b16 %v351
        %v767 = vunpack.c.l.b16 %v352
        %v768 = vunpack.c.h.b16 %v352
        %v769 = vunpack.c.l.b16 %v353
        %v770 = vunpack.c.h.b16 %v353
        %v771 = vunpack.c.l.b16 %v354
        %v772 = vunpack.c.h.b16 %v354
        %v773 = vunpack.c.l.b16 %v355
        %v774 = vunpack.c.h.b16 %v355
        %v775 = vunpack.c.l.b16 %v356
        %v776 = vunpack.c.h.b16 %v356
        %v777 = vunpack.c.l.b16 %v357
        %v778 = vunpack.c.h.b16 %v357
        %v779 = vunpack.c.l.b16 %v358
        %v780 = vunpack.c.h.b16 %v358
        %v781 = vunpack.c.l.b16 %v359
        %v782 = vunpack.c.h.b16 %v359
        %v783 = vunpack.c.l.b16 %v360
        %v784 = vunpack.c.h.b16 %v360
        %v785 = vunpack.c.l.b16 %v361
        %v786 = vunpack.c.h.b16 %v361
        %v787 = vunpack.c.l.b16 %v362
        %v788 = vunpack.c.h.b16 %v362
        %v789 = vunpack.c.l.b16 %v363
        %v790 = vunpack.c.h.b16 %v363
        %v791 = vunpack.c.l.b16 %v364
        %v792 = vunpack.c.h.b16 %v364
        %v793 = vunpack.c.l.b16 %v365
        %v794 = vunpack.c.h.b16 %v365
        %v795 = vunpack.c.l.b16 %v366
        %v796 = vunpack.c.h.b16 %v366
        %v797 = vunpack.c.l.b16 %v367
        %v798 = vunpack.c.h.b16 %v367
        %v799 = vunpack.c.l.b16 %v368
        %v800 = vunpack.c.h.b16 %v368
        %v801 = vunpack.c.l.b16 %v369
        %v802 = vunpack.c.h.b16 %v369
        %v803 = vunpack.c.l.b16 %v370
        %v804 = vunpack.c.h.b16 %v370
        %v805 = vunpack.c.l.b16 %v371
        %v806 = vunpack.c.h.b16 %v371
        %v807 = vunpack.c.l.b16 %v372
        %v808 = vunpack.c.h.b16 %v372
        %v809 = vunpack.c.l.b16 %v373
        %v810 = vunpack.c.h.b16 %v373
        %v811 = vunpack.c.l.b16 %v374
        %v812 = vunpack.c.h.b16 %v374
        %v813 = vunpack.c.l.b16 %v375
        %v814 = vunpack.c.h.b16 %v375
        %v815 = vunpack.c.l.b16 %v376
        %v816 = vunpack.c.h.b16 %v376
        %v817 = vunpack.c.l.b16 %v377
        %v818 = vunpack.c.h.b16 %v377
        %v819 = vunpack.c.l.b16 %v378
        %v820 = vunpack.c.h.b16 %v378
        %v821 = vunpack.c.l.b16 %v379
        %v822 = vunpack.c.h.b16 %v379
        %v823 = vunpack.c.l.b16 %v380
        %v824 = vunpack.c.h.b16 %v380
        %v825 = vunpack.c.l.b16 %v381
        %v826 = vunpack.c.h.b16 %v381
        %v827 = vunpack.c.l.b16 %v382
        %v828 = vunpack.c.h.b16 %v382
        %v829 = vunpack.c.l.b16 %v383
        %v830 = vunpack.c.h.b16 %v383
        %v831 = vunpack.c.l.b16 %v384
        %v832 = vunpack.c.h.b16 %v384
        %v833 = vunpack.c.l.b16 %v385
        %v834 = vunpack.c.h.b16 %v385
        %v835 = vunpack.c.l.b16 %v386
        %v836 = vunpack.c.h.b16 %v386
        %v837 = vunpack.c.l.b16 %v387
        %v838 = vunpack.c.h.b16 %v387
        %v839 = vunpack.c.l.b16 %v388
        %v840 = vunpack.c.h.b16 %v388
        %v841 = vunpack.c.l.b16 %v389
        %v842 = vunpack.c.h.b16 %v389
        %v843 = vunpack.c.l.b16 %v390
        %v844 = vunpack.c.h.b16 %v390
        %v845 = vunpack.c.l.b16 %v391
        %v846 = vunpack.c.h.b16 %v391
        %v847 = vunpack.c.l.b16 %v392
        %v848 = vunpack.c.h.b16 %v392
        %v849 = vunpack.c.l.b16 %v393
        %v850 = vunpack.c.h.b16 %v393
        %v851 = vunpack.c.l.b16 %v394
        %v852 = vunpack.c.h.b16 %v394
        %v853 = vunpack.c.l.b16 %v395
        %v854 = vunpack.c.h.b16 %v395
        %v855 = vunpack.c.l.b16 %v396
        %v856 = vunpack.c.h.b16 %v396
        %v857 = vunpack.c.l.b16 %v397
        %v858 = vunpack.c.h.b16 %v397
        %v859 = vunpack.c.l.b16 %v398
        %v860 = vunpack.c.h.b16 %v398
        %v861 = vunpack.c.l.b16 %v399
        %v862 = vunpack.c.h.b16 %v399
        %v863 = vunpack.c.l.b16 %v400
        %v864 = vunpack.c.h.b16 %v400
        %v865 = vunpack.c.l.b16 %v401
        %v866 = vunpack.c.h.b16 %v401
        %v867 = vunpack.c.l.b16 %v402
        %v868 = vunpack.c.h.b16 %v402
        %v869 = vunpack.c.l.b16 %v403
        %v870 = vunpack.c.h.b16 %v403
        %v871 = vunpack.c.l.b16 %v404
        %v872 = vunpack.c.h.b16 %v404
        %v873 = vunpack.c.l.b16 %v405
        %v874 = vunpack.c.h.b16 %v405
        %v875 = vunpack.c.l.b16 %v406
        %v876 = vunpack.c.h.b16 %v406
        %v877 = vunpack.c.l.b16 %v407
        %v878 = vunpack.c.h.b16 %v407
        %v879 = vunpack.c.l.b16 %v408
        %v880 = vunpack.c.h.b16 %v408
        %v881 = vunpack.c.l.b16 %v409
        %v882 = vunpack.c.h.b16 %v409
        %v883 = vunpack.c.l.b16 %v410
        %v884 = vunpack.c.h.b16 %v410
        %v885 = vpack.c.b16 %v631, %v629
        %v886 = vpack.c.b16 %v632, %v630
        %v887 = vpack.c.b16 %v635, %v633
        %v888 = vpack.c.b16 %v636, %v634
        %v889 = vpack.c.b16 %v639, %v637
        %v890 = vpack.c.b16 %v640, %v638
        %v891 = vpack.c.b16 %v643, %v641
        %v892 = vpack.c.b16 %v644, %v642
        %v893 = vpack.c.b16 %v647, %v645
        %v894 = vpack.c.b16 %v648, %v646
        %v895 = vpack.c.b16 %v651, %v649
        %v896 = vpack.c.b16 %v652, %v650
        %v897 = vpack.c.b16 %v655, %v653
        %v898 = vpack.c.b16 %v656, %v654
        %v899 = vpack.c.b16 %v659, %v657
        %v900 = vpack.c.b16 %v660, %v658
        %v901 = vpack.c.b16 %v663, %v661
        %v902 = vpack.c.b16 %v664, %v662
        %v903 = vpack.c.b16 %v667, %v665
        %v904 = vpack.c.b16 %v668, %v666
        %v905 = vpack.c.b16 %v671, %v669
        %v906 = vpack.c.b16 %v672, %v670
        %v907 = vpack.c.b16 %v675, %v673
        %v908 = vpack.c.b16 %v676, %v674
        %v909 = vpack.c.b16 %v679, %v677
        %v910 = vpack.c.b16 %v680, %v678
        %v911 = vpack.c.b16 %v683, %v681
        %v912 = vpack.c.b16 %v684, %v682
        %v913 = vpack.c.b16 %v687, %v685
        %v914 = vpack.c.b16 %v688, %v686
        %v915 = vpack.c.b16 %v691, %v689
        %v916 = vpack.c.b16 %v692, %v690
        %v917 = vpack.c.b16 %v695, %v693
        %v918 = vpack.c.b16 %v696, %v694
        %v919 = vpack.c.b16 %v699, %v697
        %v920 = vpack.c.b16 %v700, %v698
        %v921 = vpack.c.b16 %v703, %v701
        %v922 = vpack.c.b16 %v704, %v702
        %v923 = vpack.c.b16 %v707, %v705
        %v924 = vpack.c.b16 %v708, %v706
        %v925 = vpack.c.b16 %v711, %v709
        %v926 = vpack.c.b16 %v712, %v710
        %v927 = vpack.c.b16 %v715, %v713
        %v928 = vpack.c.b16 %v716, %v714
        %v929 = vpack.c.b16 %v719, %v717
        %v930 = vpack.c.b16 %v720, %v718
        %v931 = vpack.c.b16 %v723, %v721
        %v932 = vpack.c.b16 %v724, %v722
        %v933 = vpack.c.b16 %v727, %v725
        %v934 = vpack.c.b16 %v728, %v726
        %v935 = vpack.c.b16 %v731, %v729
        %v936 = vpack.c.b16 %v732, %v730
        %v937 = vpack.c.b16 %v735, %v733
        %v938 = vpack.c.b16 %v736, %v734
        %v939 = vpack.c.b16 %v739, %v737
        %v940 = vpack.c.b16 %v740, %v738
        %v941 = vpack.c.b16 %v743, %v741
        %v942 = vpack.c.b16 %v744, %v742
        %v943 = vpack.c.b16 %v747, %v745
        %v944 = vpack.c.b16 %v748, %v746
        %v945 = vpack.c.b16 %v751, %v749
        %v946 = vpack.c.b16 %v752, %v750
        %v947 = vpack.c.b16 %v755, %v753
        %v948 = vpack.c.b16 %v756, %v754
        %v949 = vpack.c.b16 %v759, %v757
        %v950 = vpack.c.b16 %v760, %v758
        %v951 = vpack.c.b16 %v763, %v761
        %v952 = vpack.c.b16 %v764, %v762
        %v953 = vpack.c.b16 %v767, %v765
        %v954 = vpack.c.b16 %v768, %v766
        %v955 = vpack.c.b16 %v771, %v769
        %v956 = vpack.c.b16 %v772, %v770
        %v957 = vpack.c.b16 %v775, %v773
        %v958 = vpack.c.b16 %v776, %v774
        %v959 = vpack.c.b16 %v779, %v777
        %v960 = vpack.c.b16 %v780, %v778
        %v961 = vpack.c.b16 %v783, %v781
        %v962 = vpack.c.b16 %v784, %v782
        %v963 = vpack.c.b16 %v787, %v785
        %v964 = vpack.c.b16 %v788, %v786
        %v965 = vpack.c.b16 %v791, %v789
        %v966 = vpack.c.b16 %v792, %v790
        %v967 = vpack.c.b16 %v795, %v793
        %v968 = vpack.c.b16 %v796, %v794
        %v969 = vpack.c.b16 %v799, %v797
        %v970 = vpack.c.b16 %v800, %v798
        %v971 = vpack.c.b16 %v803, %v801
        %v972 = vpack.c.b16 %v804, %v802
        %v973 = vpack.c.b16 %v807, %v805
        %v974 = vpack.c.b16 %v808, %v806
        %v975 = vpack.c.b16 %v811, %v809
        %v976 = vpack.c.b16 %v812, %v810
        %v977 = vpack.c.b16 %v815, %v813
        %v978 = vpack.c.b16 %v816, %v814
        %v979 = vpack.c.b16 %v819, %v817
        %v980 = vpack.c.b16 %v820, %v818
        %v981 = vpack.c.b16 %v823, %v821
        %v982 = vpack.c.b16 %v824, %v822
        %v983 = vpack.c.b16 %v827, %v825
        %v984 = vpack.c.b16 %v828, %v826
        %v985 = vpack.c.b16 %v831, %v829
        %v986 = vpack.c.b16 %v832, %v830
        %v987 = vpack.c.b16 %v835, %v833
        %v988 = vpack.c.b16 %v836, %v834
        %v989 = vpack.c.b16 %v839, %v837
        %v990 = vpack.c.b16 %v840, %v838
        %v991 = vpack.c.b16 %v843, %v841
        %v992 = vpack.c.b16 %v844, %v842
        %v993 = vpack.c.b16 %v847, %v845
        %v994 = vpack.c.b16 %v848, %v846
        %v995 = vpack.c.b16 %v851, %v849
        %v996 = vpack.c.b16 %v852, %v850
        %v997 = vpack.c.b16 %v855, %v853
        %v998 = vpack.c.b16 %v856, %v854
        %v999 = vpack.c.b16 %v859, %v857
        %v1000 = vpack.c.b16 %v860, %v858
        %v1001 = vpack.c.b16 %v863, %v861
        %v1002 = vpack.c.b16 %v864, %v862
        %v1003 = vpack.c.b16 %v867, %v865
        %v1004 = vpack.c.b16 %v868, %v866
        %v1005 = vpack.c.b16 %v871, %v869
        %v1006 = vpack.c.b16 %v872, %v870
        %v1007 = vpack.c.b16 %v875, %v873
        %v1008 = vpack.c.b16 %v876, %v874
        %v1009 = vpack.c.b16 %v879, %v877
        %v1010 = vpack.c.b16 %v880, %v878
        %v1011 = vpack.c.b16 %v883, %v881
        %v1012 = vpack.c.b16 %v884, %v882
        %1141 = vmatprep.subr.bf16.mxu0 %v900
        %1142 = vmatpush1.bf16.msra.mxu0 %v899
        %1143 = vmatprep.subr.bf16.mxu0 %v898
        %1144 = vmatpush1.bf16.msra.mxu0 %v897
        %1145 = vmatprep.subr.bf16.mxu0 %v896
        %1146 = vmatpush1.bf16.msra.mxu0 %v895
        %1147 = vmatprep.subr.bf16.mxu0 %v894
        %1148 = vmatpush1.bf16.msra.mxu0 %v893
        %1149 = vmatprep.subr.bf16.mxu0 %v892
        %1150 = vmatpush1.bf16.msra.mxu0 %v891
        %1151 = vmatprep.subr.bf16.mxu0 %v890
        %1152 = vmatpush1.bf16.msra.mxu0 %v889
        %1153 = vmatprep.subr.bf16.mxu0 %v888
        %1154 = vmatpush1.bf16.msra.mxu0 %v887
        %1155 = vmatprep.subr.bf16.mxu0 %v886
        %1156 = vmatpush1.bf16.msra.mxu0 %v885
        %1157 = vmatprep.subr.bf16.mxu0 %v916
        %1158 = vmatpush2.bf16.msra.mxu0 %v915
        %1159 = vmatprep.subr.bf16.mxu0 %v914
        %1160 = vmatpush2.bf16.msra.mxu0 %v913
        %1161 = vmatprep.subr.bf16.mxu0 %v912
        %1162 = vmatpush2.bf16.msra.mxu0 %v911
        %1163 = vmatprep.subr.bf16.mxu0 %v910
        %1164 = vmatpush2.bf16.msra.mxu0 %v909
        %1165 = vmatprep.subr.bf16.mxu0 %v908
        %1166 = vmatpush2.bf16.msra.mxu0 %v907
        %1167 = vmatprep.subr.bf16.mxu0 %v906
        %1168 = vmatpush2.bf16.msra.mxu0 %v905
        %1169 = vmatprep.subr.bf16.mxu0 %v904
        %1170 = vmatpush2.bf16.msra.mxu0 %v903
        %1171 = vmatprep.subr.bf16.mxu0 %v902
        %1172 = vmatpush2.bf16.msra.mxu0 %v901
        %1173 = vmatprep.mubr.bf16.mxu0 %v470
        %1174 = vmatmul.mubr.bf16.gmra.mxu0 %v469
        %v1175 = vpop.f32.mrf.mxu0
        %v1176 = vadd.f32 %v416, %v1175
        %v1177 = vpop.f32.mrf.mxu0
        %v1178 = vadd.f32 %v420, %v1177
        %v1179 = vpop.f32.mrf.mxu0
        %v1180 = vadd.f32 %v416, %v1179
        %v1181 = vpop.f32.mrf.mxu0
        %v1182 = vadd.f32 %v420, %v1181
        %1183 = vmatprep.mubr.bf16.mxu0 %v478
        %1184 = vmatmul.mubr.bf16.gmra.mxu0 %v477
        %v1185 = vpop.f32.mrf.mxu0
        %v1186 = vadd.f32 %v416, %v1185
        %v1187 = vpop.f32.mrf.mxu0
        %v1188 = vadd.f32 %v420, %v1187
        %v1189 = vpop.f32.mrf.mxu0
        %v1190 = vadd.f32 %v416, %v1189
        %v1191 = vpop.f32.mrf.mxu0
        %v1192 = vadd.f32 %v420, %v1191
        %1193 = vdwg.mxu0
        %1194 = vmatprep.subr.bf16.mxu0 %v932
        %1195 = vmatpush1.bf16.msra.mxu0 %v931
        %1196 = vmatprep.subr.bf16.mxu0 %v930
        %1197 = vmatpush1.bf16.msra.mxu0 %v929
        %1198 = vmatprep.subr.bf16.mxu0 %v928
        %1199 = vmatpush1.bf16.msra.mxu0 %v927
        %1200 = vmatprep.subr.bf16.mxu0 %v926
        %1201 = vmatpush1.bf16.msra.mxu0 %v925
        %1202 = vmatprep.subr.bf16.mxu0 %v924
        %1203 = vmatpush1.bf16.msra.mxu0 %v923
        %1204 = vmatprep.subr.bf16.mxu0 %v922
        %1205 = vmatpush1.bf16.msra.mxu0 %v921
        %1206 = vmatprep.subr.bf16.mxu0 %v920
        %1207 = vmatpush1.bf16.msra.mxu0 %v919
        %1208 = vmatprep.subr.bf16.mxu0 %v918
        %1209 = vmatpush1.bf16.msra.mxu0 %v917
        %1210 = vmatprep.subr.bf16.mxu0 %v948
        %1211 = vmatpush2.bf16.msra.mxu0 %v947
        %1212 = vmatprep.subr.bf16.mxu0 %v946
        %1213 = vmatpush2.bf16.msra.mxu0 %v945
        %1214 = vmatprep.subr.bf16.mxu0 %v944
        %1215 = vmatpush2.bf16.msra.mxu0 %v943
        %1216 = vmatprep.subr.bf16.mxu0 %v942
        %1217 = vmatpush2.bf16.msra.mxu0 %v941
        %1218 = vmatprep.subr.bf16.mxu0 %v940
        %1219 = vmatpush2.bf16.msra.mxu0 %v939
        %1220 = vmatprep.subr.bf16.mxu0 %v938
        %1221 = vmatpush2.bf16.msra.mxu0 %v937
        %1222 = vmatprep.subr.bf16.mxu0 %v936
        %1223 = vmatpush2.bf16.msra.mxu0 %v935
        %1224 = vmatprep.subr.bf16.mxu0 %v934
        %1225 = vmatpush2.bf16.msra.mxu0 %v933
        %1226 = vmatprep.mubr.bf16.mxu0 %v472
        %1227 = vmatmul.mubr.bf16.gmra.mxu0 %v471
        %v1228 = vpop.f32.mrf.mxu0
        %v1229 = vadd.f32 %v1176, %v1228
        %v1230 = vpop.f32.mrf.mxu0
        %v1231 = vadd.f32 %v1178, %v1230
        %v1232 = vpop.f32.mrf.mxu0
        %v1233 = vadd.f32 %v1180, %v1232
        %v1234 = vpop.f32.mrf.mxu0
        %v1235 = vadd.f32 %v1182, %v1234
        %1236 = vmatprep.mubr.bf16.mxu0 %v480
        %1237 = vmatmul.mubr.bf16.gmra.mxu0 %v479
        %v1238 = vpop.f32.mrf.mxu0
        %v1239 = vadd.f32 %v1186, %v1238
        %v1240 = vpop.f32.mrf.mxu0
        %v1241 = vadd.f32 %v1188, %v1240
        %v1242 = vpop.f32.mrf.mxu0
        %v1243 = vadd.f32 %v1190, %v1242
        %v1244 = vpop.f32.mrf.mxu0
        %v1245 = vadd.f32 %v1192, %v1244
        %1246 = vdwg.mxu0
        %1247 = vmatprep.subr.bf16.mxu0 %v964
        %1248 = vmatpush1.bf16.msra.mxu0 %v963
        %1249 = vmatprep.subr.bf16.mxu0 %v962
        %1250 = vmatpush1.bf16.msra.mxu0 %v961
        %1251 = vmatprep.subr.bf16.mxu0 %v960
        %1252 = vmatpush1.bf16.msra.mxu0 %v959
        %1253 = vmatprep.subr.bf16.mxu0 %v958
        %1254 = vmatpush1.bf16.msra.mxu0 %v957
        %1255 = vmatprep.subr.bf16.mxu0 %v956
        %1256 = vmatpush1.bf16.msra.mxu0 %v955
        %1257 = vmatprep.subr.bf16.mxu0 %v954
        %1258 = vmatpush1.bf16.msra.mxu0 %v953
        %1259 = vmatprep.subr.bf16.mxu0 %v952
        %1260 = vmatpush1.bf16.msra.mxu0 %v951
        %1261 = vmatprep.subr.bf16.mxu0 %v950
        %1262 = vmatpush1.bf16.msra.mxu0 %v949
        %1263 = vmatprep.subr.bf16.mxu0 %v980
        %1264 = vmatpush2.bf16.msra.mxu0 %v979
        %1265 = vmatprep.subr.bf16.mxu0 %v978
        %1266 = vmatpush2.bf16.msra.mxu0 %v977
        %1267 = vmatprep.subr.bf16.mxu0 %v976
        %1268 = vmatpush2.bf16.msra.mxu0 %v975
        %1269 = vmatprep.subr.bf16.mxu0 %v974
        %1270 = vmatpush2.bf16.msra.mxu0 %v973
        %1271 = vmatprep.subr.bf16.mxu0 %v972
        %1272 = vmatpush2.bf16.msra.mxu0 %v971
        %1273 = vmatprep.subr.bf16.mxu0 %v970
        %1274 = vmatpush2.bf16.msra.mxu0 %v969
        %1275 = vmatprep.subr.bf16.mxu0 %v968
        %1276 = vmatpush2.bf16.msra.mxu0 %v967
        %1277 = vmatprep.subr.bf16.mxu0 %v966
        %1278 = vmatpush2.bf16.msra.mxu0 %v965
        %1279 = vmatprep.mubr.bf16.mxu0 %v474
        %1280 = vmatmul.mubr.bf16.gmra.mxu0 %v473
        %v1281 = vpop.f32.mrf.mxu0
        %v1282 = vadd.f32 %v1229, %v1281
        %v1283 = vpop.f32.mrf.mxu0
        %v1284 = vadd.f32 %v1231, %v1283
        %v1285 = vpop.f32.mrf.mxu0
        %v1286 = vadd.f32 %v1233, %v1285
        %v1287 = vpop.f32.mrf.mxu0
        %v1288 = vadd.f32 %v1235, %v1287
        %1289 = vmatprep.mubr.bf16.mxu0 %v482
        %1290 = vmatmul.mubr.bf16.gmra.mxu0 %v481
        %v1291 = vpop.f32.mrf.mxu0
        %v1292 = vadd.f32 %v1239, %v1291
        %v1293 = vpop.f32.mrf.mxu0
        %v1294 = vadd.f32 %v1241, %v1293
        %v1295 = vpop.f32.mrf.mxu0
        %v1296 = vadd.f32 %v1243, %v1295
        %v1297 = vpop.f32.mrf.mxu0
        %v1298 = vadd.f32 %v1245, %v1297
        %1299 = vdwg.mxu0
        %1300 = vmatprep.subr.bf16.mxu0 %v996
        %1301 = vmatpush1.bf16.msra.mxu0 %v995
        %1302 = vmatprep.subr.bf16.mxu0 %v994
        %1303 = vmatpush1.bf16.msra.mxu0 %v993
        %1304 = vmatprep.subr.bf16.mxu0 %v992
        %1305 = vmatpush1.bf16.msra.mxu0 %v991
        %1306 = vmatprep.subr.bf16.mxu0 %v990
        %1307 = vmatpush1.bf16.msra.mxu0 %v989
        %1308 = vmatprep.subr.bf16.mxu0 %v988
        %1309 = vmatpush1.bf16.msra.mxu0 %v987
        %1310 = vmatprep.subr.bf16.mxu0 %v986
        %1311 = vmatpush1.bf16.msra.mxu0 %v985
        %1312 = vmatprep.subr.bf16.mxu0 %v984
        %1313 = vmatpush1.bf16.msra.mxu0 %v983
        %1314 = vmatprep.subr.bf16.mxu0 %v982
        %1315 = vmatpush1.bf16.msra.mxu0 %v981
        %1316 = vmatprep.subr.bf16.mxu0 %v1012
        %1317 = vmatpush2.bf16.msra.mxu0 %v1011
        %1318 = vmatprep.subr.bf16.mxu0 %v1010
        %1319 = vmatpush2.bf16.msra.mxu0 %v1009
        %1320 = vmatprep.subr.bf16.mxu0 %v1008
        %1321 = vmatpush2.bf16.msra.mxu0 %v1007
        %1322 = vmatprep.subr.bf16.mxu0 %v1006
        %1323 = vmatpush2.bf16.msra.mxu0 %v1005
        %1324 = vmatprep.subr.bf16.mxu0 %v1004
        %1325 = vmatpush2.bf16.msra.mxu0 %v1003
        %1326 = vmatprep.subr.bf16.mxu0 %v1002
        %1327 = vmatpush2.bf16.msra.mxu0 %v1001
        %1328 = vmatprep.subr.bf16.mxu0 %v1000
        %1329 = vmatpush2.bf16.msra.mxu0 %v999
        %1330 = vmatprep.subr.bf16.mxu0 %v998
        %1331 = vmatpush2.bf16.msra.mxu0 %v997
        %1332 = vmatprep.mubr.bf16.mxu0 %v476
        %1333 = vmatmul.mubr.bf16.gmra.mxu0 %v475
        %v1334 = vpop.f32.mrf.mxu0
        %v1335 = vadd.f32 %v1282, %v1334
        %v1336 = vpop.f32.mrf.mxu0
        %v1337 = vadd.f32 %v1284, %v1336
        %v1338 = vpop.f32.mrf.mxu0
        %v1339 = vadd.f32 %v1286, %v1338
        %v1340 = vpop.f32.mrf.mxu0
        %v1341 = vadd.f32 %v1288, %v1340
        %1342 = vmatprep.mubr.bf16.mxu0 %v484
        %1343 = vmatmul.mubr.bf16.gmra.mxu0 %v483
        %v1344 = vpop.f32.mrf.mxu0
        %v1345 = vadd.f32 %v1292, %v1344
        %v1346 = vpop.f32.mrf.mxu0
        %v1347 = vadd.f32 %v1294, %v1346
        %v1348 = vpop.f32.mrf.mxu0
        %v1349 = vadd.f32 %v1296, %v1348
        %v1350 = vpop.f32.mrf.mxu0
        %v1351 = vadd.f32 %v1298, %v1350
        %1352 = vdwg.mxu0
        %v1353 = vmax.f32 %v1335, 0.0
        %v1354 = vmax.f32 %v1337, 0.0
        %v1355 = vmax.f32 %v1339, 0.0
        %v1356 = vmax.f32 %v1341, 0.0
        %v1357 = vmax.f32 %v1345, 0.0
        %v1358 = vmax.f32 %v1347, 0.0
        %v1359 = vmax.f32 %v1349, 0.0
        %v1360 = vmax.f32 %v1351, 0.0
        %v1361 = vadd.f32 %v1353, %v1355
        %v1362 = vadd.f32 %v1361, %v1357
        %v1363 = vadd.f32 %v1362, %v1359
        %v1364 = vrot.slane %v1363, 4
        %v1365 = vadd.f32 %v1363, %v1364
        %v1366 = vrot.slane %v1365, 2
        %v1367 = vadd.f32 %v1365, %v1366
        %v1368 = vrot.slane %v1367, 1
        %v1369 = vadd.f32 %v1367, %v1368
        %v1370 = vadd.f32 %v1354, %v1356
        %v1371 = vadd.f32 %v1370, %v1358
        %v1372 = vadd.f32 %v1371, %v1360
        %v1373 = vrot.slane %v1372, 4
        %v1374 = vadd.f32 %v1372, %v1373
        %v1375 = vrot.slane %v1374, 2
        %v1376 = vadd.f32 %v1374, %v1375
        %v1377 = vrot.slane %v1376, 1
        %v1378 = vadd.f32 %v1376, %v1377
        %v1379 = vmul.f32 %v1353, %v1353
        %v1380 = vmul.f32 %v1354, %v1354
        %v1381 = vmul.f32 %v1355, %v1355
        %v1382 = vmul.f32 %v1356, %v1356
        %v1383 = vmul.f32 %v1357, %v1357
        %v1384 = vmul.f32 %v1358, %v1358
        %v1385 = vmul.f32 %v1359, %v1359
        %v1386 = vmul.f32 %v1360, %v1360
        %v1387 = vadd.f32 %v1379, %v1381
        %v1388 = vadd.f32 %v1387, %v1383
        %v1389 = vadd.f32 %v1388, %v1385
        %v1390 = vrot.slane %v1389, 4
        %v1391 = vadd.f32 %v1389, %v1390
        %v1392 = vrot.slane %v1391, 2
        %v1393 = vadd.f32 %v1391, %v1392
        %v1394 = vrot.slane %v1393, 1
        %v1395 = vadd.f32 %v1393, %v1394
        %v1396 = vadd.f32 %v1380, %v1382
        %v1397 = vadd.f32 %v1396, %v1384
        %v1398 = vadd.f32 %v1397, %v1386
        %v1399 = vrot.slane %v1398, 4
        %v1400 = vadd.f32 %v1398, %v1399
        %v1401 = vrot.slane %v1400, 2
        %v1402 = vadd.f32 %v1400, %v1401
        %v1403 = vrot.slane %v1402, 1
        %v1404 = vadd.f32 %v1402, %v1403
        %v1405 = vld [vmem:[#allocation6] sm:$0xff]
        %v1406 = vld [vmem:[#allocation6 + $0x8] sm:$0xff]
        %v1407 = vld [vmem:[#allocation6 + $0x10] sm:$0xff]
        %v1408 = vld [vmem:[#allocation6 + $0x18] sm:$0xff]
        %v1409 = vld [vmem:[#allocation6 + $0x20] sm:$0xff]
        %v1410 = vld [vmem:[#allocation6 + $0x28] sm:$0xff]
        %v1411 = vld [vmem:[#allocation6 + $0x30] sm:$0xff]
        %v1412 = vld [vmem:[#allocation6 + $0x38] sm:$0xff]
        %v1413 = vld [vmem:[#allocation6 + $0x40] sm:$0xff]
        %v1414 = vld [vmem:[#allocation6 + $0x48] sm:$0xff]
        %v1415 = vld [vmem:[#allocation6 + $0x50] sm:$0xff]
        %v1416 = vld [vmem:[#allocation6 + $0x58] sm:$0xff]
        %v1417 = vld [vmem:[#allocation6 + $0x60] sm:$0xff]
        %v1418 = vld [vmem:[#allocation6 + $0x68] sm:$0xff]
        %v1419 = vld [vmem:[#allocation6 + $0x70] sm:$0xff]
        %v1420 = vld [vmem:[#allocation6 + $0x78] sm:$0xff]
        %v1421 = vld [vmem:[#allocation6 + $0x80] sm:$0xff]
        %v1422 = vld [vmem:[#allocation6 + $0x88] sm:$0xff]
        %v1423 = vld [vmem:[#allocation6 + $0x90] sm:$0xff]
        %v1424 = vld [vmem:[#allocation6 + $0x98] sm:$0xff]
        %v1425 = vld [vmem:[#allocation6 + $0xa0] sm:$0xff]
        %v1426 = vld [vmem:[#allocation6 + $0xa8] sm:$0xff]
        %v1427 = vld [vmem:[#allocation6 + $0xb0] sm:$0xff]
        %v1428 = vld [vmem:[#allocation6 + $0xb8] sm:$0xff]
        %v1429 = vld [vmem:[#allocation6 + $0xc0] sm:$0xff]
        %v1430 = vld [vmem:[#allocation6 + $0xc8] sm:$0xff]
        %v1431 = vld [vmem:[#allocation6 + $0xd0] sm:$0xff]
        %v1432 = vld [vmem:[#allocation6 + $0xd8] sm:$0xff]
        %v1433 = vld [vmem:[#allocation6 + $0xe0] sm:$0xff]
        %v1434 = vld [vmem:[#allocation6 + $0xe8] sm:$0xff]
        %v1435 = vld [vmem:[#allocation6 + $0xf0] sm:$0xff]
        %v1436 = vld [vmem:[#allocation6 + $0xf8] sm:$0xff]
        %v1437 = vld [vmem:[#allocation6 + $0x100] sm:$0xff]
        %v1438 = vld [vmem:[#allocation6 + $0x108] sm:$0xff]
        %v1439 = vld [vmem:[#allocation6 + $0x110] sm:$0xff]
        %v1440 = vld [vmem:[#allocation6 + $0x118] sm:$0xff]
        %v1441 = vld [vmem:[#allocation6 + $0x120] sm:$0xff]
        %v1442 = vld [vmem:[#allocation6 + $0x128] sm:$0xff]
        %v1443 = vld [vmem:[#allocation6 + $0x130] sm:$0xff]
        %v1444 = vld [vmem:[#allocation6 + $0x138] sm:$0xff]
        %v1445 = vld [vmem:[#allocation6 + $0x140] sm:$0xff]
        %v1446 = vld [vmem:[#allocation6 + $0x148] sm:$0xff]
        %v1447 = vld [vmem:[#allocation6 + $0x150] sm:$0xff]
        %v1448 = vld [vmem:[#allocation6 + $0x158] sm:$0xff]
        %v1449 = vld [vmem:[#allocation6 + $0x160] sm:$0xff]
        %v1450 = vld [vmem:[#allocation6 + $0x168] sm:$0xff]
        %v1451 = vld [vmem:[#allocation6 + $0x170] sm:$0xff]
        %v1452 = vld [vmem:[#allocation6 + $0x178] sm:$0xff]
        %v1453 = vld [vmem:[#allocation6 + $0x180] sm:$0xff]
        %v1454 = vld [vmem:[#allocation6 + $0x188] sm:$0xff]
        %v1455 = vld [vmem:[#allocation6 + $0x190] sm:$0xff]
        %v1456 = vld [vmem:[#allocation6 + $0x198] sm:$0xff]
        %v1457 = vld [vmem:[#allocation6 + $0x1a0] sm:$0xff]
        %v1458 = vld [vmem:[#allocation6 + $0x1a8] sm:$0xff]
        %v1459 = vld [vmem:[#allocation6 + $0x1b0] sm:$0xff]
        %v1460 = vld [vmem:[#allocation6 + $0x1b8] sm:$0xff]
        %v1461 = vld [vmem:[#allocation6 + $0x1c0] sm:$0xff]
        %v1462 = vld [vmem:[#allocation6 + $0x1c8] sm:$0xff]
        %v1463 = vld [vmem:[#allocation6 + $0x1d0] sm:$0xff]
        %v1464 = vld [vmem:[#allocation6 + $0x1d8] sm:$0xff]
        %v1465 = vld [vmem:[#allocation6 + $0x1e0] sm:$0xff]
        %v1466 = vld [vmem:[#allocation6 + $0x1e8] sm:$0xff]
        %v1467 = vld [vmem:[#allocation6 + $0x1f0] sm:$0xff]
        %v1468 = vld [vmem:[#allocation6 + $0x1f8] sm:$0xff]
        %1469 = vmatprep.subr.mxu0 %v1436
        %1470 = vmatpush1.msra.mxu0 %v1435
        %1471 = vmatprep.subr.mxu0 %v1434
        %1472 = vmatpush1.msra.mxu0 %v1433
        %1473 = vmatprep.subr.mxu0 %v1432
        %1474 = vmatpush1.msra.mxu0 %v1431
        %1475 = vmatprep.subr.mxu0 %v1430
        %1476 = vmatpush1.msra.mxu0 %v1429
        %1477 = vmatprep.subr.mxu0 %v1428
        %1478 = vmatpush1.msra.mxu0 %v1427
        %1479 = vmatprep.subr.mxu0 %v1426
        %1480 = vmatpush1.msra.mxu0 %v1425
        %1481 = vmatprep.subr.mxu0 %v1424
        %1482 = vmatpush1.msra.mxu0 %v1423
        %1483 = vmatprep.subr.mxu0 %v1422
        %1484 = vmatpush1.msra.mxu0 %v1421
        %1485 = vmatprep.subr.mxu0 %v1420
        %1486 = vmatpush1.msra.mxu0 %v1419
        %1487 = vmatprep.subr.mxu0 %v1418
        %1488 = vmatpush1.msra.mxu0 %v1417
        %1489 = vmatprep.subr.mxu0 %v1416
        %1490 = vmatpush1.msra.mxu0 %v1415
        %1491 = vmatprep.subr.mxu0 %v1414
        %1492 = vmatpush1.msra.mxu0 %v1413
        %1493 = vmatprep.subr.mxu0 %v1412
        %1494 = vmatpush1.msra.mxu0 %v1411
        %1495 = vmatprep.subr.mxu0 %v1410
        %1496 = vmatpush1.msra.mxu0 %v1409
        %1497 = vmatprep.subr.mxu0 %v1408
        %1498 = vmatpush1.msra.mxu0 %v1407
        %1499 = vmatprep.subr.mxu0 %v1406
        %1500 = vmatpush1.msra.mxu0 %v1405
        %1501 = vmatprep.subr.mxu0 %v1468
        %1502 = vmatpush2.msra.mxu0 %v1467
        %1503 = vmatprep.subr.mxu0 %v1466
        %1504 = vmatpush2.msra.mxu0 %v1465
        %1505 = vmatprep.subr.mxu0 %v1464
        %1506 = vmatpush2.msra.mxu0 %v1463
        %1507 = vmatprep.subr.mxu0 %v1462
        %1508 = vmatpush2.msra.mxu0 %v1461
        %1509 = vmatprep.subr.mxu0 %v1460
        %1510 = vmatpush2.msra.mxu0 %v1459
        %1511 = vmatprep.subr.mxu0 %v1458
        %1512 = vmatpush2.msra.mxu0 %v1457
        %1513 = vmatprep.subr.mxu0 %v1456
        %1514 = vmatpush2.msra.mxu0 %v1455
        %1515 = vmatprep.subr.mxu0 %v1454
        %1516 = vmatpush2.msra.mxu0 %v1453
        %1517 = vmatprep.subr.mxu0 %v1452
        %1518 = vmatpush2.msra.mxu0 %v1451
        %1519 = vmatprep.subr.mxu0 %v1450
        %1520 = vmatpush2.msra.mxu0 %v1449
        %1521 = vmatprep.subr.mxu0 %v1448
        %1522 = vmatpush2.msra.mxu0 %v1447
        %1523 = vmatprep.subr.mxu0 %v1446
        %1524 = vmatpush2.msra.mxu0 %v1445
        %1525 = vmatprep.subr.mxu0 %v1444
        %1526 = vmatpush2.msra.mxu0 %v1443
        %1527 = vmatprep.subr.mxu0 %v1442
        %1528 = vmatpush2.msra.mxu0 %v1441
        %1529 = vmatprep.subr.mxu0 %v1440
        %1530 = vmatpush2.msra.mxu0 %v1439
        %1531 = vmatprep.subr.mxu0 %v1438
        %1532 = vmatpush2.msra.mxu0 %v1437
        %1533 = vmatprep.mubr.f32.mxu0 %v1378
        %1534 = vmatmul.mubr.f32.gmra.mxu0 %v1369
        %v1535 = vpop.f32.mrf.mxu0
        %v1536 = vadd.f32 0.0, %v1535
        %v1537 = vpop.f32.mrf.mxu0
        %v1538 = vadd.f32 0.0, %v1537
        %1539 = vdwg.mxu0
        %1540 = vmatprep.subr.mxu0 %v1436
        %1541 = vmatpush1.msra.mxu0 %v1435
        %1542 = vmatprep.subr.mxu0 %v1434
        %1543 = vmatpush1.msra.mxu0 %v1433
        %1544 = vmatprep.subr.mxu0 %v1432
        %1545 = vmatpush1.msra.mxu0 %v1431
        %1546 = vmatprep.subr.mxu0 %v1430
        %1547 = vmatpush1.msra.mxu0 %v1429
        %1548 = vmatprep.subr.mxu0 %v1428
        %1549 = vmatpush1.msra.mxu0 %v1427
        %1550 = vmatprep.subr.mxu0 %v1426
        %1551 = vmatpush1.msra.mxu0 %v1425
        %1552 = vmatprep.subr.mxu0 %v1424
        %1553 = vmatpush1.msra.mxu0 %v1423
        %1554 = vmatprep.subr.mxu0 %v1422
        %1555 = vmatpush1.msra.mxu0 %v1421
        %1556 = vmatprep.subr.mxu0 %v1420
        %1557 = vmatpush1.msra.mxu0 %v1419
        %1558 = vmatprep.subr.mxu0 %v1418
        %1559 = vmatpush1.msra.mxu0 %v1417
        %1560 = vmatprep.subr.mxu0 %v1416
        %1561 = vmatpush1.msra.mxu0 %v1415
        %1562 = vmatprep.subr.mxu0 %v1414
        %1563 = vmatpush1.msra.mxu0 %v1413
        %1564 = vmatprep.subr.mxu0 %v1412
        %1565 = vmatpush1.msra.mxu0 %v1411
        %1566 = vmatprep.subr.mxu0 %v1410
        %1567 = vmatpush1.msra.mxu0 %v1409
        %1568 = vmatprep.subr.mxu0 %v1408
        %1569 = vmatpush1.msra.mxu0 %v1407
        %1570 = vmatprep.subr.mxu0 %v1406
        %1571 = vmatpush1.msra.mxu0 %v1405
        %1572 = vmatprep.subr.mxu0 %v1468
        %1573 = vmatpush2.msra.mxu0 %v1467
        %1574 = vmatprep.subr.mxu0 %v1466
        %1575 = vmatpush2.msra.mxu0 %v1465
        %1576 = vmatprep.subr.mxu0 %v1464
        %1577 = vmatpush2.msra.mxu0 %v1463
        %1578 = vmatprep.subr.mxu0 %v1462
        %1579 = vmatpush2.msra.mxu0 %v1461
        %1580 = vmatprep.subr.mxu0 %v1460
        %1581 = vmatpush2.msra.mxu0 %v1459
        %1582 = vmatprep.subr.mxu0 %v1458
        %1583 = vmatpush2.msra.mxu0 %v1457
        %1584 = vmatprep.subr.mxu0 %v1456
        %1585 = vmatpush2.msra.mxu0 %v1455
        %1586 = vmatprep.subr.mxu0 %v1454
        %1587 = vmatpush2.msra.mxu0 %v1453
        %1588 = vmatprep.subr.mxu0 %v1452
        %1589 = vmatpush2.msra.mxu0 %v1451
        %1590 = vmatprep.subr.mxu0 %v1450
        %1591 = vmatpush2.msra.mxu0 %v1449
        %1592 = vmatprep.subr.mxu0 %v1448
        %1593 = vmatpush2.msra.mxu0 %v1447
        %1594 = vmatprep.subr.mxu0 %v1446
        %1595 = vmatpush2.msra.mxu0 %v1445
        %1596 = vmatprep.subr.mxu0 %v1444
        %1597 = vmatpush2.msra.mxu0 %v1443
        %1598 = vmatprep.subr.mxu0 %v1442
        %1599 = vmatpush2.msra.mxu0 %v1441
        %1600 = vmatprep.subr.mxu0 %v1440
        %1601 = vmatpush2.msra.mxu0 %v1439
        %1602 = vmatprep.subr.mxu0 %v1438
        %1603 = vmatpush2.msra.mxu0 %v1437
        %1604 = vmatprep.mubr.f32.mxu0 %v1404
        %1605 = vmatmul.mubr.f32.gmra.mxu0 %v1395
        %v1606 = vpop.f32.mrf.mxu0
        %v1607 = vadd.f32 0.0, %v1606
        %v1608 = vpop.f32.mrf.mxu0
        %v1609 = vadd.f32 0.0, %v1608
        %1610 = vdwg.mxu0
        %v1611 = vmul.f32 %v1536, 0.0078125
        %v1612 = vmul.f32 %v1538, 0.0078125
        %v1613 = vmul.f32 %v1607, 0.0078125
        %v1614 = vmul.f32 %v1609, 0.0078125
        %v1615 = vmul.f32 %v1611, %v1611
        %v1616 = vmul.f32 %v1612, %v1612
        %v1617 = vsub.f32 %v1613, %v1615
        %v1618 = vsub.f32 %v1614, %v1616
        %v1619 = vmax.f32 %v1617, 0.0
        %v1620 = vmax.f32 %v1618, 0.0
        %v1621 = vadd.f32 %v1619, 1e-05
        %v1622 = vadd.f32 %v1620, 1e-05
        %v1623 = vrsqrt.pop %v1621
        %v1624 = vrsqrt.pop %v1622
        %v1627 = vrot.slane %v1623, 7
        %v1628 = vrot.slane %v1624, 7
        %v1631 = vmul.f32 %v411, %v1627
        %v1632 = vmul.f32 %v412, %v1628
        %v1633 = vlaneseq
        %v1634 = vshrl.u32 %v1633, 7
        %v1635 = vsub.s32 1, %v1634
        %v1636 = vrot.slane %v1631, %v1635
        %v1637 = vlaneseq
        %v1638 = vshrl.u32 %v1637, 7
        %v1639 = vsub.s32 1, %v1638
        %v1640 = vrot.slane %v1632, %v1639
        %v1641 = vmul.f32 %v1353, %v1636
        %v1642 = vmul.f32 %v1354, %v1640
        %v1643 = vmul.f32 %v1355, %v1636
        %v1644 = vmul.f32 %v1356, %v1640
        %v1645 = vmul.f32 %v1357, %v1636
        %v1646 = vmul.f32 %v1358, %v1640
        %v1647 = vmul.f32 %v1359, %v1636
        %v1648 = vmul.f32 %v1360, %v1640
        %v1651 = vrot.slane %v1631, 1
        %v1652 = vrot.slane %v1632, 1
        %v1655 = vmul.f32 %v1611, %v1651
        %v1656 = vmul.f32 %v1612, %v1652
        %v1659 = vrot.slane %v1655, 6
        %v1660 = vrot.slane %v1656, 6
        %v1663 = vsub.f32 %v411, %v1659
        %v1664 = vsub.f32 %v412, %v1660
        %v1665 = vlaneseq
        %v1666 = vshrl.u32 %v1665, 7
        %v1667 = vsub.s32 2, %v1666
        %v1668 = vrot.slane %v1663, %v1667
        %v1669 = vlaneseq
        %v1670 = vshrl.u32 %v1669, 7
        %v1671 = vsub.s32 2, %v1670
        %v1672 = vrot.slane %v1664, %v1671
        %v1673 = vadd.f32 %v1641, %v1668
        %v1674 = vadd.f32 %v1642, %v1672
        %v1675 = vadd.f32 %v1643, %v1668
        %v1676 = vadd.f32 %v1644, %v1672
        %v1677 = vadd.f32 %v1645, %v1668
        %v1678 = vadd.f32 %v1646, %v1672
        %v1679 = vadd.f32 %v1647, %v1668
        %v1680 = vadd.f32 %v1648, %v1672
        %v1681 = vpack.c.bf16 %v1675, %v1673
        %v1682 = vpack.c.bf16 %v1676, %v1674
        %v1683 = vpack.c.bf16 %v1679, %v1677
        %v1684 = vpack.c.bf16 %v1680, %v1678
        %v1689 = vunpack.c.l.b16 %v1681
        %v1690 = vunpack.c.l.b16 %v1682
        %v1691 = vunpack.c.h.b16 %v1681
        %v1692 = vunpack.c.h.b16 %v1682
        %v1693 = vunpack.c.l.b16 %v1683
        %v1694 = vunpack.c.l.b16 %v1684
        %v1695 = vunpack.c.h.b16 %v1683
        %v1696 = vunpack.c.h.b16 %v1684
        %v1697 = vpack.c.b16 %v1690, %v1689
        %v1698 = vpack.c.b16 %v1692, %v1691
        %v1699 = vpack.c.b16 %v1694, %v1693
        %v1700 = vpack.c.b16 %v1696, %v1695
        %1705 = vst [vmem:[%s263] sm:$0xff] %v1697
        %1706 = vst [vmem:[%s263 + $0x8] sm:$0xff] %v1698
        %1707 = vst [vmem:[%s263 + $0x10] sm:$0xff] %v1699
        %1708 = vst [vmem:[%s263 + $0x18] sm:$0xff] %v1700
        %s1709 = sand.u32 %s123, 1
        %s1710 = sand.u32 %s123, 1
        %s1711 = smul.addr %s1710, 32
        %s1712 = scalar_lea.vmem [#allocation7], %s1711
        // Predicated region
        $region49: #{_lambda_.7} parent=35 // pred_check
          %p1713 = pneg %p133
        $region50: #{_lambda_.7} parent=35 // pred_check_branch
          %1715 = sbr.rel (%p1713) target = $region52
        $region51: #{_lambda_.7} parent=35 // pred_region
          %s1716 = smul.u32 2, %s21
          %s1717 = smul.addr %s1716, 4
          %s1718 = scalar_lea.vmem %s4, %s1717
          // Predicated region
          $region53: #{_lambda_.7} parent=51 // pred_check
            _
          $region54: #{_lambda_.7} parent=51 // pred_check_branch
            %1720 = sbr.rel (0) target = $region56
          $region55: #{_lambda_.7} parent=51 // pred_region
            // Predicated region
            $region57: #{_lambda_.7} parent=55 // pred_check
              _
            $region58: #{_lambda_.7} parent=55 // pred_check_branch
              %1722 = sbr.rel (0) target = $region60
            $region59: #{_lambda_.7} parent=55 // pred_region
              // Predicated region
              $region72: #{_lambda_.7} parent=59 // pred_check
                _
              $region73: #{_lambda_.7} parent=59 // pred_check_branch
                %1744 = sbr.rel (0) target = $region75
              $region74: #{_lambda_.7} parent=59 // pred_region
                loop: start=0, step=1, limit=1
                $region76: #{_lambda_.7} parent=74 // loop_pre_header
                  _
                $region77: #{_lambda_.7} parent=74 // loop_header
                  %s1746 = sphi 0, %s1750
                  %p1747 = scmp.ge.s32.totalorder %s1746, 1
                  %s1751 = sphi %s1712, %s1712
                  %s1752 = sphi %s1718, %s1718
                $region78: #{_lambda_.7} parent=74 // loop_header_branch
                  %1749 = sbr.rel (%p1747) target = $region82
                $region79: #{_lambda_.7} parent=74 // loop_body
                  %v1753 = vld [vmem:[%s1751] sm:$0xff]
                  %1754 = vst [vmem:[%s1752] sm:$0xff] %v1753
                  %v1755 = vld [vmem:[%s1751 + $0x8] sm:$0xff]
                  %1756 = vst [vmem:[%s1752 + $0x10] sm:$0xff] %v1755
                  %v1757 = vld [vmem:[%s1751 + $0x10] sm:$0xff]
                  %1758 = vst [vmem:[%s1752 + $0x20] sm:$0xff] %v1757
                  %v1759 = vld [vmem:[%s1751 + $0x18] sm:$0xff]
                  %1760 = vst [vmem:[%s1752 + $0x30] sm:$0xff] %v1759
                $region80: #{_lambda_.7} parent=74 // loop_footer
                  %s1750 = sadd.s32 1, %s1746
                $region81: #{_lambda_.7} parent=74 // loop_footer_branch
                  %1745 = sbr.rel target = $region77
                $region82: #{_lambda_.7} parent=74 // loop_exit
                  _
              $region75: #{_lambda_.7} parent=59 // pred_fallthru
                _
              // Predicated region
              $region83: #{_lambda_.7} parent=59 // pred_check
                _
              $region84: #{_lambda_.7} parent=59 // pred_check_branch
                %1762 = sbr.rel target = $region86
              $region85: #{_lambda_.7} parent=59 // pred_region
                _
              $region86: #{_lambda_.7} parent=59 // pred_fallthru
                _
            $region60: #{_lambda_.7} parent=55 // pred_fallthru
              _
            // Predicated region
            $region61: #{_lambda_.7} parent=55 // pred_check
              _
            $region62: #{_lambda_.7} parent=55 // pred_check_branch
              %1724 = sbr.rel target = $region64
            $region63: #{_lambda_.7} parent=55 // pred_region
              %s1726 = ssub.s32 256, 1
              loop: start=0, step=1, limit=1
              $region65: #{_lambda_.7} parent=63 // loop_pre_header
                _
              $region66: #{_lambda_.7} parent=63 // loop_header
                %s1728 = sphi 0, %s1732
                %p1729 = scmp.ge.s32.totalorder %s1728, 1
                %s1733 = sphi %s1712, %s1712
                %s1734 = sphi %s1718, %s1718
              $region67: #{_lambda_.7} parent=63 // loop_header_branch
                %1731 = sbr.rel (%p1729) target = $region71
              $region68: #{_lambda_.7} parent=63 // loop_body
                %v1735 = vld [vmem:[%s1733] sm:%s1726]
                %1736 = vst [vmem:[%s1734] sm:%s1726] %v1735
                %v1737 = vld [vmem:[%s1733 + $0x8] sm:%s1726]
                %1738 = vst [vmem:[%s1734 + $0x10] sm:%s1726] %v1737
                %v1739 = vld [vmem:[%s1733 + $0x10] sm:%s1726]
                %1740 = vst [vmem:[%s1734 + $0x20] sm:%s1726] %v1739
                %v1741 = vld [vmem:[%s1733 + $0x18] sm:%s1726]
                %1742 = vst [vmem:[%s1734 + $0x30] sm:%s1726] %v1741
              $region69: #{_lambda_.7} parent=63 // loop_footer
                %s1732 = sadd.s32 1, %s1728
              $region70: #{_lambda_.7} parent=63 // loop_footer_branch
                %1727 = sbr.rel target = $region66
              $region71: #{_lambda_.7} parent=63 // loop_exit
                _
            $region64: #{_lambda_.7} parent=55 // pred_fallthru
              _
          $region56: #{_lambda_.7} parent=51 // pred_fallthru
            _
          %1763 = vnop
        $region52: #{_lambda_.7} parent=35 // pred_fallthru
          _
      $region36: #{_lambda_.7} parent=5 // pred_fallthru
        _
      %p1764 = scmp.le.s32.totalorder 2, %s16
      // Predicated region
      $region87: #{_lambda_.7} parent=5 // pred_check
        %p1765 = pneg %p1764
      $region88: #{_lambda_.7} parent=5 // pred_check_branch
        %1767 = sbr.rel (%p1765) target = $region90
      $region89: #{_lambda_.7} parent=5 // pred_region
        %s1768 = ssub.s32 %s16, 2
        // Predicated region
        $region91: #{_lambda_.7} parent=89 // pred_check
          %p1769 = pneg %p139
        $region92: #{_lambda_.7} parent=89 // pred_check_branch
          %1771 = sbr.rel (%p1769) target = $region94
        $region93: #{_lambda_.7} parent=89 // pred_region
          %s1772 = sand.u32 %s124, 1
          %s1773 = sand.u32 %s124, 1
          %s1774 = smul.addr %s1773, 32
          %s1775 = scalar_lea.vmem [#allocation7], %s1774
        $region94: #{_lambda_.7} parent=89 // pred_fallthru
          _
      $region90: #{_lambda_.7} parent=5 // pred_fallthru
        _
    $region6: #{_lambda_.7} parent=1 // loop_footer
      %s20 = sadd.s32 1, %s16
    $region7: #{_lambda_.7} parent=1 // loop_footer_branch
      %15 = sbr.rel target = $region3
    $region8: #{_lambda_.7} parent=1 // loop_exit
      _
    %1776 = vsyncpa [#allocation3], 1
    %s1777 = scalar_lea.sflag [#allocation3], 1
    %1778 = vsyncpa %s1777, 1
    %1779 = vsyncpa [#allocation5], 1
    %s1780 = scalar_lea.sflag [#allocation5], 1
    %1781 = vsyncpa %s1780, 1

// kernel: _lambda_.5
$region0: #{_lambda_.5}
  #allocation0 [shape = 'u32[]', space=smem, size = 0x4, offset = 0x4, fixed_abs, tag = 'smem constant byte address 0x4 - core index']
  #allocation1 [shape = 'u32[144,128]{1,0:T(1,128)}', space=vmem, size = 0x12000, scoped, tag = 'internal scratch']
  %s0 = inlined_call_operand.vmem [shape: bf16[128,2304], index: 0, kind: input, shape index: {}]
  %s1 = inlined_call_operand.vmem [shape: bf16[2304,128], index: 1, kind: input, shape index: {}]
  %s2 = inlined_call_operand.vmem [shape: f32[8,128], index: 2, kind: input, shape index: {}]
  %s3 = inlined_call_operand.vmem [shape: bf16[128,128], index: 3, kind: output, shape index: {}]
  %s4 = sld [smem:[#allocation0]]
  $region22: #{_lambda_.5} parent=0
    _
  %s6 = ssub.s32 1, %s4
  %s7 = scalar_select 0, %s6, %s4
  // Predicated region
  $region2: #{_lambda_.5} parent=0 // pred_check
    _
  $region3: #{_lambda_.5} parent=0 // pred_check_branch
    %9 = sbr.rel (0) target = $region5
  $region4: #{_lambda_.5} parent=0 // pred_region
    _
  $region5: #{_lambda_.5} parent=0 // pred_fallthru
    _
  // Predicated region
  $region6: #{_lambda_.5} parent=0 // pred_check
    _
  $region7: #{_lambda_.5} parent=0 // pred_check_branch
    %11 = sbr.rel (0) target = $region9
  $region8: #{_lambda_.5} parent=0 // pred_region
    _
  $region9: #{_lambda_.5} parent=0 // pred_fallthru
    _
  // Predicated region
  $region10: #{_lambda_.5} parent=0 // pred_check
    _
  $region11: #{_lambda_.5} parent=0 // pred_check_branch
    %13 = sbr.rel (0) target = $region13
  $region12: #{_lambda_.5} parent=0 // pred_region
    _
  $region13: #{_lambda_.5} parent=0 // pred_fallthru
    _
  %v15 = vld [vmem:[%s0] sm:$0xff]
  %v16 = vld [vmem:[%s0 + $0x8] sm:$0xff]
  %v17 = vld [vmem:[%s0 + $0x10] sm:$0xff]
  %v18 = vld [vmem:[%s0 + $0x18] sm:$0xff]
  %v19 = vld [vmem:[%s0 + $0x20] sm:$0xff]
  %v20 = vld [vmem:[%s0 + $0x28] sm:$0xff]
  %v21 = vld [vmem:[%s0 + $0x30] sm:$0xff]
  %v22 = vld [vmem:[%s0 + $0x38] sm:$0xff]
  %v23 = vld [vmem:[%s0 + $0x40] sm:$0xff]
  %v24 = vld [vmem:[%s0 + $0x48] sm:$0xff]
  %v25 = vld [vmem:[%s0 + $0x50] sm:$0xff]
  %v26 = vld [vmem:[%s0 + $0x58] sm:$0xff]
  %v27 = vld [vmem:[%s0 + $0x60] sm:$0xff]
  %v28 = vld [vmem:[%s0 + $0x68] sm:$0xff]
  %v29 = vld [vmem:[%s0 + $0x70] sm:$0xff]
  %v30 = vld [vmem:[%s0 + $0x78] sm:$0xff]
  %v31 = vld [vmem:[%s0 + $0x80] sm:$0xff]
  %v32 = vld [vmem:[%s0 + $0x88] sm:$0xff]
  %v33 = vld [vmem:[%s0 + $0x90] sm:$0xff]
  %v34 = vld [vmem:[%s0 + $0x98] sm:$0xff]
  %v35 = vld [vmem:[%s0 + $0xa0] sm:$0xff]
  %v36 = vld [vmem:[%s0 + $0xa8] sm:$0xff]
  %v37 = vld [vmem:[%s0 + $0xb0] sm:$0xff]
  %v38 = vld [vmem:[%s0 + $0xb8] sm:$0xff]
  %v39 = vld [vmem:[%s0 + $0xc0] sm:$0xff]
  %v40 = vld [vmem:[%s0 + $0xc8] sm:$0xff]
  %v41 = vld [vmem:[%s0 + $0xd0] sm:$0xff]
  %v42 = vld [vmem:[%s0 + $0xd8] sm:$0xff]
  %v43 = vld [vmem:[%s0 + $0xe0] sm:$0xff]
  %v44 = vld [vmem:[%s0 + $0xe8] sm:$0xff]
  %v45 = vld [vmem:[%s0 + $0xf0] sm:$0xff]
  %v46 = vld [vmem:[%s0 + $0xf8] sm:$0xff]
  %v47 = vld [vmem:[%s0 + $0x100] sm:$0xff]
  %v48 = vld [vmem:[%s0 + $0x108] sm:$0xff]
  %v49 = vld [vmem:[%s0 + $0x110] sm:$0xff]
  %v50 = vld [vmem:[%s0 + $0x118] sm:$0xff]
  %v51 = vld [vmem:[%s0 + $0x120] sm:$0xff]
  %v52 = vld [vmem:[%s0 + $0x128] sm:$0xff]
  %v53 = vld [vmem:[%s0 + $0x130] sm:$0xff]
  %v54 = vld [vmem:[%s0 + $0x138] sm:$0xff]
  %v55 = vld [vmem:[%s0 + $0x140] sm:$0xff]
  %v56 = vld [vmem:[%s0 + $0x148] sm:$0xff]
  %v57 = vld [vmem:[%s0 + $0x150] sm:$0xff]
  %v58 = vld [vmem:[%s0 + $0x158] sm:$0xff]
  %v59 = vld [vmem:[%s0 + $0x160] sm:$0xff]
  %v60 = vld [vmem:[%s0 + $0x168] sm:$0xff]
  %v61 = vld [vmem:[%s0 + $0x170] sm:$0xff]
  %v62 = vld [vmem:[%s0 + $0x178] sm:$0xff]
  %v63 = vld [vmem:[%s0 + $0x180] sm:$0xff]
  %v64 = vld [vmem:[%s0 + $0x188] sm:$0xff]
  %v65 = vld [vmem:[%s0 + $0x190] sm:$0xff]
  %v66 = vld [vmem:[%s0 + $0x198] sm:$0xff]
  %v67 = vld [vmem:[%s0 + $0x1a0] sm:$0xff]
  %v68 = vld [vmem:[%s0 + $0x1a8] sm:$0xff]
  %v69 = vld [vmem:[%s0 + $0x1b0] sm:$0xff]
  %v70 = vld [vmem:[%s0 + $0x1b8] sm:$0xff]
  %v71 = vld [vmem:[%s0 + $0x1c0] sm:$0xff]
  %v72 = vld [vmem:[%s0 + $0x1c8] sm:$0xff]
  %v73 = vld [vmem:[%s0 + $0x1d0] sm:$0xff]
  %v74 = vld [vmem:[%s0 + $0x1d8] sm:$0xff]
  %v75 = vld [vmem:[%s0 + $0x1e0] sm:$0xff]
  %v76 = vld [vmem:[%s0 + $0x1e8] sm:$0xff]
  %v77 = vld [vmem:[%s0 + $0x1f0] sm:$0xff]
  %v78 = vld [vmem:[%s0 + $0x1f8] sm:$0xff]
  %v79 = vld [vmem:[%s0 + $0x200] sm:$0xff]
  %v80 = vld [vmem:[%s0 + $0x208] sm:$0xff]
  %v81 = vld [vmem:[%s0 + $0x210] sm:$0xff]
  %v82 = vld [vmem:[%s0 + $0x218] sm:$0xff]
  %v83 = vld [vmem:[%s0 + $0x220] sm:$0xff]
  %v84 = vld [vmem:[%s0 + $0x228] sm:$0xff]
  %v85 = vld [vmem:[%s0 + $0x230] sm:$0xff]
  %v86 = vld [vmem:[%s0 + $0x238] sm:$0xff]
  %v87 = vld [vmem:[%s0 + $0x240] sm:$0xff]
  %v88 = vld [vmem:[%s0 + $0x248] sm:$0xff]
  %v89 = vld [vmem:[%s0 + $0x250] sm:$0xff]
  %v90 = vld [vmem:[%s0 + $0x258] sm:$0xff]
  %v91 = vld [vmem:[%s0 + $0x260] sm:$0xff]
  %v92 = vld [vmem:[%s0 + $0x268] sm:$0xff]
  %v93 = vld [vmem:[%s0 + $0x270] sm:$0xff]
  %v94 = vld [vmem:[%s0 + $0x278] sm:$0xff]
  %v95 = vld [vmem:[%s0 + $0x280] sm:$0xff]
  %v96 = vld [vmem:[%s0 + $0x288] sm:$0xff]
  %v97 = vld [vmem:[%s0 + $0x290] sm:$0xff]
  %v98 = vld [vmem:[%s0 + $0x298] sm:$0xff]
  %v99 = vld [vmem:[%s0 + $0x2a0] sm:$0xff]
  %v100 = vld [vmem:[%s0 + $0x2a8] sm:$0xff]
  %v101 = vld [vmem:[%s0 + $0x2b0] sm:$0xff]
  %v102 = vld [vmem:[%s0 + $0x2b8] sm:$0xff]
  %v103 = vld [vmem:[%s0 + $0x2c0] sm:$0xff]
  %v104 = vld [vmem:[%s0 + $0x2c8] sm:$0xff]
  %v105 = vld [vmem:[%s0 + $0x2d0] sm:$0xff]
  %v106 = vld [vmem:[%s0 + $0x2d8] sm:$0xff]
  %v107 = vld [vmem:[%s0 + $0x2e0] sm:$0xff]
  %v108 = vld [vmem:[%s0 + $0x2e8] sm:$0xff]
  %v109 = vld [vmem:[%s0 + $0x2f0] sm:$0xff]
  %v110 = vld [vmem:[%s0 + $0x2f8] sm:$0xff]
  %v111 = vld [vmem:[%s0 + $0x300] sm:$0xff]
  %v112 = vld [vmem:[%s0 + $0x308] sm:$0xff]
  %v113 = vld [vmem:[%s0 + $0x310] sm:$0xff]
  %v114 = vld [vmem:[%s0 + $0x318] sm:$0xff]
  %v115 = vld [vmem:[%s0 + $0x320] sm:$0xff]
  %v116 = vld [vmem:[%s0 + $0x328] sm:$0xff]
  %v117 = vld [vmem:[%s0 + $0x330] sm:$0xff]
  %v118 = vld [vmem:[%s0 + $0x338] sm:$0xff]
  %v119 = vld [vmem:[%s0 + $0x340] sm:$0xff]
  %v120 = vld [vmem:[%s0 + $0x348] sm:$0xff]
  %v121 = vld [vmem:[%s0 + $0x350] sm:$0xff]
  %v122 = vld [vmem:[%s0 + $0x358] sm:$0xff]
  %v123 = vld [vmem:[%s0 + $0x360] sm:$0xff]
  %v124 = vld [vmem:[%s0 + $0x368] sm:$0xff]
  %v125 = vld [vmem:[%s0 + $0x370] sm:$0xff]
  %v126 = vld [vmem:[%s0 + $0x378] sm:$0xff]
  %v127 = vld [vmem:[%s0 + $0x380] sm:$0xff]
  %v128 = vld [vmem:[%s0 + $0x388] sm:$0xff]
  %v129 = vld [vmem:[%s0 + $0x390] sm:$0xff]
  %v130 = vld [vmem:[%s0 + $0x398] sm:$0xff]
  %v131 = vld [vmem:[%s0 + $0x3a0] sm:$0xff]
  %v132 = vld [vmem:[%s0 + $0x3a8] sm:$0xff]
  %v133 = vld [vmem:[%s0 + $0x3b0] sm:$0xff]
  %v134 = vld [vmem:[%s0 + $0x3b8] sm:$0xff]
  %v135 = vld [vmem:[%s0 + $0x3c0] sm:$0xff]
  %v136 = vld [vmem:[%s0 + $0x3c8] sm:$0xff]
  %v137 = vld [vmem:[%s0 + $0x3d0] sm:$0xff]
  %v138 = vld [vmem:[%s0 + $0x3d8] sm:$0xff]
  %v139 = vld [vmem:[%s0 + $0x3e0] sm:$0xff]
  %v140 = vld [vmem:[%s0 + $0x3e8] sm:$0xff]
  %v141 = vld [vmem:[%s0 + $0x3f0] sm:$0xff]
  %v142 = vld [vmem:[%s0 + $0x3f8] sm:$0xff]
  %v143 = vld [vmem:[%s0 + $0x400] sm:$0xff]
  %v144 = vld [vmem:[%s0 + $0x408] sm:$0xff]
  %v145 = vld [vmem:[%s0 + $0x410] sm:$0xff]
  %v146 = vld [vmem:[%s0 + $0x418] sm:$0xff]
  %v147 = vld [vmem:[%s0 + $0x420] sm:$0xff]
  %v148 = vld [vmem:[%s0 + $0x428] sm:$0xff]
  %v149 = vld [vmem:[%s0 + $0x430] sm:$0xff]
  %v150 = vld [vmem:[%s0 + $0x438] sm:$0xff]
  %v151 = vld [vmem:[%s0 + $0x440] sm:$0xff]
  %v152 = vld [vmem:[%s0 + $0x448] sm:$0xff]
  %v153 = vld [vmem:[%s0 + $0x450] sm:$0xff]
  %v154 = vld [vmem:[%s0 + $0x458] sm:$0xff]
  %v155 = vld [vmem:[%s0 + $0x460] sm:$0xff]
  %v156 = vld [vmem:[%s0 + $0x468] sm:$0xff]
  %v157 = vld [vmem:[%s0 + $0x470] sm:$0xff]
  %v158 = vld [vmem:[%s0 + $0x478] sm:$0xff]
  %v159 = vld [vmem:[%s1] sm:$0xf]
  %v160 = vld [vmem:[%s1 + $0x4] sm:$0xf]
  %v161 = vld [vmem:[%s1 + $0x8] sm:$0xf]
  %v162 = vld [vmem:[%s1 + $0xc] sm:$0xf]
  %v163 = vld [vmem:[%s1 + $0x10] sm:$0xf]
  %v164 = vld [vmem:[%s1 + $0x14] sm:$0xf]
  %v165 = vld [vmem:[%s1 + $0x18] sm:$0xf]
  %v166 = vld [vmem:[%s1 + $0x1c] sm:$0xf]
  %v167 = vld [vmem:[%s1 + $0x20] sm:$0xf]
  %v168 = vld [vmem:[%s1 + $0x24] sm:$0xf]
  %v169 = vld [vmem:[%s1 + $0x28] sm:$0xf]
  %v170 = vld [vmem:[%s1 + $0x2c] sm:$0xf]
  %v171 = vld [vmem:[%s1 + $0x30] sm:$0xf]
  %v172 = vld [vmem:[%s1 + $0x34] sm:$0xf]
  %v173 = vld [vmem:[%s1 + $0x38] sm:$0xf]
  %v174 = vld [vmem:[%s1 + $0x3c] sm:$0xf]
  %v175 = vld [vmem:[%s1 + $0x40] sm:$0xf]
  %v176 = vld [vmem:[%s1 + $0x44] sm:$0xf]
  %v177 = vld [vmem:[%s1 + $0x48] sm:$0xf]
  %v178 = vld [vmem:[%s1 + $0x4c] sm:$0xf]
  %v179 = vld [vmem:[%s1 + $0x50] sm:$0xf]
  %v180 = vld [vmem:[%s1 + $0x54] sm:$0xf]
  %v181 = vld [vmem:[%s1 + $0x58] sm:$0xf]
  %v182 = vld [vmem:[%s1 + $0x5c] sm:$0xf]
  %v183 = vld [vmem:[%s1 + $0x60] sm:$0xf]
  %v184 = vld [vmem:[%s1 + $0x64] sm:$0xf]
  %v185 = vld [vmem:[%s1 + $0x68] sm:$0xf]
  %v186 = vld [vmem:[%s1 + $0x6c] sm:$0xf]
  %v187 = vld [vmem:[%s1 + $0x70] sm:$0xf]
  %v188 = vld [vmem:[%s1 + $0x74] sm:$0xf]
  %v189 = vld [vmem:[%s1 + $0x78] sm:$0xf]
  %v190 = vld [vmem:[%s1 + $0x7c] sm:$0xf]
  %v191 = vld [vmem:[%s1 + $0x80] sm:$0xf]
  %v192 = vld [vmem:[%s1 + $0x84] sm:$0xf]
  %v193 = vld [vmem:[%s1 + $0x88] sm:$0xf]
  %v194 = vld [vmem:[%s1 + $0x8c] sm:$0xf]
  %v195 = vld [vmem:[%s1 + $0x90] sm:$0xf]
  %v196 = vld [vmem:[%s1 + $0x94] sm:$0xf]
  %v197 = vld [vmem:[%s1 + $0x98] sm:$0xf]
  %v198 = vld [vmem:[%s1 + $0x9c] sm:$0xf]
  %v199 = vld [vmem:[%s1 + $0xa0] sm:$0xf]
  %v200 = vld [vmem:[%s1 + $0xa4] sm:$0xf]
  %v201 = vld [vmem:[%s1 + $0xa8] sm:$0xf]
  %v202 = vld [vmem:[%s1 + $0xac] sm:$0xf]
  %v203 = vld [vmem:[%s1 + $0xb0] sm:$0xf]
  %v204 = vld [vmem:[%s1 + $0xb4] sm:$0xf]
  %v205 = vld [vmem:[%s1 + $0xb8] sm:$0xf]
  %v206 = vld [vmem:[%s1 + $0xbc] sm:$0xf]
  %v207 = vld [vmem:[%s1 + $0xc0] sm:$0xf]
  %v208 = vld [vmem:[%s1 + $0xc4] sm:$0xf]
  %v209 = vld [vmem:[%s1 + $0xc8] sm:$0xf]
  %v210 = vld [vmem:[%s1 + $0xcc] sm:$0xf]
  %v211 = vld [vmem:[%s1 + $0xd0] sm:$0xf]
  %v212 = vld [vmem:[%s1 + $0xd4] sm:$0xf]
  %v213 = vld [vmem:[%s1 + $0xd8] sm:$0xf]
  %v214 = vld [vmem:[%s1 + $0xdc] sm:$0xf]
  %v215 = vld [vmem:[%s1 + $0xe0] sm:$0xf]
  %v216 = vld [vmem:[%s1 + $0xe4] sm:$0xf]
  %v217 = vld [vmem:[%s1 + $0xe8] sm:$0xf]
  %v218 = vld [vmem:[%s1 + $0xec] sm:$0xf]
  %v219 = vld [vmem:[%s1 + $0xf0] sm:$0xf]
  %v220 = vld [vmem:[%s1 + $0xf4] sm:$0xf]
  %v221 = vld [vmem:[%s1 + $0xf8] sm:$0xf]
  %v222 = vld [vmem:[%s1 + $0xfc] sm:$0xf]
  %v223 = vld [vmem:[%s1 + $0x100] sm:$0xf]
  %v224 = vld [vmem:[%s1 + $0x104] sm:$0xf]
  %v225 = vld [vmem:[%s1 + $0x108] sm:$0xf]
  %v226 = vld [vmem:[%s1 + $0x10c] sm:$0xf]
  %v227 = vld [vmem:[%s1 + $0x110] sm:$0xf]
  %v228 = vld [vmem:[%s1 + $0x114] sm:$0xf]
  %v229 = vld [vmem:[%s1 + $0x118] sm:$0xf]
  %v230 = vld [vmem:[%s1 + $0x11c] sm:$0xf]
  %v231 = vld [vmem:[%s1 + $0x120] sm:$0xf]
  %v232 = vld [vmem:[%s1 + $0x124] sm:$0xf]
  %v233 = vld [vmem:[%s1 + $0x128] sm:$0xf]
  %v234 = vld [vmem:[%s1 + $0x12c] sm:$0xf]
  %v235 = vld [vmem:[%s1 + $0x130] sm:$0xf]
  %v236 = vld [vmem:[%s1 + $0x134] sm:$0xf]
  %v237 = vld [vmem:[%s1 + $0x138] sm:$0xf]
  %v238 = vld [vmem:[%s1 + $0x13c] sm:$0xf]
  %v239 = vld [vmem:[%s1 + $0x140] sm:$0xf]
  %v240 = vld [vmem:[%s1 + $0x144] sm:$0xf]
  %v241 = vld [vmem:[%s1 + $0x148] sm:$0xf]
  %v242 = vld [vmem:[%s1 + $0x14c] sm:$0xf]
  %v243 = vld [vmem:[%s1 + $0x150] sm:$0xf]
  %v244 = vld [vmem:[%s1 + $0x154] sm:$0xf]
  %v245 = vld [vmem:[%s1 + $0x158] sm:$0xf]
  %v246 = vld [vmem:[%s1 + $0x15c] sm:$0xf]
  %v247 = vld [vmem:[%s1 + $0x160] sm:$0xf]
  %v248 = vld [vmem:[%s1 + $0x164] sm:$0xf]
  %v249 = vld [vmem:[%s1 + $0x168] sm:$0xf]
  %v250 = vld [vmem:[%s1 + $0x16c] sm:$0xf]
  %v251 = vld [vmem:[%s1 + $0x170] sm:$0xf]
  %v252 = vld [vmem:[%s1 + $0x174] sm:$0xf]
  %v253 = vld [vmem:[%s1 + $0x178] sm:$0xf]
  %v254 = vld [vmem:[%s1 + $0x17c] sm:$0xf]
  %v255 = vld [vmem:[%s1 + $0x180] sm:$0xf]
  %v256 = vld [vmem:[%s1 + $0x184] sm:$0xf]
  %v257 = vld [vmem:[%s1 + $0x188] sm:$0xf]
  %v258 = vld [vmem:[%s1 + $0x18c] sm:$0xf]
  %v259 = vld [vmem:[%s1 + $0x190] sm:$0xf]
  %v260 = vld [vmem:[%s1 + $0x194] sm:$0xf]
  %v261 = vld [vmem:[%s1 + $0x198] sm:$0xf]
  %v262 = vld [vmem:[%s1 + $0x19c] sm:$0xf]
  %v263 = vld [vmem:[%s1 + $0x1a0] sm:$0xf]
  %v264 = vld [vmem:[%s1 + $0x1a4] sm:$0xf]
  %v265 = vld [vmem:[%s1 + $0x1a8] sm:$0xf]
  %v266 = vld [vmem:[%s1 + $0x1ac] sm:$0xf]
  %v267 = vld [vmem:[%s1 + $0x1b0] sm:$0xf]
  %v268 = vld [vmem:[%s1 + $0x1b4] sm:$0xf]
  %v269 = vld [vmem:[%s1 + $0x1b8] sm:$0xf]
  %v270 = vld [vmem:[%s1 + $0x1bc] sm:$0xf]
  %v271 = vld [vmem:[%s1 + $0x1c0] sm:$0xf]
  %v272 = vld [vmem:[%s1 + $0x1c4] sm:$0xf]
  %v273 = vld [vmem:[%s1 + $0x1c8] sm:$0xf]
  %v274 = vld [vmem:[%s1 + $0x1cc] sm:$0xf]
  %v275 = vld [vmem:[%s1 + $0x1d0] sm:$0xf]
  %v276 = vld [vmem:[%s1 + $0x1d4] sm:$0xf]
  %v277 = vld [vmem:[%s1 + $0x1d8] sm:$0xf]
  %v278 = vld [vmem:[%s1 + $0x1dc] sm:$0xf]
  %v279 = vld [vmem:[%s1 + $0x1e0] sm:$0xf]
  %v280 = vld [vmem:[%s1 + $0x1e4] sm:$0xf]
  %v281 = vld [vmem:[%s1 + $0x1e8] sm:$0xf]
  %v282 = vld [vmem:[%s1 + $0x1ec] sm:$0xf]
  %v283 = vld [vmem:[%s1 + $0x1f0] sm:$0xf]
  %v284 = vld [vmem:[%s1 + $0x1f4] sm:$0xf]
  %v285 = vld [vmem:[%s1 + $0x1f8] sm:$0xf]
  %v286 = vld [vmem:[%s1 + $0x1fc] sm:$0xf]
  %v287 = vld [vmem:[%s1 + $0x200] sm:$0xf]
  %v288 = vld [vmem:[%s1 + $0x204] sm:$0xf]
  %v289 = vld [vmem:[%s1 + $0x208] sm:$0xf]
  %v290 = vld [vmem:[%s1 + $0x20c] sm:$0xf]
  %v291 = vld [vmem:[%s1 + $0x210] sm:$0xf]
  %v292 = vld [vmem:[%s1 + $0x214] sm:$0xf]
  %v293 = vld [vmem:[%s1 + $0x218] sm:$0xf]
  %v294 = vld [vmem:[%s1 + $0x21c] sm:$0xf]
  %v295 = vld [vmem:[%s1 + $0x220] sm:$0xf]
  %v296 = vld [vmem:[%s1 + $0x224] sm:$0xf]
  %v297 = vld [vmem:[%s1 + $0x228] sm:$0xf]
  %v298 = vld [vmem:[%s1 + $0x22c] sm:$0xf]
  %v299 = vld [vmem:[%s1 + $0x230] sm:$0xf]
  %v300 = vld [vmem:[%s1 + $0x234] sm:$0xf]
  %v301 = vld [vmem:[%s1 + $0x238] sm:$0xf]
  %v302 = vld [vmem:[%s1 + $0x23c] sm:$0xf]
  %v303 = vld [vmem:[%s1 + $0x240] sm:$0xf]
  %v304 = vld [vmem:[%s1 + $0x244] sm:$0xf]
  %v305 = vld [vmem:[%s1 + $0x248] sm:$0xf]
  %v306 = vld [vmem:[%s1 + $0x24c] sm:$0xf]
  %v307 = vld [vmem:[%s1 + $0x250] sm:$0xf]
  %v308 = vld [vmem:[%s1 + $0x254] sm:$0xf]
  %v309 = vld [vmem:[%s1 + $0x258] sm:$0xf]
  %v310 = vld [vmem:[%s1 + $0x25c] sm:$0xf]
  %v311 = vld [vmem:[%s1 + $0x260] sm:$0xf]
  %v312 = vld [vmem:[%s1 + $0x264] sm:$0xf]
  %v313 = vld [vmem:[%s1 + $0x268] sm:$0xf]
  %v314 = vld [vmem:[%s1 + $0x26c] sm:$0xf]
  %v315 = vld [vmem:[%s1 + $0x270] sm:$0xf]
  %v316 = vld [vmem:[%s1 + $0x274] sm:$0xf]
  %v317 = vld [vmem:[%s1 + $0x278] sm:$0xf]
  %v318 = vld [vmem:[%s1 + $0x27c] sm:$0xf]
  %v319 = vld [vmem:[%s1 + $0x280] sm:$0xf]
  %v320 = vld [vmem:[%s1 + $0x284] sm:$0xf]
  %v321 = vld [vmem:[%s1 + $0x288] sm:$0xf]
  %v322 = vld [vmem:[%s1 + $0x28c] sm:$0xf]
  %v323 = vld [vmem:[%s1 + $0x290] sm:$0xf]
  %v324 = vld [vmem:[%s1 + $0x294] sm:$0xf]
  %v325 = vld [vmem:[%s1 + $0x298] sm:$0xf]
  %v326 = vld [vmem:[%s1 + $0x29c] sm:$0xf]
  %v327 = vld [vmem:[%s1 + $0x2a0] sm:$0xf]
  %v328 = vld [vmem:[%s1 + $0x2a4] sm:$0xf]
  %v329 = vld [vmem:[%s1 + $0x2a8] sm:$0xf]
  %v330 = vld [vmem:[%s1 + $0x2ac] sm:$0xf]
  %v331 = vld [vmem:[%s1 + $0x2b0] sm:$0xf]
  %v332 = vld [vmem:[%s1 + $0x2b4] sm:$0xf]
  %v333 = vld [vmem:[%s1 + $0x2b8] sm:$0xf]
  %v334 = vld [vmem:[%s1 + $0x2bc] sm:$0xf]
  %v335 = vld [vmem:[%s1 + $0x2c0] sm:$0xf]
  %v336 = vld [vmem:[%s1 + $0x2c4] sm:$0xf]
  %v337 = vld [vmem:[%s1 + $0x2c8] sm:$0xf]
  %v338 = vld [vmem:[%s1 + $0x2cc] sm:$0xf]
  %v339 = vld [vmem:[%s1 + $0x2d0] sm:$0xf]
  %v340 = vld [vmem:[%s1 + $0x2d4] sm:$0xf]
  %v341 = vld [vmem:[%s1 + $0x2d8] sm:$0xf]
  %v342 = vld [vmem:[%s1 + $0x2dc] sm:$0xf]
  %v343 = vld [vmem:[%s1 + $0x2e0] sm:$0xf]
  %v344 = vld [vmem:[%s1 + $0x2e4] sm:$0xf]
  %v345 = vld [vmem:[%s1 + $0x2e8] sm:$0xf]
  %v346 = vld [vmem:[%s1 + $0x2ec] sm:$0xf]
  %v347 = vld [vmem:[%s1 + $0x2f0] sm:$0xf]
  %v348 = vld [vmem:[%s1 + $0x2f4] sm:$0xf]
  %v349 = vld [vmem:[%s1 + $0x2f8] sm:$0xf]
  %v350 = vld [vmem:[%s1 + $0x2fc] sm:$0xf]
  %v351 = vld [vmem:[%s1 + $0x300] sm:$0xf]
  %v352 = vld [vmem:[%s1 + $0x304] sm:$0xf]
  %v353 = vld [vmem:[%s1 + $0x308] sm:$0xf]
  %v354 = vld [vmem:[%s1 + $0x30c] sm:$0xf]
  %v355 = vld [vmem:[%s1 + $0x310] sm:$0xf]
  %v356 = vld [vmem:[%s1 + $0x314] sm:$0xf]
  %v357 = vld [vmem:[%s1 + $0x318] sm:$0xf]
  %v358 = vld [vmem:[%s1 + $0x31c] sm:$0xf]
  %v359 = vld [vmem:[%s1 + $0x320] sm:$0xf]
  %v360 = vld [vmem:[%s1 + $0x324] sm:$0xf]
  %v361 = vld [vmem:[%s1 + $0x328] sm:$0xf]
  %v362 = vld [vmem:[%s1 + $0x32c] sm:$0xf]
  %v363 = vld [vmem:[%s1 + $0x330] sm:$0xf]
  %v364 = vld [vmem:[%s1 + $0x334] sm:$0xf]
  %v365 = vld [vmem:[%s1 + $0x338] sm:$0xf]
  %v366 = vld [vmem:[%s1 + $0x33c] sm:$0xf]
  %v367 = vld [vmem:[%s1 + $0x340] sm:$0xf]
  %v368 = vld [vmem:[%s1 + $0x344] sm:$0xf]
  %v369 = vld [vmem:[%s1 + $0x348] sm:$0xf]
  %v370 = vld [vmem:[%s1 + $0x34c] sm:$0xf]
  %v371 = vld [vmem:[%s1 + $0x350] sm:$0xf]
  %v372 = vld [vmem:[%s1 + $0x354] sm:$0xf]
  %v373 = vld [vmem:[%s1 + $0x358] sm:$0xf]
  %v374 = vld [vmem:[%s1 + $0x35c] sm:$0xf]
  %v375 = vld [vmem:[%s1 + $0x360] sm:$0xf]
  %v376 = vld [vmem:[%s1 + $0x364] sm:$0xf]
  %v377 = vld [vmem:[%s1 + $0x368] sm:$0xf]
  %v378 = vld [vmem:[%s1 + $0x36c] sm:$0xf]
  %v379 = vld [vmem:[%s1 + $0x370] sm:$0xf]
  %v380 = vld [vmem:[%s1 + $0x374] sm:$0xf]
  %v381 = vld [vmem:[%s1 + $0x378] sm:$0xf]
  %v382 = vld [vmem:[%s1 + $0x37c] sm:$0xf]
  %v383 = vld [vmem:[%s1 + $0x380] sm:$0xf]
  %v384 = vld [vmem:[%s1 + $0x384] sm:$0xf]
  %v385 = vld [vmem:[%s1 + $0x388] sm:$0xf]
  %v386 = vld [vmem:[%s1 + $0x38c] sm:$0xf]
  %v387 = vld [vmem:[%s1 + $0x390] sm:$0xf]
  %v388 = vld [vmem:[%s1 + $0x394] sm:$0xf]
  %v389 = vld [vmem:[%s1 + $0x398] sm:$0xf]
  %v390 = vld [vmem:[%s1 + $0x39c] sm:$0xf]
  %v391 = vld [vmem:[%s1 + $0x3a0] sm:$0xf]
  %v392 = vld [vmem:[%s1 + $0x3a4] sm:$0xf]
  %v393 = vld [vmem:[%s1 + $0x3a8] sm:$0xf]
  %v394 = vld [vmem:[%s1 + $0x3ac] sm:$0xf]
  %v395 = vld [vmem:[%s1 + $0x3b0] sm:$0xf]
  %v396 = vld [vmem:[%s1 + $0x3b4] sm:$0xf]
  %v397 = vld [vmem:[%s1 + $0x3b8] sm:$0xf]
  %v398 = vld [vmem:[%s1 + $0x3bc] sm:$0xf]
  %v399 = vld [vmem:[%s1 + $0x3c0] sm:$0xf]
  %v400 = vld [vmem:[%s1 + $0x3c4] sm:$0xf]
  %v401 = vld [vmem:[%s1 + $0x3c8] sm:$0xf]
  %v402 = vld [vmem:[%s1 + $0x3cc] sm:$0xf]
  %v403 = vld [vmem:[%s1 + $0x3d0] sm:$0xf]
  %v404 = vld [vmem:[%s1 + $0x3d4] sm:$0xf]
  %v405 = vld [vmem:[%s1 + $0x3d8] sm:$0xf]
  %v406 = vld [vmem:[%s1 + $0x3dc] sm:$0xf]
  %v407 = vld [vmem:[%s1 + $0x3e0] sm:$0xf]
  %v408 = vld [vmem:[%s1 + $0x3e4] sm:$0xf]
  %v409 = vld [vmem:[%s1 + $0x3e8] sm:$0xf]
  %v410 = vld [vmem:[%s1 + $0x3ec] sm:$0xf]
  %v411 = vld [vmem:[%s1 + $0x3f0] sm:$0xf]
  %v412 = vld [vmem:[%s1 + $0x3f4] sm:$0xf]
  %v413 = vld [vmem:[%s1 + $0x3f8] sm:$0xf]
  %v414 = vld [vmem:[%s1 + $0x3fc] sm:$0xf]
  %v415 = vld [vmem:[%s1 + $0x400] sm:$0xf]
  %v416 = vld [vmem:[%s1 + $0x404] sm:$0xf]
  %v417 = vld [vmem:[%s1 + $0x408] sm:$0xf]
  %v418 = vld [vmem:[%s1 + $0x40c] sm:$0xf]
  %v419 = vld [vmem:[%s1 + $0x410] sm:$0xf]
  %v420 = vld [vmem:[%s1 + $0x414] sm:$0xf]
  %v421 = vld [vmem:[%s1 + $0x418] sm:$0xf]
  %v422 = vld [vmem:[%s1 + $0x41c] sm:$0xf]
  %v423 = vld [vmem:[%s1 + $0x420] sm:$0xf]
  %v424 = vld [vmem:[%s1 + $0x424] sm:$0xf]
  %v425 = vld [vmem:[%s1 + $0x428] sm:$0xf]
  %v426 = vld [vmem:[%s1 + $0x42c] sm:$0xf]
  %v427 = vld [vmem:[%s1 + $0x430] sm:$0xf]
  %v428 = vld [vmem:[%s1 + $0x434] sm:$0xf]
  %v429 = vld [vmem:[%s1 + $0x438] sm:$0xf]
  %v430 = vld [vmem:[%s1 + $0x43c] sm:$0xf]
  %v431 = vld [vmem:[%s1 + $0x440] sm:$0xf]
  %v432 = vld [vmem:[%s1 + $0x444] sm:$0xf]
  %v433 = vld [vmem:[%s1 + $0x448] sm:$0xf]
  %v434 = vld [vmem:[%s1 + $0x44c] sm:$0xf]
  %v435 = vld [vmem:[%s1 + $0x450] sm:$0xf]
  %v436 = vld [vmem:[%s1 + $0x454] sm:$0xf]
  %v437 = vld [vmem:[%s1 + $0x458] sm:$0xf]
  %v438 = vld [vmem:[%s1 + $0x45c] sm:$0xf]
  %v439 = vld [vmem:[%s1 + $0x460] sm:$0xf]
  %v440 = vld [vmem:[%s1 + $0x464] sm:$0xf]
  %v441 = vld [vmem:[%s1 + $0x468] sm:$0xf]
  %v442 = vld [vmem:[%s1 + $0x46c] sm:$0xf]
  %v443 = vld [vmem:[%s1 + $0x470] sm:$0xf]
  %v444 = vld [vmem:[%s1 + $0x474] sm:$0xf]
  %v445 = vld [vmem:[%s1 + $0x478] sm:$0xf]
  %v446 = vld [vmem:[%s1 + $0x47c] sm:$0xf]
  %v447 = vld [vmem:[%s2] sm:$0xff]
  %v448 = vlaneseq
  %v449 = vshrl.u32 %v448, 7
  %v450 = vsub.s32 0, %v449
  %v451 = vrot.slane %v447, %v450
  %v596 = vunpack.c.l.b16 %v15
  %v597 = vunpack.c.h.b16 %v15
  %v598 = vunpack.c.l.b16 %v16
  %v599 = vunpack.c.h.b16 %v16
  %v600 = vunpack.c.l.b16 %v17
  %v601 = vunpack.c.h.b16 %v17
  %v602 = vunpack.c.l.b16 %v18
  %v603 = vunpack.c.h.b16 %v18
  %v604 = vunpack.c.l.b16 %v19
  %v605 = vunpack.c.h.b16 %v19
  %v606 = vunpack.c.l.b16 %v20
  %v607 = vunpack.c.h.b16 %v20
  %v608 = vunpack.c.l.b16 %v21
  %v609 = vunpack.c.h.b16 %v21
  %v610 = vunpack.c.l.b16 %v22
  %v611 = vunpack.c.h.b16 %v22
  %v612 = vunpack.c.l.b16 %v23
  %v613 = vunpack.c.h.b16 %v23
  %v614 = vunpack.c.l.b16 %v24
  %v615 = vunpack.c.h.b16 %v24
  %v616 = vunpack.c.l.b16 %v25
  %v617 = vunpack.c.h.b16 %v25
  %v618 = vunpack.c.l.b16 %v26
  %v619 = vunpack.c.h.b16 %v26
  %v620 = vunpack.c.l.b16 %v27
  %v621 = vunpack.c.h.b16 %v27
  %v622 = vunpack.c.l.b16 %v28
  %v623 = vunpack.c.h.b16 %v28
  %v624 = vunpack.c.l.b16 %v29
  %v625 = vunpack.c.h.b16 %v29
  %v626 = vunpack.c.l.b16 %v30
  %v627 = vunpack.c.h.b16 %v30
  %v628 = vunpack.c.l.b16 %v31
  %v629 = vunpack.c.h.b16 %v31
  %v630 = vunpack.c.l.b16 %v32
  %v631 = vunpack.c.h.b16 %v32
  %v632 = vunpack.c.l.b16 %v33
  %v633 = vunpack.c.h.b16 %v33
  %v634 = vunpack.c.l.b16 %v34
  %v635 = vunpack.c.h.b16 %v34
  %v636 = vunpack.c.l.b16 %v35
  %v637 = vunpack.c.h.b16 %v35
  %v638 = vunpack.c.l.b16 %v36
  %v639 = vunpack.c.h.b16 %v36
  %v640 = vunpack.c.l.b16 %v37
  %v641 = vunpack.c.h.b16 %v37
  %v642 = vunpack.c.l.b16 %v38
  %v643 = vunpack.c.h.b16 %v38
  %v644 = vunpack.c.l.b16 %v39
  %v645 = vunpack.c.h.b16 %v39
  %v646 = vunpack.c.l.b16 %v40
  %v647 = vunpack.c.h.b16 %v40
  %v648 = vunpack.c.l.b16 %v41
  %v649 = vunpack.c.h.b16 %v41
  %v650 = vunpack.c.l.b16 %v42
  %v651 = vunpack.c.h.b16 %v42
  %v652 = vunpack.c.l.b16 %v43
  %v653 = vunpack.c.h.b16 %v43
  %v654 = vunpack.c.l.b16 %v44
  %v655 = vunpack.c.h.b16 %v44
  %v656 = vunpack.c.l.b16 %v45
  %v657 = vunpack.c.h.b16 %v45
  %v658 = vunpack.c.l.b16 %v46
  %v659 = vunpack.c.h.b16 %v46
  %v660 = vunpack.c.l.b16 %v47
  %v661 = vunpack.c.h.b16 %v47
  %v662 = vunpack.c.l.b16 %v48
  %v663 = vunpack.c.h.b16 %v48
  %v664 = vunpack.c.l.b16 %v49
  %v665 = vunpack.c.h.b16 %v49
  %v666 = vunpack.c.l.b16 %v50
  %v667 = vunpack.c.h.b16 %v50
  %v668 = vunpack.c.l.b16 %v51
  %v669 = vunpack.c.h.b16 %v51
  %v670 = vunpack.c.l.b16 %v52
  %v671 = vunpack.c.h.b16 %v52
  %v672 = vunpack.c.l.b16 %v53
  %v673 = vunpack.c.h.b16 %v53
  %v674 = vunpack.c.l.b16 %v54
  %v675 = vunpack.c.h.b16 %v54
  %v676 = vunpack.c.l.b16 %v55
  %v677 = vunpack.c.h.b16 %v55
  %v678 = vunpack.c.l.b16 %v56
  %v679 = vunpack.c.h.b16 %v56
  %v680 = vunpack.c.l.b16 %v57
  %v681 = vunpack.c.h.b16 %v57
  %v682 = vunpack.c.l.b16 %v58
  %v683 = vunpack.c.h.b16 %v58
  %v684 = vunpack.c.l.b16 %v59
  %v685 = vunpack.c.h.b16 %v59
  %v686 = vunpack.c.l.b16 %v60
  %v687 = vunpack.c.h.b16 %v60
  %v688 = vunpack.c.l.b16 %v61
  %v689 = vunpack.c.h.b16 %v61
  %v690 = vunpack.c.l.b16 %v62
  %v691 = vunpack.c.h.b16 %v62
  %v692 = vunpack.c.l.b16 %v63
  %v693 = vunpack.c.h.b16 %v63
  %v694 = vunpack.c.l.b16 %v64
  %v695 = vunpack.c.h.b16 %v64
  %v696 = vunpack.c.l.b16 %v65
  %v697 = vunpack.c.h.b16 %v65
  %v698 = vunpack.c.l.b16 %v66
  %v699 = vunpack.c.h.b16 %v66
  %v700 = vunpack.c.l.b16 %v67
  %v701 = vunpack.c.h.b16 %v67
  %v702 = vunpack.c.l.b16 %v68
  %v703 = vunpack.c.h.b16 %v68
  %v704 = vunpack.c.l.b16 %v69
  %v705 = vunpack.c.h.b16 %v69
  %v706 = vunpack.c.l.b16 %v70
  %v707 = vunpack.c.h.b16 %v70
  %v708 = vunpack.c.l.b16 %v71
  %v709 = vunpack.c.h.b16 %v71
  %v710 = vunpack.c.l.b16 %v72
  %v711 = vunpack.c.h.b16 %v72
  %v712 = vunpack.c.l.b16 %v73
  %v713 = vunpack.c.h.b16 %v73
  %v714 = vunpack.c.l.b16 %v74
  %v715 = vunpack.c.h.b16 %v74
  %v716 = vunpack.c.l.b16 %v75
  %v717 = vunpack.c.h.b16 %v75
  %v718 = vunpack.c.l.b16 %v76
  %v719 = vunpack.c.h.b16 %v76
  %v720 = vunpack.c.l.b16 %v77
  %v721 = vunpack.c.h.b16 %v77
  %v722 = vunpack.c.l.b16 %v78
  %v723 = vunpack.c.h.b16 %v78
  %v724 = vunpack.c.l.b16 %v79
  %v725 = vunpack.c.h.b16 %v79
  %v726 = vunpack.c.l.b16 %v80
  %v727 = vunpack.c.h.b16 %v80
  %v728 = vunpack.c.l.b16 %v81
  %v729 = vunpack.c.h.b16 %v81
  %v730 = vunpack.c.l.b16 %v82
  %v731 = vunpack.c.h.b16 %v82
  %v732 = vunpack.c.l.b16 %v83
  %v733 = vunpack.c.h.b16 %v83
  %v734 = vunpack.c.l.b16 %v84
  %v735 = vunpack.c.h.b16 %v84
  %v736 = vunpack.c.l.b16 %v85
  %v737 = vunpack.c.h.b16 %v85
  %v738 = vunpack.c.l.b16 %v86
  %v739 = vunpack.c.h.b16 %v86
  %v740 = vunpack.c.l.b16 %v87
  %v741 = vunpack.c.h.b16 %v87
  %v742 = vunpack.c.l.b16 %v88
  %v743 = vunpack.c.h.b16 %v88
  %v744 = vunpack.c.l.b16 %v89
  %v745 = vunpack.c.h.b16 %v89
  %v746 = vunpack.c.l.b16 %v90
  %v747 = vunpack.c.h.b16 %v90
  %v748 = vunpack.c.l.b16 %v91
  %v749 = vunpack.c.h.b16 %v91
  %v750 = vunpack.c.l.b16 %v92
  %v751 = vunpack.c.h.b16 %v92
  %v752 = vunpack.c.l.b16 %v93
  %v753 = vunpack.c.h.b16 %v93
  %v754 = vunpack.c.l.b16 %v94
  %v755 = vunpack.c.h.b16 %v94
  %v756 = vunpack.c.l.b16 %v95
  %v757 = vunpack.c.h.b16 %v95
  %v758 = vunpack.c.l.b16 %v96
  %v759 = vunpack.c.h.b16 %v96
  %v760 = vunpack.c.l.b16 %v97
  %v761 = vunpack.c.h.b16 %v97
  %v762 = vunpack.c.l.b16 %v98
  %v763 = vunpack.c.h.b16 %v98
  %v764 = vunpack.c.l.b16 %v99
  %v765 = vunpack.c.h.b16 %v99
  %v766 = vunpack.c.l.b16 %v100
  %v767 = vunpack.c.h.b16 %v100
  %v768 = vunpack.c.l.b16 %v101
  %v769 = vunpack.c.h.b16 %v101
  %v770 = vunpack.c.l.b16 %v102
  %v771 = vunpack.c.h.b16 %v102
  %v772 = vunpack.c.l.b16 %v103
  %v773 = vunpack.c.h.b16 %v103
  %v774 = vunpack.c.l.b16 %v104
  %v775 = vunpack.c.h.b16 %v104
  %v776 = vunpack.c.l.b16 %v105
  %v777 = vunpack.c.h.b16 %v105
  %v778 = vunpack.c.l.b16 %v106
  %v779 = vunpack.c.h.b16 %v106
  %v780 = vunpack.c.l.b16 %v107
  %v781 = vunpack.c.h.b16 %v107
  %v782 = vunpack.c.l.b16 %v108
  %v783 = vunpack.c.h.b16 %v108
  %v784 = vunpack.c.l.b16 %v109
  %v785 = vunpack.c.h.b16 %v109
  %v786 = vunpack.c.l.b16 %v110
  %v787 = vunpack.c.h.b16 %v110
  %v788 = vunpack.c.l.b16 %v111
  %v789 = vunpack.c.h.b16 %v111
  %v790 = vunpack.c.l.b16 %v112
  %v791 = vunpack.c.h.b16 %v112
  %v792 = vunpack.c.l.b16 %v113
  %v793 = vunpack.c.h.b16 %v113
  %v794 = vunpack.c.l.b16 %v114
  %v795 = vunpack.c.h.b16 %v114
  %v796 = vunpack.c.l.b16 %v115
  %v797 = vunpack.c.h.b16 %v115
  %v798 = vunpack.c.l.b16 %v116
  %v799 = vunpack.c.h.b16 %v116
  %v800 = vunpack.c.l.b16 %v117
  %v801 = vunpack.c.h.b16 %v117
  %v802 = vunpack.c.l.b16 %v118
  %v803 = vunpack.c.h.b16 %v118
  %v804 = vunpack.c.l.b16 %v119
  %v805 = vunpack.c.h.b16 %v119
  %v806 = vunpack.c.l.b16 %v120
  %v807 = vunpack.c.h.b16 %v120
  %v808 = vunpack.c.l.b16 %v121
  %v809 = vunpack.c.h.b16 %v121
  %v810 = vunpack.c.l.b16 %v122
  %v811 = vunpack.c.h.b16 %v122
  %v812 = vunpack.c.l.b16 %v123
  %v813 = vunpack.c.h.b16 %v123
  %v814 = vunpack.c.l.b16 %v124
  %v815 = vunpack.c.h.b16 %v124
  %v816 = vunpack.c.l.b16 %v125
  %v817 = vunpack.c.h.b16 %v125
  %v818 = vunpack.c.l.b16 %v126
  %v819 = vunpack.c.h.b16 %v126
  %v820 = vunpack.c.l.b16 %v127
  %v821 = vunpack.c.h.b16 %v127
  %v822 = vunpack.c.l.b16 %v128
  %v823 = vunpack.c.h.b16 %v128
  %v824 = vunpack.c.l.b16 %v129
  %v825 = vunpack.c.h.b16 %v129
  %v826 = vunpack.c.l.b16 %v130
  %v827 = vunpack.c.h.b16 %v130
  %v828 = vunpack.c.l.b16 %v131
  %v829 = vunpack.c.h.b16 %v131
  %v830 = vunpack.c.l.b16 %v132
  %v831 = vunpack.c.h.b16 %v132
  %v832 = vunpack.c.l.b16 %v133
  %v833 = vunpack.c.h.b16 %v133
  %v834 = vunpack.c.l.b16 %v134
  %v835 = vunpack.c.h.b16 %v134
  %v836 = vunpack.c.l.b16 %v135
  %v837 = vunpack.c.h.b16 %v135
  %v838 = vunpack.c.l.b16 %v136
  %v839 = vunpack.c.h.b16 %v136
  %v840 = vunpack.c.l.b16 %v137
  %v841 = vunpack.c.h.b16 %v137
  %v842 = vunpack.c.l.b16 %v138
  %v843 = vunpack.c.h.b16 %v138
  %v844 = vunpack.c.l.b16 %v139
  %v845 = vunpack.c.h.b16 %v139
  %v846 = vunpack.c.l.b16 %v140
  %v847 = vunpack.c.h.b16 %v140
  %v848 = vunpack.c.l.b16 %v141
  %v849 = vunpack.c.h.b16 %v141
  %v850 = vunpack.c.l.b16 %v142
  %v851 = vunpack.c.h.b16 %v142
  %v852 = vunpack.c.l.b16 %v143
  %v853 = vunpack.c.h.b16 %v143
  %v854 = vunpack.c.l.b16 %v144
  %v855 = vunpack.c.h.b16 %v144
  %v856 = vunpack.c.l.b16 %v145
  %v857 = vunpack.c.h.b16 %v145
  %v858 = vunpack.c.l.b16 %v146
  %v859 = vunpack.c.h.b16 %v146
  %v860 = vunpack.c.l.b16 %v147
  %v861 = vunpack.c.h.b16 %v147
  %v862 = vunpack.c.l.b16 %v148
  %v863 = vunpack.c.h.b16 %v148
  %v864 = vunpack.c.l.b16 %v149
  %v865 = vunpack.c.h.b16 %v149
  %v866 = vunpack.c.l.b16 %v150
  %v867 = vunpack.c.h.b16 %v150
  %v868 = vunpack.c.l.b16 %v151
  %v869 = vunpack.c.h.b16 %v151
  %v870 = vunpack.c.l.b16 %v152
  %v871 = vunpack.c.h.b16 %v152
  %v872 = vunpack.c.l.b16 %v153
  %v873 = vunpack.c.h.b16 %v153
  %v874 = vunpack.c.l.b16 %v154
  %v875 = vunpack.c.h.b16 %v154
  %v876 = vunpack.c.l.b16 %v155
  %v877 = vunpack.c.h.b16 %v155
  %v878 = vunpack.c.l.b16 %v156
  %v879 = vunpack.c.h.b16 %v156
  %v880 = vunpack.c.l.b16 %v157
  %v881 = vunpack.c.h.b16 %v157
  %v882 = vunpack.c.l.b16 %v158
  %v883 = vunpack.c.h.b16 %v158
  %v884 = vpack.c.b16 %v614, %v596
  %v885 = vpack.c.b16 %v615, %v597
  %v886 = vpack.c.b16 %v616, %v598
  %v887 = vpack.c.b16 %v617, %v599
  %v888 = vpack.c.b16 %v618, %v600
  %v889 = vpack.c.b16 %v619, %v601
  %v890 = vpack.c.b16 %v620, %v602
  %v891 = vpack.c.b16 %v621, %v603
  %v892 = vpack.c.b16 %v622, %v604
  %v893 = vpack.c.b16 %v623, %v605
  %v894 = vpack.c.b16 %v624, %v606
  %v895 = vpack.c.b16 %v625, %v607
  %v896 = vpack.c.b16 %v626, %v608
  %v897 = vpack.c.b16 %v627, %v609
  %v898 = vpack.c.b16 %v628, %v610
  %v899 = vpack.c.b16 %v629, %v611
  %v900 = vpack.c.b16 %v630, %v612
  %v901 = vpack.c.b16 %v631, %v613
  %v902 = vpack.c.b16 %v650, %v632
  %v903 = vpack.c.b16 %v651, %v633
  %v904 = vpack.c.b16 %v652, %v634
  %v905 = vpack.c.b16 %v653, %v635
  %v906 = vpack.c.b16 %v654, %v636
  %v907 = vpack.c.b16 %v655, %v637
  %v908 = vpack.c.b16 %v656, %v638
  %v909 = vpack.c.b16 %v657, %v639
  %v910 = vpack.c.b16 %v658, %v640
  %v911 = vpack.c.b16 %v659, %v641
  %v912 = vpack.c.b16 %v660, %v642
  %v913 = vpack.c.b16 %v661, %v643
  %v914 = vpack.c.b16 %v662, %v644
  %v915 = vpack.c.b16 %v663, %v645
  %v916 = vpack.c.b16 %v664, %v646
  %v917 = vpack.c.b16 %v665, %v647
  %v918 = vpack.c.b16 %v666, %v648
  %v919 = vpack.c.b16 %v667, %v649
  %v920 = vpack.c.b16 %v686, %v668
  %v921 = vpack.c.b16 %v687, %v669
  %v922 = vpack.c.b16 %v688, %v670
  %v923 = vpack.c.b16 %v689, %v671
  %v924 = vpack.c.b16 %v690, %v672
  %v925 = vpack.c.b16 %v691, %v673
  %v926 = vpack.c.b16 %v692, %v674
  %v927 = vpack.c.b16 %v693, %v675
  %v928 = vpack.c.b16 %v694, %v676
  %v929 = vpack.c.b16 %v695, %v677
  %v930 = vpack.c.b16 %v696, %v678
  %v931 = vpack.c.b16 %v697, %v679
  %v932 = vpack.c.b16 %v698, %v680
  %v933 = vpack.c.b16 %v699, %v681
  %v934 = vpack.c.b16 %v700, %v682
  %v935 = vpack.c.b16 %v701, %v683
  %v936 = vpack.c.b16 %v702, %v684
  %v937 = vpack.c.b16 %v703, %v685
  %v938 = vpack.c.b16 %v722, %v704
  %v939 = vpack.c.b16 %v723, %v705
  %v940 = vpack.c.b16 %v724, %v706
  %v941 = vpack.c.b16 %v725, %v707
  %v942 = vpack.c.b16 %v726, %v708
  %v943 = vpack.c.b16 %v727, %v709
  %v944 = vpack.c.b16 %v728, %v710
  %v945 = vpack.c.b16 %v729, %v711
  %v946 = vpack.c.b16 %v730, %v712
  %v947 = vpack.c.b16 %v731, %v713
  %v948 = vpack.c.b16 %v732, %v714
  %v949 = vpack.c.b16 %v733, %v715
  %v950 = vpack.c.b16 %v734, %v716
  %v951 = vpack.c.b16 %v735, %v717
  %v952 = vpack.c.b16 %v736, %v718
  %v953 = vpack.c.b16 %v737, %v719
  %v954 = vpack.c.b16 %v738, %v720
  %v955 = vpack.c.b16 %v739, %v721
  %v956 = vpack.c.b16 %v758, %v740
  %v957 = vpack.c.b16 %v759, %v741
  %v958 = vpack.c.b16 %v760, %v742
  %v959 = vpack.c.b16 %v761, %v743
  %v960 = vpack.c.b16 %v762, %v744
  %v961 = vpack.c.b16 %v763, %v745
  %v962 = vpack.c.b16 %v764, %v746
  %v963 = vpack.c.b16 %v765, %v747
  %v964 = vpack.c.b16 %v766, %v748
  %v965 = vpack.c.b16 %v767, %v749
  %v966 = vpack.c.b16 %v768, %v750
  %v967 = vpack.c.b16 %v769, %v751
  %v968 = vpack.c.b16 %v770, %v752
  %v969 = vpack.c.b16 %v771, %v753
  %v970 = vpack.c.b16 %v772, %v754
  %v971 = vpack.c.b16 %v773, %v755
  %v972 = vpack.c.b16 %v774, %v756
  %v973 = vpack.c.b16 %v775, %v757
  %v974 = vpack.c.b16 %v794, %v776
  %v975 = vpack.c.b16 %v795, %v777
  %v976 = vpack.c.b16 %v796, %v778
  %v977 = vpack.c.b16 %v797, %v779
  %v978 = vpack.c.b16 %v798, %v780
  %v979 = vpack.c.b16 %v799, %v781
  %v980 = vpack.c.b16 %v800, %v782
  %v981 = vpack.c.b16 %v801, %v783
  %v982 = vpack.c.b16 %v802, %v784
  %v983 = vpack.c.b16 %v803, %v785
  %v984 = vpack.c.b16 %v804, %v786
  %v985 = vpack.c.b16 %v805, %v787
  %v986 = vpack.c.b16 %v806, %v788
  %v987 = vpack.c.b16 %v807, %v789
  %v988 = vpack.c.b16 %v808, %v790
  %v989 = vpack.c.b16 %v809, %v791
  %v990 = vpack.c.b16 %v810, %v792
  %v991 = vpack.c.b16 %v811, %v793
  %v992 = vpack.c.b16 %v830, %v812
  %v993 = vpack.c.b16 %v831, %v813
  %v994 = vpack.c.b16 %v832, %v814
  %v995 = vpack.c.b16 %v833, %v815
  %v996 = vpack.c.b16 %v834, %v816
  %v997 = vpack.c.b16 %v835, %v817
  %v998 = vpack.c.b16 %v836, %v818
  %v999 = vpack.c.b16 %v837, %v819
  %v1000 = vpack.c.b16 %v838, %v820
  %v1001 = vpack.c.b16 %v839, %v821
  %v1002 = vpack.c.b16 %v840, %v822
  %v1003 = vpack.c.b16 %v841, %v823
  %v1004 = vpack.c.b16 %v842, %v824
  %v1005 = vpack.c.b16 %v843, %v825
  %v1006 = vpack.c.b16 %v844, %v826
  %v1007 = vpack.c.b16 %v845, %v827
  %v1008 = vpack.c.b16 %v846, %v828
  %v1009 = vpack.c.b16 %v847, %v829
  %v1010 = vpack.c.b16 %v866, %v848
  %v1011 = vpack.c.b16 %v867, %v849
  %v1012 = vpack.c.b16 %v868, %v850
  %v1013 = vpack.c.b16 %v869, %v851
  %v1014 = vpack.c.b16 %v870, %v852
  %v1015 = vpack.c.b16 %v871, %v853
  %v1016 = vpack.c.b16 %v872, %v854
  %v1017 = vpack.c.b16 %v873, %v855
  %v1018 = vpack.c.b16 %v874, %v856
  %v1019 = vpack.c.b16 %v875, %v857
  %v1020 = vpack.c.b16 %v876, %v858
  %v1021 = vpack.c.b16 %v877, %v859
  %v1022 = vpack.c.b16 %v878, %v860
  %v1023 = vpack.c.b16 %v879, %v861
  %v1024 = vpack.c.b16 %v880, %v862
  %v1025 = vpack.c.b16 %v881, %v863
  %v1026 = vpack.c.b16 %v882, %v864
  %v1027 = vpack.c.b16 %v883, %v865
  %v1460 = vunpack.c.l.b16 %v159
  %v1461 = vunpack.c.l.b16 %v160
  %v1462 = vunpack.c.l.b16 %v161
  %v1463 = vunpack.c.l.b16 %v162
  %v1464 = vunpack.c.l.b16 %v163
  %v1465 = vunpack.c.l.b16 %v164
  %v1466 = vunpack.c.l.b16 %v165
  %v1467 = vunpack.c.l.b16 %v166
  %v1468 = vunpack.c.l.b16 %v167
  %v1469 = vunpack.c.l.b16 %v168
  %v1470 = vunpack.c.l.b16 %v169
  %v1471 = vunpack.c.l.b16 %v170
  %v1472 = vunpack.c.l.b16 %v171
  %v1473 = vunpack.c.l.b16 %v172
  %v1474 = vunpack.c.l.b16 %v173
  %v1475 = vunpack.c.l.b16 %v174
  %v1476 = vunpack.c.l.b16 %v175
  %v1477 = vunpack.c.l.b16 %v176
  %v1478 = vunpack.c.l.b16 %v177
  %v1479 = vunpack.c.l.b16 %v178
  %v1480 = vunpack.c.l.b16 %v179
  %v1481 = vunpack.c.l.b16 %v180
  %v1482 = vunpack.c.l.b16 %v181
  %v1483 = vunpack.c.l.b16 %v182
  %v1484 = vunpack.c.l.b16 %v183
  %v1485 = vunpack.c.l.b16 %v184
  %v1486 = vunpack.c.l.b16 %v185
  %v1487 = vunpack.c.l.b16 %v186
  %v1488 = vunpack.c.l.b16 %v187
  %v1489 = vunpack.c.l.b16 %v188
  %v1490 = vunpack.c.l.b16 %v189
  %v1491 = vunpack.c.l.b16 %v190
  %v1492 = vunpack.c.l.b16 %v191
  %v1493 = vunpack.c.l.b16 %v192
  %v1494 = vunpack.c.l.b16 %v193
  %v1495 = vunpack.c.l.b16 %v194
  %v1496 = vunpack.c.l.b16 %v195
  %v1497 = vunpack.c.l.b16 %v196
  %v1498 = vunpack.c.l.b16 %v197
  %v1499 = vunpack.c.l.b16 %v198
  %v1500 = vunpack.c.l.b16 %v199
  %v1501 = vunpack.c.l.b16 %v200
  %v1502 = vunpack.c.l.b16 %v201
  %v1503 = vunpack.c.l.b16 %v202
  %v1504 = vunpack.c.l.b16 %v203
  %v1505 = vunpack.c.l.b16 %v204
  %v1506 = vunpack.c.l.b16 %v205
  %v1507 = vunpack.c.l.b16 %v206
  %v1508 = vunpack.c.l.b16 %v207
  %v1509 = vunpack.c.l.b16 %v208
  %v1510 = vunpack.c.l.b16 %v209
  %v1511 = vunpack.c.l.b16 %v210
  %v1512 = vunpack.c.l.b16 %v211
  %v1513 = vunpack.c.l.b16 %v212
  %v1514 = vunpack.c.l.b16 %v213
  %v1515 = vunpack.c.l.b16 %v214
  %v1516 = vunpack.c.l.b16 %v215
  %v1517 = vunpack.c.l.b16 %v216
  %v1518 = vunpack.c.l.b16 %v217
  %v1519 = vunpack.c.l.b16 %v218
  %v1520 = vunpack.c.l.b16 %v219
  %v1521 = vunpack.c.l.b16 %v220
  %v1522 = vunpack.c.l.b16 %v221
  %v1523 = vunpack.c.l.b16 %v222
  %v1524 = vunpack.c.l.b16 %v223
  %v1525 = vunpack.c.l.b16 %v224
  %v1526 = vunpack.c.l.b16 %v225
  %v1527 = vunpack.c.l.b16 %v226
  %v1528 = vunpack.c.l.b16 %v227
  %v1529 = vunpack.c.l.b16 %v228
  %v1530 = vunpack.c.l.b16 %v229
  %v1531 = vunpack.c.l.b16 %v230
  %v1532 = vunpack.c.l.b16 %v231
  %v1533 = vunpack.c.l.b16 %v232
  %v1534 = vunpack.c.l.b16 %v233
  %v1535 = vunpack.c.l.b16 %v234
  %v1536 = vunpack.c.l.b16 %v235
  %v1537 = vunpack.c.l.b16 %v236
  %v1538 = vunpack.c.l.b16 %v237
  %v1539 = vunpack.c.l.b16 %v238
  %v1540 = vunpack.c.l.b16 %v239
  %v1541 = vunpack.c.l.b16 %v240
  %v1542 = vunpack.c.l.b16 %v241
  %v1543 = vunpack.c.l.b16 %v242
  %v1544 = vunpack.c.l.b16 %v243
  %v1545 = vunpack.c.l.b16 %v244
  %v1546 = vunpack.c.l.b16 %v245
  %v1547 = vunpack.c.l.b16 %v246
  %v1548 = vunpack.c.l.b16 %v247
  %v1549 = vunpack.c.l.b16 %v248
  %v1550 = vunpack.c.l.b16 %v249
  %v1551 = vunpack.c.l.b16 %v250
  %v1552 = vunpack.c.l.b16 %v251
  %v1553 = vunpack.c.l.b16 %v252
  %v1554 = vunpack.c.l.b16 %v253
  %v1555 = vunpack.c.l.b16 %v254
  %v1556 = vunpack.c.l.b16 %v255
  %v1557 = vunpack.c.l.b16 %v256
  %v1558 = vunpack.c.l.b16 %v257
  %v1559 = vunpack.c.l.b16 %v258
  %v1560 = vunpack.c.l.b16 %v259
  %v1561 = vunpack.c.l.b16 %v260
  %v1562 = vunpack.c.l.b16 %v261
  %v1563 = vunpack.c.l.b16 %v262
  %v1564 = vunpack.c.l.b16 %v263
  %v1565 = vunpack.c.l.b16 %v264
  %v1566 = vunpack.c.l.b16 %v265
  %v1567 = vunpack.c.l.b16 %v266
  %v1568 = vunpack.c.l.b16 %v267
  %v1569 = vunpack.c.l.b16 %v268
  %v1570 = vunpack.c.l.b16 %v269
  %v1571 = vunpack.c.l.b16 %v270
  %v1572 = vunpack.c.l.b16 %v271
  %v1573 = vunpack.c.l.b16 %v272
  %v1574 = vunpack.c.l.b16 %v273
  %v1575 = vunpack.c.l.b16 %v274
  %v1576 = vunpack.c.l.b16 %v275
  %v1577 = vunpack.c.l.b16 %v276
  %v1578 = vunpack.c.l.b16 %v277
  %v1579 = vunpack.c.l.b16 %v278
  %v1580 = vunpack.c.l.b16 %v279
  %v1581 = vunpack.c.l.b16 %v280
  %v1582 = vunpack.c.l.b16 %v281
  %v1583 = vunpack.c.l.b16 %v282
  %v1584 = vunpack.c.l.b16 %v283
  %v1585 = vunpack.c.l.b16 %v284
  %v1586 = vunpack.c.l.b16 %v285
  %v1587 = vunpack.c.l.b16 %v286
  %v1588 = vunpack.c.l.b16 %v287
  %v1589 = vunpack.c.l.b16 %v288
  %v1590 = vunpack.c.l.b16 %v289
  %v1591 = vunpack.c.l.b16 %v290
  %v1592 = vunpack.c.l.b16 %v291
  %v1593 = vunpack.c.l.b16 %v292
  %v1594 = vunpack.c.l.b16 %v293
  %v1595 = vunpack.c.l.b16 %v294
  %v1596 = vunpack.c.l.b16 %v295
  %v1597 = vunpack.c.l.b16 %v296
  %v1598 = vunpack.c.l.b16 %v297
  %v1599 = vunpack.c.l.b16 %v298
  %v1600 = vunpack.c.l.b16 %v299
  %v1601 = vunpack.c.l.b16 %v300
  %v1602 = vunpack.c.l.b16 %v301
  %v1603 = vunpack.c.l.b16 %v302
  %v1604 = vunpack.c.l.b16 %v303
  %v1605 = vunpack.c.l.b16 %v304
  %v1606 = vunpack.c.l.b16 %v305
  %v1607 = vunpack.c.l.b16 %v306
  %v1608 = vunpack.c.l.b16 %v307
  %v1609 = vunpack.c.l.b16 %v308
  %v1610 = vunpack.c.l.b16 %v309
  %v1611 = vunpack.c.l.b16 %v310
  %v1612 = vunpack.c.l.b16 %v311
  %v1613 = vunpack.c.l.b16 %v312
  %v1614 = vunpack.c.l.b16 %v313
  %v1615 = vunpack.c.l.b16 %v314
  %v1616 = vunpack.c.l.b16 %v315
  %v1617 = vunpack.c.l.b16 %v316
  %v1618 = vunpack.c.l.b16 %v317
  %v1619 = vunpack.c.l.b16 %v318
  %v1620 = vunpack.c.l.b16 %v319
  %v1621 = vunpack.c.l.b16 %v320
  %v1622 = vunpack.c.l.b16 %v321
  %v1623 = vunpack.c.l.b16 %v322
  %v1624 = vunpack.c.l.b16 %v323
  %v1625 = vunpack.c.l.b16 %v324
  %v1626 = vunpack.c.l.b16 %v325
  %v1627 = vunpack.c.l.b16 %v326
  %v1628 = vunpack.c.l.b16 %v327
  %v1629 = vunpack.c.l.b16 %v328
  %v1630 = vunpack.c.l.b16 %v329
  %v1631 = vunpack.c.l.b16 %v330
  %v1632 = vunpack.c.l.b16 %v331
  %v1633 = vunpack.c.l.b16 %v332
  %v1634 = vunpack.c.l.b16 %v333
  %v1635 = vunpack.c.l.b16 %v334
  %v1636 = vunpack.c.l.b16 %v335
  %v1637 = vunpack.c.l.b16 %v336
  %v1638 = vunpack.c.l.b16 %v337
  %v1639 = vunpack.c.l.b16 %v338
  %v1640 = vunpack.c.l.b16 %v339
  %v1641 = vunpack.c.l.b16 %v340
  %v1642 = vunpack.c.l.b16 %v341
  %v1643 = vunpack.c.l.b16 %v342
  %v1644 = vunpack.c.l.b16 %v343
  %v1645 = vunpack.c.l.b16 %v344
  %v1646 = vunpack.c.l.b16 %v345
  %v1647 = vunpack.c.l.b16 %v346
  %v1648 = vunpack.c.l.b16 %v347
  %v1649 = vunpack.c.l.b16 %v348
  %v1650 = vunpack.c.l.b16 %v349
  %v1651 = vunpack.c.l.b16 %v350
  %v1652 = vunpack.c.l.b16 %v351
  %v1653 = vunpack.c.l.b16 %v352
  %v1654 = vunpack.c.l.b16 %v353
  %v1655 = vunpack.c.l.b16 %v354
  %v1656 = vunpack.c.l.b16 %v355
  %v1657 = vunpack.c.l.b16 %v356
  %v1658 = vunpack.c.l.b16 %v357
  %v1659 = vunpack.c.l.b16 %v358
  %v1660 = vunpack.c.l.b16 %v359
  %v1661 = vunpack.c.l.b16 %v360
  %v1662 = vunpack.c.l.b16 %v361
  %v1663 = vunpack.c.l.b16 %v362
  %v1664 = vunpack.c.l.b16 %v363
  %v1665 = vunpack.c.l.b16 %v364
  %v1666 = vunpack.c.l.b16 %v365
  %v1667 = vunpack.c.l.b16 %v366
  %v1668 = vunpack.c.l.b16 %v367
  %v1669 = vunpack.c.l.b16 %v368
  %v1670 = vunpack.c.l.b16 %v369
  %v1671 = vunpack.c.l.b16 %v370
  %v1672 = vunpack.c.l.b16 %v371
  %v1673 = vunpack.c.l.b16 %v372
  %v1674 = vunpack.c.l.b16 %v373
  %v1675 = vunpack.c.l.b16 %v374
  %v1676 = vunpack.c.l.b16 %v375
  %v1677 = vunpack.c.l.b16 %v376
  %v1678 = vunpack.c.l.b16 %v377
  %v1679 = vunpack.c.l.b16 %v378
  %v1680 = vunpack.c.l.b16 %v379
  %v1681 = vunpack.c.l.b16 %v380
  %v1682 = vunpack.c.l.b16 %v381
  %v1683 = vunpack.c.l.b16 %v382
  %v1684 = vunpack.c.l.b16 %v383
  %v1685 = vunpack.c.l.b16 %v384
  %v1686 = vunpack.c.l.b16 %v385
  %v1687 = vunpack.c.l.b16 %v386
  %v1688 = vunpack.c.l.b16 %v387
  %v1689 = vunpack.c.l.b16 %v388
  %v1690 = vunpack.c.l.b16 %v389
  %v1691 = vunpack.c.l.b16 %v390
  %v1692 = vunpack.c.l.b16 %v391
  %v1693 = vunpack.c.l.b16 %v392
  %v1694 = vunpack.c.l.b16 %v393
  %v1695 = vunpack.c.l.b16 %v394
  %v1696 = vunpack.c.l.b16 %v395
  %v1697 = vunpack.c.l.b16 %v396
  %v1698 = vunpack.c.l.b16 %v397
  %v1699 = vunpack.c.l.b16 %v398
  %v1700 = vunpack.c.l.b16 %v399
  %v1701 = vunpack.c.l.b16 %v400
  %v1702 = vunpack.c.l.b16 %v401
  %v1703 = vunpack.c.l.b16 %v402
  %v1704 = vunpack.c.l.b16 %v403
  %v1705 = vunpack.c.l.b16 %v404
  %v1706 = vunpack.c.l.b16 %v405
  %v1707 = vunpack.c.l.b16 %v406
  %v1708 = vunpack.c.l.b16 %v407
  %v1709 = vunpack.c.l.b16 %v408
  %v1710 = vunpack.c.l.b16 %v409
  %v1711 = vunpack.c.l.b16 %v410
  %v1712 = vunpack.c.l.b16 %v411
  %v1713 = vunpack.c.l.b16 %v412
  %v1714 = vunpack.c.l.b16 %v413
  %v1715 = vunpack.c.l.b16 %v414
  %v1716 = vunpack.c.l.b16 %v415
  %v1717 = vunpack.c.l.b16 %v416
  %v1718 = vunpack.c.l.b16 %v417
  %v1719 = vunpack.c.l.b16 %v418
  %v1720 = vunpack.c.l.b16 %v419
  %v1721 = vunpack.c.l.b16 %v420
  %v1722 = vunpack.c.l.b16 %v421
  %v1723 = vunpack.c.l.b16 %v422
  %v1724 = vunpack.c.l.b16 %v423
  %v1725 = vunpack.c.l.b16 %v424
  %v1726 = vunpack.c.l.b16 %v425
  %v1727 = vunpack.c.l.b16 %v426
  %v1728 = vunpack.c.l.b16 %v427
  %v1729 = vunpack.c.l.b16 %v428
  %v1730 = vunpack.c.l.b16 %v429
  %v1731 = vunpack.c.l.b16 %v430
  %v1732 = vunpack.c.l.b16 %v431
  %v1733 = vunpack.c.l.b16 %v432
  %v1734 = vunpack.c.l.b16 %v433
  %v1735 = vunpack.c.l.b16 %v434
  %v1736 = vunpack.c.l.b16 %v435
  %v1737 = vunpack.c.l.b16 %v436
  %v1738 = vunpack.c.l.b16 %v437
  %v1739 = vunpack.c.l.b16 %v438
  %v1740 = vunpack.c.l.b16 %v439
  %v1741 = vunpack.c.l.b16 %v440
  %v1742 = vunpack.c.l.b16 %v441
  %v1743 = vunpack.c.l.b16 %v442
  %v1744 = vunpack.c.l.b16 %v443
  %v1745 = vunpack.c.l.b16 %v444
  %v1746 = vunpack.c.l.b16 %v445
  %v1747 = vunpack.c.l.b16 %v446
  %v1748 = vpack.c.b16 %v1461, %v1460
  %v1749 = vpack.c.b16 %v1463, %v1462
  %v1750 = vpack.c.b16 %v1465, %v1464
  %v1751 = vpack.c.b16 %v1467, %v1466
  %v1752 = vpack.c.b16 %v1469, %v1468
  %v1753 = vpack.c.b16 %v1471, %v1470
  %v1754 = vpack.c.b16 %v1473, %v1472
  %v1755 = vpack.c.b16 %v1475, %v1474
  %v1756 = vpack.c.b16 %v1477, %v1476
  %v1757 = vpack.c.b16 %v1479, %v1478
  %v1758 = vpack.c.b16 %v1481, %v1480
  %v1759 = vpack.c.b16 %v1483, %v1482
  %v1760 = vpack.c.b16 %v1485, %v1484
  %v1761 = vpack.c.b16 %v1487, %v1486
  %v1762 = vpack.c.b16 %v1489, %v1488
  %v1763 = vpack.c.b16 %v1491, %v1490
  %v1764 = vpack.c.b16 %v1493, %v1492
  %v1765 = vpack.c.b16 %v1495, %v1494
  %v1766 = vpack.c.b16 %v1497, %v1496
  %v1767 = vpack.c.b16 %v1499, %v1498
  %v1768 = vpack.c.b16 %v1501, %v1500
  %v1769 = vpack.c.b16 %v1503, %v1502
  %v1770 = vpack.c.b16 %v1505, %v1504
  %v1771 = vpack.c.b16 %v1507, %v1506
  %v1772 = vpack.c.b16 %v1509, %v1508
  %v1773 = vpack.c.b16 %v1511, %v1510
  %v1774 = vpack.c.b16 %v1513, %v1512
  %v1775 = vpack.c.b16 %v1515, %v1514
  %v1776 = vpack.c.b16 %v1517, %v1516
  %v1777 = vpack.c.b16 %v1519, %v1518
  %v1778 = vpack.c.b16 %v1521, %v1520
  %v1779 = vpack.c.b16 %v1523, %v1522
  %v1780 = vpack.c.b16 %v1525, %v1524
  %v1781 = vpack.c.b16 %v1527, %v1526
  %v1782 = vpack.c.b16 %v1529, %v1528
  %v1783 = vpack.c.b16 %v1531, %v1530
  %v1784 = vpack.c.b16 %v1533, %v1532
  %v1785 = vpack.c.b16 %v1535, %v1534
  %v1786 = vpack.c.b16 %v1537, %v1536
  %v1787 = vpack.c.b16 %v1539, %v1538
  %v1788 = vpack.c.b16 %v1541, %v1540
  %v1789 = vpack.c.b16 %v1543, %v1542
  %v1790 = vpack.c.b16 %v1545, %v1544
  %v1791 = vpack.c.b16 %v1547, %v1546
  %v1792 = vpack.c.b16 %v1549, %v1548
  %v1793 = vpack.c.b16 %v1551, %v1550
  %v1794 = vpack.c.b16 %v1553, %v1552
  %v1795 = vpack.c.b16 %v1555, %v1554
  %v1796 = vpack.c.b16 %v1557, %v1556
  %v1797 = vpack.c.b16 %v1559, %v1558
  %v1798 = vpack.c.b16 %v1561, %v1560
  %v1799 = vpack.c.b16 %v1563, %v1562
  %v1800 = vpack.c.b16 %v1565, %v1564
  %v1801 = vpack.c.b16 %v1567, %v1566
  %v1802 = vpack.c.b16 %v1569, %v1568
  %v1803 = vpack.c.b16 %v1571, %v1570
  %v1804 = vpack.c.b16 %v1573, %v1572
  %v1805 = vpack.c.b16 %v1575, %v1574
  %v1806 = vpack.c.b16 %v1577, %v1576
  %v1807 = vpack.c.b16 %v1579, %v1578
  %v1808 = vpack.c.b16 %v1581, %v1580
  %v1809 = vpack.c.b16 %v1583, %v1582
  %v1810 = vpack.c.b16 %v1585, %v1584
  %v1811 = vpack.c.b16 %v1587, %v1586
  %v1812 = vpack.c.b16 %v1589, %v1588
  %v1813 = vpack.c.b16 %v1591, %v1590
  %v1814 = vpack.c.b16 %v1593, %v1592
  %v1815 = vpack.c.b16 %v1595, %v1594
  %v1816 = vpack.c.b16 %v1597, %v1596
  %v1817 = vpack.c.b16 %v1599, %v1598
  %v1818 = vpack.c.b16 %v1601, %v1600
  %v1819 = vpack.c.b16 %v1603, %v1602
  %v1820 = vpack.c.b16 %v1605, %v1604
  %v1821 = vpack.c.b16 %v1607, %v1606
  %v1822 = vpack.c.b16 %v1609, %v1608
  %v1823 = vpack.c.b16 %v1611, %v1610
  %v1824 = vpack.c.b16 %v1613, %v1612
  %v1825 = vpack.c.b16 %v1615, %v1614
  %v1826 = vpack.c.b16 %v1617, %v1616
  %v1827 = vpack.c.b16 %v1619, %v1618
  %v1828 = vpack.c.b16 %v1621, %v1620
  %v1829 = vpack.c.b16 %v1623, %v1622
  %v1830 = vpack.c.b16 %v1625, %v1624
  %v1831 = vpack.c.b16 %v1627, %v1626
  %v1832 = vpack.c.b16 %v1629, %v1628
  %v1833 = vpack.c.b16 %v1631, %v1630
  %v1834 = vpack.c.b16 %v1633, %v1632
  %v1835 = vpack.c.b16 %v1635, %v1634
  %v1836 = vpack.c.b16 %v1637, %v1636
  %v1837 = vpack.c.b16 %v1639, %v1638
  %v1838 = vpack.c.b16 %v1641, %v1640
  %v1839 = vpack.c.b16 %v1643, %v1642
  %v1840 = vpack.c.b16 %v1645, %v1644
  %v1841 = vpack.c.b16 %v1647, %v1646
  %v1842 = vpack.c.b16 %v1649, %v1648
  %v1843 = vpack.c.b16 %v1651, %v1650
  %v1844 = vpack.c.b16 %v1653, %v1652
  %v1845 = vpack.c.b16 %v1655, %v1654
  %v1846 = vpack.c.b16 %v1657, %v1656
  %v1847 = vpack.c.b16 %v1659, %v1658
  %v1848 = vpack.c.b16 %v1661, %v1660
  %v1849 = vpack.c.b16 %v1663, %v1662
  %v1850 = vpack.c.b16 %v1665, %v1664
  %v1851 = vpack.c.b16 %v1667, %v1666
  %v1852 = vpack.c.b16 %v1669, %v1668
  %v1853 = vpack.c.b16 %v1671, %v1670
  %v1854 = vpack.c.b16 %v1673, %v1672
  %v1855 = vpack.c.b16 %v1675, %v1674
  %v1856 = vpack.c.b16 %v1677, %v1676
  %v1857 = vpack.c.b16 %v1679, %v1678
  %v1858 = vpack.c.b16 %v1681, %v1680
  %v1859 = vpack.c.b16 %v1683, %v1682
  %v1860 = vpack.c.b16 %v1685, %v1684
  %v1861 = vpack.c.b16 %v1687, %v1686
  %v1862 = vpack.c.b16 %v1689, %v1688
  %v1863 = vpack.c.b16 %v1691, %v1690
  %v1864 = vpack.c.b16 %v1693, %v1692
  %v1865 = vpack.c.b16 %v1695, %v1694
  %v1866 = vpack.c.b16 %v1697, %v1696
  %v1867 = vpack.c.b16 %v1699, %v1698
  %v1868 = vpack.c.b16 %v1701, %v1700
  %v1869 = vpack.c.b16 %v1703, %v1702
  %v1870 = vpack.c.b16 %v1705, %v1704
  %v1871 = vpack.c.b16 %v1707, %v1706
  %v1872 = vpack.c.b16 %v1709, %v1708
  %v1873 = vpack.c.b16 %v1711, %v1710
  %v1874 = vpack.c.b16 %v1713, %v1712
  %v1875 = vpack.c.b16 %v1715, %v1714
  %v1876 = vpack.c.b16 %v1717, %v1716
  %v1877 = vpack.c.b16 %v1719, %v1718
  %v1878 = vpack.c.b16 %v1721, %v1720
  %v1879 = vpack.c.b16 %v1723, %v1722
  %v1880 = vpack.c.b16 %v1725, %v1724
  %v1881 = vpack.c.b16 %v1727, %v1726
  %v1882 = vpack.c.b16 %v1729, %v1728
  %v1883 = vpack.c.b16 %v1731, %v1730
  %v1884 = vpack.c.b16 %v1733, %v1732
  %v1885 = vpack.c.b16 %v1735, %v1734
  %v1886 = vpack.c.b16 %v1737, %v1736
  %v1887 = vpack.c.b16 %v1739, %v1738
  %v1888 = vpack.c.b16 %v1741, %v1740
  %v1889 = vpack.c.b16 %v1743, %v1742
  %v1890 = vpack.c.b16 %v1745, %v1744
  %v1891 = vpack.c.b16 %v1747, %v1746
  %2036 = vmatprep.subr.bf16.mxu0 0
  %2037 = vmatpush1.bf16.msra.mxu0 %v1755
  %2038 = vmatprep.subr.bf16.mxu0 0
  %2039 = vmatpush1.bf16.msra.mxu0 %v1754
  %2040 = vmatprep.subr.bf16.mxu0 0
  %2041 = vmatpush1.bf16.msra.mxu0 %v1753
  %2042 = vmatprep.subr.bf16.mxu0 0
  %2043 = vmatpush1.bf16.msra.mxu0 %v1752
  %2044 = vmatprep.subr.bf16.mxu0 0
  %2045 = vmatpush1.bf16.msra.mxu0 %v1751
  %2046 = vmatprep.subr.bf16.mxu0 0
  %2047 = vmatpush1.bf16.msra.mxu0 %v1750
  %2048 = vmatprep.subr.bf16.mxu0 0
  %2049 = vmatpush1.bf16.msra.mxu0 %v1749
  %2050 = vmatprep.subr.bf16.mxu0 0
  %2051 = vmatpush1.bf16.msra.mxu0 %v1748
  %2052 = vmatprep.subr.bf16.mxu0 0
  %2053 = vmatpush2.bf16.msra.mxu0 %v1763
  %2054 = vmatprep.subr.bf16.mxu0 0
  %2055 = vmatpush2.bf16.msra.mxu0 %v1762
  %2056 = vmatprep.subr.bf16.mxu0 0
  %2057 = vmatpush2.bf16.msra.mxu0 %v1761
  %2058 = vmatprep.subr.bf16.mxu0 0
  %2059 = vmatpush2.bf16.msra.mxu0 %v1760
  %2060 = vmatprep.subr.bf16.mxu0 0
  %2061 = vmatpush2.bf16.msra.mxu0 %v1759
  %2062 = vmatprep.subr.bf16.mxu0 0
  %2063 = vmatpush2.bf16.msra.mxu0 %v1758
  %2064 = vmatprep.subr.bf16.mxu0 0
  %2065 = vmatpush2.bf16.msra.mxu0 %v1757
  %2066 = vmatprep.subr.bf16.mxu0 0
  %2067 = vmatpush2.bf16.msra.mxu0 %v1756
  %2068 = vmatprep.mubr.bf16.mxu0 %v885
  %2069 = vmatmul.mubr.bf16.gmra.mxu0 %v884
  %v2070 = vpop.f32.mrf.mxu0
  %v2071 = vadd.f32 %v451, %v2070
  %v2072 = vpop.f32.mrf.mxu0
  %v2073 = vpop.f32.mrf.mxu0
  %v2074 = vadd.f32 %v451, %v2073
  %v2075 = vpop.f32.mrf.mxu0
  %2076 = vmatprep.mubr.bf16.mxu0 %v903
  %2077 = vmatmul.mubr.bf16.gmra.mxu0 %v902
  %v2078 = vpop.f32.mrf.mxu0
  %v2079 = vadd.f32 %v451, %v2078
  %v2080 = vpop.f32.mrf.mxu0
  %v2081 = vpop.f32.mrf.mxu0
  %v2082 = vadd.f32 %v451, %v2081
  %v2083 = vpop.f32.mrf.mxu0
  %2084 = vmatprep.mubr.bf16.mxu0 %v921
  %2085 = vmatmul.mubr.bf16.gmra.mxu0 %v920
  %v2086 = vpop.f32.mrf.mxu0
  %v2087 = vadd.f32 %v451, %v2086
  %v2088 = vpop.f32.mrf.mxu0
  %v2089 = vpop.f32.mrf.mxu0
  %v2090 = vadd.f32 %v451, %v2089
  %v2091 = vpop.f32.mrf.mxu0
  %2092 = vmatprep.mubr.bf16.mxu0 %v939
  %2093 = vmatmul.mubr.bf16.gmra.mxu0 %v938
  %v2094 = vpop.f32.mrf.mxu0
  %v2095 = vadd.f32 %v451, %v2094
  %v2096 = vpop.f32.mrf.mxu0
  %v2097 = vpop.f32.mrf.mxu0
  %v2098 = vadd.f32 %v451, %v2097
  %v2099 = vpop.f32.mrf.mxu0
  %2100 = vmatprep.mubr.bf16.mxu0 %v957
  %2101 = vmatmul.mubr.bf16.gmra.mxu0 %v956
  %v2102 = vpop.f32.mrf.mxu0
  %v2103 = vadd.f32 %v451, %v2102
  %v2104 = vpop.f32.mrf.mxu0
  %v2105 = vpop.f32.mrf.mxu0
  %v2106 = vadd.f32 %v451, %v2105
  %v2107 = vpop.f32.mrf.mxu0
  %2108 = vmatprep.mubr.bf16.mxu0 %v975
  %2109 = vmatmul.mubr.bf16.gmra.mxu0 %v974
  %v2110 = vpop.f32.mrf.mxu0
  %v2111 = vadd.f32 %v451, %v2110
  %v2112 = vpop.f32.mrf.mxu0
  %v2113 = vpop.f32.mrf.mxu0
  %v2114 = vadd.f32 %v451, %v2113
  %v2115 = vpop.f32.mrf.mxu0
  %2116 = vmatprep.mubr.bf16.mxu0 %v993
  %2117 = vmatmul.mubr.bf16.gmra.mxu0 %v992
  %v2118 = vpop.f32.mrf.mxu0
  %v2119 = vadd.f32 %v451, %v2118
  %v2120 = vpop.f32.mrf.mxu0
  %v2121 = vpop.f32.mrf.mxu0
  %v2122 = vadd.f32 %v451, %v2121
  %v2123 = vpop.f32.mrf.mxu0
  %2124 = vmatprep.mubr.bf16.mxu0 %v1011
  %2125 = vmatmul.mubr.bf16.gmra.mxu0 %v1010
  %v2126 = vpop.f32.mrf.mxu0
  %v2127 = vadd.f32 %v451, %v2126
  %v2128 = vpop.f32.mrf.mxu0
  %v2129 = vpop.f32.mrf.mxu0
  %v2130 = vadd.f32 %v451, %v2129
  %v2131 = vpop.f32.mrf.mxu0
  %2132 = vdwg.mxu0
  %2133 = vmatprep.subr.bf16.mxu0 0
  %2134 = vmatpush1.bf16.msra.mxu0 %v1771
  %2135 = vmatprep.subr.bf16.mxu0 0
  %2136 = vmatpush1.bf16.msra.mxu0 %v1770
  %2137 = vmatprep.subr.bf16.mxu0 0
  %2138 = vmatpush1.bf16.msra.mxu0 %v1769
  %2139 = vmatprep.subr.bf16.mxu0 0
  %2140 = vmatpush1.bf16.msra.mxu0 %v1768
  %2141 = vmatprep.subr.bf16.mxu0 0
  %2142 = vmatpush1.bf16.msra.mxu0 %v1767
  %2143 = vmatprep.subr.bf16.mxu0 0
  %2144 = vmatpush1.bf16.msra.mxu0 %v1766
  %2145 = vmatprep.subr.bf16.mxu0 0
  %2146 = vmatpush1.bf16.msra.mxu0 %v1765
  %2147 = vmatprep.subr.bf16.mxu0 0
  %2148 = vmatpush1.bf16.msra.mxu0 %v1764
  %2149 = vmatprep.subr.bf16.mxu0 0
  %2150 = vmatpush2.bf16.msra.mxu0 %v1779
  %2151 = vmatprep.subr.bf16.mxu0 0
  %2152 = vmatpush2.bf16.msra.mxu0 %v1778
  %2153 = vmatprep.subr.bf16.mxu0 0
  %2154 = vmatpush2.bf16.msra.mxu0 %v1777
  %2155 = vmatprep.subr.bf16.mxu0 0
  %2156 = vmatpush2.bf16.msra.mxu0 %v1776
  %2157 = vmatprep.subr.bf16.mxu0 0
  %2158 = vmatpush2.bf16.msra.mxu0 %v1775
  %2159 = vmatprep.subr.bf16.mxu0 0
  %2160 = vmatpush2.bf16.msra.mxu0 %v1774
  %2161 = vmatprep.subr.bf16.mxu0 0
  %2162 = vmatpush2.bf16.msra.mxu0 %v1773
  %2163 = vmatprep.subr.bf16.mxu0 0
  %2164 = vmatpush2.bf16.msra.mxu0 %v1772
  %2165 = vmatprep.mubr.bf16.mxu0 %v887
  %2166 = vmatmul.mubr.bf16.gmra.mxu0 %v886
  %v2167 = vpop.f32.mrf.mxu0
  %v2168 = vadd.f32 %v2071, %v2167
  %v2169 = vpop.f32.mrf.mxu0
  %v2170 = vpop.f32.mrf.mxu0
  %v2171 = vadd.f32 %v2074, %v2170
  %v2172 = vpop.f32.mrf.mxu0
  %2173 = vmatprep.mubr.bf16.mxu0 %v905
  %2174 = vmatmul.mubr.bf16.gmra.mxu0 %v904
  %v2175 = vpop.f32.mrf.mxu0
  %v2176 = vadd.f32 %v2079, %v2175
  %v2177 = vpop.f32.mrf.mxu0
  %v2178 = vpop.f32.mrf.mxu0
  %v2179 = vadd.f32 %v2082, %v2178
  %v2180 = vpop.f32.mrf.mxu0
  %2181 = vmatprep.mubr.bf16.mxu0 %v923
  %2182 = vmatmul.mubr.bf16.gmra.mxu0 %v922
  %v2183 = vpop.f32.mrf.mxu0
  %v2184 = vadd.f32 %v2087, %v2183
  %v2185 = vpop.f32.mrf.mxu0
  %v2186 = vpop.f32.mrf.mxu0
  %v2187 = vadd.f32 %v2090, %v2186
  %v2188 = vpop.f32.mrf.mxu0
  %2189 = vmatprep.mubr.bf16.mxu0 %v941
  %2190 = vmatmul.mubr.bf16.gmra.mxu0 %v940
  %v2191 = vpop.f32.mrf.mxu0
  %v2192 = vadd.f32 %v2095, %v2191
  %v2193 = vpop.f32.mrf.mxu0
  %v2194 = vpop.f32.mrf.mxu0
  %v2195 = vadd.f32 %v2098, %v2194
  %v2196 = vpop.f32.mrf.mxu0
  %2197 = vmatprep.mubr.bf16.mxu0 %v959
  %2198 = vmatmul.mubr.bf16.gmra.mxu0 %v958
  %v2199 = vpop.f32.mrf.mxu0
  %v2200 = vadd.f32 %v2103, %v2199
  %v2201 = vpop.f32.mrf.mxu0
  %v2202 = vpop.f32.mrf.mxu0
  %v2203 = vadd.f32 %v2106, %v2202
  %v2204 = vpop.f32.mrf.mxu0
  %2205 = vmatprep.mubr.bf16.mxu0 %v977
  %2206 = vmatmul.mubr.bf16.gmra.mxu0 %v976
  %v2207 = vpop.f32.mrf.mxu0
  %v2208 = vadd.f32 %v2111, %v2207
  %v2209 = vpop.f32.mrf.mxu0
  %v2210 = vpop.f32.mrf.mxu0
  %v2211 = vadd.f32 %v2114, %v2210
  %v2212 = vpop.f32.mrf.mxu0
  %2213 = vmatprep.mubr.bf16.mxu0 %v995
  %2214 = vmatmul.mubr.bf16.gmra.mxu0 %v994
  %v2215 = vpop.f32.mrf.mxu0
  %v2216 = vadd.f32 %v2119, %v2215
  %v2217 = vpop.f32.mrf.mxu0
  %v2218 = vpop.f32.mrf.mxu0
  %v2219 = vadd.f32 %v2122, %v2218
  %v2220 = vpop.f32.mrf.mxu0
  %2221 = vmatprep.mubr.bf16.mxu0 %v1013
  %2222 = vmatmul.mubr.bf16.gmra.mxu0 %v1012
  %v2223 = vpop.f32.mrf.mxu0
  %v2224 = vadd.f32 %v2127, %v2223
  %v2225 = vpop.f32.mrf.mxu0
  %v2226 = vpop.f32.mrf.mxu0
  %v2227 = vadd.f32 %v2130, %v2226
  %v2228 = vpop.f32.mrf.mxu0
  %2229 = vdwg.mxu0
  %2230 = vmatprep.subr.bf16.mxu0 0
  %2231 = vmatpush1.bf16.msra.mxu0 %v1787
  %2232 = vmatprep.subr.bf16.mxu0 0
  %2233 = vmatpush1.bf16.msra.mxu0 %v1786
  %2234 = vmatprep.subr.bf16.mxu0 0
  %2235 = vmatpush1.bf16.msra.mxu0 %v1785
  %2236 = vmatprep.subr.bf16.mxu0 0
  %2237 = vmatpush1.bf16.msra.mxu0 %v1784
  %2238 = vmatprep.subr.bf16.mxu0 0
  %2239 = vmatpush1.bf16.msra.mxu0 %v1783
  %2240 = vmatprep.subr.bf16.mxu0 0
  %2241 = vmatpush1.bf16.msra.mxu0 %v1782
  %2242 = vmatprep.subr.bf16.mxu0 0
  %2243 = vmatpush1.bf16.msra.mxu0 %v1781
  %2244 = vmatprep.subr.bf16.mxu0 0
  %2245 = vmatpush1.bf16.msra.mxu0 %v1780
  %2246 = vmatprep.subr.bf16.mxu0 0
  %2247 = vmatpush2.bf16.msra.mxu0 %v1795
  %2248 = vmatprep.subr.bf16.mxu0 0
  %2249 = vmatpush2.bf16.msra.mxu0 %v1794
  %2250 = vmatprep.subr.bf16.mxu0 0
  %2251 = vmatpush2.bf16.msra.mxu0 %v1793
  %2252 = vmatprep.subr.bf16.mxu0 0
  %2253 = vmatpush2.bf16.msra.mxu0 %v1792
  %2254 = vmatprep.subr.bf16.mxu0 0
  %2255 = vmatpush2.bf16.msra.mxu0 %v1791
  %2256 = vmatprep.subr.bf16.mxu0 0
  %2257 = vmatpush2.bf16.msra.mxu0 %v1790
  %2258 = vmatprep.subr.bf16.mxu0 0
  %2259 = vmatpush2.bf16.msra.mxu0 %v1789
  %2260 = vmatprep.subr.bf16.mxu0 0
  %2261 = vmatpush2.bf16.msra.mxu0 %v1788
  %2262 = vmatprep.mubr.bf16.mxu0 %v889
  %2263 = vmatmul.mubr.bf16.gmra.mxu0 %v888
  %v2264 = vpop.f32.mrf.mxu0
  %v2265 = vadd.f32 %v2168, %v2264
  %v2266 = vpop.f32.mrf.mxu0
  %v2267 = vpop.f32.mrf.mxu0
  %v2268 = vadd.f32 %v2171, %v2267
  %v2269 = vpop.f32.mrf.mxu0
  %2270 = vmatprep.mubr.bf16.mxu0 %v907
  %2271 = vmatmul.mubr.bf16.gmra.mxu0 %v906
  %v2272 = vpop.f32.mrf.mxu0
  %v2273 = vadd.f32 %v2176, %v2272
  %v2274 = vpop.f32.mrf.mxu0
  %v2275 = vpop.f32.mrf.mxu0
  %v2276 = vadd.f32 %v2179, %v2275
  %v2277 = vpop.f32.mrf.mxu0
  %2278 = vmatprep.mubr.bf16.mxu0 %v925
  %2279 = vmatmul.mubr.bf16.gmra.mxu0 %v924
  %v2280 = vpop.f32.mrf.mxu0
  %v2281 = vadd.f32 %v2184, %v2280
  %v2282 = vpop.f32.mrf.mxu0
  %v2283 = vpop.f32.mrf.mxu0
  %v2284 = vadd.f32 %v2187, %v2283
  %v2285 = vpop.f32.mrf.mxu0
  %2286 = vmatprep.mubr.bf16.mxu0 %v943
  %2287 = vmatmul.mubr.bf16.gmra.mxu0 %v942
  %v2288 = vpop.f32.mrf.mxu0
  %v2289 = vadd.f32 %v2192, %v2288
  %v2290 = vpop.f32.mrf.mxu0
  %v2291 = vpop.f32.mrf.mxu0
  %v2292 = vadd.f32 %v2195, %v2291
  %v2293 = vpop.f32.mrf.mxu0
  %2294 = vmatprep.mubr.bf16.mxu0 %v961
  %2295 = vmatmul.mubr.bf16.gmra.mxu0 %v960
  %v2296 = vpop.f32.mrf.mxu0
  %v2297 = vadd.f32 %v2200, %v2296
  %v2298 = vpop.f32.mrf.mxu0
  %v2299 = vpop.f32.mrf.mxu0
  %v2300 = vadd.f32 %v2203, %v2299
  %v2301 = vpop.f32.mrf.mxu0
  %2302 = vmatprep.mubr.bf16.mxu0 %v979
  %2303 = vmatmul.mubr.bf16.gmra.mxu0 %v978
  %v2304 = vpop.f32.mrf.mxu0
  %v2305 = vadd.f32 %v2208, %v2304
  %v2306 = vpop.f32.mrf.mxu0
  %v2307 = vpop.f32.mrf.mxu0
  %v2308 = vadd.f32 %v2211, %v2307
  %v2309 = vpop.f32.mrf.mxu0
  %2310 = vmatprep.mubr.bf16.mxu0 %v997
  %2311 = vmatmul.mubr.bf16.gmra.mxu0 %v996
  %v2312 = vpop.f32.mrf.mxu0
  %v2313 = vadd.f32 %v2216, %v2312
  %v2314 = vpop.f32.mrf.mxu0
  %v2315 = vpop.f32.mrf.mxu0
  %v2316 = vadd.f32 %v2219, %v2315
  %v2317 = vpop.f32.mrf.mxu0
  %2318 = vmatprep.mubr.bf16.mxu0 %v1015
  %2319 = vmatmul.mubr.bf16.gmra.mxu0 %v1014
  %v2320 = vpop.f32.mrf.mxu0
  %v2321 = vadd.f32 %v2224, %v2320
  %v2322 = vpop.f32.mrf.mxu0
  %v2323 = vpop.f32.mrf.mxu0
  %v2324 = vadd.f32 %v2227, %v2323
  %v2325 = vpop.f32.mrf.mxu0
  %2326 = vdwg.mxu0
  %2327 = vmatprep.subr.bf16.mxu0 0
  %2328 = vmatpush1.bf16.msra.mxu0 %v1803
  %2329 = vmatprep.subr.bf16.mxu0 0
  %2330 = vmatpush1.bf16.msra.mxu0 %v1802
  %2331 = vmatprep.subr.bf16.mxu0 0
  %2332 = vmatpush1.bf16.msra.mxu0 %v1801
  %2333 = vmatprep.subr.bf16.mxu0 0
  %2334 = vmatpush1.bf16.msra.mxu0 %v1800
  %2335 = vmatprep.subr.bf16.mxu0 0
  %2336 = vmatpush1.bf16.msra.mxu0 %v1799
  %2337 = vmatprep.subr.bf16.mxu0 0
  %2338 = vmatpush1.bf16.msra.mxu0 %v1798
  %2339 = vmatprep.subr.bf16.mxu0 0
  %2340 = vmatpush1.bf16.msra.mxu0 %v1797
  %2341 = vmatprep.subr.bf16.mxu0 0
  %2342 = vmatpush1.bf16.msra.mxu0 %v1796
  %2343 = vmatprep.subr.bf16.mxu0 0
  %2344 = vmatpush2.bf16.msra.mxu0 %v1811
  %2345 = vmatprep.subr.bf16.mxu0 0
  %2346 = vmatpush2.bf16.msra.mxu0 %v1810
  %2347 = vmatprep.subr.bf16.mxu0 0
  %2348 = vmatpush2.bf16.msra.mxu0 %v1809
  %2349 = vmatprep.subr.bf16.mxu0 0
  %2350 = vmatpush2.bf16.msra.mxu0 %v1808
  %2351 = vmatprep.subr.bf16.mxu0 0
  %2352 = vmatpush2.bf16.msra.mxu0 %v1807
  %2353 = vmatprep.subr.bf16.mxu0 0
  %2354 = vmatpush2.bf16.msra.mxu0 %v1806
  %2355 = vmatprep.subr.bf16.mxu0 0
  %2356 = vmatpush2.bf16.msra.mxu0 %v1805
  %2357 = vmatprep.subr.bf16.mxu0 0
  %2358 = vmatpush2.bf16.msra.mxu0 %v1804
  %2359 = vmatprep.mubr.bf16.mxu0 %v891
  %2360 = vmatmul.mubr.bf16.gmra.mxu0 %v890
  %v2361 = vpop.f32.mrf.mxu0
  %v2362 = vadd.f32 %v2265, %v2361
  %v2363 = vpop.f32.mrf.mxu0
  %v2364 = vpop.f32.mrf.mxu0
  %v2365 = vadd.f32 %v2268, %v2364
  %v2366 = vpop.f32.mrf.mxu0
  %2367 = vmatprep.mubr.bf16.mxu0 %v909
  %2368 = vmatmul.mubr.bf16.gmra.mxu0 %v908
  %v2369 = vpop.f32.mrf.mxu0
  %v2370 = vadd.f32 %v2273, %v2369
  %v2371 = vpop.f32.mrf.mxu0
  %v2372 = vpop.f32.mrf.mxu0
  %v2373 = vadd.f32 %v2276, %v2372
  %v2374 = vpop.f32.mrf.mxu0
  %2375 = vmatprep.mubr.bf16.mxu0 %v927
  %2376 = vmatmul.mubr.bf16.gmra.mxu0 %v926
  %v2377 = vpop.f32.mrf.mxu0
  %v2378 = vadd.f32 %v2281, %v2377
  %v2379 = vpop.f32.mrf.mxu0
  %v2380 = vpop.f32.mrf.mxu0
  %v2381 = vadd.f32 %v2284, %v2380
  %v2382 = vpop.f32.mrf.mxu0
  %2383 = vmatprep.mubr.bf16.mxu0 %v945
  %2384 = vmatmul.mubr.bf16.gmra.mxu0 %v944
  %v2385 = vpop.f32.mrf.mxu0
  %v2386 = vadd.f32 %v2289, %v2385
  %v2387 = vpop.f32.mrf.mxu0
  %v2388 = vpop.f32.mrf.mxu0
  %v2389 = vadd.f32 %v2292, %v2388
  %v2390 = vpop.f32.mrf.mxu0
  %2391 = vmatprep.mubr.bf16.mxu0 %v963
  %2392 = vmatmul.mubr.bf16.gmra.mxu0 %v962
  %v2393 = vpop.f32.mrf.mxu0
  %v2394 = vadd.f32 %v2297, %v2393
  %v2395 = vpop.f32.mrf.mxu0
  %v2396 = vpop.f32.mrf.mxu0
  %v2397 = vadd.f32 %v2300, %v2396
  %v2398 = vpop.f32.mrf.mxu0
  %2399 = vmatprep.mubr.bf16.mxu0 %v981
  %2400 = vmatmul.mubr.bf16.gmra.mxu0 %v980
  %v2401 = vpop.f32.mrf.mxu0
  %v2402 = vadd.f32 %v2305, %v2401
  %v2403 = vpop.f32.mrf.mxu0
  %v2404 = vpop.f32.mrf.mxu0
  %v2405 = vadd.f32 %v2308, %v2404
  %v2406 = vpop.f32.mrf.mxu0
  %2407 = vmatprep.mubr.bf16.mxu0 %v999
  %2408 = vmatmul.mubr.bf16.gmra.mxu0 %v998
  %v2409 = vpop.f32.mrf.mxu0
  %v2410 = vadd.f32 %v2313, %v2409
  %v2411 = vpop.f32.mrf.mxu0
  %v2412 = vpop.f32.mrf.mxu0
  %v2413 = vadd.f32 %v2316, %v2412
  %v2414 = vpop.f32.mrf.mxu0
  %2415 = vmatprep.mubr.bf16.mxu0 %v1017
  %2416 = vmatmul.mubr.bf16.gmra.mxu0 %v1016
  %v2417 = vpop.f32.mrf.mxu0
  %v2418 = vadd.f32 %v2321, %v2417
  %v2419 = vpop.f32.mrf.mxu0
  %v2420 = vpop.f32.mrf.mxu0
  %v2421 = vadd.f32 %v2324, %v2420
  %v2422 = vpop.f32.mrf.mxu0
  %2423 = vdwg.mxu0
  %2424 = vmatprep.subr.bf16.mxu0 0
  %2425 = vmatpush1.bf16.msra.mxu0 %v1819
  %2426 = vmatprep.subr.bf16.mxu0 0
  %2427 = vmatpush1.bf16.msra.mxu0 %v1818
  %2428 = vmatprep.subr.bf16.mxu0 0
  %2429 = vmatpush1.bf16.msra.mxu0 %v1817
  %2430 = vmatprep.subr.bf16.mxu0 0
  %2431 = vmatpush1.bf16.msra.mxu0 %v1816
  %2432 = vmatprep.subr.bf16.mxu0 0
  %2433 = vmatpush1.bf16.msra.mxu0 %v1815
  %2434 = vmatprep.subr.bf16.mxu0 0
  %2435 = vmatpush1.bf16.msra.mxu0 %v1814
  %2436 = vmatprep.subr.bf16.mxu0 0
  %2437 = vmatpush1.bf16.msra.mxu0 %v1813
  %2438 = vmatprep.subr.bf16.mxu0 0
  %2439 = vmatpush1.bf16.msra.mxu0 %v1812
  %2440 = vmatprep.subr.bf16.mxu0 0
  %2441 = vmatpush2.bf16.msra.mxu0 %v1827
  %2442 = vmatprep.subr.bf16.mxu0 0
  %2443 = vmatpush2.bf16.msra.mxu0 %v1826
  %2444 = vmatprep.subr.bf16.mxu0 0
  %2445 = vmatpush2.bf16.msra.mxu0 %v1825
  %2446 = vmatprep.subr.bf16.mxu0 0
  %2447 = vmatpush2.bf16.msra.mxu0 %v1824
  %2448 = vmatprep.subr.bf16.mxu0 0
  %2449 = vmatpush2.bf16.msra.mxu0 %v1823
  %2450 = vmatprep.subr.bf16.mxu0 0
  %2451 = vmatpush2.bf16.msra.mxu0 %v1822
  %2452 = vmatprep.subr.bf16.mxu0 0
  %2453 = vmatpush2.bf16.msra.mxu0 %v1821
  %2454 = vmatprep.subr.bf16.mxu0 0
  %2455 = vmatpush2.bf16.msra.mxu0 %v1820
  %2456 = vmatprep.mubr.bf16.mxu0 %v893
  %2457 = vmatmul.mubr.bf16.gmra.mxu0 %v892
  %v2458 = vpop.f32.mrf.mxu0
  %v2459 = vadd.f32 %v2362, %v2458
  %v2460 = vpop.f32.mrf.mxu0
  %v2461 = vpop.f32.mrf.mxu0
  %v2462 = vadd.f32 %v2365, %v2461
  %v2463 = vpop.f32.mrf.mxu0
  %2464 = vmatprep.mubr.bf16.mxu0 %v911
  %2465 = vmatmul.mubr.bf16.gmra.mxu0 %v910
  %v2466 = vpop.f32.mrf.mxu0
  %v2467 = vadd.f32 %v2370, %v2466
  %v2468 = vpop.f32.mrf.mxu0
  %v2469 = vpop.f32.mrf.mxu0
  %v2470 = vadd.f32 %v2373, %v2469
  %v2471 = vpop.f32.mrf.mxu0
  %2472 = vmatprep.mubr.bf16.mxu0 %v929
  %2473 = vmatmul.mubr.bf16.gmra.mxu0 %v928
  %v2474 = vpop.f32.mrf.mxu0
  %v2475 = vadd.f32 %v2378, %v2474
  %v2476 = vpop.f32.mrf.mxu0
  %v2477 = vpop.f32.mrf.mxu0
  %v2478 = vadd.f32 %v2381, %v2477
  %v2479 = vpop.f32.mrf.mxu0
  %2480 = vmatprep.mubr.bf16.mxu0 %v947
  %2481 = vmatmul.mubr.bf16.gmra.mxu0 %v946
  %v2482 = vpop.f32.mrf.mxu0
  %v2483 = vadd.f32 %v2386, %v2482
  %v2484 = vpop.f32.mrf.mxu0
  %v2485 = vpop.f32.mrf.mxu0
  %v2486 = vadd.f32 %v2389, %v2485
  %v2487 = vpop.f32.mrf.mxu0
  %2488 = vmatprep.mubr.bf16.mxu0 %v965
  %2489 = vmatmul.mubr.bf16.gmra.mxu0 %v964
  %v2490 = vpop.f32.mrf.mxu0
  %v2491 = vadd.f32 %v2394, %v2490
  %v2492 = vpop.f32.mrf.mxu0
  %v2493 = vpop.f32.mrf.mxu0
  %v2494 = vadd.f32 %v2397, %v2493
  %v2495 = vpop.f32.mrf.mxu0
  %2496 = vmatprep.mubr.bf16.mxu0 %v983
  %2497 = vmatmul.mubr.bf16.gmra.mxu0 %v982
  %v2498 = vpop.f32.mrf.mxu0
  %v2499 = vadd.f32 %v2402, %v2498
  %v2500 = vpop.f32.mrf.mxu0
  %v2501 = vpop.f32.mrf.mxu0
  %v2502 = vadd.f32 %v2405, %v2501
  %v2503 = vpop.f32.mrf.mxu0
  %2504 = vmatprep.mubr.bf16.mxu0 %v1001
  %2505 = vmatmul.mubr.bf16.gmra.mxu0 %v1000
  %v2506 = vpop.f32.mrf.mxu0
  %v2507 = vadd.f32 %v2410, %v2506
  %v2508 = vpop.f32.mrf.mxu0
  %v2509 = vpop.f32.mrf.mxu0
  %v2510 = vadd.f32 %v2413, %v2509
  %v2511 = vpop.f32.mrf.mxu0
  %2512 = vmatprep.mubr.bf16.mxu0 %v1019
  %2513 = vmatmul.mubr.bf16.gmra.mxu0 %v1018
  %v2514 = vpop.f32.mrf.mxu0
  %v2515 = vadd.f32 %v2418, %v2514
  %v2516 = vpop.f32.mrf.mxu0
  %v2517 = vpop.f32.mrf.mxu0
  %v2518 = vadd.f32 %v2421, %v2517
  %v2519 = vpop.f32.mrf.mxu0
  %2520 = vdwg.mxu0
  %2521 = vmatprep.subr.bf16.mxu0 0
  %2522 = vmatpush1.bf16.msra.mxu0 %v1835
  %2523 = vmatprep.subr.bf16.mxu0 0
  %2524 = vmatpush1.bf16.msra.mxu0 %v1834
  %2525 = vmatprep.subr.bf16.mxu0 0
  %2526 = vmatpush1.bf16.msra.mxu0 %v1833
  %2527 = vmatprep.subr.bf16.mxu0 0
  %2528 = vmatpush1.bf16.msra.mxu0 %v1832
  %2529 = vmatprep.subr.bf16.mxu0 0
  %2530 = vmatpush1.bf16.msra.mxu0 %v1831
  %2531 = vmatprep.subr.bf16.mxu0 0
  %2532 = vmatpush1.bf16.msra.mxu0 %v1830
  %2533 = vmatprep.subr.bf16.mxu0 0
  %2534 = vmatpush1.bf16.msra.mxu0 %v1829
  %2535 = vmatprep.subr.bf16.mxu0 0
  %2536 = vmatpush1.bf16.msra.mxu0 %v1828
  %2537 = vmatprep.subr.bf16.mxu0 0
  %2538 = vmatpush2.bf16.msra.mxu0 %v1843
  %2539 = vmatprep.subr.bf16.mxu0 0
  %2540 = vmatpush2.bf16.msra.mxu0 %v1842
  %2541 = vmatprep.subr.bf16.mxu0 0
  %2542 = vmatpush2.bf16.msra.mxu0 %v1841
  %2543 = vmatprep.subr.bf16.mxu0 0
  %2544 = vmatpush2.bf16.msra.mxu0 %v1840
  %2545 = vmatprep.subr.bf16.mxu0 0
  %2546 = vmatpush2.bf16.msra.mxu0 %v1839
  %2547 = vmatprep.subr.bf16.mxu0 0
  %2548 = vmatpush2.bf16.msra.mxu0 %v1838
  %2549 = vmatprep.subr.bf16.mxu0 0
  %2550 = vmatpush2.bf16.msra.mxu0 %v1837
  %2551 = vmatprep.subr.bf16.mxu0 0
  %2552 = vmatpush2.bf16.msra.mxu0 %v1836
  %2553 = vmatprep.mubr.bf16.mxu0 %v895
  %2554 = vmatmul.mubr.bf16.gmra.mxu0 %v894
  %v2555 = vpop.f32.mrf.mxu0
  %v2556 = vadd.f32 %v2459, %v2555
  %v2557 = vpop.f32.mrf.mxu0
  %v2558 = vpop.f32.mrf.mxu0
  %v2559 = vadd.f32 %v2462, %v2558
  %v2560 = vpop.f32.mrf.mxu0
  %2561 = vmatprep.mubr.bf16.mxu0 %v913
  %2562 = vmatmul.mubr.bf16.gmra.mxu0 %v912
  %v2563 = vpop.f32.mrf.mxu0
  %v2564 = vadd.f32 %v2467, %v2563
  %v2565 = vpop.f32.mrf.mxu0
  %v2566 = vpop.f32.mrf.mxu0
  %v2567 = vadd.f32 %v2470, %v2566
  %v2568 = vpop.f32.mrf.mxu0
  %2569 = vmatprep.mubr.bf16.mxu0 %v931
  %2570 = vmatmul.mubr.bf16.gmra.mxu0 %v930
  %v2571 = vpop.f32.mrf.mxu0
  %v2572 = vadd.f32 %v2475, %v2571
  %v2573 = vpop.f32.mrf.mxu0
  %v2574 = vpop.f32.mrf.mxu0
  %v2575 = vadd.f32 %v2478, %v2574
  %v2576 = vpop.f32.mrf.mxu0
  %2577 = vmatprep.mubr.bf16.mxu0 %v949
  %2578 = vmatmul.mubr.bf16.gmra.mxu0 %v948
  %v2579 = vpop.f32.mrf.mxu0
  %v2580 = vadd.f32 %v2483, %v2579
  %v2581 = vpop.f32.mrf.mxu0
  %v2582 = vpop.f32.mrf.mxu0
  %v2583 = vadd.f32 %v2486, %v2582
  %v2584 = vpop.f32.mrf.mxu0
  %2585 = vmatprep.mubr.bf16.mxu0 %v967
  %2586 = vmatmul.mubr.bf16.gmra.mxu0 %v966
  %v2587 = vpop.f32.mrf.mxu0
  %v2588 = vadd.f32 %v2491, %v2587
  %v2589 = vpop.f32.mrf.mxu0
  %v2590 = vpop.f32.mrf.mxu0
  %v2591 = vadd.f32 %v2494, %v2590
  %v2592 = vpop.f32.mrf.mxu0
  %2593 = vmatprep.mubr.bf16.mxu0 %v985
  %2594 = vmatmul.mubr.bf16.gmra.mxu0 %v984
  %v2595 = vpop.f32.mrf.mxu0
  %v2596 = vadd.f32 %v2499, %v2595
  %v2597 = vpop.f32.mrf.mxu0
  %v2598 = vpop.f32.mrf.mxu0
  %v2599 = vadd.f32 %v2502, %v2598
  %v2600 = vpop.f32.mrf.mxu0
  %2601 = vmatprep.mubr.bf16.mxu0 %v1003
  %2602 = vmatmul.mubr.bf16.gmra.mxu0 %v1002
  %v2603 = vpop.f32.mrf.mxu0
  %v2604 = vadd.f32 %v2507, %v2603
  %v2605 = vpop.f32.mrf.mxu0
  %v2606 = vpop.f32.mrf.mxu0
  %v2607 = vadd.f32 %v2510, %v2606
  %v2608 = vpop.f32.mrf.mxu0
  %2609 = vmatprep.mubr.bf16.mxu0 %v1021
  %2610 = vmatmul.mubr.bf16.gmra.mxu0 %v1020
  %v2611 = vpop.f32.mrf.mxu0
  %v2612 = vadd.f32 %v2515, %v2611
  %v2613 = vpop.f32.mrf.mxu0
  %v2614 = vpop.f32.mrf.mxu0
  %v2615 = vadd.f32 %v2518, %v2614
  %v2616 = vpop.f32.mrf.mxu0
  %2617 = vdwg.mxu0
  %2618 = vmatprep.subr.bf16.mxu0 0
  %2619 = vmatpush1.bf16.msra.mxu0 %v1851
  %2620 = vmatprep.subr.bf16.mxu0 0
  %2621 = vmatpush1.bf16.msra.mxu0 %v1850
  %2622 = vmatprep.subr.bf16.mxu0 0
  %2623 = vmatpush1.bf16.msra.mxu0 %v1849
  %2624 = vmatprep.subr.bf16.mxu0 0
  %2625 = vmatpush1.bf16.msra.mxu0 %v1848
  %2626 = vmatprep.subr.bf16.mxu0 0
  %2627 = vmatpush1.bf16.msra.mxu0 %v1847
  %2628 = vmatprep.subr.bf16.mxu0 0
  %2629 = vmatpush1.bf16.msra.mxu0 %v1846
  %2630 = vmatprep.subr.bf16.mxu0 0
  %2631 = vmatpush1.bf16.msra.mxu0 %v1845
  %2632 = vmatprep.subr.bf16.mxu0 0
  %2633 = vmatpush1.bf16.msra.mxu0 %v1844
  %2634 = vmatprep.subr.bf16.mxu0 0
  %2635 = vmatpush2.bf16.msra.mxu0 %v1859
  %2636 = vmatprep.subr.bf16.mxu0 0
  %2637 = vmatpush2.bf16.msra.mxu0 %v1858
  %2638 = vmatprep.subr.bf16.mxu0 0
  %2639 = vmatpush2.bf16.msra.mxu0 %v1857
  %2640 = vmatprep.subr.bf16.mxu0 0
  %2641 = vmatpush2.bf16.msra.mxu0 %v1856
  %2642 = vmatprep.subr.bf16.mxu0 0
  %2643 = vmatpush2.bf16.msra.mxu0 %v1855
  %2644 = vmatprep.subr.bf16.mxu0 0
  %2645 = vmatpush2.bf16.msra.mxu0 %v1854
  %2646 = vmatprep.subr.bf16.mxu0 0
  %2647 = vmatpush2.bf16.msra.mxu0 %v1853
  %2648 = vmatprep.subr.bf16.mxu0 0
  %2649 = vmatpush2.bf16.msra.mxu0 %v1852
  %2650 = vmatprep.mubr.bf16.mxu0 %v897
  %2651 = vmatmul.mubr.bf16.gmra.mxu0 %v896
  %v2652 = vpop.f32.mrf.mxu0
  %v2653 = vadd.f32 %v2556, %v2652
  %v2654 = vpop.f32.mrf.mxu0
  %v2655 = vpop.f32.mrf.mxu0
  %v2656 = vadd.f32 %v2559, %v2655
  %v2657 = vpop.f32.mrf.mxu0
  %2658 = vmatprep.mubr.bf16.mxu0 %v915
  %2659 = vmatmul.mubr.bf16.gmra.mxu0 %v914
  %v2660 = vpop.f32.mrf.mxu0
  %v2661 = vadd.f32 %v2564, %v2660
  %v2662 = vpop.f32.mrf.mxu0
  %v2663 = vpop.f32.mrf.mxu0
  %v2664 = vadd.f32 %v2567, %v2663
  %v2665 = vpop.f32.mrf.mxu0
  %2666 = vmatprep.mubr.bf16.mxu0 %v933
  %2667 = vmatmul.mubr.bf16.gmra.mxu0 %v932
  %v2668 = vpop.f32.mrf.mxu0
  %v2669 = vadd.f32 %v2572, %v2668
  %v2670 = vpop.f32.mrf.mxu0
  %v2671 = vpop.f32.mrf.mxu0
  %v2672 = vadd.f32 %v2575, %v2671
  %v2673 = vpop.f32.mrf.mxu0
  %2674 = vmatprep.mubr.bf16.mxu0 %v951
  %2675 = vmatmul.mubr.bf16.gmra.mxu0 %v950
  %v2676 = vpop.f32.mrf.mxu0
  %v2677 = vadd.f32 %v2580, %v2676
  %v2678 = vpop.f32.mrf.mxu0
  %v2679 = vpop.f32.mrf.mxu0
  %v2680 = vadd.f32 %v2583, %v2679
  %v2681 = vpop.f32.mrf.mxu0
  %2682 = vmatprep.mubr.bf16.mxu0 %v969
  %2683 = vmatmul.mubr.bf16.gmra.mxu0 %v968
  %v2684 = vpop.f32.mrf.mxu0
  %v2685 = vadd.f32 %v2588, %v2684
  %v2686 = vpop.f32.mrf.mxu0
  %v2687 = vpop.f32.mrf.mxu0
  %v2688 = vadd.f32 %v2591, %v2687
  %v2689 = vpop.f32.mrf.mxu0
  %2690 = vmatprep.mubr.bf16.mxu0 %v987
  %2691 = vmatmul.mubr.bf16.gmra.mxu0 %v986
  %v2692 = vpop.f32.mrf.mxu0
  %v2693 = vadd.f32 %v2596, %v2692
  %v2694 = vpop.f32.mrf.mxu0
  %v2695 = vpop.f32.mrf.mxu0
  %v2696 = vadd.f32 %v2599, %v2695
  %v2697 = vpop.f32.mrf.mxu0
  %2698 = vmatprep.mubr.bf16.mxu0 %v1005
  %2699 = vmatmul.mubr.bf16.gmra.mxu0 %v1004
  %v2700 = vpop.f32.mrf.mxu0
  %v2701 = vadd.f32 %v2604, %v2700
  %v2702 = vpop.f32.mrf.mxu0
  %v2703 = vpop.f32.mrf.mxu0
  %v2704 = vadd.f32 %v2607, %v2703
  %v2705 = vpop.f32.mrf.mxu0
  %2706 = vmatprep.mubr.bf16.mxu0 %v1023
  %2707 = vmatmul.mubr.bf16.gmra.mxu0 %v1022
  %v2708 = vpop.f32.mrf.mxu0
  %v2709 = vadd.f32 %v2612, %v2708
  %v2710 = vpop.f32.mrf.mxu0
  %v2711 = vpop.f32.mrf.mxu0
  %v2712 = vadd.f32 %v2615, %v2711
  %v2713 = vpop.f32.mrf.mxu0
  %2714 = vdwg.mxu0
  %2715 = vmatprep.subr.bf16.mxu0 0
  %2716 = vmatpush1.bf16.msra.mxu0 %v1867
  %2717 = vmatprep.subr.bf16.mxu0 0
  %2718 = vmatpush1.bf16.msra.mxu0 %v1866
  %2719 = vmatprep.subr.bf16.mxu0 0
  %2720 = vmatpush1.bf16.msra.mxu0 %v1865
  %2721 = vmatprep.subr.bf16.mxu0 0
  %2722 = vmatpush1.bf16.msra.mxu0 %v1864
  %2723 = vmatprep.subr.bf16.mxu0 0
  %2724 = vmatpush1.bf16.msra.mxu0 %v1863
  %2725 = vmatprep.subr.bf16.mxu0 0
  %2726 = vmatpush1.bf16.msra.mxu0 %v1862
  %2727 = vmatprep.subr.bf16.mxu0 0
  %2728 = vmatpush1.bf16.msra.mxu0 %v1861
  %2729 = vmatprep.subr.bf16.mxu0 0
  %2730 = vmatpush1.bf16.msra.mxu0 %v1860
  %2731 = vmatprep.subr.bf16.mxu0 0
  %2732 = vmatpush2.bf16.msra.mxu0 %v1875
  %2733 = vmatprep.subr.bf16.mxu0 0
  %2734 = vmatpush2.bf16.msra.mxu0 %v1874
  %2735 = vmatprep.subr.bf16.mxu0 0
  %2736 = vmatpush2.bf16.msra.mxu0 %v1873
  %2737 = vmatprep.subr.bf16.mxu0 0
  %2738 = vmatpush2.bf16.msra.mxu0 %v1872
  %2739 = vmatprep.subr.bf16.mxu0 0
  %2740 = vmatpush2.bf16.msra.mxu0 %v1871
  %2741 = vmatprep.subr.bf16.mxu0 0
  %2742 = vmatpush2.bf16.msra.mxu0 %v1870
  %2743 = vmatprep.subr.bf16.mxu0 0
  %2744 = vmatpush2.bf16.msra.mxu0 %v1869
  %2745 = vmatprep.subr.bf16.mxu0 0
  %2746 = vmatpush2.bf16.msra.mxu0 %v1868
  %2747 = vmatprep.mubr.bf16.mxu0 %v899
  %2748 = vmatmul.mubr.bf16.gmra.mxu0 %v898
  %v2749 = vpop.f32.mrf.mxu0
  %v2750 = vadd.f32 %v2653, %v2749
  %v2751 = vpop.f32.mrf.mxu0
  %v2752 = vpop.f32.mrf.mxu0
  %v2753 = vadd.f32 %v2656, %v2752
  %v2754 = vpop.f32.mrf.mxu0
  %2755 = vmatprep.mubr.bf16.mxu0 %v917
  %2756 = vmatmul.mubr.bf16.gmra.mxu0 %v916
  %v2757 = vpop.f32.mrf.mxu0
  %v2758 = vadd.f32 %v2661, %v2757
  %v2759 = vpop.f32.mrf.mxu0
  %v2760 = vpop.f32.mrf.mxu0
  %v2761 = vadd.f32 %v2664, %v2760
  %v2762 = vpop.f32.mrf.mxu0
  %2763 = vmatprep.mubr.bf16.mxu0 %v935
  %2764 = vmatmul.mubr.bf16.gmra.mxu0 %v934
  %v2765 = vpop.f32.mrf.mxu0
  %v2766 = vadd.f32 %v2669, %v2765
  %v2767 = vpop.f32.mrf.mxu0
  %v2768 = vpop.f32.mrf.mxu0
  %v2769 = vadd.f32 %v2672, %v2768
  %v2770 = vpop.f32.mrf.mxu0
  %2771 = vmatprep.mubr.bf16.mxu0 %v953
  %2772 = vmatmul.mubr.bf16.gmra.mxu0 %v952
  %v2773 = vpop.f32.mrf.mxu0
  %v2774 = vadd.f32 %v2677, %v2773
  %v2775 = vpop.f32.mrf.mxu0
  %v2776 = vpop.f32.mrf.mxu0
  %v2777 = vadd.f32 %v2680, %v2776
  %v2778 = vpop.f32.mrf.mxu0
  %2779 = vmatprep.mubr.bf16.mxu0 %v971
  %2780 = vmatmul.mubr.bf16.gmra.mxu0 %v970
  %v2781 = vpop.f32.mrf.mxu0
  %v2782 = vadd.f32 %v2685, %v2781
  %v2783 = vpop.f32.mrf.mxu0
  %v2784 = vpop.f32.mrf.mxu0
  %v2785 = vadd.f32 %v2688, %v2784
  %v2786 = vpop.f32.mrf.mxu0
  %2787 = vmatprep.mubr.bf16.mxu0 %v989
  %2788 = vmatmul.mubr.bf16.gmra.mxu0 %v988
  %v2789 = vpop.f32.mrf.mxu0
  %v2790 = vadd.f32 %v2693, %v2789
  %v2791 = vpop.f32.mrf.mxu0
  %v2792 = vpop.f32.mrf.mxu0
  %v2793 = vadd.f32 %v2696, %v2792
  %v2794 = vpop.f32.mrf.mxu0
  %2795 = vmatprep.mubr.bf16.mxu0 %v1007
  %2796 = vmatmul.mubr.bf16.gmra.mxu0 %v1006
  %v2797 = vpop.f32.mrf.mxu0
  %v2798 = vadd.f32 %v2701, %v2797
  %v2799 = vpop.f32.mrf.mxu0
  %v2800 = vpop.f32.mrf.mxu0
  %v2801 = vadd.f32 %v2704, %v2800
  %v2802 = vpop.f32.mrf.mxu0
  %2803 = vmatprep.mubr.bf16.mxu0 %v1025
  %2804 = vmatmul.mubr.bf16.gmra.mxu0 %v1024
  %v2805 = vpop.f32.mrf.mxu0
  %v2806 = vadd.f32 %v2709, %v2805
  %v2807 = vpop.f32.mrf.mxu0
  %v2808 = vpop.f32.mrf.mxu0
  %v2809 = vadd.f32 %v2712, %v2808
  %v2810 = vpop.f32.mrf.mxu0
  %2811 = vdwg.mxu0
  %2812 = vmatprep.subr.bf16.mxu0 0
  %2813 = vmatpush1.bf16.msra.mxu0 %v1883
  %2814 = vmatprep.subr.bf16.mxu0 0
  %2815 = vmatpush1.bf16.msra.mxu0 %v1882
  %2816 = vmatprep.subr.bf16.mxu0 0
  %2817 = vmatpush1.bf16.msra.mxu0 %v1881
  %2818 = vmatprep.subr.bf16.mxu0 0
  %2819 = vmatpush1.bf16.msra.mxu0 %v1880
  %2820 = vmatprep.subr.bf16.mxu0 0
  %2821 = vmatpush1.bf16.msra.mxu0 %v1879
  %2822 = vmatprep.subr.bf16.mxu0 0
  %2823 = vmatpush1.bf16.msra.mxu0 %v1878
  %2824 = vmatprep.subr.bf16.mxu0 0
  %2825 = vmatpush1.bf16.msra.mxu0 %v1877
  %2826 = vmatprep.subr.bf16.mxu0 0
  %2827 = vmatpush1.bf16.msra.mxu0 %v1876
  %2828 = vmatprep.subr.bf16.mxu0 0
  %2829 = vmatpush2.bf16.msra.mxu0 %v1891
  %2830 = vmatprep.subr.bf16.mxu0 0
  %2831 = vmatpush2.bf16.msra.mxu0 %v1890
  %2832 = vmatprep.subr.bf16.mxu0 0
  %2833 = vmatpush2.bf16.msra.mxu0 %v1889
  %2834 = vmatprep.subr.bf16.mxu0 0
  %2835 = vmatpush2.bf16.msra.mxu0 %v1888
  %2836 = vmatprep.subr.bf16.mxu0 0
  %2837 = vmatpush2.bf16.msra.mxu0 %v1887
  %2838 = vmatprep.subr.bf16.mxu0 0
  %2839 = vmatpush2.bf16.msra.mxu0 %v1886
  %2840 = vmatprep.subr.bf16.mxu0 0
  %2841 = vmatpush2.bf16.msra.mxu0 %v1885
  %2842 = vmatprep.subr.bf16.mxu0 0
  %2843 = vmatpush2.bf16.msra.mxu0 %v1884
  %2844 = vmatprep.mubr.bf16.mxu0 %v901
  %2845 = vmatmul.mubr.bf16.gmra.mxu0 %v900
  %v2846 = vpop.f32.mrf.mxu0
  %v2847 = vadd.f32 %v2750, %v2846
  %v2848 = vpop.f32.mrf.mxu0
  %v2849 = vpop.f32.mrf.mxu0
  %v2850 = vadd.f32 %v2753, %v2849
  %v2851 = vpop.f32.mrf.mxu0
  %2852 = vmatprep.mubr.bf16.mxu0 %v919
  %2853 = vmatmul.mubr.bf16.gmra.mxu0 %v918
  %v2854 = vpop.f32.mrf.mxu0
  %v2855 = vadd.f32 %v2758, %v2854
  %v2856 = vpop.f32.mrf.mxu0
  %v2857 = vpop.f32.mrf.mxu0
  %v2858 = vadd.f32 %v2761, %v2857
  %v2859 = vpop.f32.mrf.mxu0
  %2860 = vmatprep.mubr.bf16.mxu0 %v937
  %2861 = vmatmul.mubr.bf16.gmra.mxu0 %v936
  %v2862 = vpop.f32.mrf.mxu0
  %v2863 = vadd.f32 %v2766, %v2862
  %v2864 = vpop.f32.mrf.mxu0
  %v2865 = vpop.f32.mrf.mxu0
  %v2866 = vadd.f32 %v2769, %v2865
  %v2867 = vpop.f32.mrf.mxu0
  %2868 = vmatprep.mubr.bf16.mxu0 %v955
  %2869 = vmatmul.mubr.bf16.gmra.mxu0 %v954
  %v2870 = vpop.f32.mrf.mxu0
  %v2871 = vadd.f32 %v2774, %v2870
  %v2872 = vpop.f32.mrf.mxu0
  %v2873 = vpop.f32.mrf.mxu0
  %v2874 = vadd.f32 %v2777, %v2873
  %v2875 = vpop.f32.mrf.mxu0
  %2876 = vmatprep.mubr.bf16.mxu0 %v973
  %2877 = vmatmul.mubr.bf16.gmra.mxu0 %v972
  %v2878 = vpop.f32.mrf.mxu0
  %v2879 = vadd.f32 %v2782, %v2878
  %v2880 = vpop.f32.mrf.mxu0
  %v2881 = vpop.f32.mrf.mxu0
  %v2882 = vadd.f32 %v2785, %v2881
  %v2883 = vpop.f32.mrf.mxu0
  %2884 = vmatprep.mubr.bf16.mxu0 %v991
  %2885 = vmatmul.mubr.bf16.gmra.mxu0 %v990
  %v2886 = vpop.f32.mrf.mxu0
  %v2887 = vadd.f32 %v2790, %v2886
  %v2888 = vpop.f32.mrf.mxu0
  %v2889 = vpop.f32.mrf.mxu0
  %v2890 = vadd.f32 %v2793, %v2889
  %v2891 = vpop.f32.mrf.mxu0
  %2892 = vmatprep.mubr.bf16.mxu0 %v1009
  %2893 = vmatmul.mubr.bf16.gmra.mxu0 %v1008
  %v2894 = vpop.f32.mrf.mxu0
  %v2895 = vadd.f32 %v2798, %v2894
  %v2896 = vpop.f32.mrf.mxu0
  %v2897 = vpop.f32.mrf.mxu0
  %v2898 = vadd.f32 %v2801, %v2897
  %v2899 = vpop.f32.mrf.mxu0
  %2900 = vmatprep.mubr.bf16.mxu0 %v1027
  %2901 = vmatmul.mubr.bf16.gmra.mxu0 %v1026
  %v2902 = vpop.f32.mrf.mxu0
  %v2903 = vadd.f32 %v2806, %v2902
  %v2904 = vpop.f32.mrf.mxu0
  %v2905 = vpop.f32.mrf.mxu0
  %v2906 = vadd.f32 %v2809, %v2905
  %v2907 = vpop.f32.mrf.mxu0
  %2908 = vdwg.mxu0
  %v2909 = vmax.f32 %v2847, 0.0
  %v2910 = vmax.f32 %v2850, 0.0
  %v2911 = vmax.f32 %v2855, 0.0
  %v2912 = vmax.f32 %v2858, 0.0
  %v2913 = vmax.f32 %v2863, 0.0
  %v2914 = vmax.f32 %v2866, 0.0
  %v2915 = vmax.f32 %v2871, 0.0
  %v2916 = vmax.f32 %v2874, 0.0
  %v2917 = vmax.f32 %v2879, 0.0
  %v2918 = vmax.f32 %v2882, 0.0
  %v2919 = vmax.f32 %v2887, 0.0
  %v2920 = vmax.f32 %v2890, 0.0
  %v2921 = vmax.f32 %v2895, 0.0
  %v2922 = vmax.f32 %v2898, 0.0
  %v2923 = vmax.f32 %v2903, 0.0
  %v2924 = vmax.f32 %v2906, 0.0
  %v2925 = vadd.f32 %v2909, %v2910
  %v2926 = vadd.f32 %v2925, %v2911
  %v2927 = vadd.f32 %v2926, %v2912
  %v2928 = vadd.f32 %v2927, %v2913
  %v2929 = vadd.f32 %v2928, %v2914
  %v2930 = vadd.f32 %v2929, %v2915
  %v2931 = vadd.f32 %v2930, %v2916
  %v2932 = vadd.f32 %v2931, %v2917
  %v2933 = vadd.f32 %v2932, %v2918
  %v2934 = vadd.f32 %v2933, %v2919
  %v2935 = vadd.f32 %v2934, %v2920
  %v2936 = vadd.f32 %v2935, %v2921
  %v2937 = vadd.f32 %v2936, %v2922
  %v2938 = vadd.f32 %v2937, %v2923
  %v2939 = vadd.f32 %v2938, %v2924
  %v2940 = vrot.slane %v2939, 4
  %v2941 = vadd.f32 %v2939, %v2940
  %v2942 = vrot.slane %v2941, 2
  %v2943 = vadd.f32 %v2941, %v2942
  %v2944 = vrot.slane %v2943, 1
  %v2945 = vadd.f32 %v2943, %v2944
  %v2946 = vmul.f32 %v2909, %v2909
  %v2947 = vmul.f32 %v2910, %v2910
  %v2948 = vmul.f32 %v2911, %v2911
  %v2949 = vmul.f32 %v2912, %v2912
  %v2950 = vmul.f32 %v2913, %v2913
  %v2951 = vmul.f32 %v2914, %v2914
  %v2952 = vmul.f32 %v2915, %v2915
  %v2953 = vmul.f32 %v2916, %v2916
  %v2954 = vmul.f32 %v2917, %v2917
  %v2955 = vmul.f32 %v2918, %v2918
  %v2956 = vmul.f32 %v2919, %v2919
  %v2957 = vmul.f32 %v2920, %v2920
  %v2958 = vmul.f32 %v2921, %v2921
  %v2959 = vmul.f32 %v2922, %v2922
  %v2960 = vmul.f32 %v2923, %v2923
  %v2961 = vmul.f32 %v2924, %v2924
  %v2962 = vadd.f32 %v2946, %v2947
  %v2963 = vadd.f32 %v2962, %v2948
  %v2964 = vadd.f32 %v2963, %v2949
  %v2965 = vadd.f32 %v2964, %v2950
  %v2966 = vadd.f32 %v2965, %v2951
  %v2967 = vadd.f32 %v2966, %v2952
  %v2968 = vadd.f32 %v2967, %v2953
  %v2969 = vadd.f32 %v2968, %v2954
  %v2970 = vadd.f32 %v2969, %v2955
  %v2971 = vadd.f32 %v2970, %v2956
  %v2972 = vadd.f32 %v2971, %v2957
  %v2973 = vadd.f32 %v2972, %v2958
  %v2974 = vadd.f32 %v2973, %v2959
  %v2975 = vadd.f32 %v2974, %v2960
  %v2976 = vadd.f32 %v2975, %v2961
  %v2977 = vrot.slane %v2976, 4
  %v2978 = vadd.f32 %v2976, %v2977
  %v2979 = vrot.slane %v2978, 2
  %v2980 = vadd.f32 %v2978, %v2979
  %v2981 = vrot.slane %v2980, 1
  %v2982 = vadd.f32 %v2980, %v2981
  %v2983 = vmul.f32 %v2945, 0.0078125
  %v2984 = vmul.f32 %v2982, 0.0078125
  %v2985 = vmul.f32 %v2983, %v2983
  %v2986 = vsub.f32 %v2984, %v2985
  %v2987 = vmax.f32 %v2986, 0.0
  %v2988 = vadd.f32 %v2987, 1e-05
  %v2989 = vrsqrt.pop %v2988
  %v2990 = vmul.f32 %v447, %v2989
  %v2991 = vlaneseq
  %v2992 = vshrl.u32 %v2991, 7
  %v2993 = vsub.s32 1, %v2992
  %v2994 = vrot.slane %v2990, %v2993
  %v2995 = vmul.f32 %v2909, %v2994
  %v2996 = vmul.f32 %v2910, %v2994
  %v2997 = vmul.f32 %v2911, %v2994
  %v2998 = vmul.f32 %v2912, %v2994
  %v2999 = vmul.f32 %v2913, %v2994
  %v3000 = vmul.f32 %v2914, %v2994
  %v3001 = vmul.f32 %v2915, %v2994
  %v3002 = vmul.f32 %v2916, %v2994
  %v3003 = vmul.f32 %v2917, %v2994
  %v3004 = vmul.f32 %v2918, %v2994
  %v3005 = vmul.f32 %v2919, %v2994
  %v3006 = vmul.f32 %v2920, %v2994
  %v3007 = vmul.f32 %v2921, %v2994
  %v3008 = vmul.f32 %v2922, %v2994
  %v3009 = vmul.f32 %v2923, %v2994
  %v3010 = vmul.f32 %v2924, %v2994
  %v3011 = vmul.f32 %v2983, %v2990
  %v3013 = vrot.slane %v3011, 7
  %v3015 = vsub.f32 %v447, %v3013
  %v3016 = vlaneseq
  %v3017 = vshrl.u32 %v3016, 7
  %v3018 = vsub.s32 2, %v3017
  %v3019 = vrot.slane %v3015, %v3018
  %v3020 = vadd.f32 %v2995, %v3019
  %v3021 = vadd.f32 %v2996, %v3019
  %v3022 = vadd.f32 %v2997, %v3019
  %v3023 = vadd.f32 %v2998, %v3019
  %v3024 = vadd.f32 %v2999, %v3019
  %v3025 = vadd.f32 %v3000, %v3019
  %v3026 = vadd.f32 %v3001, %v3019
  %v3027 = vadd.f32 %v3002, %v3019
  %v3028 = vadd.f32 %v3003, %v3019
  %v3029 = vadd.f32 %v3004, %v3019
  %v3030 = vadd.f32 %v3005, %v3019
  %v3031 = vadd.f32 %v3006, %v3019
  %v3032 = vadd.f32 %v3007, %v3019
  %v3033 = vadd.f32 %v3008, %v3019
  %v3034 = vadd.f32 %v3009, %v3019
  %v3035 = vadd.f32 %v3010, %v3019
  %v3036 = vpack.c.bf16 %v3021, %v3020
  %v3037 = vpack.c.bf16 %v3023, %v3022
  %v3038 = vpack.c.bf16 %v3025, %v3024
  %v3039 = vpack.c.bf16 %v3027, %v3026
  %v3040 = vpack.c.bf16 %v3029, %v3028
  %v3041 = vpack.c.bf16 %v3031, %v3030
  %v3042 = vpack.c.bf16 %v3033, %v3032
  %v3043 = vpack.c.bf16 %v3035, %v3034
  %v3052 = vunpack.c.l.b16 %v3036
  %v3053 = vunpack.c.h.b16 %v3036
  %v3054 = vunpack.c.l.b16 %v3037
  %v3055 = vunpack.c.h.b16 %v3037
  %v3056 = vunpack.c.l.b16 %v3038
  %v3057 = vunpack.c.h.b16 %v3038
  %v3058 = vunpack.c.l.b16 %v3039
  %v3059 = vunpack.c.h.b16 %v3039
  %v3060 = vunpack.c.l.b16 %v3040
  %v3061 = vunpack.c.h.b16 %v3040
  %v3062 = vunpack.c.l.b16 %v3041
  %v3063 = vunpack.c.h.b16 %v3041
  %v3064 = vunpack.c.l.b16 %v3042
  %v3065 = vunpack.c.h.b16 %v3042
  %v3066 = vunpack.c.l.b16 %v3043
  %v3067 = vunpack.c.h.b16 %v3043
  %v3068 = vpack.c.b16 %v3052, %v3052
  %v3069 = vpack.c.b16 %v3053, %v3053
  %v3070 = vpack.c.b16 %v3054, %v3054
  %v3071 = vpack.c.b16 %v3055, %v3055
  %v3072 = vpack.c.b16 %v3056, %v3056
  %v3073 = vpack.c.b16 %v3057, %v3057
  %v3074 = vpack.c.b16 %v3058, %v3058
  %v3075 = vpack.c.b16 %v3059, %v3059
  %v3076 = vpack.c.b16 %v3060, %v3060
  %v3077 = vpack.c.b16 %v3061, %v3061
  %v3078 = vpack.c.b16 %v3062, %v3062
  %v3079 = vpack.c.b16 %v3063, %v3063
  %v3080 = vpack.c.b16 %v3064, %v3064
  %v3081 = vpack.c.b16 %v3065, %v3065
  %v3082 = vpack.c.b16 %v3066, %v3066
  %v3083 = vpack.c.b16 %v3067, %v3067
  %3100 = vst [vmem:[%s3] sm:$0xf] %v3068
  %3101 = vst [vmem:[%s3 + $0x4] sm:$0xf] %v3069
  %3102 = vst [vmem:[%s3 + $0x8] sm:$0xf] %v3070
  %3103 = vst [vmem:[%s3 + $0xc] sm:$0xf] %v3071
  %3104 = vst [vmem:[%s3 + $0x10] sm:$0xf] %v3072
  %3105 = vst [vmem:[%s3 + $0x14] sm:$0xf] %v3073
  %3106 = vst [vmem:[%s3 + $0x18] sm:$0xf] %v3074
  %3107 = vst [vmem:[%s3 + $0x1c] sm:$0xf] %v3075
  %3108 = vst [vmem:[%s3 + $0x20] sm:$0xf] %v3076
  %3109 = vst [vmem:[%s3 + $0x24] sm:$0xf] %v3077
  %3110 = vst [vmem:[%s3 + $0x28] sm:$0xf] %v3078
  %3111 = vst [vmem:[%s3 + $0x2c] sm:$0xf] %v3079
  %3112 = vst [vmem:[%s3 + $0x30] sm:$0xf] %v3080
  %3113 = vst [vmem:[%s3 + $0x34] sm:$0xf] %v3081
  %3114 = vst [vmem:[%s3 + $0x38] sm:$0xf] %v3082
  %3115 = vst [vmem:[%s3 + $0x3c] sm:$0xf] %v3083
  // Predicated region
  $region14: #{_lambda_.5} parent=0 // pred_check
    _
  $region15: #{_lambda_.5} parent=0 // pred_check_branch
    %3117 = sbr.rel (0) target = $region17
  $region16: #{_lambda_.5} parent=0 // pred_region
    _
  $region17: #{_lambda_.5} parent=0 // pred_fallthru
    _
  // Predicated region
  $region18: #{_lambda_.5} parent=0 // pred_check
    _
  $region19: #{_lambda_.5} parent=0 // pred_check_branch
    %3119 = sbr.rel (0) target = $region21
  $region20: #{_lambda_.5} parent=0 // pred_region
    _
  $region21: #{_lambda_.5} parent=0 // pred_fallthru
    _

// kernel: _lambda_.6
$region0: #{_lambda_.6}
  #allocation0 [shape = 'u32[]', space=smem, size = 0x4, offset = 0x4, fixed_abs, tag = 'smem constant byte address 0x4 - core index']
  #allocation1 [shape = 'u32[144,128]{1,0:T(1,128)}', space=vmem, size = 0x12000, scoped, tag = 'internal scratch']
  %s0 = inlined_call_operand.vmem [shape: bf16[512,1152], index: 0, kind: input, shape index: {}]
  %s1 = inlined_call_operand.vmem [shape: bf16[1152,128], index: 1, kind: input, shape index: {}]
  %s2 = inlined_call_operand.vmem [shape: f32[8,128], index: 2, kind: input, shape index: {}]
  %s3 = inlined_call_operand.vmem [shape: bf16[512,128], index: 3, kind: output, shape index: {}]
  %s4 = sld [smem:[#allocation0]]
  $region22: #{_lambda_.6} parent=0
    _
  %s6 = ssub.s32 1, %s4
  %s7 = scalar_select 0, %s6, %s4
  // Predicated region
  $region2: #{_lambda_.6} parent=0 // pred_check
    _
  $region3: #{_lambda_.6} parent=0 // pred_check_branch
    %9 = sbr.rel (0) target = $region5
  $region4: #{_lambda_.6} parent=0 // pred_region
    _
  $region5: #{_lambda_.6} parent=0 // pred_fallthru
    _
  // Predicated region
  $region6: #{_lambda_.6} parent=0 // pred_check
    _
  $region7: #{_lambda_.6} parent=0 // pred_check_branch
    %11 = sbr.rel (0) target = $region9
  $region8: #{_lambda_.6} parent=0 // pred_region
    _
  $region9: #{_lambda_.6} parent=0 // pred_fallthru
    _
  // Predicated region
  $region10: #{_lambda_.6} parent=0 // pred_check
    _
  $region11: #{_lambda_.6} parent=0 // pred_check_branch
    %13 = sbr.rel (0) target = $region13
  $region12: #{_lambda_.6} parent=0 // pred_region
    _
  $region13: #{_lambda_.6} parent=0 // pred_fallthru
    _
  %v15 = vld [vmem:[%s0] sm:$0xff]
  %v16 = vld [vmem:[%s0 + $0x8] sm:$0xff]
  %v17 = vld [vmem:[%s0 + $0x10] sm:$0xff]
  %v18 = vld [vmem:[%s0 + $0x18] sm:$0xff]
  %v19 = vld [vmem:[%s0 + $0x20] sm:$0xf]
  %v20 = vld [vmem:[%s0 + $0x24] sm:$0xff]
  %v21 = vld [vmem:[%s0 + $0x2c] sm:$0xff]
  %v22 = vld [vmem:[%s0 + $0x34] sm:$0xff]
  %v23 = vld [vmem:[%s0 + $0x3c] sm:$0xff]
  %v24 = vld [vmem:[%s0 + $0x44] sm:$0xf]
  %v25 = vld [vmem:[%s0 + $0x48] sm:$0xff]
  %v26 = vld [vmem:[%s0 + $0x50] sm:$0xff]
  %v27 = vld [vmem:[%s0 + $0x58] sm:$0xff]
  %v28 = vld [vmem:[%s0 + $0x60] sm:$0xff]
  %v29 = vld [vmem:[%s0 + $0x68] sm:$0xf]
  %v30 = vld [vmem:[%s0 + $0x6c] sm:$0xff]
  %v31 = vld [vmem:[%s0 + $0x74] sm:$0xff]
  %v32 = vld [vmem:[%s0 + $0x7c] sm:$0xff]
  %v33 = vld [vmem:[%s0 + $0x84] sm:$0xff]
  %v34 = vld [vmem:[%s0 + $0x8c] sm:$0xf]
  %v35 = vld [vmem:[%s0 + $0x90] sm:$0xff]
  %v36 = vld [vmem:[%s0 + $0x98] sm:$0xff]
  %v37 = vld [vmem:[%s0 + $0xa0] sm:$0xff]
  %v38 = vld [vmem:[%s0 + $0xa8] sm:$0xff]
  %v39 = vld [vmem:[%s0 + $0xb0] sm:$0xf]
  %v40 = vld [vmem:[%s0 + $0xb4] sm:$0xff]
  %v41 = vld [vmem:[%s0 + $0xbc] sm:$0xff]
  %v42 = vld [vmem:[%s0 + $0xc4] sm:$0xff]
  %v43 = vld [vmem:[%s0 + $0xcc] sm:$0xff]
  %v44 = vld [vmem:[%s0 + $0xd4] sm:$0xf]
  %v45 = vld [vmem:[%s0 + $0xd8] sm:$0xff]
  %v46 = vld [vmem:[%s0 + $0xe0] sm:$0xff]
  %v47 = vld [vmem:[%s0 + $0xe8] sm:$0xff]
  %v48 = vld [vmem:[%s0 + $0xf0] sm:$0xff]
  %v49 = vld [vmem:[%s0 + $0xf8] sm:$0xf]
  %v50 = vld [vmem:[%s0 + $0xfc] sm:$0xff]
  %v51 = vld [vmem:[%s0 + $0x104] sm:$0xff]
  %v52 = vld [vmem:[%s0 + $0x10c] sm:$0xff]
  %v53 = vld [vmem:[%s0 + $0x114] sm:$0xff]
  %v54 = vld [vmem:[%s0 + $0x11c] sm:$0xf]
  %v55 = vld [vmem:[%s0 + $0x120] sm:$0xff]
  %v56 = vld [vmem:[%s0 + $0x128] sm:$0xff]
  %v57 = vld [vmem:[%s0 + $0x130] sm:$0xff]
  %v58 = vld [vmem:[%s0 + $0x138] sm:$0xff]
  %v59 = vld [vmem:[%s0 + $0x140] sm:$0xf]
  %v60 = vld [vmem:[%s0 + $0x144] sm:$0xff]
  %v61 = vld [vmem:[%s0 + $0x14c] sm:$0xff]
  %v62 = vld [vmem:[%s0 + $0x154] sm:$0xff]
  %v63 = vld [vmem:[%s0 + $0x15c] sm:$0xff]
  %v64 = vld [vmem:[%s0 + $0x164] sm:$0xf]
  %v65 = vld [vmem:[%s0 + $0x168] sm:$0xff]
  %v66 = vld [vmem:[%s0 + $0x170] sm:$0xff]
  %v67 = vld [vmem:[%s0 + $0x178] sm:$0xff]
  %v68 = vld [vmem:[%s0 + $0x180] sm:$0xff]
  %v69 = vld [vmem:[%s0 + $0x188] sm:$0xf]
  %v70 = vld [vmem:[%s0 + $0x18c] sm:$0xff]
  %v71 = vld [vmem:[%s0 + $0x194] sm:$0xff]
  %v72 = vld [vmem:[%s0 + $0x19c] sm:$0xff]
  %v73 = vld [vmem:[%s0 + $0x1a4] sm:$0xff]
  %v74 = vld [vmem:[%s0 + $0x1ac] sm:$0xf]
  %v75 = vld [vmem:[%s0 + $0x1b0] sm:$0xff]
  %v76 = vld [vmem:[%s0 + $0x1b8] sm:$0xff]
  %v77 = vld [vmem:[%s0 + $0x1c0] sm:$0xff]
  %v78 = vld [vmem:[%s0 + $0x1c8] sm:$0xff]
  %v79 = vld [vmem:[%s0 + $0x1d0] sm:$0xf]
  %v80 = vld [vmem:[%s0 + $0x1d4] sm:$0xff]
  %v81 = vld [vmem:[%s0 + $0x1dc] sm:$0xff]
  %v82 = vld [vmem:[%s0 + $0x1e4] sm:$0xff]
  %v83 = vld [vmem:[%s0 + $0x1ec] sm:$0xff]
  %v84 = vld [vmem:[%s0 + $0x1f4] sm:$0xf]
  %v85 = vld [vmem:[%s0 + $0x1f8] sm:$0xff]
  %v86 = vld [vmem:[%s0 + $0x200] sm:$0xff]
  %v87 = vld [vmem:[%s0 + $0x208] sm:$0xff]
  %v88 = vld [vmem:[%s0 + $0x210] sm:$0xff]
  %v89 = vld [vmem:[%s0 + $0x218] sm:$0xf]
  %v90 = vld [vmem:[%s0 + $0x21c] sm:$0xff]
  %v91 = vld [vmem:[%s0 + $0x224] sm:$0xff]
  %v92 = vld [vmem:[%s0 + $0x22c] sm:$0xff]
  %v93 = vld [vmem:[%s0 + $0x234] sm:$0xff]
  %v94 = vld [vmem:[%s0 + $0x23c] sm:$0xf]
  %v95 = vld [vmem:[%s0 + $0x240] sm:$0xff]
  %v96 = vld [vmem:[%s0 + $0x248] sm:$0xff]
  %v97 = vld [vmem:[%s0 + $0x250] sm:$0xff]
  %v98 = vld [vmem:[%s0 + $0x258] sm:$0xff]
  %v99 = vld [vmem:[%s0 + $0x260] sm:$0xf]
  %v100 = vld [vmem:[%s0 + $0x264] sm:$0xff]
  %v101 = vld [vmem:[%s0 + $0x26c] sm:$0xff]
  %v102 = vld [vmem:[%s0 + $0x274] sm:$0xff]
  %v103 = vld [vmem:[%s0 + $0x27c] sm:$0xff]
  %v104 = vld [vmem:[%s0 + $0x284] sm:$0xf]
  %v105 = vld [vmem:[%s0 + $0x288] sm:$0xff]
  %v106 = vld [vmem:[%s0 + $0x290] sm:$0xff]
  %v107 = vld [vmem:[%s0 + $0x298] sm:$0xff]
  %v108 = vld [vmem:[%s0 + $0x2a0] sm:$0xff]
  %v109 = vld [vmem:[%s0 + $0x2a8] sm:$0xf]
  %v110 = vld [vmem:[%s0 + $0x2ac] sm:$0xff]
  %v111 = vld [vmem:[%s0 + $0x2b4] sm:$0xff]
  %v112 = vld [vmem:[%s0 + $0x2bc] sm:$0xff]
  %v113 = vld [vmem:[%s0 + $0x2c4] sm:$0xff]
  %v114 = vld [vmem:[%s0 + $0x2cc] sm:$0xf]
  %v115 = vld [vmem:[%s0 + $0x2d0] sm:$0xff]
  %v116 = vld [vmem:[%s0 + $0x2d8] sm:$0xff]
  %v117 = vld [vmem:[%s0 + $0x2e0] sm:$0xff]
  %v118 = vld [vmem:[%s0 + $0x2e8] sm:$0xff]
  %v119 = vld [vmem:[%s0 + $0x2f0] sm:$0xf]
  %v120 = vld [vmem:[%s0 + $0x2f4] sm:$0xff]
  %v121 = vld [vmem:[%s0 + $0x2fc] sm:$0xff]
  %v122 = vld [vmem:[%s0 + $0x304] sm:$0xff]
  %v123 = vld [vmem:[%s0 + $0x30c] sm:$0xff]
  %v124 = vld [vmem:[%s0 + $0x314] sm:$0xf]
  %v125 = vld [vmem:[%s0 + $0x318] sm:$0xff]
  %v126 = vld [vmem:[%s0 + $0x320] sm:$0xff]
  %v127 = vld [vmem:[%s0 + $0x328] sm:$0xff]
  %v128 = vld [vmem:[%s0 + $0x330] sm:$0xff]
  %v129 = vld [vmem:[%s0 + $0x338] sm:$0xf]
  %v130 = vld [vmem:[%s0 + $0x33c] sm:$0xff]
  %v131 = vld [vmem:[%s0 + $0x344] sm:$0xff]
  %v132 = vld [vmem:[%s0 + $0x34c] sm:$0xff]
  %v133 = vld [vmem:[%s0 + $0x354] sm:$0xff]
  %v134 = vld [vmem:[%s0 + $0x35c] sm:$0xf]
  %v135 = vld [vmem:[%s0 + $0x360] sm:$0xff]
  %v136 = vld [vmem:[%s0 + $0x368] sm:$0xff]
  %v137 = vld [vmem:[%s0 + $0x370] sm:$0xff]
  %v138 = vld [vmem:[%s0 + $0x378] sm:$0xff]
  %v139 = vld [vmem:[%s0 + $0x380] sm:$0xf]
  %v140 = vld [vmem:[%s0 + $0x384] sm:$0xff]
  %v141 = vld [vmem:[%s0 + $0x38c] sm:$0xff]
  %v142 = vld [vmem:[%s0 + $0x394] sm:$0xff]
  %v143 = vld [vmem:[%s0 + $0x39c] sm:$0xff]
  %v144 = vld [vmem:[%s0 + $0x3a4] sm:$0xf]
  %v145 = vld [vmem:[%s0 + $0x3a8] sm:$0xff]
  %v146 = vld [vmem:[%s0 + $0x3b0] sm:$0xff]
  %v147 = vld [vmem:[%s0 + $0x3b8] sm:$0xff]
  %v148 = vld [vmem:[%s0 + $0x3c0] sm:$0xff]
  %v149 = vld [vmem:[%s0 + $0x3c8] sm:$0xf]
  %v150 = vld [vmem:[%s0 + $0x3cc] sm:$0xff]
  %v151 = vld [vmem:[%s0 + $0x3d4] sm:$0xff]
  %v152 = vld [vmem:[%s0 + $0x3dc] sm:$0xff]
  %v153 = vld [vmem:[%s0 + $0x3e4] sm:$0xff]
  %v154 = vld [vmem:[%s0 + $0x3ec] sm:$0xf]
  %v155 = vld [vmem:[%s0 + $0x3f0] sm:$0xff]
  %v156 = vld [vmem:[%s0 + $0x3f8] sm:$0xff]
  %v157 = vld [vmem:[%s0 + $0x400] sm:$0xff]
  %v158 = vld [vmem:[%s0 + $0x408] sm:$0xff]
  %v159 = vld [vmem:[%s0 + $0x410] sm:$0xf]
  %v160 = vld [vmem:[%s0 + $0x414] sm:$0xff]
  %v161 = vld [vmem:[%s0 + $0x41c] sm:$0xff]
  %v162 = vld [vmem:[%s0 + $0x424] sm:$0xff]
  %v163 = vld [vmem:[%s0 + $0x42c] sm:$0xff]
  %v164 = vld [vmem:[%s0 + $0x434] sm:$0xf]
  %v165 = vld [vmem:[%s0 + $0x438] sm:$0xff]
  %v166 = vld [vmem:[%s0 + $0x440] sm:$0xff]
  %v167 = vld [vmem:[%s0 + $0x448] sm:$0xff]
  %v168 = vld [vmem:[%s0 + $0x450] sm:$0xff]
  %v169 = vld [vmem:[%s0 + $0x458] sm:$0xf]
  %v170 = vld [vmem:[%s0 + $0x45c] sm:$0xff]
  %v171 = vld [vmem:[%s0 + $0x464] sm:$0xff]
  %v172 = vld [vmem:[%s0 + $0x46c] sm:$0xff]
  %v173 = vld [vmem:[%s0 + $0x474] sm:$0xff]
  %v174 = vld [vmem:[%s0 + $0x47c] sm:$0xf]
  %v175 = vld [vmem:[%s0 + $0x480] sm:$0xff]
  %v176 = vld [vmem:[%s0 + $0x488] sm:$0xff]
  %v177 = vld [vmem:[%s0 + $0x490] sm:$0xff]
  %v178 = vld [vmem:[%s0 + $0x498] sm:$0xff]
  %v179 = vld [vmem:[%s0 + $0x4a0] sm:$0xf]
  %v180 = vld [vmem:[%s0 + $0x4a4] sm:$0xff]
  %v181 = vld [vmem:[%s0 + $0x4ac] sm:$0xff]
  %v182 = vld [vmem:[%s0 + $0x4b4] sm:$0xff]
  %v183 = vld [vmem:[%s0 + $0x4bc] sm:$0xff]
  %v184 = vld [vmem:[%s0 + $0x4c4] sm:$0xf]
  %v185 = vld [vmem:[%s0 + $0x4c8] sm:$0xff]
  %v186 = vld [vmem:[%s0 + $0x4d0] sm:$0xff]
  %v187 = vld [vmem:[%s0 + $0x4d8] sm:$0xff]
  %v188 = vld [vmem:[%s0 + $0x4e0] sm:$0xff]
  %v189 = vld [vmem:[%s0 + $0x4e8] sm:$0xf]
  %v190 = vld [vmem:[%s0 + $0x4ec] sm:$0xff]
  %v191 = vld [vmem:[%s0 + $0x4f4] sm:$0xff]
  %v192 = vld [vmem:[%s0 + $0x4fc] sm:$0xff]
  %v193 = vld [vmem:[%s0 + $0x504] sm:$0xff]
  %v194 = vld [vmem:[%s0 + $0x50c] sm:$0xf]
  %v195 = vld [vmem:[%s0 + $0x510] sm:$0xff]
  %v196 = vld [vmem:[%s0 + $0x518] sm:$0xff]
  %v197 = vld [vmem:[%s0 + $0x520] sm:$0xff]
  %v198 = vld [vmem:[%s0 + $0x528] sm:$0xff]
  %v199 = vld [vmem:[%s0 + $0x530] sm:$0xf]
  %v200 = vld [vmem:[%s0 + $0x534] sm:$0xff]
  %v201 = vld [vmem:[%s0 + $0x53c] sm:$0xff]
  %v202 = vld [vmem:[%s0 + $0x544] sm:$0xff]
  %v203 = vld [vmem:[%s0 + $0x54c] sm:$0xff]
  %v204 = vld [vmem:[%s0 + $0x554] sm:$0xf]
  %v205 = vld [vmem:[%s0 + $0x558] sm:$0xff]
  %v206 = vld [vmem:[%s0 + $0x560] sm:$0xff]
  %v207 = vld [vmem:[%s0 + $0x568] sm:$0xff]
  %v208 = vld [vmem:[%s0 + $0x570] sm:$0xff]
  %v209 = vld [vmem:[%s0 + $0x578] sm:$0xf]
  %v210 = vld [vmem:[%s0 + $0x57c] sm:$0xff]
  %v211 = vld [vmem:[%s0 + $0x584] sm:$0xff]
  %v212 = vld [vmem:[%s0 + $0x58c] sm:$0xff]
  %v213 = vld [vmem:[%s0 + $0x594] sm:$0xff]
  %v214 = vld [vmem:[%s0 + $0x59c] sm:$0xf]
  %v215 = vld [vmem:[%s0 + $0x5a0] sm:$0xff]
  %v216 = vld [vmem:[%s0 + $0x5a8] sm:$0xff]
  %v217 = vld [vmem:[%s0 + $0x5b0] sm:$0xff]
  %v218 = vld [vmem:[%s0 + $0x5b8] sm:$0xff]
  %v219 = vld [vmem:[%s0 + $0x5c0] sm:$0xf]
  %v220 = vld [vmem:[%s0 + $0x5c4] sm:$0xff]
  %v221 = vld [vmem:[%s0 + $0x5cc] sm:$0xff]
  %v222 = vld [vmem:[%s0 + $0x5d4] sm:$0xff]
  %v223 = vld [vmem:[%s0 + $0x5dc] sm:$0xff]
  %v224 = vld [vmem:[%s0 + $0x5e4] sm:$0xf]
  %v225 = vld [vmem:[%s0 + $0x5e8] sm:$0xff]
  %v226 = vld [vmem:[%s0 + $0x5f0] sm:$0xff]
  %v227 = vld [vmem:[%s0 + $0x5f8] sm:$0xff]
  %v228 = vld [vmem:[%s0 + $0x600] sm:$0xff]
  %v229 = vld [vmem:[%s0 + $0x608] sm:$0xf]
  %v230 = vld [vmem:[%s0 + $0x60c] sm:$0xff]
  %v231 = vld [vmem:[%s0 + $0x614] sm:$0xff]
  %v232 = vld [vmem:[%s0 + $0x61c] sm:$0xff]
  %v233 = vld [vmem:[%s0 + $0x624] sm:$0xff]
  %v234 = vld [vmem:[%s0 + $0x62c] sm:$0xf]
  %v235 = vld [vmem:[%s0 + $0x630] sm:$0xff]
  %v236 = vld [vmem:[%s0 + $0x638] sm:$0xff]
  %v237 = vld [vmem:[%s0 + $0x640] sm:$0xff]
  %v238 = vld [vmem:[%s0 + $0x648] sm:$0xff]
  %v239 = vld [vmem:[%s0 + $0x650] sm:$0xf]
  %v240 = vld [vmem:[%s0 + $0x654] sm:$0xff]
  %v241 = vld [vmem:[%s0 + $0x65c] sm:$0xff]
  %v242 = vld [vmem:[%s0 + $0x664] sm:$0xff]
  %v243 = vld [vmem:[%s0 + $0x66c] sm:$0xff]
  %v244 = vld [vmem:[%s0 + $0x674] sm:$0xf]
  %v245 = vld [vmem:[%s0 + $0x678] sm:$0xff]
  %v246 = vld [vmem:[%s0 + $0x680] sm:$0xff]
  %v247 = vld [vmem:[%s0 + $0x688] sm:$0xff]
  %v248 = vld [vmem:[%s0 + $0x690] sm:$0xff]
  %v249 = vld [vmem:[%s0 + $0x698] sm:$0xf]
  %v250 = vld [vmem:[%s0 + $0x69c] sm:$0xff]
  %v251 = vld [vmem:[%s0 + $0x6a4] sm:$0xff]
  %v252 = vld [vmem:[%s0 + $0x6ac] sm:$0xff]
  %v253 = vld [vmem:[%s0 + $0x6b4] sm:$0xff]
  %v254 = vld [vmem:[%s0 + $0x6bc] sm:$0xf]
  %v255 = vld [vmem:[%s0 + $0x6c0] sm:$0xff]
  %v256 = vld [vmem:[%s0 + $0x6c8] sm:$0xff]
  %v257 = vld [vmem:[%s0 + $0x6d0] sm:$0xff]
  %v258 = vld [vmem:[%s0 + $0x6d8] sm:$0xff]
  %v259 = vld [vmem:[%s0 + $0x6e0] sm:$0xf]
  %v260 = vld [vmem:[%s0 + $0x6e4] sm:$0xff]
  %v261 = vld [vmem:[%s0 + $0x6ec] sm:$0xff]
  %v262 = vld [vmem:[%s0 + $0x6f4] sm:$0xff]
  %v263 = vld [vmem:[%s0 + $0x6fc] sm:$0xff]
  %v264 = vld [vmem:[%s0 + $0x704] sm:$0xf]
  %v265 = vld [vmem:[%s0 + $0x708] sm:$0xff]
  %v266 = vld [vmem:[%s0 + $0x710] sm:$0xff]
  %v267 = vld [vmem:[%s0 + $0x718] sm:$0xff]
  %v268 = vld [vmem:[%s0 + $0x720] sm:$0xff]
  %v269 = vld [vmem:[%s0 + $0x728] sm:$0xf]
  %v270 = vld [vmem:[%s0 + $0x72c] sm:$0xff]
  %v271 = vld [vmem:[%s0 + $0x734] sm:$0xff]
  %v272 = vld [vmem:[%s0 + $0x73c] sm:$0xff]
  %v273 = vld [vmem:[%s0 + $0x744] sm:$0xff]
  %v274 = vld [vmem:[%s0 + $0x74c] sm:$0xf]
  %v275 = vld [vmem:[%s0 + $0x750] sm:$0xff]
  %v276 = vld [vmem:[%s0 + $0x758] sm:$0xff]
  %v277 = vld [vmem:[%s0 + $0x760] sm:$0xff]
  %v278 = vld [vmem:[%s0 + $0x768] sm:$0xff]
  %v279 = vld [vmem:[%s0 + $0x770] sm:$0xf]
  %v280 = vld [vmem:[%s0 + $0x774] sm:$0xff]
  %v281 = vld [vmem:[%s0 + $0x77c] sm:$0xff]
  %v282 = vld [vmem:[%s0 + $0x784] sm:$0xff]
  %v283 = vld [vmem:[%s0 + $0x78c] sm:$0xff]
  %v284 = vld [vmem:[%s0 + $0x794] sm:$0xf]
  %v285 = vld [vmem:[%s0 + $0x798] sm:$0xff]
  %v286 = vld [vmem:[%s0 + $0x7a0] sm:$0xff]
  %v287 = vld [vmem:[%s0 + $0x7a8] sm:$0xff]
  %v288 = vld [vmem:[%s0 + $0x7b0] sm:$0xff]
  %v289 = vld [vmem:[%s0 + $0x7b8] sm:$0xf]
  %v290 = vld [vmem:[%s0 + $0x7bc] sm:$0xff]
  %v291 = vld [vmem:[%s0 + $0x7c4] sm:$0xff]
  %v292 = vld [vmem:[%s0 + $0x7cc] sm:$0xff]
  %v293 = vld [vmem:[%s0 + $0x7d4] sm:$0xff]
  %v294 = vld [vmem:[%s0 + $0x7dc] sm:$0xf]
  %v295 = vld [vmem:[%s0 + $0x7e0] sm:$0xff]
  %v296 = vld [vmem:[%s0 + $0x7e8] sm:$0xff]
  %v297 = vld [vmem:[%s0 + $0x7f0] sm:$0xff]
  %v298 = vld [vmem:[%s0 + $0x7f8] sm:$0xff]
  %v299 = vld [vmem:[%s0 + $0x800] sm:$0xf]
  %v300 = vld [vmem:[%s0 + $0x804] sm:$0xff]
  %v301 = vld [vmem:[%s0 + $0x80c] sm:$0xff]
  %v302 = vld [vmem:[%s0 + $0x814] sm:$0xff]
  %v303 = vld [vmem:[%s0 + $0x81c] sm:$0xff]
  %v304 = vld [vmem:[%s0 + $0x824] sm:$0xf]
  %v305 = vld [vmem:[%s0 + $0x828] sm:$0xff]
  %v306 = vld [vmem:[%s0 + $0x830] sm:$0xff]
  %v307 = vld [vmem:[%s0 + $0x838] sm:$0xff]
  %v308 = vld [vmem:[%s0 + $0x840] sm:$0xff]
  %v309 = vld [vmem:[%s0 + $0x848] sm:$0xf]
  %v310 = vld [vmem:[%s0 + $0x84c] sm:$0xff]
  %v311 = vld [vmem:[%s0 + $0x854] sm:$0xff]
  %v312 = vld [vmem:[%s0 + $0x85c] sm:$0xff]
  %v313 = vld [vmem:[%s0 + $0x864] sm:$0xff]
  %v314 = vld [vmem:[%s0 + $0x86c] sm:$0xf]
  %v315 = vld [vmem:[%s0 + $0x870] sm:$0xff]
  %v316 = vld [vmem:[%s0 + $0x878] sm:$0xff]
  %v317 = vld [vmem:[%s0 + $0x880] sm:$0xff]
  %v318 = vld [vmem:[%s0 + $0x888] sm:$0xff]
  %v319 = vld [vmem:[%s0 + $0x890] sm:$0xf]
  %v320 = vld [vmem:[%s0 + $0x894] sm:$0xff]
  %v321 = vld [vmem:[%s0 + $0x89c] sm:$0xff]
  %v322 = vld [vmem:[%s0 + $0x8a4] sm:$0xff]
  %v323 = vld [vmem:[%s0 + $0x8ac] sm:$0xff]
  %v324 = vld [vmem:[%s0 + $0x8b4] sm:$0xf]
  %v325 = vld [vmem:[%s0 + $0x8b8] sm:$0xff]
  %v326 = vld [vmem:[%s0 + $0x8c0] sm:$0xff]
  %v327 = vld [vmem:[%s0 + $0x8c8] sm:$0xff]
  %v328 = vld [vmem:[%s0 + $0x8d0] sm:$0xff]
  %v329 = vld [vmem:[%s0 + $0x8d8] sm:$0xf]
  %v330 = vld [vmem:[%s0 + $0x8dc] sm:$0xff]
  %v331 = vld [vmem:[%s0 + $0x8e4] sm:$0xff]
  %v332 = vld [vmem:[%s0 + $0x8ec] sm:$0xff]
  %v333 = vld [vmem:[%s0 + $0x8f4] sm:$0xff]
  %v334 = vld [vmem:[%s0 + $0x8fc] sm:$0xf]
  %v335 = vld [vmem:[%s1] sm:$0xf]
  %v336 = vld [vmem:[%s1 + $0x4] sm:$0xf]
  %v337 = vld [vmem:[%s1 + $0x8] sm:$0xf]
  %v338 = vld [vmem:[%s1 + $0xc] sm:$0xf]
  %v339 = vld [vmem:[%s1 + $0x10] sm:$0xf]
  %v340 = vld [vmem:[%s1 + $0x14] sm:$0xf]
  %v341 = vld [vmem:[%s1 + $0x18] sm:$0xf]
  %v342 = vld [vmem:[%s1 + $0x1c] sm:$0xf]
  %v343 = vld [vmem:[%s1 + $0x20] sm:$0xf]
  %v344 = vld [vmem:[%s1 + $0x24] sm:$0xf]
  %v345 = vld [vmem:[%s1 + $0x28] sm:$0xf]
  %v346 = vld [vmem:[%s1 + $0x2c] sm:$0xf]
  %v347 = vld [vmem:[%s1 + $0x30] sm:$0xf]
  %v348 = vld [vmem:[%s1 + $0x34] sm:$0xf]
  %v349 = vld [vmem:[%s1 + $0x38] sm:$0xf]
  %v350 = vld [vmem:[%s1 + $0x3c] sm:$0xf]
  %v351 = vld [vmem:[%s1 + $0x40] sm:$0xf]
  %v352 = vld [vmem:[%s1 + $0x44] sm:$0xf]
  %v353 = vld [vmem:[%s1 + $0x48] sm:$0xf]
  %v354 = vld [vmem:[%s1 + $0x4c] sm:$0xf]
  %v355 = vld [vmem:[%s1 + $0x50] sm:$0xf]
  %v356 = vld [vmem:[%s1 + $0x54] sm:$0xf]
  %v357 = vld [vmem:[%s1 + $0x58] sm:$0xf]
  %v358 = vld [vmem:[%s1 + $0x5c] sm:$0xf]
  %v359 = vld [vmem:[%s1 + $0x60] sm:$0xf]
  %v360 = vld [vmem:[%s1 + $0x64] sm:$0xf]
  %v361 = vld [vmem:[%s1 + $0x68] sm:$0xf]
  %v362 = vld [vmem:[%s1 + $0x6c] sm:$0xf]
  %v363 = vld [vmem:[%s1 + $0x70] sm:$0xf]
  %v364 = vld [vmem:[%s1 + $0x74] sm:$0xf]
  %v365 = vld [vmem:[%s1 + $0x78] sm:$0xf]
  %v366 = vld [vmem:[%s1 + $0x7c] sm:$0xf]
  %v367 = vld [vmem:[%s1 + $0x80] sm:$0xf]
  %v368 = vld [vmem:[%s1 + $0x84] sm:$0xf]
  %v369 = vld [vmem:[%s1 + $0x88] sm:$0xf]
  %v370 = vld [vmem:[%s1 + $0x8c] sm:$0xf]
  %v371 = vld [vmem:[%s1 + $0x90] sm:$0xf]
  %v372 = vld [vmem:[%s1 + $0x94] sm:$0xf]
  %v373 = vld [vmem:[%s1 + $0x98] sm:$0xf]
  %v374 = vld [vmem:[%s1 + $0x9c] sm:$0xf]
  %v375 = vld [vmem:[%s1 + $0xa0] sm:$0xf]
  %v376 = vld [vmem:[%s1 + $0xa4] sm:$0xf]
  %v377 = vld [vmem:[%s1 + $0xa8] sm:$0xf]
  %v378 = vld [vmem:[%s1 + $0xac] sm:$0xf]
  %v379 = vld [vmem:[%s1 + $0xb0] sm:$0xf]
  %v380 = vld [vmem:[%s1 + $0xb4] sm:$0xf]
  %v381 = vld [vmem:[%s1 + $0xb8] sm:$0xf]
  %v382 = vld [vmem:[%s1 + $0xbc] sm:$0xf]
  %v383 = vld [vmem:[%s1 + $0xc0] sm:$0xf]
  %v384 = vld [vmem:[%s1 + $0xc4] sm:$0xf]
  %v385 = vld [vmem:[%s1 + $0xc8] sm:$0xf]
  %v386 = vld [vmem:[%s1 + $0xcc] sm:$0xf]
  %v387 = vld [vmem:[%s1 + $0xd0] sm:$0xf]
  %v388 = vld [vmem:[%s1 + $0xd4] sm:$0xf]
  %v389 = vld [vmem:[%s1 + $0xd8] sm:$0xf]
  %v390 = vld [vmem:[%s1 + $0xdc] sm:$0xf]
  %v391 = vld [vmem:[%s1 + $0xe0] sm:$0xf]
  %v392 = vld [vmem:[%s1 + $0xe4] sm:$0xf]
  %v393 = vld [vmem:[%s1 + $0xe8] sm:$0xf]
  %v394 = vld [vmem:[%s1 + $0xec] sm:$0xf]
  %v395 = vld [vmem:[%s1 + $0xf0] sm:$0xf]
  %v396 = vld [vmem:[%s1 + $0xf4] sm:$0xf]
  %v397 = vld [vmem:[%s1 + $0xf8] sm:$0xf]
  %v398 = vld [vmem:[%s1 + $0xfc] sm:$0xf]
  %v399 = vld [vmem:[%s1 + $0x100] sm:$0xf]
  %v400 = vld [vmem:[%s1 + $0x104] sm:$0xf]
  %v401 = vld [vmem:[%s1 + $0x108] sm:$0xf]
  %v402 = vld [vmem:[%s1 + $0x10c] sm:$0xf]
  %v403 = vld [vmem:[%s1 + $0x110] sm:$0xf]
  %v404 = vld [vmem:[%s1 + $0x114] sm:$0xf]
  %v405 = vld [vmem:[%s1 + $0x118] sm:$0xf]
  %v406 = vld [vmem:[%s1 + $0x11c] sm:$0xf]
  %v407 = vld [vmem:[%s1 + $0x120] sm:$0xf]
  %v408 = vld [vmem:[%s1 + $0x124] sm:$0xf]
  %v409 = vld [vmem:[%s1 + $0x128] sm:$0xf]
  %v410 = vld [vmem:[%s1 + $0x12c] sm:$0xf]
  %v411 = vld [vmem:[%s1 + $0x130] sm:$0xf]
  %v412 = vld [vmem:[%s1 + $0x134] sm:$0xf]
  %v413 = vld [vmem:[%s1 + $0x138] sm:$0xf]
  %v414 = vld [vmem:[%s1 + $0x13c] sm:$0xf]
  %v415 = vld [vmem:[%s1 + $0x140] sm:$0xf]
  %v416 = vld [vmem:[%s1 + $0x144] sm:$0xf]
  %v417 = vld [vmem:[%s1 + $0x148] sm:$0xf]
  %v418 = vld [vmem:[%s1 + $0x14c] sm:$0xf]
  %v419 = vld [vmem:[%s1 + $0x150] sm:$0xf]
  %v420 = vld [vmem:[%s1 + $0x154] sm:$0xf]
  %v421 = vld [vmem:[%s1 + $0x158] sm:$0xf]
  %v422 = vld [vmem:[%s1 + $0x15c] sm:$0xf]
  %v423 = vld [vmem:[%s1 + $0x160] sm:$0xf]
  %v424 = vld [vmem:[%s1 + $0x164] sm:$0xf]
  %v425 = vld [vmem:[%s1 + $0x168] sm:$0xf]
  %v426 = vld [vmem:[%s1 + $0x16c] sm:$0xf]
  %v427 = vld [vmem:[%s1 + $0x170] sm:$0xf]
  %v428 = vld [vmem:[%s1 + $0x174] sm:$0xf]
  %v429 = vld [vmem:[%s1 + $0x178] sm:$0xf]
  %v430 = vld [vmem:[%s1 + $0x17c] sm:$0xf]
  %v431 = vld [vmem:[%s1 + $0x180] sm:$0xf]
  %v432 = vld [vmem:[%s1 + $0x184] sm:$0xf]
  %v433 = vld [vmem:[%s1 + $0x188] sm:$0xf]
  %v434 = vld [vmem:[%s1 + $0x18c] sm:$0xf]
  %v435 = vld [vmem:[%s1 + $0x190] sm:$0xf]
  %v436 = vld [vmem:[%s1 + $0x194] sm:$0xf]
  %v437 = vld [vmem:[%s1 + $0x198] sm:$0xf]
  %v438 = vld [vmem:[%s1 + $0x19c] sm:$0xf]
  %v439 = vld [vmem:[%s1 + $0x1a0] sm:$0xf]
  %v440 = vld [vmem:[%s1 + $0x1a4] sm:$0xf]
  %v441 = vld [vmem:[%s1 + $0x1a8] sm:$0xf]
  %v442 = vld [vmem:[%s1 + $0x1ac] sm:$0xf]
  %v443 = vld [vmem:[%s1 + $0x1b0] sm:$0xf]
  %v444 = vld [vmem:[%s1 + $0x1b4] sm:$0xf]
  %v445 = vld [vmem:[%s1 + $0x1b8] sm:$0xf]
  %v446 = vld [vmem:[%s1 + $0x1bc] sm:$0xf]
  %v447 = vld [vmem:[%s1 + $0x1c0] sm:$0xf]
  %v448 = vld [vmem:[%s1 + $0x1c4] sm:$0xf]
  %v449 = vld [vmem:[%s1 + $0x1c8] sm:$0xf]
  %v450 = vld [vmem:[%s1 + $0x1cc] sm:$0xf]
  %v451 = vld [vmem:[%s1 + $0x1d0] sm:$0xf]
  %v452 = vld [vmem:[%s1 + $0x1d4] sm:$0xf]
  %v453 = vld [vmem:[%s1 + $0x1d8] sm:$0xf]
  %v454 = vld [vmem:[%s1 + $0x1dc] sm:$0xf]
  %v455 = vld [vmem:[%s1 + $0x1e0] sm:$0xf]
  %v456 = vld [vmem:[%s1 + $0x1e4] sm:$0xf]
  %v457 = vld [vmem:[%s1 + $0x1e8] sm:$0xf]
  %v458 = vld [vmem:[%s1 + $0x1ec] sm:$0xf]
  %v459 = vld [vmem:[%s1 + $0x1f0] sm:$0xf]
  %v460 = vld [vmem:[%s1 + $0x1f4] sm:$0xf]
  %v461 = vld [vmem:[%s1 + $0x1f8] sm:$0xf]
  %v462 = vld [vmem:[%s1 + $0x1fc] sm:$0xf]
  %v463 = vld [vmem:[%s1 + $0x200] sm:$0xf]
  %v464 = vld [vmem:[%s1 + $0x204] sm:$0xf]
  %v465 = vld [vmem:[%s1 + $0x208] sm:$0xf]
  %v466 = vld [vmem:[%s1 + $0x20c] sm:$0xf]
  %v467 = vld [vmem:[%s1 + $0x210] sm:$0xf]
  %v468 = vld [vmem:[%s1 + $0x214] sm:$0xf]
  %v469 = vld [vmem:[%s1 + $0x218] sm:$0xf]
  %v470 = vld [vmem:[%s1 + $0x21c] sm:$0xf]
  %v471 = vld [vmem:[%s1 + $0x220] sm:$0xf]
  %v472 = vld [vmem:[%s1 + $0x224] sm:$0xf]
  %v473 = vld [vmem:[%s1 + $0x228] sm:$0xf]
  %v474 = vld [vmem:[%s1 + $0x22c] sm:$0xf]
  %v475 = vld [vmem:[%s1 + $0x230] sm:$0xf]
  %v476 = vld [vmem:[%s1 + $0x234] sm:$0xf]
  %v477 = vld [vmem:[%s1 + $0x238] sm:$0xf]
  %v478 = vld [vmem:[%s1 + $0x23c] sm:$0xf]
  %v479 = vld [vmem:[%s2] sm:$0xff]
  %v480 = vlaneseq
  %v481 = vshrl.u32 %v480, 7
  %v482 = vsub.s32 0, %v481
  %v483 = vrot.slane %v479, %v482
  %v804 = vunpack.c.l.b16 %v15
  %v805 = vunpack.c.h.b16 %v15
  %v806 = vunpack.c.l.b16 %v16
  %v807 = vunpack.c.h.b16 %v16
  %v808 = vunpack.c.l.b16 %v17
  %v809 = vunpack.c.h.b16 %v17
  %v810 = vunpack.c.l.b16 %v18
  %v811 = vunpack.c.h.b16 %v18
  %v812 = vunpack.c.l.b16 %v19
  %v813 = vunpack.c.l.b16 %v20
  %v814 = vunpack.c.h.b16 %v20
  %v815 = vunpack.c.l.b16 %v21
  %v816 = vunpack.c.h.b16 %v21
  %v817 = vunpack.c.l.b16 %v22
  %v818 = vunpack.c.h.b16 %v22
  %v819 = vunpack.c.l.b16 %v23
  %v820 = vunpack.c.h.b16 %v23
  %v821 = vunpack.c.l.b16 %v24
  %v822 = vunpack.c.l.b16 %v25
  %v823 = vunpack.c.h.b16 %v25
  %v824 = vunpack.c.l.b16 %v26
  %v825 = vunpack.c.h.b16 %v26
  %v826 = vunpack.c.l.b16 %v27
  %v827 = vunpack.c.h.b16 %v27
  %v828 = vunpack.c.l.b16 %v28
  %v829 = vunpack.c.h.b16 %v28
  %v830 = vunpack.c.l.b16 %v29
  %v831 = vunpack.c.l.b16 %v30
  %v832 = vunpack.c.h.b16 %v30
  %v833 = vunpack.c.l.b16 %v31
  %v834 = vunpack.c.h.b16 %v31
  %v835 = vunpack.c.l.b16 %v32
  %v836 = vunpack.c.h.b16 %v32
  %v837 = vunpack.c.l.b16 %v33
  %v838 = vunpack.c.h.b16 %v33
  %v839 = vunpack.c.l.b16 %v34
  %v840 = vunpack.c.l.b16 %v35
  %v841 = vunpack.c.h.b16 %v35
  %v842 = vunpack.c.l.b16 %v36
  %v843 = vunpack.c.h.b16 %v36
  %v844 = vunpack.c.l.b16 %v37
  %v845 = vunpack.c.h.b16 %v37
  %v846 = vunpack.c.l.b16 %v38
  %v847 = vunpack.c.h.b16 %v38
  %v848 = vunpack.c.l.b16 %v39
  %v849 = vunpack.c.l.b16 %v40
  %v850 = vunpack.c.h.b16 %v40
  %v851 = vunpack.c.l.b16 %v41
  %v852 = vunpack.c.h.b16 %v41
  %v853 = vunpack.c.l.b16 %v42
  %v854 = vunpack.c.h.b16 %v42
  %v855 = vunpack.c.l.b16 %v43
  %v856 = vunpack.c.h.b16 %v43
  %v857 = vunpack.c.l.b16 %v44
  %v858 = vunpack.c.l.b16 %v45
  %v859 = vunpack.c.h.b16 %v45
  %v860 = vunpack.c.l.b16 %v46
  %v861 = vunpack.c.h.b16 %v46
  %v862 = vunpack.c.l.b16 %v47
  %v863 = vunpack.c.h.b16 %v47
  %v864 = vunpack.c.l.b16 %v48
  %v865 = vunpack.c.h.b16 %v48
  %v866 = vunpack.c.l.b16 %v49
  %v867 = vunpack.c.l.b16 %v50
  %v868 = vunpack.c.h.b16 %v50
  %v869 = vunpack.c.l.b16 %v51
  %v870 = vunpack.c.h.b16 %v51
  %v871 = vunpack.c.l.b16 %v52
  %v872 = vunpack.c.h.b16 %v52
  %v873 = vunpack.c.l.b16 %v53
  %v874 = vunpack.c.h.b16 %v53
  %v875 = vunpack.c.l.b16 %v54
  %v876 = vunpack.c.l.b16 %v55
  %v877 = vunpack.c.h.b16 %v55
  %v878 = vunpack.c.l.b16 %v56
  %v879 = vunpack.c.h.b16 %v56
  %v880 = vunpack.c.l.b16 %v57
  %v881 = vunpack.c.h.b16 %v57
  %v882 = vunpack.c.l.b16 %v58
  %v883 = vunpack.c.h.b16 %v58
  %v884 = vunpack.c.l.b16 %v59
  %v885 = vunpack.c.l.b16 %v60
  %v886 = vunpack.c.h.b16 %v60
  %v887 = vunpack.c.l.b16 %v61
  %v888 = vunpack.c.h.b16 %v61
  %v889 = vunpack.c.l.b16 %v62
  %v890 = vunpack.c.h.b16 %v62
  %v891 = vunpack.c.l.b16 %v63
  %v892 = vunpack.c.h.b16 %v63
  %v893 = vunpack.c.l.b16 %v64
  %v894 = vunpack.c.l.b16 %v65
  %v895 = vunpack.c.h.b16 %v65
  %v896 = vunpack.c.l.b16 %v66
  %v897 = vunpack.c.h.b16 %v66
  %v898 = vunpack.c.l.b16 %v67
  %v899 = vunpack.c.h.b16 %v67
  %v900 = vunpack.c.l.b16 %v68
  %v901 = vunpack.c.h.b16 %v68
  %v902 = vunpack.c.l.b16 %v69
  %v903 = vunpack.c.l.b16 %v70
  %v904 = vunpack.c.h.b16 %v70
  %v905 = vunpack.c.l.b16 %v71
  %v906 = vunpack.c.h.b16 %v71
  %v907 = vunpack.c.l.b16 %v72
  %v908 = vunpack.c.h.b16 %v72
  %v909 = vunpack.c.l.b16 %v73
  %v910 = vunpack.c.h.b16 %v73
  %v911 = vunpack.c.l.b16 %v74
  %v912 = vunpack.c.l.b16 %v75
  %v913 = vunpack.c.h.b16 %v75
  %v914 = vunpack.c.l.b16 %v76
  %v915 = vunpack.c.h.b16 %v76
  %v916 = vunpack.c.l.b16 %v77
  %v917 = vunpack.c.h.b16 %v77
  %v918 = vunpack.c.l.b16 %v78
  %v919 = vunpack.c.h.b16 %v78
  %v920 = vunpack.c.l.b16 %v79
  %v921 = vunpack.c.l.b16 %v80
  %v922 = vunpack.c.h.b16 %v80
  %v923 = vunpack.c.l.b16 %v81
  %v924 = vunpack.c.h.b16 %v81
  %v925 = vunpack.c.l.b16 %v82
  %v926 = vunpack.c.h.b16 %v82
  %v927 = vunpack.c.l.b16 %v83
  %v928 = vunpack.c.h.b16 %v83
  %v929 = vunpack.c.l.b16 %v84
  %v930 = vunpack.c.l.b16 %v85
  %v931 = vunpack.c.h.b16 %v85
  %v932 = vunpack.c.l.b16 %v86
  %v933 = vunpack.c.h.b16 %v86
  %v934 = vunpack.c.l.b16 %v87
  %v935 = vunpack.c.h.b16 %v87
  %v936 = vunpack.c.l.b16 %v88
  %v937 = vunpack.c.h.b16 %v88
  %v938 = vunpack.c.l.b16 %v89
  %v939 = vunpack.c.l.b16 %v90
  %v940 = vunpack.c.h.b16 %v90
  %v941 = vunpack.c.l.b16 %v91
  %v942 = vunpack.c.h.b16 %v91
  %v943 = vunpack.c.l.b16 %v92
  %v944 = vunpack.c.h.b16 %v92
  %v945 = vunpack.c.l.b16 %v93
  %v946 = vunpack.c.h.b16 %v93
  %v947 = vunpack.c.l.b16 %v94
  %v948 = vunpack.c.l.b16 %v95
  %v949 = vunpack.c.h.b16 %v95
  %v950 = vunpack.c.l.b16 %v96
  %v951 = vunpack.c.h.b16 %v96
  %v952 = vunpack.c.l.b16 %v97
  %v953 = vunpack.c.h.b16 %v97
  %v954 = vunpack.c.l.b16 %v98
  %v955 = vunpack.c.h.b16 %v98
  %v956 = vunpack.c.l.b16 %v99
  %v957 = vunpack.c.l.b16 %v100
  %v958 = vunpack.c.h.b16 %v100
  %v959 = vunpack.c.l.b16 %v101
  %v960 = vunpack.c.h.b16 %v101
  %v961 = vunpack.c.l.b16 %v102
  %v962 = vunpack.c.h.b16 %v102
  %v963 = vunpack.c.l.b16 %v103
  %v964 = vunpack.c.h.b16 %v103
  %v965 = vunpack.c.l.b16 %v104
  %v966 = vunpack.c.l.b16 %v105
  %v967 = vunpack.c.h.b16 %v105
  %v968 = vunpack.c.l.b16 %v106
  %v969 = vunpack.c.h.b16 %v106
  %v970 = vunpack.c.l.b16 %v107
  %v971 = vunpack.c.h.b16 %v107
  %v972 = vunpack.c.l.b16 %v108
  %v973 = vunpack.c.h.b16 %v108
  %v974 = vunpack.c.l.b16 %v109
  %v975 = vunpack.c.l.b16 %v110
  %v976 = vunpack.c.h.b16 %v110
  %v977 = vunpack.c.l.b16 %v111
  %v978 = vunpack.c.h.b16 %v111
  %v979 = vunpack.c.l.b16 %v112
  %v980 = vunpack.c.h.b16 %v112
  %v981 = vunpack.c.l.b16 %v113
  %v982 = vunpack.c.h.b16 %v113
  %v983 = vunpack.c.l.b16 %v114
  %v984 = vunpack.c.l.b16 %v115
  %v985 = vunpack.c.h.b16 %v115
  %v986 = vunpack.c.l.b16 %v116
  %v987 = vunpack.c.h.b16 %v116
  %v988 = vunpack.c.l.b16 %v117
  %v989 = vunpack.c.h.b16 %v117
  %v990 = vunpack.c.l.b16 %v118
  %v991 = vunpack.c.h.b16 %v118
  %v992 = vunpack.c.l.b16 %v119
  %v993 = vunpack.c.l.b16 %v120
  %v994 = vunpack.c.h.b16 %v120
  %v995 = vunpack.c.l.b16 %v121
  %v996 = vunpack.c.h.b16 %v121
  %v997 = vunpack.c.l.b16 %v122
  %v998 = vunpack.c.h.b16 %v122
  %v999 = vunpack.c.l.b16 %v123
  %v1000 = vunpack.c.h.b16 %v123
  %v1001 = vunpack.c.l.b16 %v124
  %v1002 = vunpack.c.l.b16 %v125
  %v1003 = vunpack.c.h.b16 %v125
  %v1004 = vunpack.c.l.b16 %v126
  %v1005 = vunpack.c.h.b16 %v126
  %v1006 = vunpack.c.l.b16 %v127
  %v1007 = vunpack.c.h.b16 %v127
  %v1008 = vunpack.c.l.b16 %v128
  %v1009 = vunpack.c.h.b16 %v128
  %v1010 = vunpack.c.l.b16 %v129
  %v1011 = vunpack.c.l.b16 %v130
  %v1012 = vunpack.c.h.b16 %v130
  %v1013 = vunpack.c.l.b16 %v131
  %v1014 = vunpack.c.h.b16 %v131
  %v1015 = vunpack.c.l.b16 %v132
  %v1016 = vunpack.c.h.b16 %v132
  %v1017 = vunpack.c.l.b16 %v133
  %v1018 = vunpack.c.h.b16 %v133
  %v1019 = vunpack.c.l.b16 %v134
  %v1020 = vunpack.c.l.b16 %v135
  %v1021 = vunpack.c.h.b16 %v135
  %v1022 = vunpack.c.l.b16 %v136
  %v1023 = vunpack.c.h.b16 %v136
  %v1024 = vunpack.c.l.b16 %v137
  %v1025 = vunpack.c.h.b16 %v137
  %v1026 = vunpack.c.l.b16 %v138
  %v1027 = vunpack.c.h.b16 %v138
  %v1028 = vunpack.c.l.b16 %v139
  %v1029 = vunpack.c.l.b16 %v140
  %v1030 = vunpack.c.h.b16 %v140
  %v1031 = vunpack.c.l.b16 %v141
  %v1032 = vunpack.c.h.b16 %v141
  %v1033 = vunpack.c.l.b16 %v142
  %v1034 = vunpack.c.h.b16 %v142
  %v1035 = vunpack.c.l.b16 %v143
  %v1036 = vunpack.c.h.b16 %v143
  %v1037 = vunpack.c.l.b16 %v144
  %v1038 = vunpack.c.l.b16 %v145
  %v1039 = vunpack.c.h.b16 %v145
  %v1040 = vunpack.c.l.b16 %v146
  %v1041 = vunpack.c.h.b16 %v146
  %v1042 = vunpack.c.l.b16 %v147
  %v1043 = vunpack.c.h.b16 %v147
  %v1044 = vunpack.c.l.b16 %v148
  %v1045 = vunpack.c.h.b16 %v148
  %v1046 = vunpack.c.l.b16 %v149
  %v1047 = vunpack.c.l.b16 %v150
  %v1048 = vunpack.c.h.b16 %v150
  %v1049 = vunpack.c.l.b16 %v151
  %v1050 = vunpack.c.h.b16 %v151
  %v1051 = vunpack.c.l.b16 %v152
  %v1052 = vunpack.c.h.b16 %v152
  %v1053 = vunpack.c.l.b16 %v153
  %v1054 = vunpack.c.h.b16 %v153
  %v1055 = vunpack.c.l.b16 %v154
  %v1056 = vunpack.c.l.b16 %v155
  %v1057 = vunpack.c.h.b16 %v155
  %v1058 = vunpack.c.l.b16 %v156
  %v1059 = vunpack.c.h.b16 %v156
  %v1060 = vunpack.c.l.b16 %v157
  %v1061 = vunpack.c.h.b16 %v157
  %v1062 = vunpack.c.l.b16 %v158
  %v1063 = vunpack.c.h.b16 %v158
  %v1064 = vunpack.c.l.b16 %v159
  %v1065 = vunpack.c.l.b16 %v160
  %v1066 = vunpack.c.h.b16 %v160
  %v1067 = vunpack.c.l.b16 %v161
  %v1068 = vunpack.c.h.b16 %v161
  %v1069 = vunpack.c.l.b16 %v162
  %v1070 = vunpack.c.h.b16 %v162
  %v1071 = vunpack.c.l.b16 %v163
  %v1072 = vunpack.c.h.b16 %v163
  %v1073 = vunpack.c.l.b16 %v164
  %v1074 = vunpack.c.l.b16 %v165
  %v1075 = vunpack.c.h.b16 %v165
  %v1076 = vunpack.c.l.b16 %v166
  %v1077 = vunpack.c.h.b16 %v166
  %v1078 = vunpack.c.l.b16 %v167
  %v1079 = vunpack.c.h.b16 %v167
  %v1080 = vunpack.c.l.b16 %v168
  %v1081 = vunpack.c.h.b16 %v168
  %v1082 = vunpack.c.l.b16 %v169
  %v1083 = vunpack.c.l.b16 %v170
  %v1084 = vunpack.c.h.b16 %v170
  %v1085 = vunpack.c.l.b16 %v171
  %v1086 = vunpack.c.h.b16 %v171
  %v1087 = vunpack.c.l.b16 %v172
  %v1088 = vunpack.c.h.b16 %v172
  %v1089 = vunpack.c.l.b16 %v173
  %v1090 = vunpack.c.h.b16 %v173
  %v1091 = vunpack.c.l.b16 %v174
  %v1092 = vunpack.c.l.b16 %v175
  %v1093 = vunpack.c.h.b16 %v175
  %v1094 = vunpack.c.l.b16 %v176
  %v1095 = vunpack.c.h.b16 %v176
  %v1096 = vunpack.c.l.b16 %v177
  %v1097 = vunpack.c.h.b16 %v177
  %v1098 = vunpack.c.l.b16 %v178
  %v1099 = vunpack.c.h.b16 %v178
  %v1100 = vunpack.c.l.b16 %v179
  %v1101 = vunpack.c.l.b16 %v180
  %v1102 = vunpack.c.h.b16 %v180
  %v1103 = vunpack.c.l.b16 %v181
  %v1104 = vunpack.c.h.b16 %v181
  %v1105 = vunpack.c.l.b16 %v182
  %v1106 = vunpack.c.h.b16 %v182
  %v1107 = vunpack.c.l.b16 %v183
  %v1108 = vunpack.c.h.b16 %v183
  %v1109 = vunpack.c.l.b16 %v184
  %v1110 = vunpack.c.l.b16 %v185
  %v1111 = vunpack.c.h.b16 %v185
  %v1112 = vunpack.c.l.b16 %v186
  %v1113 = vunpack.c.h.b16 %v186
  %v1114 = vunpack.c.l.b16 %v187
  %v1115 = vunpack.c.h.b16 %v187
  %v1116 = vunpack.c.l.b16 %v188
  %v1117 = vunpack.c.h.b16 %v188
  %v1118 = vunpack.c.l.b16 %v189
  %v1119 = vunpack.c.l.b16 %v190
  %v1120 = vunpack.c.h.b16 %v190
  %v1121 = vunpack.c.l.b16 %v191
  %v1122 = vunpack.c.h.b16 %v191
  %v1123 = vunpack.c.l.b16 %v192
  %v1124 = vunpack.c.h.b16 %v192
  %v1125 = vunpack.c.l.b16 %v193
  %v1126 = vunpack.c.h.b16 %v193
  %v1127 = vunpack.c.l.b16 %v194
  %v1128 = vunpack.c.l.b16 %v195
  %v1129 = vunpack.c.h.b16 %v195
  %v1130 = vunpack.c.l.b16 %v196
  %v1131 = vunpack.c.h.b16 %v196
  %v1132 = vunpack.c.l.b16 %v197
  %v1133 = vunpack.c.h.b16 %v197
  %v1134 = vunpack.c.l.b16 %v198
  %v1135 = vunpack.c.h.b16 %v198
  %v1136 = vunpack.c.l.b16 %v199
  %v1137 = vunpack.c.l.b16 %v200
  %v1138 = vunpack.c.h.b16 %v200
  %v1139 = vunpack.c.l.b16 %v201
  %v1140 = vunpack.c.h.b16 %v201
  %v1141 = vunpack.c.l.b16 %v202
  %v1142 = vunpack.c.h.b16 %v202
  %v1143 = vunpack.c.l.b16 %v203
  %v1144 = vunpack.c.h.b16 %v203
  %v1145 = vunpack.c.l.b16 %v204
  %v1146 = vunpack.c.l.b16 %v205
  %v1147 = vunpack.c.h.b16 %v205
  %v1148 = vunpack.c.l.b16 %v206
  %v1149 = vunpack.c.h.b16 %v206
  %v1150 = vunpack.c.l.b16 %v207
  %v1151 = vunpack.c.h.b16 %v207
  %v1152 = vunpack.c.l.b16 %v208
  %v1153 = vunpack.c.h.b16 %v208
  %v1154 = vunpack.c.l.b16 %v209
  %v1155 = vunpack.c.l.b16 %v210
  %v1156 = vunpack.c.h.b16 %v210
  %v1157 = vunpack.c.l.b16 %v211
  %v1158 = vunpack.c.h.b16 %v211
  %v1159 = vunpack.c.l.b16 %v212
  %v1160 = vunpack.c.h.b16 %v212
  %v1161 = vunpack.c.l.b16 %v213
  %v1162 = vunpack.c.h.b16 %v213
  %v1163 = vunpack.c.l.b16 %v214
  %v1164 = vunpack.c.l.b16 %v215
  %v1165 = vunpack.c.h.b16 %v215
  %v1166 = vunpack.c.l.b16 %v216
  %v1167 = vunpack.c.h.b16 %v216
  %v1168 = vunpack.c.l.b16 %v217
  %v1169 = vunpack.c.h.b16 %v217
  %v1170 = vunpack.c.l.b16 %v218
  %v1171 = vunpack.c.h.b16 %v218
  %v1172 = vunpack.c.l.b16 %v219
  %v1173 = vunpack.c.l.b16 %v220
  %v1174 = vunpack.c.h.b16 %v220
  %v1175 = vunpack.c.l.b16 %v221
  %v1176 = vunpack.c.h.b16 %v221
  %v1177 = vunpack.c.l.b16 %v222
  %v1178 = vunpack.c.h.b16 %v222
  %v1179 = vunpack.c.l.b16 %v223
  %v1180 = vunpack.c.h.b16 %v223
  %v1181 = vunpack.c.l.b16 %v224
  %v1182 = vunpack.c.l.b16 %v225
  %v1183 = vunpack.c.h.b16 %v225
  %v1184 = vunpack.c.l.b16 %v226
  %v1185 = vunpack.c.h.b16 %v226
  %v1186 = vunpack.c.l.b16 %v227
  %v1187 = vunpack.c.h.b16 %v227
  %v1188 = vunpack.c.l.b16 %v228
  %v1189 = vunpack.c.h.b16 %v228
  %v1190 = vunpack.c.l.b16 %v229
  %v1191 = vunpack.c.l.b16 %v230
  %v1192 = vunpack.c.h.b16 %v230
  %v1193 = vunpack.c.l.b16 %v231
  %v1194 = vunpack.c.h.b16 %v231
  %v1195 = vunpack.c.l.b16 %v232
  %v1196 = vunpack.c.h.b16 %v232
  %v1197 = vunpack.c.l.b16 %v233
  %v1198 = vunpack.c.h.b16 %v233
  %v1199 = vunpack.c.l.b16 %v234
  %v1200 = vunpack.c.l.b16 %v235
  %v1201 = vunpack.c.h.b16 %v235
  %v1202 = vunpack.c.l.b16 %v236
  %v1203 = vunpack.c.h.b16 %v236
  %v1204 = vunpack.c.l.b16 %v237
  %v1205 = vunpack.c.h.b16 %v237
  %v1206 = vunpack.c.l.b16 %v238
  %v1207 = vunpack.c.h.b16 %v238
  %v1208 = vunpack.c.l.b16 %v239
  %v1209 = vunpack.c.l.b16 %v240
  %v1210 = vunpack.c.h.b16 %v240
  %v1211 = vunpack.c.l.b16 %v241
  %v1212 = vunpack.c.h.b16 %v241
  %v1213 = vunpack.c.l.b16 %v242
  %v1214 = vunpack.c.h.b16 %v242
  %v1215 = vunpack.c.l.b16 %v243
  %v1216 = vunpack.c.h.b16 %v243
  %v1217 = vunpack.c.l.b16 %v244
  %v1218 = vunpack.c.l.b16 %v245
  %v1219 = vunpack.c.h.b16 %v245
  %v1220 = vunpack.c.l.b16 %v246
  %v1221 = vunpack.c.h.b16 %v246
  %v1222 = vunpack.c.l.b16 %v247
  %v1223 = vunpack.c.h.b16 %v247
  %v1224 = vunpack.c.l.b16 %v248
  %v1225 = vunpack.c.h.b16 %v248
  %v1226 = vunpack.c.l.b16 %v249
  %v1227 = vunpack.c.l.b16 %v250
  %v1228 = vunpack.c.h.b16 %v250
  %v1229 = vunpack.c.l.b16 %v251
  %v1230 = vunpack.c.h.b16 %v251
  %v1231 = vunpack.c.l.b16 %v252
  %v1232 = vunpack.c.h.b16 %v252
  %v1233 = vunpack.c.l.b16 %v253
  %v1234 = vunpack.c.h.b16 %v253
  %v1235 = vunpack.c.l.b16 %v254
  %v1236 = vunpack.c.l.b16 %v255
  %v1237 = vunpack.c.h.b16 %v255
  %v1238 = vunpack.c.l.b16 %v256
  %v1239 = vunpack.c.h.b16 %v256
  %v1240 = vunpack.c.l.b16 %v257
  %v1241 = vunpack.c.h.b16 %v257
  %v1242 = vunpack.c.l.b16 %v258
  %v1243 = vunpack.c.h.b16 %v258
  %v1244 = vunpack.c.l.b16 %v259
  %v1245 = vunpack.c.l.b16 %v260
  %v1246 = vunpack.c.h.b16 %v260
  %v1247 = vunpack.c.l.b16 %v261
  %v1248 = vunpack.c.h.b16 %v261
  %v1249 = vunpack.c.l.b16 %v262
  %v1250 = vunpack.c.h.b16 %v262
  %v1251 = vunpack.c.l.b16 %v263
  %v1252 = vunpack.c.h.b16 %v263
  %v1253 = vunpack.c.l.b16 %v264
  %v1254 = vunpack.c.l.b16 %v265
  %v1255 = vunpack.c.h.b16 %v265
  %v1256 = vunpack.c.l.b16 %v266
  %v1257 = vunpack.c.h.b16 %v266
  %v1258 = vunpack.c.l.b16 %v267
  %v1259 = vunpack.c.h.b16 %v267
  %v1260 = vunpack.c.l.b16 %v268
  %v1261 = vunpack.c.h.b16 %v268
  %v1262 = vunpack.c.l.b16 %v269
  %v1263 = vunpack.c.l.b16 %v270
  %v1264 = vunpack.c.h.b16 %v270
  %v1265 = vunpack.c.l.b16 %v271
  %v1266 = vunpack.c.h.b16 %v271
  %v1267 = vunpack.c.l.b16 %v272
  %v1268 = vunpack.c.h.b16 %v272
  %v1269 = vunpack.c.l.b16 %v273
  %v1270 = vunpack.c.h.b16 %v273
  %v1271 = vunpack.c.l.b16 %v274
  %v1272 = vunpack.c.l.b16 %v275
  %v1273 = vunpack.c.h.b16 %v275
  %v1274 = vunpack.c.l.b16 %v276
  %v1275 = vunpack.c.h.b16 %v276
  %v1276 = vunpack.c.l.b16 %v277
  %v1277 = vunpack.c.h.b16 %v277
  %v1278 = vunpack.c.l.b16 %v278
  %v1279 = vunpack.c.h.b16 %v278
  %v1280 = vunpack.c.l.b16 %v279
  %v1281 = vunpack.c.l.b16 %v280
  %v1282 = vunpack.c.h.b16 %v280
  %v1283 = vunpack.c.l.b16 %v281
  %v1284 = vunpack.c.h.b16 %v281
  %v1285 = vunpack.c.l.b16 %v282
  %v1286 = vunpack.c.h.b16 %v282
  %v1287 = vunpack.c.l.b16 %v283
  %v1288 = vunpack.c.h.b16 %v283
  %v1289 = vunpack.c.l.b16 %v284
  %v1290 = vunpack.c.l.b16 %v285
  %v1291 = vunpack.c.h.b16 %v285
  %v1292 = vunpack.c.l.b16 %v286
  %v1293 = vunpack.c.h.b16 %v286
  %v1294 = vunpack.c.l.b16 %v287
  %v1295 = vunpack.c.h.b16 %v287
  %v1296 = vunpack.c.l.b16 %v288
  %v1297 = vunpack.c.h.b16 %v288
  %v1298 = vunpack.c.l.b16 %v289
  %v1299 = vunpack.c.l.b16 %v290
  %v1300 = vunpack.c.h.b16 %v290
  %v1301 = vunpack.c.l.b16 %v291
  %v1302 = vunpack.c.h.b16 %v291
  %v1303 = vunpack.c.l.b16 %v292
  %v1304 = vunpack.c.h.b16 %v292
  %v1305 = vunpack.c.l.b16 %v293
  %v1306 = vunpack.c.h.b16 %v293
  %v1307 = vunpack.c.l.b16 %v294
  %v1308 = vunpack.c.l.b16 %v295
  %v1309 = vunpack.c.h.b16 %v295
  %v1310 = vunpack.c.l.b16 %v296
  %v1311 = vunpack.c.h.b16 %v296
  %v1312 = vunpack.c.l.b16 %v297
  %v1313 = vunpack.c.h.b16 %v297
  %v1314 = vunpack.c.l.b16 %v298
  %v1315 = vunpack.c.h.b16 %v298
  %v1316 = vunpack.c.l.b16 %v299
  %v1317 = vunpack.c.l.b16 %v300
  %v1318 = vunpack.c.h.b16 %v300
  %v1319 = vunpack.c.l.b16 %v301
  %v1320 = vunpack.c.h.b16 %v301
  %v1321 = vunpack.c.l.b16 %v302
  %v1322 = vunpack.c.h.b16 %v302
  %v1323 = vunpack.c.l.b16 %v303
  %v1324 = vunpack.c.h.b16 %v303
  %v1325 = vunpack.c.l.b16 %v304
  %v1326 = vunpack.c.l.b16 %v305
  %v1327 = vunpack.c.h.b16 %v305
  %v1328 = vunpack.c.l.b16 %v306
  %v1329 = vunpack.c.h.b16 %v306
  %v1330 = vunpack.c.l.b16 %v307
  %v1331 = vunpack.c.h.b16 %v307
  %v1332 = vunpack.c.l.b16 %v308
  %v1333 = vunpack.c.h.b16 %v308
  %v1334 = vunpack.c.l.b16 %v309
  %v1335 = vunpack.c.l.b16 %v310
  %v1336 = vunpack.c.h.b16 %v310
  %v1337 = vunpack.c.l.b16 %v311
  %v1338 = vunpack.c.h.b16 %v311
  %v1339 = vunpack.c.l.b16 %v312
  %v1340 = vunpack.c.h.b16 %v312
  %v1341 = vunpack.c.l.b16 %v313
  %v1342 = vunpack.c.h.b16 %v313
  %v1343 = vunpack.c.l.b16 %v314
  %v1344 = vunpack.c.l.b16 %v315
  %v1345 = vunpack.c.h.b16 %v315
  %v1346 = vunpack.c.l.b16 %v316
  %v1347 = vunpack.c.h.b16 %v316
  %v1348 = vunpack.c.l.b16 %v317
  %v1349 = vunpack.c.h.b16 %v317
  %v1350 = vunpack.c.l.b16 %v318
  %v1351 = vunpack.c.h.b16 %v318
  %v1352 = vunpack.c.l.b16 %v319
  %v1353 = vunpack.c.l.b16 %v320
  %v1354 = vunpack.c.h.b16 %v320
  %v1355 = vunpack.c.l.b16 %v321
  %v1356 = vunpack.c.h.b16 %v321
  %v1357 = vunpack.c.l.b16 %v322
  %v1358 = vunpack.c.h.b16 %v322
  %v1359 = vunpack.c.l.b16 %v323
  %v1360 = vunpack.c.h.b16 %v323
  %v1361 = vunpack.c.l.b16 %v324
  %v1362 = vunpack.c.l.b16 %v325
  %v1363 = vunpack.c.h.b16 %v325
  %v1364 = vunpack.c.l.b16 %v326
  %v1365 = vunpack.c.h.b16 %v326
  %v1366 = vunpack.c.l.b16 %v327
  %v1367 = vunpack.c.h.b16 %v327
  %v1368 = vunpack.c.l.b16 %v328
  %v1369 = vunpack.c.h.b16 %v328
  %v1370 = vunpack.c.l.b16 %v329
  %v1371 = vunpack.c.l.b16 %v330
  %v1372 = vunpack.c.h.b16 %v330
  %v1373 = vunpack.c.l.b16 %v331
  %v1374 = vunpack.c.h.b16 %v331
  %v1375 = vunpack.c.l.b16 %v332
  %v1376 = vunpack.c.h.b16 %v332
  %v1377 = vunpack.c.l.b16 %v333
  %v1378 = vunpack.c.h.b16 %v333
  %v1379 = vunpack.c.l.b16 %v334
  %v1380 = vpack.c.b16 %v813, %v804
  %v1381 = vpack.c.b16 %v814, %v805
  %v1382 = vpack.c.b16 %v815, %v806
  %v1383 = vpack.c.b16 %v816, %v807
  %v1384 = vpack.c.b16 %v817, %v808
  %v1385 = vpack.c.b16 %v818, %v809
  %v1386 = vpack.c.b16 %v819, %v810
  %v1387 = vpack.c.b16 %v820, %v811
  %v1388 = vpack.c.b16 %v821, %v812
  %v1389 = vpack.c.b16 %v831, %v822
  %v1390 = vpack.c.b16 %v832, %v823
  %v1391 = vpack.c.b16 %v833, %v824
  %v1392 = vpack.c.b16 %v834, %v825
  %v1393 = vpack.c.b16 %v835, %v826
  %v1394 = vpack.c.b16 %v836, %v827
  %v1395 = vpack.c.b16 %v837, %v828
  %v1396 = vpack.c.b16 %v838, %v829
  %v1397 = vpack.c.b16 %v839, %v830
  %v1398 = vpack.c.b16 %v849, %v840
  %v1399 = vpack.c.b16 %v850, %v841
  %v1400 = vpack.c.b16 %v851, %v842
  %v1401 = vpack.c.b16 %v852, %v843
  %v1402 = vpack.c.b16 %v853, %v844
  %v1403 = vpack.c.b16 %v854, %v845
  %v1404 = vpack.c.b16 %v855, %v846
  %v1405 = vpack.c.b16 %v856, %v847
  %v1406 = vpack.c.b16 %v857, %v848
  %v1407 = vpack.c.b16 %v867, %v858
  %v1408 = vpack.c.b16 %v868, %v859
  %v1409 = vpack.c.b16 %v869, %v860
  %v1410 = vpack.c.b16 %v870, %v861
  %v1411 = vpack.c.b16 %v871, %v862
  %v1412 = vpack.c.b16 %v872, %v863
  %v1413 = vpack.c.b16 %v873, %v864
  %v1414 = vpack.c.b16 %v874, %v865
  %v1415 = vpack.c.b16 %v875, %v866
  %v1416 = vpack.c.b16 %v885, %v876
  %v1417 = vpack.c.b16 %v886, %v877
  %v1418 = vpack.c.b16 %v887, %v878
  %v1419 = vpack.c.b16 %v888, %v879
  %v1420 = vpack.c.b16 %v889, %v880
  %v1421 = vpack.c.b16 %v890, %v881
  %v1422 = vpack.c.b16 %v891, %v882
  %v1423 = vpack.c.b16 %v892, %v883
  %v1424 = vpack.c.b16 %v893, %v884
  %v1425 = vpack.c.b16 %v903, %v894
  %v1426 = vpack.c.b16 %v904, %v895
  %v1427 = vpack.c.b16 %v905, %v896
  %v1428 = vpack.c.b16 %v906, %v897
  %v1429 = vpack.c.b16 %v907, %v898
  %v1430 = vpack.c.b16 %v908, %v899
  %v1431 = vpack.c.b16 %v909, %v900
  %v1432 = vpack.c.b16 %v910, %v901
  %v1433 = vpack.c.b16 %v911, %v902
  %v1434 = vpack.c.b16 %v921, %v912
  %v1435 = vpack.c.b16 %v922, %v913
  %v1436 = vpack.c.b16 %v923, %v914
  %v1437 = vpack.c.b16 %v924, %v915
  %v1438 = vpack.c.b16 %v925, %v916
  %v1439 = vpack.c.b16 %v926, %v917
  %v1440 = vpack.c.b16 %v927, %v918
  %v1441 = vpack.c.b16 %v928, %v919
  %v1442 = vpack.c.b16 %v929, %v920
  %v1443 = vpack.c.b16 %v939, %v930
  %v1444 = vpack.c.b16 %v940, %v931
  %v1445 = vpack.c.b16 %v941, %v932
  %v1446 = vpack.c.b16 %v942, %v933
  %v1447 = vpack.c.b16 %v943, %v934
  %v1448 = vpack.c.b16 %v944, %v935
  %v1449 = vpack.c.b16 %v945, %v936
  %v1450 = vpack.c.b16 %v946, %v937
  %v1451 = vpack.c.b16 %v947, %v938
  %v1452 = vpack.c.b16 %v957, %v948
  %v1453 = vpack.c.b16 %v958, %v949
  %v1454 = vpack.c.b16 %v959, %v950
  %v1455 = vpack.c.b16 %v960, %v951
  %v1456 = vpack.c.b16 %v961, %v952
  %v1457 = vpack.c.b16 %v962, %v953
  %v1458 = vpack.c.b16 %v963, %v954
  %v1459 = vpack.c.b16 %v964, %v955
  %v1460 = vpack.c.b16 %v965, %v956
  %v1461 = vpack.c.b16 %v975, %v966
  %v1462 = vpack.c.b16 %v976, %v967
  %v1463 = vpack.c.b16 %v977, %v968
  %v1464 = vpack.c.b16 %v978, %v969
  %v1465 = vpack.c.b16 %v979, %v970
  %v1466 = vpack.c.b16 %v980, %v971
  %v1467 = vpack.c.b16 %v981, %v972
  %v1468 = vpack.c.b16 %v982, %v973
  %v1469 = vpack.c.b16 %v983, %v974
  %v1470 = vpack.c.b16 %v993, %v984
  %v1471 = vpack.c.b16 %v994, %v985
  %v1472 = vpack.c.b16 %v995, %v986
  %v1473 = vpack.c.b16 %v996, %v987
  %v1474 = vpack.c.b16 %v997, %v988
  %v1475 = vpack.c.b16 %v998, %v989
  %v1476 = vpack.c.b16 %v999, %v990
  %v1477 = vpack.c.b16 %v1000, %v991
  %v1478 = vpack.c.b16 %v1001, %v992
  %v1479 = vpack.c.b16 %v1011, %v1002
  %v1480 = vpack.c.b16 %v1012, %v1003
  %v1481 = vpack.c.b16 %v1013, %v1004
  %v1482 = vpack.c.b16 %v1014, %v1005
  %v1483 = vpack.c.b16 %v1015, %v1006
  %v1484 = vpack.c.b16 %v1016, %v1007
  %v1485 = vpack.c.b16 %v1017, %v1008
  %v1486 = vpack.c.b16 %v1018, %v1009
  %v1487 = vpack.c.b16 %v1019, %v1010
  %v1488 = vpack.c.b16 %v1029, %v1020
  %v1489 = vpack.c.b16 %v1030, %v1021
  %v1490 = vpack.c.b16 %v1031, %v1022
  %v1491 = vpack.c.b16 %v1032, %v1023
  %v1492 = vpack.c.b16 %v1033, %v1024
  %v1493 = vpack.c.b16 %v1034, %v1025
  %v1494 = vpack.c.b16 %v1035, %v1026
  %v1495 = vpack.c.b16 %v1036, %v1027
  %v1496 = vpack.c.b16 %v1037, %v1028
  %v1497 = vpack.c.b16 %v1047, %v1038
  %v1498 = vpack.c.b16 %v1048, %v1039
  %v1499 = vpack.c.b16 %v1049, %v1040
  %v1500 = vpack.c.b16 %v1050, %v1041
  %v1501 = vpack.c.b16 %v1051, %v1042
  %v1502 = vpack.c.b16 %v1052, %v1043
  %v1503 = vpack.c.b16 %v1053, %v1044
  %v1504 = vpack.c.b16 %v1054, %v1045
  %v1505 = vpack.c.b16 %v1055, %v1046
  %v1506 = vpack.c.b16 %v1065, %v1056
  %v1507 = vpack.c.b16 %v1066, %v1057
  %v1508 = vpack.c.b16 %v1067, %v1058
  %v1509 = vpack.c.b16 %v1068, %v1059
  %v1510 = vpack.c.b16 %v1069, %v1060
  %v1511 = vpack.c.b16 %v1070, %v1061
  %v1512 = vpack.c.b16 %v1071, %v1062
  %v1513 = vpack.c.b16 %v1072, %v1063
  %v1514 = vpack.c.b16 %v1073, %v1064
  %v1515 = vpack.c.b16 %v1083, %v1074
  %v1516 = vpack.c.b16 %v1084, %v1075
  %v1517 = vpack.c.b16 %v1085, %v1076
  %v1518 = vpack.c.b16 %v1086, %v1077
  %v1519 = vpack.c.b16 %v1087, %v1078
  %v1520 = vpack.c.b16 %v1088, %v1079
  %v1521 = vpack.c.b16 %v1089, %v1080
  %v1522 = vpack.c.b16 %v1090, %v1081
  %v1523 = vpack.c.b16 %v1091, %v1082
  %v1524 = vpack.c.b16 %v1101, %v1092
  %v1525 = vpack.c.b16 %v1102, %v1093
  %v1526 = vpack.c.b16 %v1103, %v1094
  %v1527 = vpack.c.b16 %v1104, %v1095
  %v1528 = vpack.c.b16 %v1105, %v1096
  %v1529 = vpack.c.b16 %v1106, %v1097
  %v1530 = vpack.c.b16 %v1107, %v1098
  %v1531 = vpack.c.b16 %v1108, %v1099
  %v1532 = vpack.c.b16 %v1109, %v1100
  %v1533 = vpack.c.b16 %v1119, %v1110
  %v1534 = vpack.c.b16 %v1120, %v1111
  %v1535 = vpack.c.b16 %v1121, %v1112
  %v1536 = vpack.c.b16 %v1122, %v1113
  %v1537 = vpack.c.b16 %v1123, %v1114
  %v1538 = vpack.c.b16 %v1124, %v1115
  %v1539 = vpack.c.b16 %v1125, %v1116
  %v1540 = vpack.c.b16 %v1126, %v1117
  %v1541 = vpack.c.b16 %v1127, %v1118
  %v1542 = vpack.c.b16 %v1137, %v1128
  %v1543 = vpack.c.b16 %v1138, %v1129
  %v1544 = vpack.c.b16 %v1139, %v1130
  %v1545 = vpack.c.b16 %v1140, %v1131
  %v1546 = vpack.c.b16 %v1141, %v1132
  %v1547 = vpack.c.b16 %v1142, %v1133
  %v1548 = vpack.c.b16 %v1143, %v1134
  %v1549 = vpack.c.b16 %v1144, %v1135
  %v1550 = vpack.c.b16 %v1145, %v1136
  %v1551 = vpack.c.b16 %v1155, %v1146
  %v1552 = vpack.c.b16 %v1156, %v1147
  %v1553 = vpack.c.b16 %v1157, %v1148
  %v1554 = vpack.c.b16 %v1158, %v1149
  %v1555 = vpack.c.b16 %v1159, %v1150
  %v1556 = vpack.c.b16 %v1160, %v1151
  %v1557 = vpack.c.b16 %v1161, %v1152
  %v1558 = vpack.c.b16 %v1162, %v1153
  %v1559 = vpack.c.b16 %v1163, %v1154
  %v1560 = vpack.c.b16 %v1173, %v1164
  %v1561 = vpack.c.b16 %v1174, %v1165
  %v1562 = vpack.c.b16 %v1175, %v1166
  %v1563 = vpack.c.b16 %v1176, %v1167
  %v1564 = vpack.c.b16 %v1177, %v1168
  %v1565 = vpack.c.b16 %v1178, %v1169
  %v1566 = vpack.c.b16 %v1179, %v1170
  %v1567 = vpack.c.b16 %v1180, %v1171
  %v1568 = vpack.c.b16 %v1181, %v1172
  %v1569 = vpack.c.b16 %v1191, %v1182
  %v1570 = vpack.c.b16 %v1192, %v1183
  %v1571 = vpack.c.b16 %v1193, %v1184
  %v1572 = vpack.c.b16 %v1194, %v1185
  %v1573 = vpack.c.b16 %v1195, %v1186
  %v1574 = vpack.c.b16 %v1196, %v1187
  %v1575 = vpack.c.b16 %v1197, %v1188
  %v1576 = vpack.c.b16 %v1198, %v1189
  %v1577 = vpack.c.b16 %v1199, %v1190
  %v1578 = vpack.c.b16 %v1209, %v1200
  %v1579 = vpack.c.b16 %v1210, %v1201
  %v1580 = vpack.c.b16 %v1211, %v1202
  %v1581 = vpack.c.b16 %v1212, %v1203
  %v1582 = vpack.c.b16 %v1213, %v1204
  %v1583 = vpack.c.b16 %v1214, %v1205
  %v1584 = vpack.c.b16 %v1215, %v1206
  %v1585 = vpack.c.b16 %v1216, %v1207
  %v1586 = vpack.c.b16 %v1217, %v1208
  %v1587 = vpack.c.b16 %v1227, %v1218
  %v1588 = vpack.c.b16 %v1228, %v1219
  %v1589 = vpack.c.b16 %v1229, %v1220
  %v1590 = vpack.c.b16 %v1230, %v1221
  %v1591 = vpack.c.b16 %v1231, %v1222
  %v1592 = vpack.c.b16 %v1232, %v1223
  %v1593 = vpack.c.b16 %v1233, %v1224
  %v1594 = vpack.c.b16 %v1234, %v1225
  %v1595 = vpack.c.b16 %v1235, %v1226
  %v1596 = vpack.c.b16 %v1245, %v1236
  %v1597 = vpack.c.b16 %v1246, %v1237
  %v1598 = vpack.c.b16 %v1247, %v1238
  %v1599 = vpack.c.b16 %v1248, %v1239
  %v1600 = vpack.c.b16 %v1249, %v1240
  %v1601 = vpack.c.b16 %v1250, %v1241
  %v1602 = vpack.c.b16 %v1251, %v1242
  %v1603 = vpack.c.b16 %v1252, %v1243
  %v1604 = vpack.c.b16 %v1253, %v1244
  %v1605 = vpack.c.b16 %v1263, %v1254
  %v1606 = vpack.c.b16 %v1264, %v1255
  %v1607 = vpack.c.b16 %v1265, %v1256
  %v1608 = vpack.c.b16 %v1266, %v1257
  %v1609 = vpack.c.b16 %v1267, %v1258
  %v1610 = vpack.c.b16 %v1268, %v1259
  %v1611 = vpack.c.b16 %v1269, %v1260
  %v1612 = vpack.c.b16 %v1270, %v1261
  %v1613 = vpack.c.b16 %v1271, %v1262
  %v1614 = vpack.c.b16 %v1281, %v1272
  %v1615 = vpack.c.b16 %v1282, %v1273
  %v1616 = vpack.c.b16 %v1283, %v1274
  %v1617 = vpack.c.b16 %v1284, %v1275
  %v1618 = vpack.c.b16 %v1285, %v1276
  %v1619 = vpack.c.b16 %v1286, %v1277
  %v1620 = vpack.c.b16 %v1287, %v1278
  %v1621 = vpack.c.b16 %v1288, %v1279
  %v1622 = vpack.c.b16 %v1289, %v1280
  %v1623 = vpack.c.b16 %v1299, %v1290
  %v1624 = vpack.c.b16 %v1300, %v1291
  %v1625 = vpack.c.b16 %v1301, %v1292
  %v1626 = vpack.c.b16 %v1302, %v1293
  %v1627 = vpack.c.b16 %v1303, %v1294
  %v1628 = vpack.c.b16 %v1304, %v1295
  %v1629 = vpack.c.b16 %v1305, %v1296
  %v1630 = vpack.c.b16 %v1306, %v1297
  %v1631 = vpack.c.b16 %v1307, %v1298
  %v1632 = vpack.c.b16 %v1317, %v1308
  %v1633 = vpack.c.b16 %v1318, %v1309
  %v1634 = vpack.c.b16 %v1319, %v1310
  %v1635 = vpack.c.b16 %v1320, %v1311
  %v1636 = vpack.c.b16 %v1321, %v1312
  %v1637 = vpack.c.b16 %v1322, %v1313
  %v1638 = vpack.c.b16 %v1323, %v1314
  %v1639 = vpack.c.b16 %v1324, %v1315
  %v1640 = vpack.c.b16 %v1325, %v1316
  %v1641 = vpack.c.b16 %v1335, %v1326
  %v1642 = vpack.c.b16 %v1336, %v1327
  %v1643 = vpack.c.b16 %v1337, %v1328
  %v1644 = vpack.c.b16 %v1338, %v1329
  %v1645 = vpack.c.b16 %v1339, %v1330
  %v1646 = vpack.c.b16 %v1340, %v1331
  %v1647 = vpack.c.b16 %v1341, %v1332
  %v1648 = vpack.c.b16 %v1342, %v1333
  %v1649 = vpack.c.b16 %v1343, %v1334
  %v1650 = vpack.c.b16 %v1353, %v1344
  %v1651 = vpack.c.b16 %v1354, %v1345
  %v1652 = vpack.c.b16 %v1355, %v1346
  %v1653 = vpack.c.b16 %v1356, %v1347
  %v1654 = vpack.c.b16 %v1357, %v1348
  %v1655 = vpack.c.b16 %v1358, %v1349
  %v1656 = vpack.c.b16 %v1359, %v1350
  %v1657 = vpack.c.b16 %v1360, %v1351
  %v1658 = vpack.c.b16 %v1361, %v1352
  %v1659 = vpack.c.b16 %v1371, %v1362
  %v1660 = vpack.c.b16 %v1372, %v1363
  %v1661 = vpack.c.b16 %v1373, %v1364
  %v1662 = vpack.c.b16 %v1374, %v1365
  %v1663 = vpack.c.b16 %v1375, %v1366
  %v1664 = vpack.c.b16 %v1376, %v1367
  %v1665 = vpack.c.b16 %v1377, %v1368
  %v1666 = vpack.c.b16 %v1378, %v1369
  %v1667 = vpack.c.b16 %v1379, %v1370
  %v2100 = vunpack.c.l.b16 %v335
  %v2101 = vunpack.c.l.b16 %v336
  %v2102 = vunpack.c.l.b16 %v337
  %v2103 = vunpack.c.l.b16 %v338
  %v2104 = vunpack.c.l.b16 %v339
  %v2105 = vunpack.c.l.b16 %v340
  %v2106 = vunpack.c.l.b16 %v341
  %v2107 = vunpack.c.l.b16 %v342
  %v2108 = vunpack.c.l.b16 %v343
  %v2109 = vunpack.c.l.b16 %v344
  %v2110 = vunpack.c.l.b16 %v345
  %v2111 = vunpack.c.l.b16 %v346
  %v2112 = vunpack.c.l.b16 %v347
  %v2113 = vunpack.c.l.b16 %v348
  %v2114 = vunpack.c.l.b16 %v349
  %v2115 = vunpack.c.l.b16 %v350
  %v2116 = vunpack.c.l.b16 %v351
  %v2117 = vunpack.c.l.b16 %v352
  %v2118 = vunpack.c.l.b16 %v353
  %v2119 = vunpack.c.l.b16 %v354
  %v2120 = vunpack.c.l.b16 %v355
  %v2121 = vunpack.c.l.b16 %v356
  %v2122 = vunpack.c.l.b16 %v357
  %v2123 = vunpack.c.l.b16 %v358
  %v2124 = vunpack.c.l.b16 %v359
  %v2125 = vunpack.c.l.b16 %v360
  %v2126 = vunpack.c.l.b16 %v361
  %v2127 = vunpack.c.l.b16 %v362
  %v2128 = vunpack.c.l.b16 %v363
  %v2129 = vunpack.c.l.b16 %v364
  %v2130 = vunpack.c.l.b16 %v365
  %v2131 = vunpack.c.l.b16 %v366
  %v2132 = vunpack.c.l.b16 %v367
  %v2133 = vunpack.c.l.b16 %v368
  %v2134 = vunpack.c.l.b16 %v369
  %v2135 = vunpack.c.l.b16 %v370
  %v2136 = vunpack.c.l.b16 %v371
  %v2137 = vunpack.c.l.b16 %v372
  %v2138 = vunpack.c.l.b16 %v373
  %v2139 = vunpack.c.l.b16 %v374
  %v2140 = vunpack.c.l.b16 %v375
  %v2141 = vunpack.c.l.b16 %v376
  %v2142 = vunpack.c.l.b16 %v377
  %v2143 = vunpack.c.l.b16 %v378
  %v2144 = vunpack.c.l.b16 %v379
  %v2145 = vunpack.c.l.b16 %v380
  %v2146 = vunpack.c.l.b16 %v381
  %v2147 = vunpack.c.l.b16 %v382
  %v2148 = vunpack.c.l.b16 %v383
  %v2149 = vunpack.c.l.b16 %v384
  %v2150 = vunpack.c.l.b16 %v385
  %v2151 = vunpack.c.l.b16 %v386
  %v2152 = vunpack.c.l.b16 %v387
  %v2153 = vunpack.c.l.b16 %v388
  %v2154 = vunpack.c.l.b16 %v389
  %v2155 = vunpack.c.l.b16 %v390
  %v2156 = vunpack.c.l.b16 %v391
  %v2157 = vunpack.c.l.b16 %v392
  %v2158 = vunpack.c.l.b16 %v393
  %v2159 = vunpack.c.l.b16 %v394
  %v2160 = vunpack.c.l.b16 %v395
  %v2161 = vunpack.c.l.b16 %v396
  %v2162 = vunpack.c.l.b16 %v397
  %v2163 = vunpack.c.l.b16 %v398
  %v2164 = vunpack.c.l.b16 %v399
  %v2165 = vunpack.c.l.b16 %v400
  %v2166 = vunpack.c.l.b16 %v401
  %v2167 = vunpack.c.l.b16 %v402
  %v2168 = vunpack.c.l.b16 %v403
  %v2169 = vunpack.c.l.b16 %v404
  %v2170 = vunpack.c.l.b16 %v405
  %v2171 = vunpack.c.l.b16 %v406
  %v2172 = vunpack.c.l.b16 %v407
  %v2173 = vunpack.c.l.b16 %v408
  %v2174 = vunpack.c.l.b16 %v409
  %v2175 = vunpack.c.l.b16 %v410
  %v2176 = vunpack.c.l.b16 %v411
  %v2177 = vunpack.c.l.b16 %v412
  %v2178 = vunpack.c.l.b16 %v413
  %v2179 = vunpack.c.l.b16 %v414
  %v2180 = vunpack.c.l.b16 %v415
  %v2181 = vunpack.c.l.b16 %v416
  %v2182 = vunpack.c.l.b16 %v417
  %v2183 = vunpack.c.l.b16 %v418
  %v2184 = vunpack.c.l.b16 %v419
  %v2185 = vunpack.c.l.b16 %v420
  %v2186 = vunpack.c.l.b16 %v421
  %v2187 = vunpack.c.l.b16 %v422
  %v2188 = vunpack.c.l.b16 %v423
  %v2189 = vunpack.c.l.b16 %v424
  %v2190 = vunpack.c.l.b16 %v425
  %v2191 = vunpack.c.l.b16 %v426
  %v2192 = vunpack.c.l.b16 %v427
  %v2193 = vunpack.c.l.b16 %v428
  %v2194 = vunpack.c.l.b16 %v429
  %v2195 = vunpack.c.l.b16 %v430
  %v2196 = vunpack.c.l.b16 %v431
  %v2197 = vunpack.c.l.b16 %v432
  %v2198 = vunpack.c.l.b16 %v433
  %v2199 = vunpack.c.l.b16 %v434
  %v2200 = vunpack.c.l.b16 %v435
  %v2201 = vunpack.c.l.b16 %v436
  %v2202 = vunpack.c.l.b16 %v437
  %v2203 = vunpack.c.l.b16 %v438
  %v2204 = vunpack.c.l.b16 %v439
  %v2205 = vunpack.c.l.b16 %v440
  %v2206 = vunpack.c.l.b16 %v441
  %v2207 = vunpack.c.l.b16 %v442
  %v2208 = vunpack.c.l.b16 %v443
  %v2209 = vunpack.c.l.b16 %v444
  %v2210 = vunpack.c.l.b16 %v445
  %v2211 = vunpack.c.l.b16 %v446
  %v2212 = vunpack.c.l.b16 %v447
  %v2213 = vunpack.c.l.b16 %v448
  %v2214 = vunpack.c.l.b16 %v449
  %v2215 = vunpack.c.l.b16 %v450
  %v2216 = vunpack.c.l.b16 %v451
  %v2217 = vunpack.c.l.b16 %v452
  %v2218 = vunpack.c.l.b16 %v453
  %v2219 = vunpack.c.l.b16 %v454
  %v2220 = vunpack.c.l.b16 %v455
  %v2221 = vunpack.c.l.b16 %v456
  %v2222 = vunpack.c.l.b16 %v457
  %v2223 = vunpack.c.l.b16 %v458
  %v2224 = vunpack.c.l.b16 %v459
  %v2225 = vunpack.c.l.b16 %v460
  %v2226 = vunpack.c.l.b16 %v461
  %v2227 = vunpack.c.l.b16 %v462
  %v2228 = vunpack.c.l.b16 %v463
  %v2229 = vunpack.c.l.b16 %v464
  %v2230 = vunpack.c.l.b16 %v465
  %v2231 = vunpack.c.l.b16 %v466
  %v2232 = vunpack.c.l.b16 %v467
  %v2233 = vunpack.c.l.b16 %v468
  %v2234 = vunpack.c.l.b16 %v469
  %v2235 = vunpack.c.l.b16 %v470
  %v2236 = vunpack.c.l.b16 %v471
  %v2237 = vunpack.c.l.b16 %v472
  %v2238 = vunpack.c.l.b16 %v473
  %v2239 = vunpack.c.l.b16 %v474
  %v2240 = vunpack.c.l.b16 %v475
  %v2241 = vunpack.c.l.b16 %v476
  %v2242 = vunpack.c.l.b16 %v477
  %v2243 = vunpack.c.l.b16 %v478
  %v2244 = vpack.c.b16 %v2101, %v2100
  %v2245 = vpack.c.b16 %v2103, %v2102
  %v2246 = vpack.c.b16 %v2105, %v2104
  %v2247 = vpack.c.b16 %v2107, %v2106
  %v2248 = vpack.c.b16 %v2109, %v2108
  %v2249 = vpack.c.b16 %v2111, %v2110
  %v2250 = vpack.c.b16 %v2113, %v2112
  %v2251 = vpack.c.b16 %v2115, %v2114
  %v2252 = vpack.c.b16 %v2117, %v2116
  %v2253 = vpack.c.b16 %v2119, %v2118
  %v2254 = vpack.c.b16 %v2121, %v2120
  %v2255 = vpack.c.b16 %v2123, %v2122
  %v2256 = vpack.c.b16 %v2125, %v2124
  %v2257 = vpack.c.b16 %v2127, %v2126
  %v2258 = vpack.c.b16 %v2129, %v2128
  %v2259 = vpack.c.b16 %v2131, %v2130
  %v2260 = vpack.c.b16 %v2133, %v2132
  %v2261 = vpack.c.b16 %v2135, %v2134
  %v2262 = vpack.c.b16 %v2137, %v2136
  %v2263 = vpack.c.b16 %v2139, %v2138
  %v2264 = vpack.c.b16 %v2141, %v2140
  %v2265 = vpack.c.b16 %v2143, %v2142
  %v2266 = vpack.c.b16 %v2145, %v2144
  %v2267 = vpack.c.b16 %v2147, %v2146
  %v2268 = vpack.c.b16 %v2149, %v2148
  %v2269 = vpack.c.b16 %v2151, %v2150
  %v2270 = vpack.c.b16 %v2153, %v2152
  %v2271 = vpack.c.b16 %v2155, %v2154
  %v2272 = vpack.c.b16 %v2157, %v2156
  %v2273 = vpack.c.b16 %v2159, %v2158
  %v2274 = vpack.c.b16 %v2161, %v2160
  %v2275 = vpack.c.b16 %v2163, %v2162
  %v2276 = vpack.c.b16 %v2165, %v2164
  %v2277 = vpack.c.b16 %v2167, %v2166
  %v2278 = vpack.c.b16 %v2169, %v2168
  %v2279 = vpack.c.b16 %v2171, %v2170
  %v2280 = vpack.c.b16 %v2173, %v2172
  %v2281 = vpack.c.b16 %v2175, %v2174
  %v2282 = vpack.c.b16 %v2177, %v2176
  %v2283 = vpack.c.b16 %v2179, %v2178
  %v2284 = vpack.c.b16 %v2181, %v2180
  %v2285 = vpack.c.b16 %v2183, %v2182
  %v2286 = vpack.c.b16 %v2185, %v2184
  %v2287 = vpack.c.b16 %v2187, %v2186
  %v2288 = vpack.c.b16 %v2189, %v2188
  %v2289 = vpack.c.b16 %v2191, %v2190
  %v2290 = vpack.c.b16 %v2193, %v2192
  %v2291 = vpack.c.b16 %v2195, %v2194
  %v2292 = vpack.c.b16 %v2197, %v2196
  %v2293 = vpack.c.b16 %v2199, %v2198
  %v2294 = vpack.c.b16 %v2201, %v2200
  %v2295 = vpack.c.b16 %v2203, %v2202
  %v2296 = vpack.c.b16 %v2205, %v2204
  %v2297 = vpack.c.b16 %v2207, %v2206
  %v2298 = vpack.c.b16 %v2209, %v2208
  %v2299 = vpack.c.b16 %v2211, %v2210
  %v2300 = vpack.c.b16 %v2213, %v2212
  %v2301 = vpack.c.b16 %v2215, %v2214
  %v2302 = vpack.c.b16 %v2217, %v2216
  %v2303 = vpack.c.b16 %v2219, %v2218
  %v2304 = vpack.c.b16 %v2221, %v2220
  %v2305 = vpack.c.b16 %v2223, %v2222
  %v2306 = vpack.c.b16 %v2225, %v2224
  %v2307 = vpack.c.b16 %v2227, %v2226
  %v2308 = vpack.c.b16 %v2229, %v2228
  %v2309 = vpack.c.b16 %v2231, %v2230
  %v2310 = vpack.c.b16 %v2233, %v2232
  %v2311 = vpack.c.b16 %v2235, %v2234
  %v2312 = vpack.c.b16 %v2237, %v2236
  %v2313 = vpack.c.b16 %v2239, %v2238
  %v2314 = vpack.c.b16 %v2241, %v2240
  %v2315 = vpack.c.b16 %v2243, %v2242
  %2388 = vmatprep.subr.bf16.mxu0 0
  %2389 = vmatpush1.bf16.msra.mxu0 %v2251
  %2390 = vmatprep.subr.bf16.mxu0 0
  %2391 = vmatpush1.bf16.msra.mxu0 %v2250
  %2392 = vmatprep.subr.bf16.mxu0 0
  %2393 = vmatpush1.bf16.msra.mxu0 %v2249
  %2394 = vmatprep.subr.bf16.mxu0 0
  %2395 = vmatpush1.bf16.msra.mxu0 %v2248
  %2396 = vmatprep.subr.bf16.mxu0 0
  %2397 = vmatpush1.bf16.msra.mxu0 %v2247
  %2398 = vmatprep.subr.bf16.mxu0 0
  %2399 = vmatpush1.bf16.msra.mxu0 %v2246
  %2400 = vmatprep.subr.bf16.mxu0 0
  %2401 = vmatpush1.bf16.msra.mxu0 %v2245
  %2402 = vmatprep.subr.bf16.mxu0 0
  %2403 = vmatpush1.bf16.msra.mxu0 %v2244
  %2404 = vmatprep.subr.bf16.mxu0 0
  %2405 = vmatpush2.bf16.msra.mxu0 %v2259
  %2406 = vmatprep.subr.bf16.mxu0 0
  %2407 = vmatpush2.bf16.msra.mxu0 %v2258
  %2408 = vmatprep.subr.bf16.mxu0 0
  %2409 = vmatpush2.bf16.msra.mxu0 %v2257
  %2410 = vmatprep.subr.bf16.mxu0 0
  %2411 = vmatpush2.bf16.msra.mxu0 %v2256
  %2412 = vmatprep.subr.bf16.mxu0 0
  %2413 = vmatpush2.bf16.msra.mxu0 %v2255
  %2414 = vmatprep.subr.bf16.mxu0 0
  %2415 = vmatpush2.bf16.msra.mxu0 %v2254
  %2416 = vmatprep.subr.bf16.mxu0 0
  %2417 = vmatpush2.bf16.msra.mxu0 %v2253
  %2418 = vmatprep.subr.bf16.mxu0 0
  %2419 = vmatpush2.bf16.msra.mxu0 %v2252
  %2420 = vmatprep.mubr.bf16.mxu0 %v1381
  %2421 = vmatmul.mubr.bf16.gmra.mxu0 %v1380
  %v2422 = vpop.f32.mrf.mxu0
  %v2423 = vadd.f32 %v483, %v2422
  %v2424 = vpop.f32.mrf.mxu0
  %v2425 = vpop.f32.mrf.mxu0
  %v2426 = vadd.f32 %v483, %v2425
  %v2427 = vpop.f32.mrf.mxu0
  %2428 = vmatprep.mubr.bf16.mxu0 %v1390
  %2429 = vmatmul.mubr.bf16.gmra.mxu0 %v1389
  %v2430 = vpop.f32.mrf.mxu0
  %v2431 = vadd.f32 %v483, %v2430
  %v2432 = vpop.f32.mrf.mxu0
  %v2433 = vpop.f32.mrf.mxu0
  %v2434 = vadd.f32 %v483, %v2433
  %v2435 = vpop.f32.mrf.mxu0
  %2436 = vmatprep.mubr.bf16.mxu0 %v1399
  %2437 = vmatmul.mubr.bf16.gmra.mxu0 %v1398
  %v2438 = vpop.f32.mrf.mxu0
  %v2439 = vadd.f32 %v483, %v2438
  %v2440 = vpop.f32.mrf.mxu0
  %v2441 = vpop.f32.mrf.mxu0
  %v2442 = vadd.f32 %v483, %v2441
  %v2443 = vpop.f32.mrf.mxu0
  %2444 = vmatprep.mubr.bf16.mxu0 %v1408
  %2445 = vmatmul.mubr.bf16.gmra.mxu0 %v1407
  %v2446 = vpop.f32.mrf.mxu0
  %v2447 = vadd.f32 %v483, %v2446
  %v2448 = vpop.f32.mrf.mxu0
  %v2449 = vpop.f32.mrf.mxu0
  %v2450 = vadd.f32 %v483, %v2449
  %v2451 = vpop.f32.mrf.mxu0
  %2452 = vmatprep.mubr.bf16.mxu0 %v1417
  %2453 = vmatmul.mubr.bf16.gmra.mxu0 %v1416
  %v2454 = vpop.f32.mrf.mxu0
  %v2455 = vadd.f32 %v483, %v2454
  %v2456 = vpop.f32.mrf.mxu0
  %v2457 = vpop.f32.mrf.mxu0
  %v2458 = vadd.f32 %v483, %v2457
  %v2459 = vpop.f32.mrf.mxu0
  %2460 = vmatprep.mubr.bf16.mxu0 %v1426
  %2461 = vmatmul.mubr.bf16.gmra.mxu0 %v1425
  %v2462 = vpop.f32.mrf.mxu0
  %v2463 = vadd.f32 %v483, %v2462
  %v2464 = vpop.f32.mrf.mxu0
  %v2465 = vpop.f32.mrf.mxu0
  %v2466 = vadd.f32 %v483, %v2465
  %v2467 = vpop.f32.mrf.mxu0
  %2468 = vmatprep.mubr.bf16.mxu0 %v1435
  %2469 = vmatmul.mubr.bf16.gmra.mxu0 %v1434
  %v2470 = vpop.f32.mrf.mxu0
  %v2471 = vadd.f32 %v483, %v2470
  %v2472 = vpop.f32.mrf.mxu0
  %v2473 = vpop.f32.mrf.mxu0
  %v2474 = vadd.f32 %v483, %v2473
  %v2475 = vpop.f32.mrf.mxu0
  %2476 = vmatprep.mubr.bf16.mxu0 %v1444
  %2477 = vmatmul.mubr.bf16.gmra.mxu0 %v1443
  %v2478 = vpop.f32.mrf.mxu0
  %v2479 = vadd.f32 %v483, %v2478
  %v2480 = vpop.f32.mrf.mxu0
  %v2481 = vpop.f32.mrf.mxu0
  %v2482 = vadd.f32 %v483, %v2481
  %v2483 = vpop.f32.mrf.mxu0
  %2484 = vmatprep.mubr.bf16.mxu0 %v1453
  %2485 = vmatmul.mubr.bf16.gmra.mxu0 %v1452
  %v2486 = vpop.f32.mrf.mxu0
  %v2487 = vadd.f32 %v483, %v2486
  %v2488 = vpop.f32.mrf.mxu0
  %v2489 = vpop.f32.mrf.mxu0
  %v2490 = vadd.f32 %v483, %v2489
  %v2491 = vpop.f32.mrf.mxu0
  %2492 = vmatprep.mubr.bf16.mxu0 %v1462
  %2493 = vmatmul.mubr.bf16.gmra.mxu0 %v1461
  %v2494 = vpop.f32.mrf.mxu0
  %v2495 = vadd.f32 %v483, %v2494
  %v2496 = vpop.f32.mrf.mxu0
  %v2497 = vpop.f32.mrf.mxu0
  %v2498 = vadd.f32 %v483, %v2497
  %v2499 = vpop.f32.mrf.mxu0
  %2500 = vmatprep.mubr.bf16.mxu0 %v1471
  %2501 = vmatmul.mubr.bf16.gmra.mxu0 %v1470
  %v2502 = vpop.f32.mrf.mxu0
  %v2503 = vadd.f32 %v483, %v2502
  %v2504 = vpop.f32.mrf.mxu0
  %v2505 = vpop.f32.mrf.mxu0
  %v2506 = vadd.f32 %v483, %v2505
  %v2507 = vpop.f32.mrf.mxu0
  %2508 = vmatprep.mubr.bf16.mxu0 %v1480
  %2509 = vmatmul.mubr.bf16.gmra.mxu0 %v1479
  %v2510 = vpop.f32.mrf.mxu0
  %v2511 = vadd.f32 %v483, %v2510
  %v2512 = vpop.f32.mrf.mxu0
  %v2513 = vpop.f32.mrf.mxu0
  %v2514 = vadd.f32 %v483, %v2513
  %v2515 = vpop.f32.mrf.mxu0
  %2516 = vmatprep.mubr.bf16.mxu0 %v1489
  %2517 = vmatmul.mubr.bf16.gmra.mxu0 %v1488
  %v2518 = vpop.f32.mrf.mxu0
  %v2519 = vadd.f32 %v483, %v2518
  %v2520 = vpop.f32.mrf.mxu0
  %v2521 = vpop.f32.mrf.mxu0
  %v2522 = vadd.f32 %v483, %v2521
  %v2523 = vpop.f32.mrf.mxu0
  %2524 = vmatprep.mubr.bf16.mxu0 %v1498
  %2525 = vmatmul.mubr.bf16.gmra.mxu0 %v1497
  %v2526 = vpop.f32.mrf.mxu0
  %v2527 = vadd.f32 %v483, %v2526
  %v2528 = vpop.f32.mrf.mxu0
  %v2529 = vpop.f32.mrf.mxu0
  %v2530 = vadd.f32 %v483, %v2529
  %v2531 = vpop.f32.mrf.mxu0
  %2532 = vmatprep.mubr.bf16.mxu0 %v1507
  %2533 = vmatmul.mubr.bf16.gmra.mxu0 %v1506
  %v2534 = vpop.f32.mrf.mxu0
  %v2535 = vadd.f32 %v483, %v2534
  %v2536 = vpop.f32.mrf.mxu0
  %v2537 = vpop.f32.mrf.mxu0
  %v2538 = vadd.f32 %v483, %v2537
  %v2539 = vpop.f32.mrf.mxu0
  %2540 = vmatprep.mubr.bf16.mxu0 %v1516
  %2541 = vmatmul.mubr.bf16.gmra.mxu0 %v1515
  %v2542 = vpop.f32.mrf.mxu0
  %v2543 = vadd.f32 %v483, %v2542
  %v2544 = vpop.f32.mrf.mxu0
  %v2545 = vpop.f32.mrf.mxu0
  %v2546 = vadd.f32 %v483, %v2545
  %v2547 = vpop.f32.mrf.mxu0
  %2548 = vmatprep.mubr.bf16.mxu0 %v1525
  %2549 = vmatmul.mubr.bf16.gmra.mxu0 %v1524
  %v2550 = vpop.f32.mrf.mxu0
  %v2551 = vadd.f32 %v483, %v2550
  %v2552 = vpop.f32.mrf.mxu0
  %v2553 = vpop.f32.mrf.mxu0
  %v2554 = vadd.f32 %v483, %v2553
  %v2555 = vpop.f32.mrf.mxu0
  %2556 = vmatprep.mubr.bf16.mxu0 %v1534
  %2557 = vmatmul.mubr.bf16.gmra.mxu0 %v1533
  %v2558 = vpop.f32.mrf.mxu0
  %v2559 = vadd.f32 %v483, %v2558
  %v2560 = vpop.f32.mrf.mxu0
  %v2561 = vpop.f32.mrf.mxu0
  %v2562 = vadd.f32 %v483, %v2561
  %v2563 = vpop.f32.mrf.mxu0
  %2564 = vmatprep.mubr.bf16.mxu0 %v1543
  %2565 = vmatmul.mubr.bf16.gmra.mxu0 %v1542
  %v2566 = vpop.f32.mrf.mxu0
  %v2567 = vadd.f32 %v483, %v2566
  %v2568 = vpop.f32.mrf.mxu0
  %v2569 = vpop.f32.mrf.mxu0
  %v2570 = vadd.f32 %v483, %v2569
  %v2571 = vpop.f32.mrf.mxu0
  %2572 = vmatprep.mubr.bf16.mxu0 %v1552
  %2573 = vmatmul.mubr.bf16.gmra.mxu0 %v1551
  %v2574 = vpop.f32.mrf.mxu0
  %v2575 = vadd.f32 %v483, %v2574
  %v2576 = vpop.f32.mrf.mxu0
  %v2577 = vpop.f32.mrf.mxu0
  %v2578 = vadd.f32 %v483, %v2577
  %v2579 = vpop.f32.mrf.mxu0
  %2580 = vmatprep.mubr.bf16.mxu0 %v1561
  %2581 = vmatmul.mubr.bf16.gmra.mxu0 %v1560
  %v2582 = vpop.f32.mrf.mxu0
  %v2583 = vadd.f32 %v483, %v2582
  %v2584 = vpop.f32.mrf.mxu0
  %v2585 = vpop.f32.mrf.mxu0
  %v2586 = vadd.f32 %v483, %v2585
  %v2587 = vpop.f32.mrf.mxu0
  %2588 = vmatprep.mubr.bf16.mxu0 %v1570
  %2589 = vmatmul.mubr.bf16.gmra.mxu0 %v1569
  %v2590 = vpop.f32.mrf.mxu0
  %v2591 = vadd.f32 %v483, %v2590
  %v2592 = vpop.f32.mrf.mxu0
  %v2593 = vpop.f32.mrf.mxu0
  %v2594 = vadd.f32 %v483, %v2593
  %v2595 = vpop.f32.mrf.mxu0
  %2596 = vmatprep.mubr.bf16.mxu0 %v1579
  %2597 = vmatmul.mubr.bf16.gmra.mxu0 %v1578
  %v2598 = vpop.f32.mrf.mxu0
  %v2599 = vadd.f32 %v483, %v2598
  %v2600 = vpop.f32.mrf.mxu0
  %v2601 = vpop.f32.mrf.mxu0
  %v2602 = vadd.f32 %v483, %v2601
  %v2603 = vpop.f32.mrf.mxu0
  %2604 = vmatprep.mubr.bf16.mxu0 %v1588
  %2605 = vmatmul.mubr.bf16.gmra.mxu0 %v1587
  %v2606 = vpop.f32.mrf.mxu0
  %v2607 = vadd.f32 %v483, %v2606
  %v2608 = vpop.f32.mrf.mxu0
  %v2609 = vpop.f32.mrf.mxu0
  %v2610 = vadd.f32 %v483, %v2609
  %v2611 = vpop.f32.mrf.mxu0
  %2612 = vmatprep.mubr.bf16.mxu0 %v1597
  %2613 = vmatmul.mubr.bf16.gmra.mxu0 %v1596
  %v2614 = vpop.f32.mrf.mxu0
  %v2615 = vadd.f32 %v483, %v2614
  %v2616 = vpop.f32.mrf.mxu0
  %v2617 = vpop.f32.mrf.mxu0
  %v2618 = vadd.f32 %v483, %v2617
  %v2619 = vpop.f32.mrf.mxu0
  %2620 = vmatprep.mubr.bf16.mxu0 %v1606
  %2621 = vmatmul.mubr.bf16.gmra.mxu0 %v1605
  %v2622 = vpop.f32.mrf.mxu0
  %v2623 = vadd.f32 %v483, %v2622
  %v2624 = vpop.f32.mrf.mxu0
  %v2625 = vpop.f32.mrf.mxu0
  %v2626 = vadd.f32 %v483, %v2625
  %v2627 = vpop.f32.mrf.mxu0
  %2628 = vmatprep.mubr.bf16.mxu0 %v1615
  %2629 = vmatmul.mubr.bf16.gmra.mxu0 %v1614
  %v2630 = vpop.f32.mrf.mxu0
  %v2631 = vadd.f32 %v483, %v2630
  %v2632 = vpop.f32.mrf.mxu0
  %v2633 = vpop.f32.mrf.mxu0
  %v2634 = vadd.f32 %v483, %v2633
  %v2635 = vpop.f32.mrf.mxu0
  %2636 = vmatprep.mubr.bf16.mxu0 %v1624
  %2637 = vmatmul.mubr.bf16.gmra.mxu0 %v1623
  %v2638 = vpop.f32.mrf.mxu0
  %v2639 = vadd.f32 %v483, %v2638
  %v2640 = vpop.f32.mrf.mxu0
  %v2641 = vpop.f32.mrf.mxu0
  %v2642 = vadd.f32 %v483, %v2641
  %v2643 = vpop.f32.mrf.mxu0
  %2644 = vmatprep.mubr.bf16.mxu0 %v1633
  %2645 = vmatmul.mubr.bf16.gmra.mxu0 %v1632
  %v2646 = vpop.f32.mrf.mxu0
  %v2647 = vadd.f32 %v483, %v2646
  %v2648 = vpop.f32.mrf.mxu0
  %v2649 = vpop.f32.mrf.mxu0
  %v2650 = vadd.f32 %v483, %v2649
  %v2651 = vpop.f32.mrf.mxu0
  %2652 = vmatprep.mubr.bf16.mxu0 %v1642
  %2653 = vmatmul.mubr.bf16.gmra.mxu0 %v1641
  %v2654 = vpop.f32.mrf.mxu0
  %v2655 = vadd.f32 %v483, %v2654
  %v2656 = vpop.f32.mrf.mxu0
  %v2657 = vpop.f32.mrf.mxu0
  %v2658 = vadd.f32 %v483, %v2657
  %v2659 = vpop.f32.mrf.mxu0
  %2660 = vmatprep.mubr.bf16.mxu0 %v1651
  %2661 = vmatmul.mubr.bf16.gmra.mxu0 %v1650
  %v2662 = vpop.f32.mrf.mxu0
  %v2663 = vadd.f32 %v483, %v2662
  %v2664 = vpop.f32.mrf.mxu0
  %v2665 = vpop.f32.mrf.mxu0
  %v2666 = vadd.f32 %v483, %v2665
  %v2667 = vpop.f32.mrf.mxu0
  %2668 = vmatprep.mubr.bf16.mxu0 %v1660
  %2669 = vmatmul.mubr.bf16.gmra.mxu0 %v1659
  %v2670 = vpop.f32.mrf.mxu0
  %v2671 = vadd.f32 %v483, %v2670
  %v2672 = vpop.f32.mrf.mxu0
  %v2673 = vpop.f32.mrf.mxu0
  %v2674 = vadd.f32 %v483, %v2673
  %v2675 = vpop.f32.mrf.mxu0
  %2676 = vdwg.mxu0
  %2677 = vmatprep.subr.bf16.mxu0 0
  %2678 = vmatpush1.bf16.msra.mxu0 %v2267
  %2679 = vmatprep.subr.bf16.mxu0 0
  %2680 = vmatpush1.bf16.msra.mxu0 %v2266
  %2681 = vmatprep.subr.bf16.mxu0 0
  %2682 = vmatpush1.bf16.msra.mxu0 %v2265
  %2683 = vmatprep.subr.bf16.mxu0 0
  %2684 = vmatpush1.bf16.msra.mxu0 %v2264
  %2685 = vmatprep.subr.bf16.mxu0 0
  %2686 = vmatpush1.bf16.msra.mxu0 %v2263
  %2687 = vmatprep.subr.bf16.mxu0 0
  %2688 = vmatpush1.bf16.msra.mxu0 %v2262
  %2689 = vmatprep.subr.bf16.mxu0 0
  %2690 = vmatpush1.bf16.msra.mxu0 %v2261
  %2691 = vmatprep.subr.bf16.mxu0 0
  %2692 = vmatpush1.bf16.msra.mxu0 %v2260
  %2693 = vmatprep.subr.bf16.mxu0 0
  %2694 = vmatpush2.bf16.msra.mxu0 %v2275
  %2695 = vmatprep.subr.bf16.mxu0 0
  %2696 = vmatpush2.bf16.msra.mxu0 %v2274
  %2697 = vmatprep.subr.bf16.mxu0 0
  %2698 = vmatpush2.bf16.msra.mxu0 %v2273
  %2699 = vmatprep.subr.bf16.mxu0 0
  %2700 = vmatpush2.bf16.msra.mxu0 %v2272
  %2701 = vmatprep.subr.bf16.mxu0 0
  %2702 = vmatpush2.bf16.msra.mxu0 %v2271
  %2703 = vmatprep.subr.bf16.mxu0 0
  %2704 = vmatpush2.bf16.msra.mxu0 %v2270
  %2705 = vmatprep.subr.bf16.mxu0 0
  %2706 = vmatpush2.bf16.msra.mxu0 %v2269
  %2707 = vmatprep.subr.bf16.mxu0 0
  %2708 = vmatpush2.bf16.msra.mxu0 %v2268
  %2709 = vmatprep.mubr.bf16.mxu0 %v1383
  %2710 = vmatmul.mubr.bf16.gmra.mxu0 %v1382
  %v2711 = vpop.f32.mrf.mxu0
  %v2712 = vadd.f32 %v2423, %v2711
  %v2713 = vpop.f32.mrf.mxu0
  %v2714 = vpop.f32.mrf.mxu0
  %v2715 = vadd.f32 %v2426, %v2714
  %v2716 = vpop.f32.mrf.mxu0
  %2717 = vmatprep.mubr.bf16.mxu0 %v1392
  %2718 = vmatmul.mubr.bf16.gmra.mxu0 %v1391
  %v2719 = vpop.f32.mrf.mxu0
  %v2720 = vadd.f32 %v2431, %v2719
  %v2721 = vpop.f32.mrf.mxu0
  %v2722 = vpop.f32.mrf.mxu0
  %v2723 = vadd.f32 %v2434, %v2722
  %v2724 = vpop.f32.mrf.mxu0
  %2725 = vmatprep.mubr.bf16.mxu0 %v1401
  %2726 = vmatmul.mubr.bf16.gmra.mxu0 %v1400
  %v2727 = vpop.f32.mrf.mxu0
  %v2728 = vadd.f32 %v2439, %v2727
  %v2729 = vpop.f32.mrf.mxu0
  %v2730 = vpop.f32.mrf.mxu0
  %v2731 = vadd.f32 %v2442, %v2730
  %v2732 = vpop.f32.mrf.mxu0
  %2733 = vmatprep.mubr.bf16.mxu0 %v1410
  %2734 = vmatmul.mubr.bf16.gmra.mxu0 %v1409
  %v2735 = vpop.f32.mrf.mxu0
  %v2736 = vadd.f32 %v2447, %v2735
  %v2737 = vpop.f32.mrf.mxu0
  %v2738 = vpop.f32.mrf.mxu0
  %v2739 = vadd.f32 %v2450, %v2738
  %v2740 = vpop.f32.mrf.mxu0
  %2741 = vmatprep.mubr.bf16.mxu0 %v1419
  %2742 = vmatmul.mubr.bf16.gmra.mxu0 %v1418
  %v2743 = vpop.f32.mrf.mxu0
  %v2744 = vadd.f32 %v2455, %v2743
  %v2745 = vpop.f32.mrf.mxu0
  %v2746 = vpop.f32.mrf.mxu0
  %v2747 = vadd.f32 %v2458, %v2746
  %v2748 = vpop.f32.mrf.mxu0
  %2749 = vmatprep.mubr.bf16.mxu0 %v1428
  %2750 = vmatmul.mubr.bf16.gmra.mxu0 %v1427
  %v2751 = vpop.f32.mrf.mxu0
  %v2752 = vadd.f32 %v2463, %v2751
  %v2753 = vpop.f32.mrf.mxu0
  %v2754 = vpop.f32.mrf.mxu0
  %v2755 = vadd.f32 %v2466, %v2754
  %v2756 = vpop.f32.mrf.mxu0
  %2757 = vmatprep.mubr.bf16.mxu0 %v1437
  %2758 = vmatmul.mubr.bf16.gmra.mxu0 %v1436
  %v2759 = vpop.f32.mrf.mxu0
  %v2760 = vadd.f32 %v2471, %v2759
  %v2761 = vpop.f32.mrf.mxu0
  %v2762 = vpop.f32.mrf.mxu0
  %v2763 = vadd.f32 %v2474, %v2762
  %v2764 = vpop.f32.mrf.mxu0
  %2765 = vmatprep.mubr.bf16.mxu0 %v1446
  %2766 = vmatmul.mubr.bf16.gmra.mxu0 %v1445
  %v2767 = vpop.f32.mrf.mxu0
  %v2768 = vadd.f32 %v2479, %v2767
  %v2769 = vpop.f32.mrf.mxu0
  %v2770 = vpop.f32.mrf.mxu0
  %v2771 = vadd.f32 %v2482, %v2770
  %v2772 = vpop.f32.mrf.mxu0
  %2773 = vmatprep.mubr.bf16.mxu0 %v1455
  %2774 = vmatmul.mubr.bf16.gmra.mxu0 %v1454
  %v2775 = vpop.f32.mrf.mxu0
  %v2776 = vadd.f32 %v2487, %v2775
  %v2777 = vpop.f32.mrf.mxu0
  %v2778 = vpop.f32.mrf.mxu0
  %v2779 = vadd.f32 %v2490, %v2778
  %v2780 = vpop.f32.mrf.mxu0
  %2781 = vmatprep.mubr.bf16.mxu0 %v1464
  %2782 = vmatmul.mubr.bf16.gmra.mxu0 %v1463
  %v2783 = vpop.f32.mrf.mxu0
  %v2784 = vadd.f32 %v2495, %v2783
  %v2785 = vpop.f32.mrf.mxu0
  %v2786 = vpop.f32.mrf.mxu0
  %v2787 = vadd.f32 %v2498, %v2786
  %v2788 = vpop.f32.mrf.mxu0
  %2789 = vmatprep.mubr.bf16.mxu0 %v1473
  %2790 = vmatmul.mubr.bf16.gmra.mxu0 %v1472
  %v2791 = vpop.f32.mrf.mxu0
  %v2792 = vadd.f32 %v2503, %v2791
  %v2793 = vpop.f32.mrf.mxu0
  %v2794 = vpop.f32.mrf.mxu0
  %v2795 = vadd.f32 %v2506, %v2794
  %v2796 = vpop.f32.mrf.mxu0
  %2797 = vmatprep.mubr.bf16.mxu0 %v1482
  %2798 = vmatmul.mubr.bf16.gmra.mxu0 %v1481
  %v2799 = vpop.f32.mrf.mxu0
  %v2800 = vadd.f32 %v2511, %v2799
  %v2801 = vpop.f32.mrf.mxu0
  %v2802 = vpop.f32.mrf.mxu0
  %v2803 = vadd.f32 %v2514, %v2802
  %v2804 = vpop.f32.mrf.mxu0
  %2805 = vmatprep.mubr.bf16.mxu0 %v1491
  %2806 = vmatmul.mubr.bf16.gmra.mxu0 %v1490
  %v2807 = vpop.f32.mrf.mxu0
  %v2808 = vadd.f32 %v2519, %v2807
  %v2809 = vpop.f32.mrf.mxu0
  %v2810 = vpop.f32.mrf.mxu0
  %v2811 = vadd.f32 %v2522, %v2810
  %v2812 = vpop.f32.mrf.mxu0
  %2813 = vmatprep.mubr.bf16.mxu0 %v1500
  %2814 = vmatmul.mubr.bf16.gmra.mxu0 %v1499
  %v2815 = vpop.f32.mrf.mxu0
  %v2816 = vadd.f32 %v2527, %v2815
  %v2817 = vpop.f32.mrf.mxu0
  %v2818 = vpop.f32.mrf.mxu0
  %v2819 = vadd.f32 %v2530, %v2818
  %v2820 = vpop.f32.mrf.mxu0
  %2821 = vmatprep.mubr.bf16.mxu0 %v1509
  %2822 = vmatmul.mubr.bf16.gmra.mxu0 %v1508
  %v2823 = vpop.f32.mrf.mxu0
  %v2824 = vadd.f32 %v2535, %v2823
  %v2825 = vpop.f32.mrf.mxu0
  %v2826 = vpop.f32.mrf.mxu0
  %v2827 = vadd.f32 %v2538, %v2826
  %v2828 = vpop.f32.mrf.mxu0
  %2829 = vmatprep.mubr.bf16.mxu0 %v1518
  %2830 = vmatmul.mubr.bf16.gmra.mxu0 %v1517
  %v2831 = vpop.f32.mrf.mxu0
  %v2832 = vadd.f32 %v2543, %v2831
  %v2833 = vpop.f32.mrf.mxu0
  %v2834 = vpop.f32.mrf.mxu0
  %v2835 = vadd.f32 %v2546, %v2834
  %v2836 = vpop.f32.mrf.mxu0
  %2837 = vmatprep.mubr.bf16.mxu0 %v1527
  %2838 = vmatmul.mubr.bf16.gmra.mxu0 %v1526
  %v2839 = vpop.f32.mrf.mxu0
  %v2840 = vadd.f32 %v2551, %v2839
  %v2841 = vpop.f32.mrf.mxu0
  %v2842 = vpop.f32.mrf.mxu0
  %v2843 = vadd.f32 %v2554, %v2842
  %v2844 = vpop.f32.mrf.mxu0
  %2845 = vmatprep.mubr.bf16.mxu0 %v1536
  %2846 = vmatmul.mubr.bf16.gmra.mxu0 %v1535
  %v2847 = vpop.f32.mrf.mxu0
  %v2848 = vadd.f32 %v2559, %v2847
  %v2849 = vpop.f32.mrf.mxu0
  %v2850 = vpop.f32.mrf.mxu0
  %v2851 = vadd.f32 %v2562, %v2850
  %v2852 = vpop.f32.mrf.mxu0
  %2853 = vmatprep.mubr.bf16.mxu0 %v1545
  %2854 = vmatmul.mubr.bf16.gmra.mxu0 %v1544
  %v2855 = vpop.f32.mrf.mxu0
  %v2856 = vadd.f32 %v2567, %v2855
  %v2857 = vpop.f32.mrf.mxu0
  %v2858 = vpop.f32.mrf.mxu0
  %v2859 = vadd.f32 %v2570, %v2858
  %v2860 = vpop.f32.mrf.mxu0
  %2861 = vmatprep.mubr.bf16.mxu0 %v1554
  %2862 = vmatmul.mubr.bf16.gmra.mxu0 %v1553
  %v2863 = vpop.f32.mrf.mxu0
  %v2864 = vadd.f32 %v2575, %v2863
  %v2865 = vpop.f32.mrf.mxu0
  %v2866 = vpop.f32.mrf.mxu0
  %v2867 = vadd.f32 %v2578, %v2866
  %v2868 = vpop.f32.mrf.mxu0
  %2869 = vmatprep.mubr.bf16.mxu0 %v1563
  %2870 = vmatmul.mubr.bf16.gmra.mxu0 %v1562
  %v2871 = vpop.f32.mrf.mxu0
  %v2872 = vadd.f32 %v2583, %v2871
  %v2873 = vpop.f32.mrf.mxu0
  %v2874 = vpop.f32.mrf.mxu0
  %v2875 = vadd.f32 %v2586, %v2874
  %v2876 = vpop.f32.mrf.mxu0
  %2877 = vmatprep.mubr.bf16.mxu0 %v1572
  %2878 = vmatmul.mubr.bf16.gmra.mxu0 %v1571
  %v2879 = vpop.f32.mrf.mxu0
  %v2880 = vadd.f32 %v2591, %v2879
  %v2881 = vpop.f32.mrf.mxu0
  %v2882 = vpop.f32.mrf.mxu0
  %v2883 = vadd.f32 %v2594, %v2882
  %v2884 = vpop.f32.mrf.mxu0
  %2885 = vmatprep.mubr.bf16.mxu0 %v1581
  %2886 = vmatmul.mubr.bf16.gmra.mxu0 %v1580
  %v2887 = vpop.f32.mrf.mxu0
  %v2888 = vadd.f32 %v2599, %v2887
  %v2889 = vpop.f32.mrf.mxu0
  %v2890 = vpop.f32.mrf.mxu0
  %v2891 = vadd.f32 %v2602, %v2890
  %v2892 = vpop.f32.mrf.mxu0
  %2893 = vmatprep.mubr.bf16.mxu0 %v1590
  %2894 = vmatmul.mubr.bf16.gmra.mxu0 %v1589
  %v2895 = vpop.f32.mrf.mxu0
  %v2896 = vadd.f32 %v2607, %v2895
  %v2897 = vpop.f32.mrf.mxu0
  %v2898 = vpop.f32.mrf.mxu0
  %v2899 = vadd.f32 %v2610, %v2898
  %v2900 = vpop.f32.mrf.mxu0
  %2901 = vmatprep.mubr.bf16.mxu0 %v1599
  %2902 = vmatmul.mubr.bf16.gmra.mxu0 %v1598
  %v2903 = vpop.f32.mrf.mxu0
  %v2904 = vadd.f32 %v2615, %v2903
  %v2905 = vpop.f32.mrf.mxu0
  %v2906 = vpop.f32.mrf.mxu0
  %v2907 = vadd.f32 %v2618, %v2906
  %v2908 = vpop.f32.mrf.mxu0
  %2909 = vmatprep.mubr.bf16.mxu0 %v1608
  %2910 = vmatmul.mubr.bf16.gmra.mxu0 %v1607
  %v2911 = vpop.f32.mrf.mxu0
  %v2912 = vadd.f32 %v2623, %v2911
  %v2913 = vpop.f32.mrf.mxu0
  %v2914 = vpop.f32.mrf.mxu0
  %v2915 = vadd.f32 %v2626, %v2914
  %v2916 = vpop.f32.mrf.mxu0
  %2917 = vmatprep.mubr.bf16.mxu0 %v1617
  %2918 = vmatmul.mubr.bf16.gmra.mxu0 %v1616
  %v2919 = vpop.f32.mrf.mxu0
  %v2920 = vadd.f32 %v2631, %v2919
  %v2921 = vpop.f32.mrf.mxu0
  %v2922 = vpop.f32.mrf.mxu0
  %v2923 = vadd.f32 %v2634, %v2922
  %v2924 = vpop.f32.mrf.mxu0
  %2925 = vmatprep.mubr.bf16.mxu0 %v1626
  %2926 = vmatmul.mubr.bf16.gmra.mxu0 %v1625
  %v2927 = vpop.f32.mrf.mxu0
  %v2928 = vadd.f32 %v2639, %v2927
  %v2929 = vpop.f32.mrf.mxu0
  %v2930 = vpop.f32.mrf.mxu0
  %v2931 = vadd.f32 %v2642, %v2930
  %v2932 = vpop.f32.mrf.mxu0
  %2933 = vmatprep.mubr.bf16.mxu0 %v1635
  %2934 = vmatmul.mubr.bf16.gmra.mxu0 %v1634
  %v2935 = vpop.f32.mrf.mxu0
  %v2936 = vadd.f32 %v2647, %v2935
  %v2937 = vpop.f32.mrf.mxu0
  %v2938 = vpop.f32.mrf.mxu0
  %v2939 = vadd.f32 %v2650, %v2938
  %v2940 = vpop.f32.mrf.mxu0
  %2941 = vmatprep.mubr.bf16.mxu0 %v1644
  %2942 = vmatmul.mubr.bf16.gmra.mxu0 %v1643
  %v2943 = vpop.f32.mrf.mxu0
  %v2944 = vadd.f32 %v2655, %v2943
  %v2945 = vpop.f32.mrf.mxu0
  %v2946 = vpop.f32.mrf.mxu0
  %v2947 = vadd.f32 %v2658, %v2946
  %v2948 = vpop.f32.mrf.mxu0
  %2949 = vmatprep.mubr.bf16.mxu0 %v1653
  %2950 = vmatmul.mubr.bf16.gmra.mxu0 %v1652
  %v2951 = vpop.f32.mrf.mxu0
  %v2952 = vadd.f32 %v2663, %v2951
  %v2953 = vpop.f32.mrf.mxu0
  %v2954 = vpop.f32.mrf.mxu0
  %v2955 = vadd.f32 %v2666, %v2954
  %v2956 = vpop.f32.mrf.mxu0
  %2957 = vmatprep.mubr.bf16.mxu0 %v1662
  %2958 = vmatmul.mubr.bf16.gmra.mxu0 %v1661
  %v2959 = vpop.f32.mrf.mxu0
  %v2960 = vadd.f32 %v2671, %v2959
  %v2961 = vpop.f32.mrf.mxu0
  %v2962 = vpop.f32.mrf.mxu0
  %v2963 = vadd.f32 %v2674, %v2962
  %v2964 = vpop.f32.mrf.mxu0
  %2965 = vdwg.mxu0
  %2966 = vmatprep.subr.bf16.mxu0 0
  %2967 = vmatpush1.bf16.msra.mxu0 %v2283
  %2968 = vmatprep.subr.bf16.mxu0 0
  %2969 = vmatpush1.bf16.msra.mxu0 %v2282
  %2970 = vmatprep.subr.bf16.mxu0 0
  %2971 = vmatpush1.bf16.msra.mxu0 %v2281
  %2972 = vmatprep.subr.bf16.mxu0 0
  %2973 = vmatpush1.bf16.msra.mxu0 %v2280
  %2974 = vmatprep.subr.bf16.mxu0 0
  %2975 = vmatpush1.bf16.msra.mxu0 %v2279
  %2976 = vmatprep.subr.bf16.mxu0 0
  %2977 = vmatpush1.bf16.msra.mxu0 %v2278
  %2978 = vmatprep.subr.bf16.mxu0 0
  %2979 = vmatpush1.bf16.msra.mxu0 %v2277
  %2980 = vmatprep.subr.bf16.mxu0 0
  %2981 = vmatpush1.bf16.msra.mxu0 %v2276
  %2982 = vmatprep.subr.bf16.mxu0 0
  %2983 = vmatpush2.bf16.msra.mxu0 %v2291
  %2984 = vmatprep.subr.bf16.mxu0 0
  %2985 = vmatpush2.bf16.msra.mxu0 %v2290
  %2986 = vmatprep.subr.bf16.mxu0 0
  %2987 = vmatpush2.bf16.msra.mxu0 %v2289
  %2988 = vmatprep.subr.bf16.mxu0 0
  %2989 = vmatpush2.bf16.msra.mxu0 %v2288
  %2990 = vmatprep.subr.bf16.mxu0 0
  %2991 = vmatpush2.bf16.msra.mxu0 %v2287
  %2992 = vmatprep.subr.bf16.mxu0 0
  %2993 = vmatpush2.bf16.msra.mxu0 %v2286
  %2994 = vmatprep.subr.bf16.mxu0 0
  %2995 = vmatpush2.bf16.msra.mxu0 %v2285
  %2996 = vmatprep.subr.bf16.mxu0 0
  %2997 = vmatpush2.bf16.msra.mxu0 %v2284
  %2998 = vmatprep.mubr.bf16.mxu0 %v1385
  %2999 = vmatmul.mubr.bf16.gmra.mxu0 %v1384
  %v3000 = vpop.f32.mrf.mxu0
  %v3001 = vadd.f32 %v2712, %v3000
  %v3002 = vpop.f32.mrf.mxu0
  %v3003 = vpop.f32.mrf.mxu0
  %v3004 = vadd.f32 %v2715, %v3003
  %v3005 = vpop.f32.mrf.mxu0
  %3006 = vmatprep.mubr.bf16.mxu0 %v1394
  %3007 = vmatmul.mubr.bf16.gmra.mxu0 %v1393
  %v3008 = vpop.f32.mrf.mxu0
  %v3009 = vadd.f32 %v2720, %v3008
  %v3010 = vpop.f32.mrf.mxu0
  %v3011 = vpop.f32.mrf.mxu0
  %v3012 = vadd.f32 %v2723, %v3011
  %v3013 = vpop.f32.mrf.mxu0
  %3014 = vmatprep.mubr.bf16.mxu0 %v1403
  %3015 = vmatmul.mubr.bf16.gmra.mxu0 %v1402
  %v3016 = vpop.f32.mrf.mxu0
  %v3017 = vadd.f32 %v2728, %v3016
  %v3018 = vpop.f32.mrf.mxu0
  %v3019 = vpop.f32.mrf.mxu0
  %v3020 = vadd.f32 %v2731, %v3019
  %v3021 = vpop.f32.mrf.mxu0
  %3022 = vmatprep.mubr.bf16.mxu0 %v1412
  %3023 = vmatmul.mubr.bf16.gmra.mxu0 %v1411
  %v3024 = vpop.f32.mrf.mxu0
  %v3025 = vadd.f32 %v2736, %v3024
  %v3026 = vpop.f32.mrf.mxu0
  %v3027 = vpop.f32.mrf.mxu0
  %v3028 = vadd.f32 %v2739, %v3027
  %v3029 = vpop.f32.mrf.mxu0
  %3030 = vmatprep.mubr.bf16.mxu0 %v1421
  %3031 = vmatmul.mubr.bf16.gmra.mxu0 %v1420
  %v3032 = vpop.f32.mrf.mxu0
  %v3033 = vadd.f32 %v2744, %v3032
  %v3034 = vpop.f32.mrf.mxu0
  %v3035 = vpop.f32.mrf.mxu0
  %v3036 = vadd.f32 %v2747, %v3035
  %v3037 = vpop.f32.mrf.mxu0
  %3038 = vmatprep.mubr.bf16.mxu0 %v1430
  %3039 = vmatmul.mubr.bf16.gmra.mxu0 %v1429
  %v3040 = vpop.f32.mrf.mxu0
  %v3041 = vadd.f32 %v2752, %v3040
  %v3042 = vpop.f32.mrf.mxu0
  %v3043 = vpop.f32.mrf.mxu0
  %v3044 = vadd.f32 %v2755, %v3043
  %v3045 = vpop.f32.mrf.mxu0
  %3046 = vmatprep.mubr.bf16.mxu0 %v1439
  %3047 = vmatmul.mubr.bf16.gmra.mxu0 %v1438
  %v3048 = vpop.f32.mrf.mxu0
  %v3049 = vadd.f32 %v2760, %v3048
  %v3050 = vpop.f32.mrf.mxu0
  %v3051 = vpop.f32.mrf.mxu0
  %v3052 = vadd.f32 %v2763, %v3051
  %v3053 = vpop.f32.mrf.mxu0
  %3054 = vmatprep.mubr.bf16.mxu0 %v1448
  %3055 = vmatmul.mubr.bf16.gmra.mxu0 %v1447
  %v3056 = vpop.f32.mrf.mxu0
  %v3057 = vadd.f32 %v2768, %v3056
  %v3058 = vpop.f32.mrf.mxu0
  %v3059 = vpop.f32.mrf.mxu0
  %v3060 = vadd.f32 %v2771, %v3059
  %v3061 = vpop.f32.mrf.mxu0
  %3062 = vmatprep.mubr.bf16.mxu0 %v1457
  %3063 = vmatmul.mubr.bf16.gmra.mxu0 %v1456
  %v3064 = vpop.f32.mrf.mxu0
  %v3065 = vadd.f32 %v2776, %v3064
  %v3066 = vpop.f32.mrf.mxu0
  %v3067 = vpop.f32.mrf.mxu0
  %v3068 = vadd.f32 %v2779, %v3067
  %v3069 = vpop.f32.mrf.mxu0
  %3070 = vmatprep.mubr.bf16.mxu0 %v1466
  %3071 = vmatmul.mubr.bf16.gmra.mxu0 %v1465
  %v3072 = vpop.f32.mrf.mxu0
  %v3073 = vadd.f32 %v2784, %v3072
  %v3074 = vpop.f32.mrf.mxu0
  %v3075 = vpop.f32.mrf.mxu0
  %v3076 = vadd.f32 %v2787, %v3075
  %v3077 = vpop.f32.mrf.mxu0
  %3078 = vmatprep.mubr.bf16.mxu0 %v1475
  %3079 = vmatmul.mubr.bf16.gmra.mxu0 %v1474
  %v3080 = vpop.f32.mrf.mxu0
  %v3081 = vadd.f32 %v2792, %v3080
  %v3082 = vpop.f32.mrf.mxu0
  %v3083 = vpop.f32.mrf.mxu0
  %v3084 = vadd.f32 %v2795, %v3083
  %v3085 = vpop.f32.mrf.mxu0
  %3086 = vmatprep.mubr.bf16.mxu0 %v1484
  %3087 = vmatmul.mubr.bf16.gmra.mxu0 %v1483
  %v3088 = vpop.f32.mrf.mxu0
  %v3089 = vadd.f32 %v2800, %v3088
  %v3090 = vpop.f32.mrf.mxu0
  %v3091 = vpop.f32.mrf.mxu0
  %v3092 = vadd.f32 %v2803, %v3091
  %v3093 = vpop.f32.mrf.mxu0
  %3094 = vmatprep.mubr.bf16.mxu0 %v1493
  %3095 = vmatmul.mubr.bf16.gmra.mxu0 %v1492
  %v3096 = vpop.f32.mrf.mxu0
  %v3097 = vadd.f32 %v2808, %v3096
  %v3098 = vpop.f32.mrf.mxu0
  %v3099 = vpop.f32.mrf.mxu0
  %v3100 = vadd.f32 %v2811, %v3099
  %v3101 = vpop.f32.mrf.mxu0
  %3102 = vmatprep.mubr.bf16.mxu0 %v1502
  %3103 = vmatmul.mubr.bf16.gmra.mxu0 %v1501
  %v3104 = vpop.f32.mrf.mxu0
  %v3105 = vadd.f32 %v2816, %v3104
  %v3106 = vpop.f32.mrf.mxu0
  %v3107 = vpop.f32.mrf.mxu0
  %v3108 = vadd.f32 %v2819, %v3107
  %v3109 = vpop.f32.mrf.mxu0
  %3110 = vmatprep.mubr.bf16.mxu0 %v1511
  %3111 = vmatmul.mubr.bf16.gmra.mxu0 %v1510
  %v3112 = vpop.f32.mrf.mxu0
  %v3113 = vadd.f32 %v2824, %v3112
  %v3114 = vpop.f32.mrf.mxu0
  %v3115 = vpop.f32.mrf.mxu0
  %v3116 = vadd.f32 %v2827, %v3115
  %v3117 = vpop.f32.mrf.mxu0
  %3118 = vmatprep.mubr.bf16.mxu0 %v1520
  %3119 = vmatmul.mubr.bf16.gmra.mxu0 %v1519
  %v3120 = vpop.f32.mrf.mxu0
  %v3121 = vadd.f32 %v2832, %v3120
  %v3122 = vpop.f32.mrf.mxu0
  %v3123 = vpop.f32.mrf.mxu0
  %v3124 = vadd.f32 %v2835, %v3123
  %v3125 = vpop.f32.mrf.mxu0
  %3126 = vmatprep.mubr.bf16.mxu0 %v1529
  %3127 = vmatmul.mubr.bf16.gmra.mxu0 %v1528
  %v3128 = vpop.f32.mrf.mxu0
  %v3129 = vadd.f32 %v2840, %v3128
  %v3130 = vpop.f32.mrf.mxu0
  %v3131 = vpop.f32.mrf.mxu0
  %v3132 = vadd.f32 %v2843, %v3131
  %v3133 = vpop.f32.mrf.mxu0
  %3134 = vmatprep.mubr.bf16.mxu0 %v1538
  %3135 = vmatmul.mubr.bf16.gmra.mxu0 %v1537
  %v3136 = vpop.f32.mrf.mxu0
  %v3137 = vadd.f32 %v2848, %v3136
  %v3138 = vpop.f32.mrf.mxu0
  %v3139 = vpop.f32.mrf.mxu0
  %v3140 = vadd.f32 %v2851, %v3139
  %v3141 = vpop.f32.mrf.mxu0
  %3142 = vmatprep.mubr.bf16.mxu0 %v1547
  %3143 = vmatmul.mubr.bf16.gmra.mxu0 %v1546
  %v3144 = vpop.f32.mrf.mxu0
  %v3145 = vadd.f32 %v2856, %v3144
  %v3146 = vpop.f32.mrf.mxu0
  %v3147 = vpop.f32.mrf.mxu0
  %v3148 = vadd.f32 %v2859, %v3147
  %v3149 = vpop.f32.mrf.mxu0
  %3150 = vmatprep.mubr.bf16.mxu0 %v1556
  %3151 = vmatmul.mubr.bf16.gmra.mxu0 %v1555
  %v3152 = vpop.f32.mrf.mxu0
  %v3153 = vadd.f32 %v2864, %v3152
  %v3154 = vpop.f32.mrf.mxu0
  %v3155 = vpop.f32.mrf.mxu0
  %v3156 = vadd.f32 %v2867, %v3155
  %v3157 = vpop.f32.mrf.mxu0
  %3158 = vmatprep.mubr.bf16.mxu0 %v1565
  %3159 = vmatmul.mubr.bf16.gmra.mxu0 %v1564
  %v3160 = vpop.f32.mrf.mxu0
  %v3161 = vadd.f32 %v2872, %v3160
  %v3162 = vpop.f32.mrf.mxu0
  %v3163 = vpop.f32.mrf.mxu0
  %v3164 = vadd.f32 %v2875, %v3163
  %v3165 = vpop.f32.mrf.mxu0
  %3166 = vmatprep.mubr.bf16.mxu0 %v1574
  %3167 = vmatmul.mubr.bf16.gmra.mxu0 %v1573
  %v3168 = vpop.f32.mrf.mxu0
  %v3169 = vadd.f32 %v2880, %v3168
  %v3170 = vpop.f32.mrf.mxu0
  %v3171 = vpop.f32.mrf.mxu0
  %v3172 = vadd.f32 %v2883, %v3171
  %v3173 = vpop.f32.mrf.mxu0
  %3174 = vmatprep.mubr.bf16.mxu0 %v1583
  %3175 = vmatmul.mubr.bf16.gmra.mxu0 %v1582
  %v3176 = vpop.f32.mrf.mxu0
  %v3177 = vadd.f32 %v2888, %v3176
  %v3178 = vpop.f32.mrf.mxu0
  %v3179 = vpop.f32.mrf.mxu0
  %v3180 = vadd.f32 %v2891, %v3179
  %v3181 = vpop.f32.mrf.mxu0
  %3182 = vmatprep.mubr.bf16.mxu0 %v1592
  %3183 = vmatmul.mubr.bf16.gmra.mxu0 %v1591
  %v3184 = vpop.f32.mrf.mxu0
  %v3185 = vadd.f32 %v2896, %v3184
  %v3186 = vpop.f32.mrf.mxu0
  %v3187 = vpop.f32.mrf.mxu0
  %v3188 = vadd.f32 %v2899, %v3187
  %v3189 = vpop.f32.mrf.mxu0
  %3190 = vmatprep.mubr.bf16.mxu0 %v1601
  %3191 = vmatmul.mubr.bf16.gmra.mxu0 %v1600
  %v3192 = vpop.f32.mrf.mxu0
  %v3193 = vadd.f32 %v2904, %v3192
  %v3194 = vpop.f32.mrf.mxu0
  %v3195 = vpop.f32.mrf.mxu0
  %v3196 = vadd.f32 %v2907, %v3195
  %v3197 = vpop.f32.mrf.mxu0
  %3198 = vmatprep.mubr.bf16.mxu0 %v1610
  %3199 = vmatmul.mubr.bf16.gmra.mxu0 %v1609
  %v3200 = vpop.f32.mrf.mxu0
  %v3201 = vadd.f32 %v2912, %v3200
  %v3202 = vpop.f32.mrf.mxu0
  %v3203 = vpop.f32.mrf.mxu0
  %v3204 = vadd.f32 %v2915, %v3203
  %v3205 = vpop.f32.mrf.mxu0
  %3206 = vmatprep.mubr.bf16.mxu0 %v1619
  %3207 = vmatmul.mubr.bf16.gmra.mxu0 %v1618
  %v3208 = vpop.f32.mrf.mxu0
  %v3209 = vadd.f32 %v2920, %v3208
  %v3210 = vpop.f32.mrf.mxu0
  %v3211 = vpop.f32.mrf.mxu0
  %v3212 = vadd.f32 %v2923, %v3211
  %v3213 = vpop.f32.mrf.mxu0
  %3214 = vmatprep.mubr.bf16.mxu0 %v1628
  %3215 = vmatmul.mubr.bf16.gmra.mxu0 %v1627
  %v3216 = vpop.f32.mrf.mxu0
  %v3217 = vadd.f32 %v2928, %v3216
  %v3218 = vpop.f32.mrf.mxu0
  %v3219 = vpop.f32.mrf.mxu0
  %v3220 = vadd.f32 %v2931, %v3219
  %v3221 = vpop.f32.mrf.mxu0
  %3222 = vmatprep.mubr.bf16.mxu0 %v1637
  %3223 = vmatmul.mubr.bf16.gmra.mxu0 %v1636
  %v3224 = vpop.f32.mrf.mxu0
  %v3225 = vadd.f32 %v2936, %v3224
  %v3226 = vpop.f32.mrf.mxu0
  %v3227 = vpop.f32.mrf.mxu0
  %v3228 = vadd.f32 %v2939, %v3227
  %v3229 = vpop.f32.mrf.mxu0
  %3230 = vmatprep.mubr.bf16.mxu0 %v1646
  %3231 = vmatmul.mubr.bf16.gmra.mxu0 %v1645
  %v3232 = vpop.f32.mrf.mxu0
  %v3233 = vadd.f32 %v2944, %v3232
  %v3234 = vpop.f32.mrf.mxu0
  %v3235 = vpop.f32.mrf.mxu0
  %v3236 = vadd.f32 %v2947, %v3235
  %v3237 = vpop.f32.mrf.mxu0
  %3238 = vmatprep.mubr.bf16.mxu0 %v1655
  %3239 = vmatmul.mubr.bf16.gmra.mxu0 %v1654
  %v3240 = vpop.f32.mrf.mxu0
  %v3241 = vadd.f32 %v2952, %v3240
  %v3242 = vpop.f32.mrf.mxu0
  %v3243 = vpop.f32.mrf.mxu0
  %v3244 = vadd.f32 %v2955, %v3243
  %v3245 = vpop.f32.mrf.mxu0
  %3246 = vmatprep.mubr.bf16.mxu0 %v1664
  %3247 = vmatmul.mubr.bf16.gmra.mxu0 %v1663
  %v3248 = vpop.f32.mrf.mxu0
  %v3249 = vadd.f32 %v2960, %v3248
  %v3250 = vpop.f32.mrf.mxu0
  %v3251 = vpop.f32.mrf.mxu0
  %v3252 = vadd.f32 %v2963, %v3251
  %v3253 = vpop.f32.mrf.mxu0
  %3254 = vdwg.mxu0
  %3255 = vmatprep.subr.bf16.mxu0 0
  %3256 = vmatpush1.bf16.msra.mxu0 %v2299
  %3257 = vmatprep.subr.bf16.mxu0 0
  %3258 = vmatpush1.bf16.msra.mxu0 %v2298
  %3259 = vmatprep.subr.bf16.mxu0 0
  %3260 = vmatpush1.bf16.msra.mxu0 %v2297
  %3261 = vmatprep.subr.bf16.mxu0 0
  %3262 = vmatpush1.bf16.msra.mxu0 %v2296
  %3263 = vmatprep.subr.bf16.mxu0 0
  %3264 = vmatpush1.bf16.msra.mxu0 %v2295
  %3265 = vmatprep.subr.bf16.mxu0 0
  %3266 = vmatpush1.bf16.msra.mxu0 %v2294
  %3267 = vmatprep.subr.bf16.mxu0 0
  %3268 = vmatpush1.bf16.msra.mxu0 %v2293
  %3269 = vmatprep.subr.bf16.mxu0 0
  %3270 = vmatpush1.bf16.msra.mxu0 %v2292
  %3271 = vmatprep.subr.bf16.mxu0 0
  %3272 = vmatpush2.bf16.msra.mxu0 %v2307
  %3273 = vmatprep.subr.bf16.mxu0 0
  %3274 = vmatpush2.bf16.msra.mxu0 %v2306
  %3275 = vmatprep.subr.bf16.mxu0 0
  %3276 = vmatpush2.bf16.msra.mxu0 %v2305
  %3277 = vmatprep.subr.bf16.mxu0 0
  %3278 = vmatpush2.bf16.msra.mxu0 %v2304
  %3279 = vmatprep.subr.bf16.mxu0 0
  %3280 = vmatpush2.bf16.msra.mxu0 %v2303
  %3281 = vmatprep.subr.bf16.mxu0 0
  %3282 = vmatpush2.bf16.msra.mxu0 %v2302
  %3283 = vmatprep.subr.bf16.mxu0 0
  %3284 = vmatpush2.bf16.msra.mxu0 %v2301
  %3285 = vmatprep.subr.bf16.mxu0 0
  %3286 = vmatpush2.bf16.msra.mxu0 %v2300
  %3287 = vmatprep.mubr.bf16.mxu0 %v1387
  %3288 = vmatmul.mubr.bf16.gmra.mxu0 %v1386
  %v3289 = vpop.f32.mrf.mxu0
  %v3290 = vadd.f32 %v3001, %v3289
  %v3291 = vpop.f32.mrf.mxu0
  %v3292 = vpop.f32.mrf.mxu0
  %v3293 = vadd.f32 %v3004, %v3292
  %v3294 = vpop.f32.mrf.mxu0
  %3295 = vmatprep.mubr.bf16.mxu0 %v1396
  %3296 = vmatmul.mubr.bf16.gmra.mxu0 %v1395
  %v3297 = vpop.f32.mrf.mxu0
  %v3298 = vadd.f32 %v3009, %v3297
  %v3299 = vpop.f32.mrf.mxu0
  %v3300 = vpop.f32.mrf.mxu0
  %v3301 = vadd.f32 %v3012, %v3300
  %v3302 = vpop.f32.mrf.mxu0
  %3303 = vmatprep.mubr.bf16.mxu0 %v1405
  %3304 = vmatmul.mubr.bf16.gmra.mxu0 %v1404
  %v3305 = vpop.f32.mrf.mxu0
  %v3306 = vadd.f32 %v3017, %v3305
  %v3307 = vpop.f32.mrf.mxu0
  %v3308 = vpop.f32.mrf.mxu0
  %v3309 = vadd.f32 %v3020, %v3308
  %v3310 = vpop.f32.mrf.mxu0
  %3311 = vmatprep.mubr.bf16.mxu0 %v1414
  %3312 = vmatmul.mubr.bf16.gmra.mxu0 %v1413
  %v3313 = vpop.f32.mrf.mxu0
  %v3314 = vadd.f32 %v3025, %v3313
  %v3315 = vpop.f32.mrf.mxu0
  %v3316 = vpop.f32.mrf.mxu0
  %v3317 = vadd.f32 %v3028, %v3316
  %v3318 = vpop.f32.mrf.mxu0
  %3319 = vmatprep.mubr.bf16.mxu0 %v1423
  %3320 = vmatmul.mubr.bf16.gmra.mxu0 %v1422
  %v3321 = vpop.f32.mrf.mxu0
  %v3322 = vadd.f32 %v3033, %v3321
  %v3323 = vpop.f32.mrf.mxu0
  %v3324 = vpop.f32.mrf.mxu0
  %v3325 = vadd.f32 %v3036, %v3324
  %v3326 = vpop.f32.mrf.mxu0
  %3327 = vmatprep.mubr.bf16.mxu0 %v1432
  %3328 = vmatmul.mubr.bf16.gmra.mxu0 %v1431
  %v3329 = vpop.f32.mrf.mxu0
  %v3330 = vadd.f32 %v3041, %v3329
  %v3331 = vpop.f32.mrf.mxu0
  %v3332 = vpop.f32.mrf.mxu0
  %v3333 = vadd.f32 %v3044, %v3332
  %v3334 = vpop.f32.mrf.mxu0
  %3335 = vmatprep.mubr.bf16.mxu0 %v1441
  %3336 = vmatmul.mubr.bf16.gmra.mxu0 %v1440
  %v3337 = vpop.f32.mrf.mxu0
  %v3338 = vadd.f32 %v3049, %v3337
  %v3339 = vpop.f32.mrf.mxu0
  %v3340 = vpop.f32.mrf.mxu0
  %v3341 = vadd.f32 %v3052, %v3340
  %v3342 = vpop.f32.mrf.mxu0
  %3343 = vmatprep.mubr.bf16.mxu0 %v1450
  %3344 = vmatmul.mubr.bf16.gmra.mxu0 %v1449
  %v3345 = vpop.f32.mrf.mxu0
  %v3346 = vadd.f32 %v3057, %v3345
  %v3347 = vpop.f32.mrf.mxu0
  %v3348 = vpop.f32.mrf.mxu0
  %v3349 = vadd.f32 %v3060, %v3348
  %v3350 = vpop.f32.mrf.mxu0
  %3351 = vmatprep.mubr.bf16.mxu0 %v1459
  %3352 = vmatmul.mubr.bf16.gmra.mxu0 %v1458
  %v3353 = vpop.f32.mrf.mxu0
  %v3354 = vadd.f32 %v3065, %v3353
  %v3355 = vpop.f32.mrf.mxu0
  %v3356 = vpop.f32.mrf.mxu0
  %v3357 = vadd.f32 %v3068, %v3356
  %v3358 = vpop.f32.mrf.mxu0
  %3359 = vmatprep.mubr.bf16.mxu0 %v1468
  %3360 = vmatmul.mubr.bf16.gmra.mxu0 %v1467
  %v3361 = vpop.f32.mrf.mxu0
  %v3362 = vadd.f32 %v3073, %v3361
  %v3363 = vpop.f32.mrf.mxu0
  %v3364 = vpop.f32.mrf.mxu0
  %v3365 = vadd.f32 %v3076, %v3364
  %v3366 = vpop.f32.mrf.mxu0
  %3367 = vmatprep.mubr.bf16.mxu0 %v1477
  %3368 = vmatmul.mubr.bf16.gmra.mxu0 %v1476
  %v3369 = vpop.f32.mrf.mxu0
  %v3370 = vadd.f32 %v3081, %v3369
  %v3371 = vpop.f32.mrf.mxu0
  %v3372 = vpop.f32.mrf.mxu0
  %v3373 = vadd.f32 %v3084, %v3372
  %v3374 = vpop.f32.mrf.mxu0
  %3375 = vmatprep.mubr.bf16.mxu0 %v1486
  %3376 = vmatmul.mubr.bf16.gmra.mxu0 %v1485
  %v3377 = vpop.f32.mrf.mxu0
  %v3378 = vadd.f32 %v3089, %v3377
  %v3379 = vpop.f32.mrf.mxu0
  %v3380 = vpop.f32.mrf.mxu0
  %v3381 = vadd.f32 %v3092, %v3380
  %v3382 = vpop.f32.mrf.mxu0
  %3383 = vmatprep.mubr.bf16.mxu0 %v1495
  %3384 = vmatmul.mubr.bf16.gmra.mxu0 %v1494
  %v3385 = vpop.f32.mrf.mxu0
  %v3386 = vadd.f32 %v3097, %v3385
  %v3387 = vpop.f32.mrf.mxu0
  %v3388 = vpop.f32.mrf.mxu0
  %v3389 = vadd.f32 %v3100, %v3388
  %v3390 = vpop.f32.mrf.mxu0
  %3391 = vmatprep.mubr.bf16.mxu0 %v1504
  %3392 = vmatmul.mubr.bf16.gmra.mxu0 %v1503
  %v3393 = vpop.f32.mrf.mxu0
  %v3394 = vadd.f32 %v3105, %v3393
  %v3395 = vpop.f32.mrf.mxu0
  %v3396 = vpop.f32.mrf.mxu0
  %v3397 = vadd.f32 %v3108, %v3396
  %v3398 = vpop.f32.mrf.mxu0
  %3399 = vmatprep.mubr.bf16.mxu0 %v1513
  %3400 = vmatmul.mubr.bf16.gmra.mxu0 %v1512
  %v3401 = vpop.f32.mrf.mxu0
  %v3402 = vadd.f32 %v3113, %v3401
  %v3403 = vpop.f32.mrf.mxu0
  %v3404 = vpop.f32.mrf.mxu0
  %v3405 = vadd.f32 %v3116, %v3404
  %v3406 = vpop.f32.mrf.mxu0
  %3407 = vmatprep.mubr.bf16.mxu0 %v1522
  %3408 = vmatmul.mubr.bf16.gmra.mxu0 %v1521
  %v3409 = vpop.f32.mrf.mxu0
  %v3410 = vadd.f32 %v3121, %v3409
  %v3411 = vpop.f32.mrf.mxu0
  %v3412 = vpop.f32.mrf.mxu0
  %v3413 = vadd.f32 %v3124, %v3412
  %v3414 = vpop.f32.mrf.mxu0
  %3415 = vmatprep.mubr.bf16.mxu0 %v1531
  %3416 = vmatmul.mubr.bf16.gmra.mxu0 %v1530
  %v3417 = vpop.f32.mrf.mxu0
  %v3418 = vadd.f32 %v3129, %v3417
  %v3419 = vpop.f32.mrf.mxu0
  %v3420 = vpop.f32.mrf.mxu0
  %v3421 = vadd.f32 %v3132, %v3420
  %v3422 = vpop.f32.mrf.mxu0
  %3423 = vmatprep.mubr.bf16.mxu0 %v1540
  %3424 = vmatmul.mubr.bf16.gmra.mxu0 %v1539
  %v3425 = vpop.f32.mrf.mxu0
  %v3426 = vadd.f32 %v3137, %v3425
  %v3427 = vpop.f32.mrf.mxu0
  %v3428 = vpop.f32.mrf.mxu0
  %v3429 = vadd.f32 %v3140, %v3428
  %v3430 = vpop.f32.mrf.mxu0
  %3431 = vmatprep.mubr.bf16.mxu0 %v1549
  %3432 = vmatmul.mubr.bf16.gmra.mxu0 %v1548
  %v3433 = vpop.f32.mrf.mxu0
  %v3434 = vadd.f32 %v3145, %v3433
  %v3435 = vpop.f32.mrf.mxu0
  %v3436 = vpop.f32.mrf.mxu0
  %v3437 = vadd.f32 %v3148, %v3436
  %v3438 = vpop.f32.mrf.mxu0
  %3439 = vmatprep.mubr.bf16.mxu0 %v1558
  %3440 = vmatmul.mubr.bf16.gmra.mxu0 %v1557
  %v3441 = vpop.f32.mrf.mxu0
  %v3442 = vadd.f32 %v3153, %v3441
  %v3443 = vpop.f32.mrf.mxu0
  %v3444 = vpop.f32.mrf.mxu0
  %v3445 = vadd.f32 %v3156, %v3444
  %v3446 = vpop.f32.mrf.mxu0
  %3447 = vmatprep.mubr.bf16.mxu0 %v1567
  %3448 = vmatmul.mubr.bf16.gmra.mxu0 %v1566
  %v3449 = vpop.f32.mrf.mxu0
  %v3450 = vadd.f32 %v3161, %v3449
  %v3451 = vpop.f32.mrf.mxu0
  %v3452 = vpop.f32.mrf.mxu0
  %v3453 = vadd.f32 %v3164, %v3452
  %v3454 = vpop.f32.mrf.mxu0
  %3455 = vmatprep.mubr.bf16.mxu0 %v1576
  %3456 = vmatmul.mubr.bf16.gmra.mxu0 %v1575
  %v3457 = vpop.f32.mrf.mxu0
  %v3458 = vadd.f32 %v3169, %v3457
  %v3459 = vpop.f32.mrf.mxu0
  %v3460 = vpop.f32.mrf.mxu0
  %v3461 = vadd.f32 %v3172, %v3460
  %v3462 = vpop.f32.mrf.mxu0
  %3463 = vmatprep.mubr.bf16.mxu0 %v1585
  %3464 = vmatmul.mubr.bf16.gmra.mxu0 %v1584
  %v3465 = vpop.f32.mrf.mxu0
  %v3466 = vadd.f32 %v3177, %v3465
  %v3467 = vpop.f32.mrf.mxu0
  %v3468 = vpop.f32.mrf.mxu0
  %v3469 = vadd.f32 %v3180, %v3468
  %v3470 = vpop.f32.mrf.mxu0
  %3471 = vmatprep.mubr.bf16.mxu0 %v1594
  %3472 = vmatmul.mubr.bf16.gmra.mxu0 %v1593
  %v3473 = vpop.f32.mrf.mxu0
  %v3474 = vadd.f32 %v3185, %v3473
  %v3475 = vpop.f32.mrf.mxu0
  %v3476 = vpop.f32.mrf.mxu0
  %v3477 = vadd.f32 %v3188, %v3476
  %v3478 = vpop.f32.mrf.mxu0
  %3479 = vmatprep.mubr.bf16.mxu0 %v1603
  %3480 = vmatmul.mubr.bf16.gmra.mxu0 %v1602
  %v3481 = vpop.f32.mrf.mxu0
  %v3482 = vadd.f32 %v3193, %v3481
  %v3483 = vpop.f32.mrf.mxu0
  %v3484 = vpop.f32.mrf.mxu0
  %v3485 = vadd.f32 %v3196, %v3484
  %v3486 = vpop.f32.mrf.mxu0
  %3487 = vmatprep.mubr.bf16.mxu0 %v1612
  %3488 = vmatmul.mubr.bf16.gmra.mxu0 %v1611
  %v3489 = vpop.f32.mrf.mxu0
  %v3490 = vadd.f32 %v3201, %v3489
  %v3491 = vpop.f32.mrf.mxu0
  %v3492 = vpop.f32.mrf.mxu0
  %v3493 = vadd.f32 %v3204, %v3492
  %v3494 = vpop.f32.mrf.mxu0
  %3495 = vmatprep.mubr.bf16.mxu0 %v1621
  %3496 = vmatmul.mubr.bf16.gmra.mxu0 %v1620
  %v3497 = vpop.f32.mrf.mxu0
  %v3498 = vadd.f32 %v3209, %v3497
  %v3499 = vpop.f32.mrf.mxu0
  %v3500 = vpop.f32.mrf.mxu0
  %v3501 = vadd.f32 %v3212, %v3500
  %v3502 = vpop.f32.mrf.mxu0
  %3503 = vmatprep.mubr.bf16.mxu0 %v1630
  %3504 = vmatmul.mubr.bf16.gmra.mxu0 %v1629
  %v3505 = vpop.f32.mrf.mxu0
  %v3506 = vadd.f32 %v3217, %v3505
  %v3507 = vpop.f32.mrf.mxu0
  %v3508 = vpop.f32.mrf.mxu0
  %v3509 = vadd.f32 %v3220, %v3508
  %v3510 = vpop.f32.mrf.mxu0
  %3511 = vmatprep.mubr.bf16.mxu0 %v1639
  %3512 = vmatmul.mubr.bf16.gmra.mxu0 %v1638
  %v3513 = vpop.f32.mrf.mxu0
  %v3514 = vadd.f32 %v3225, %v3513
  %v3515 = vpop.f32.mrf.mxu0
  %v3516 = vpop.f32.mrf.mxu0
  %v3517 = vadd.f32 %v3228, %v3516
  %v3518 = vpop.f32.mrf.mxu0
  %3519 = vmatprep.mubr.bf16.mxu0 %v1648
  %3520 = vmatmul.mubr.bf16.gmra.mxu0 %v1647
  %v3521 = vpop.f32.mrf.mxu0
  %v3522 = vadd.f32 %v3233, %v3521
  %v3523 = vpop.f32.mrf.mxu0
  %v3524 = vpop.f32.mrf.mxu0
  %v3525 = vadd.f32 %v3236, %v3524
  %v3526 = vpop.f32.mrf.mxu0
  %3527 = vmatprep.mubr.bf16.mxu0 %v1657
  %3528 = vmatmul.mubr.bf16.gmra.mxu0 %v1656
  %v3529 = vpop.f32.mrf.mxu0
  %v3530 = vadd.f32 %v3241, %v3529
  %v3531 = vpop.f32.mrf.mxu0
  %v3532 = vpop.f32.mrf.mxu0
  %v3533 = vadd.f32 %v3244, %v3532
  %v3534 = vpop.f32.mrf.mxu0
  %3535 = vmatprep.mubr.bf16.mxu0 %v1666
  %3536 = vmatmul.mubr.bf16.gmra.mxu0 %v1665
  %v3537 = vpop.f32.mrf.mxu0
  %v3538 = vadd.f32 %v3249, %v3537
  %v3539 = vpop.f32.mrf.mxu0
  %v3540 = vpop.f32.mrf.mxu0
  %v3541 = vadd.f32 %v3252, %v3540
  %v3542 = vpop.f32.mrf.mxu0
  %3543 = vdwg.mxu0
  %3544 = vmatprep.subr.bf16.mxu0 0
  %3545 = vmatpush1.bf16.msra.mxu0 %v2315
  %3546 = vmatprep.subr.bf16.mxu0 0
  %3547 = vmatpush1.bf16.msra.mxu0 %v2314
  %3548 = vmatprep.subr.bf16.mxu0 0
  %3549 = vmatpush1.bf16.msra.mxu0 %v2313
  %3550 = vmatprep.subr.bf16.mxu0 0
  %3551 = vmatpush1.bf16.msra.mxu0 %v2312
  %3552 = vmatprep.subr.bf16.mxu0 0
  %3553 = vmatpush1.bf16.msra.mxu0 %v2311
  %3554 = vmatprep.subr.bf16.mxu0 0
  %3555 = vmatpush1.bf16.msra.mxu0 %v2310
  %3556 = vmatprep.subr.bf16.mxu0 0
  %3557 = vmatpush1.bf16.msra.mxu0 %v2309
  %3558 = vmatprep.subr.bf16.mxu0 0
  %3559 = vmatpush1.bf16.msra.mxu0 %v2308
  %3560 = vmatprep.subr.bf16.mxu0 0
  %3561 = vmatpush2.bf16.msra.mxu0 0
  %3562 = vmatprep.subr.bf16.mxu0 0
  %3563 = vmatpush2.bf16.msra.mxu0 0
  %3564 = vmatprep.subr.bf16.mxu0 0
  %3565 = vmatpush2.bf16.msra.mxu0 0
  %3566 = vmatprep.subr.bf16.mxu0 0
  %3567 = vmatpush2.bf16.msra.mxu0 0
  %3568 = vmatprep.subr.bf16.mxu0 0
  %3569 = vmatpush2.bf16.msra.mxu0 0
  %3570 = vmatprep.subr.bf16.mxu0 0
  %3571 = vmatpush2.bf16.msra.mxu0 0
  %3572 = vmatprep.subr.bf16.mxu0 0
  %3573 = vmatpush2.bf16.msra.mxu0 0
  %3574 = vmatprep.subr.bf16.mxu0 0
  %3575 = vmatpush2.bf16.msra.mxu0 0
  %3576 = vmatprep.mubr.bf16.mxu0 0
  %3577 = vmatmul.mubr.bf16.gmra.mxu0 %v1388
  %v3578 = vpop.f32.mrf.mxu0
  %v3579 = vadd.f32 %v3290, %v3578
  %v3580 = vpop.f32.mrf.mxu0
  %v3581 = vpop.f32.mrf.mxu0
  %v3582 = vadd.f32 %v3293, %v3581
  %v3583 = vpop.f32.mrf.mxu0
  %3584 = vmatprep.mubr.bf16.mxu0 0
  %3585 = vmatmul.mubr.bf16.gmra.mxu0 %v1397
  %v3586 = vpop.f32.mrf.mxu0
  %v3587 = vadd.f32 %v3298, %v3586
  %v3588 = vpop.f32.mrf.mxu0
  %v3589 = vpop.f32.mrf.mxu0
  %v3590 = vadd.f32 %v3301, %v3589
  %v3591 = vpop.f32.mrf.mxu0
  %3592 = vmatprep.mubr.bf16.mxu0 0
  %3593 = vmatmul.mubr.bf16.gmra.mxu0 %v1406
  %v3594 = vpop.f32.mrf.mxu0
  %v3595 = vadd.f32 %v3306, %v3594
  %v3596 = vpop.f32.mrf.mxu0
  %v3597 = vpop.f32.mrf.mxu0
  %v3598 = vadd.f32 %v3309, %v3597
  %v3599 = vpop.f32.mrf.mxu0
  %3600 = vmatprep.mubr.bf16.mxu0 0
  %3601 = vmatmul.mubr.bf16.gmra.mxu0 %v1415
  %v3602 = vpop.f32.mrf.mxu0
  %v3603 = vadd.f32 %v3314, %v3602
  %v3604 = vpop.f32.mrf.mxu0
  %v3605 = vpop.f32.mrf.mxu0
  %v3606 = vadd.f32 %v3317, %v3605
  %v3607 = vpop.f32.mrf.mxu0
  %3608 = vmatprep.mubr.bf16.mxu0 0
  %3609 = vmatmul.mubr.bf16.gmra.mxu0 %v1424
  %v3610 = vpop.f32.mrf.mxu0
  %v3611 = vadd.f32 %v3322, %v3610
  %v3612 = vpop.f32.mrf.mxu0
  %v3613 = vpop.f32.mrf.mxu0
  %v3614 = vadd.f32 %v3325, %v3613
  %v3615 = vpop.f32.mrf.mxu0
  %3616 = vmatprep.mubr.bf16.mxu0 0
  %3617 = vmatmul.mubr.bf16.gmra.mxu0 %v1433
  %v3618 = vpop.f32.mrf.mxu0
  %v3619 = vadd.f32 %v3330, %v3618
  %v3620 = vpop.f32.mrf.mxu0
  %v3621 = vpop.f32.mrf.mxu0
  %v3622 = vadd.f32 %v3333, %v3621
  %v3623 = vpop.f32.mrf.mxu0
  %3624 = vmatprep.mubr.bf16.mxu0 0
  %3625 = vmatmul.mubr.bf16.gmra.mxu0 %v1442
  %v3626 = vpop.f32.mrf.mxu0
  %v3627 = vadd.f32 %v3338, %v3626
  %v3628 = vpop.f32.mrf.mxu0
  %v3629 = vpop.f32.mrf.mxu0
  %v3630 = vadd.f32 %v3341, %v3629
  %v3631 = vpop.f32.mrf.mxu0
  %3632 = vmatprep.mubr.bf16.mxu0 0
  %3633 = vmatmul.mubr.bf16.gmra.mxu0 %v1451
  %v3634 = vpop.f32.mrf.mxu0
  %v3635 = vadd.f32 %v3346, %v3634
  %v3636 = vpop.f32.mrf.mxu0
  %v3637 = vpop.f32.mrf.mxu0
  %v3638 = vadd.f32 %v3349, %v3637
  %v3639 = vpop.f32.mrf.mxu0
  %3640 = vmatprep.mubr.bf16.mxu0 0
  %3641 = vmatmul.mubr.bf16.gmra.mxu0 %v1460
  %v3642 = vpop.f32.mrf.mxu0
  %v3643 = vadd.f32 %v3354, %v3642
  %v3644 = vpop.f32.mrf.mxu0
  %v3645 = vpop.f32.mrf.mxu0
  %v3646 = vadd.f32 %v3357, %v3645
  %v3647 = vpop.f32.mrf.mxu0
  %3648 = vmatprep.mubr.bf16.mxu0 0
  %3649 = vmatmul.mubr.bf16.gmra.mxu0 %v1469
  %v3650 = vpop.f32.mrf.mxu0
  %v3651 = vadd.f32 %v3362, %v3650
  %v3652 = vpop.f32.mrf.mxu0
  %v3653 = vpop.f32.mrf.mxu0
  %v3654 = vadd.f32 %v3365, %v3653
  %v3655 = vpop.f32.mrf.mxu0
  %3656 = vmatprep.mubr.bf16.mxu0 0
  %3657 = vmatmul.mubr.bf16.gmra.mxu0 %v1478
  %v3658 = vpop.f32.mrf.mxu0
  %v3659 = vadd.f32 %v3370, %v3658
  %v3660 = vpop.f32.mrf.mxu0
  %v3661 = vpop.f32.mrf.mxu0
  %v3662 = vadd.f32 %v3373, %v3661
  %v3663 = vpop.f32.mrf.mxu0
  %3664 = vmatprep.mubr.bf16.mxu0 0
  %3665 = vmatmul.mubr.bf16.gmra.mxu0 %v1487
  %v3666 = vpop.f32.mrf.mxu0
  %v3667 = vadd.f32 %v3378, %v3666
  %v3668 = vpop.f32.mrf.mxu0
  %v3669 = vpop.f32.mrf.mxu0
  %v3670 = vadd.f32 %v3381, %v3669
  %v3671 = vpop.f32.mrf.mxu0
  %3672 = vmatprep.mubr.bf16.mxu0 0
  %3673 = vmatmul.mubr.bf16.gmra.mxu0 %v1496
  %v3674 = vpop.f32.mrf.mxu0
  %v3675 = vadd.f32 %v3386, %v3674
  %v3676 = vpop.f32.mrf.mxu0
  %v3677 = vpop.f32.mrf.mxu0
  %v3678 = vadd.f32 %v3389, %v3677
  %v3679 = vpop.f32.mrf.mxu0
  %3680 = vmatprep.mubr.bf16.mxu0 0
  %3681 = vmatmul.mubr.bf16.gmra.mxu0 %v1505
  %v3682 = vpop.f32.mrf.mxu0
  %v3683 = vadd.f32 %v3394, %v3682
  %v3684 = vpop.f32.mrf.mxu0
  %v3685 = vpop.f32.mrf.mxu0
  %v3686 = vadd.f32 %v3397, %v3685
  %v3687 = vpop.f32.mrf.mxu0
  %3688 = vmatprep.mubr.bf16.mxu0 0
  %3689 = vmatmul.mubr.bf16.gmra.mxu0 %v1514
  %v3690 = vpop.f32.mrf.mxu0
  %v3691 = vadd.f32 %v3402, %v3690
  %v3692 = vpop.f32.mrf.mxu0
  %v3693 = vpop.f32.mrf.mxu0
  %v3694 = vadd.f32 %v3405, %v3693
  %v3695 = vpop.f32.mrf.mxu0
  %3696 = vmatprep.mubr.bf16.mxu0 0
  %3697 = vmatmul.mubr.bf16.gmra.mxu0 %v1523
  %v3698 = vpop.f32.mrf.mxu0
  %v3699 = vadd.f32 %v3410, %v3698
  %v3700 = vpop.f32.mrf.mxu0
  %v3701 = vpop.f32.mrf.mxu0
  %v3702 = vadd.f32 %v3413, %v3701
  %v3703 = vpop.f32.mrf.mxu0
  %3704 = vmatprep.mubr.bf16.mxu0 0
  %3705 = vmatmul.mubr.bf16.gmra.mxu0 %v1532
  %v3706 = vpop.f32.mrf.mxu0
  %v3707 = vadd.f32 %v3418, %v3706
  %v3708 = vpop.f32.mrf.mxu0
  %v3709 = vpop.f32.mrf.mxu0
  %v3710 = vadd.f32 %v3421, %v3709
  %v3711 = vpop.f32.mrf.mxu0
  %3712 = vmatprep.mubr.bf16.mxu0 0
  %3713 = vmatmul.mubr.bf16.gmra.mxu0 %v1541
  %v3714 = vpop.f32.mrf.mxu0
  %v3715 = vadd.f32 %v3426, %v3714
  %v3716 = vpop.f32.mrf.mxu0
  %v3717 = vpop.f32.mrf.mxu0
  %v3718 = vadd.f32 %v3429, %v3717
  %v3719 = vpop.f32.mrf.mxu0
  %3720 = vmatprep.mubr.bf16.mxu0 0
  %3721 = vmatmul.mubr.bf16.gmra.mxu0 %v1550
  %v3722 = vpop.f32.mrf.mxu0
  %v3723 = vadd.f32 %v3434, %v3722
  %v3724 = vpop.f32.mrf.mxu0
  %v3725 = vpop.f32.mrf.mxu0
  %v3726 = vadd.f32 %v3437, %v3725
  %v3727 = vpop.f32.mrf.mxu0
  %3728 = vmatprep.mubr.bf16.mxu0 0
  %3729 = vmatmul.mubr.bf16.gmra.mxu0 %v1559
  %v3730 = vpop.f32.mrf.mxu0
  %v3731 = vadd.f32 %v3442, %v3730
  %v3732 = vpop.f32.mrf.mxu0
  %v3733 = vpop.f32.mrf.mxu0
  %v3734 = vadd.f32 %v3445, %v3733
  %v3735 = vpop.f32.mrf.mxu0
  %3736 = vmatprep.mubr.bf16.mxu0 0
  %3737 = vmatmul.mubr.bf16.gmra.mxu0 %v1568
  %v3738 = vpop.f32.mrf.mxu0
  %v3739 = vadd.f32 %v3450, %v3738
  %v3740 = vpop.f32.mrf.mxu0
  %v3741 = vpop.f32.mrf.mxu0
  %v3742 = vadd.f32 %v3453, %v3741
  %v3743 = vpop.f32.mrf.mxu0
  %3744 = vmatprep.mubr.bf16.mxu0 0
  %3745 = vmatmul.mubr.bf16.gmra.mxu0 %v1577
  %v3746 = vpop.f32.mrf.mxu0
  %v3747 = vadd.f32 %v3458, %v3746
  %v3748 = vpop.f32.mrf.mxu0
  %v3749 = vpop.f32.mrf.mxu0
  %v3750 = vadd.f32 %v3461, %v3749
  %v3751 = vpop.f32.mrf.mxu0
  %3752 = vmatprep.mubr.bf16.mxu0 0
  %3753 = vmatmul.mubr.bf16.gmra.mxu0 %v1586
  %v3754 = vpop.f32.mrf.mxu0
  %v3755 = vadd.f32 %v3466, %v3754
  %v3756 = vpop.f32.mrf.mxu0
  %v3757 = vpop.f32.mrf.mxu0
  %v3758 = vadd.f32 %v3469, %v3757
  %v3759 = vpop.f32.mrf.mxu0
  %3760 = vmatprep.mubr.bf16.mxu0 0
  %3761 = vmatmul.mubr.bf16.gmra.mxu0 %v1595
  %v3762 = vpop.f32.mrf.mxu0
  %v3763 = vadd.f32 %v3474, %v3762
  %v3764 = vpop.f32.mrf.mxu0
  %v3765 = vpop.f32.mrf.mxu0
  %v3766 = vadd.f32 %v3477, %v3765
  %v3767 = vpop.f32.mrf.mxu0
  %3768 = vmatprep.mubr.bf16.mxu0 0
  %3769 = vmatmul.mubr.bf16.gmra.mxu0 %v1604
  %v3770 = vpop.f32.mrf.mxu0
  %v3771 = vadd.f32 %v3482, %v3770
  %v3772 = vpop.f32.mrf.mxu0
  %v3773 = vpop.f32.mrf.mxu0
  %v3774 = vadd.f32 %v3485, %v3773
  %v3775 = vpop.f32.mrf.mxu0
  %3776 = vmatprep.mubr.bf16.mxu0 0
  %3777 = vmatmul.mubr.bf16.gmra.mxu0 %v1613
  %v3778 = vpop.f32.mrf.mxu0
  %v3779 = vadd.f32 %v3490, %v3778
  %v3780 = vpop.f32.mrf.mxu0
  %v3781 = vpop.f32.mrf.mxu0
  %v3782 = vadd.f32 %v3493, %v3781
  %v3783 = vpop.f32.mrf.mxu0
  %3784 = vmatprep.mubr.bf16.mxu0 0
  %3785 = vmatmul.mubr.bf16.gmra.mxu0 %v1622
  %v3786 = vpop.f32.mrf.mxu0
  %v3787 = vadd.f32 %v3498, %v3786
  %v3788 = vpop.f32.mrf.mxu0
  %v3789 = vpop.f32.mrf.mxu0
  %v3790 = vadd.f32 %v3501, %v3789
  %v3791 = vpop.f32.mrf.mxu0
  %3792 = vmatprep.mubr.bf16.mxu0 0
  %3793 = vmatmul.mubr.bf16.gmra.mxu0 %v1631
  %v3794 = vpop.f32.mrf.mxu0
  %v3795 = vadd.f32 %v3506, %v3794
  %v3796 = vpop.f32.mrf.mxu0
  %v3797 = vpop.f32.mrf.mxu0
  %v3798 = vadd.f32 %v3509, %v3797
  %v3799 = vpop.f32.mrf.mxu0
  %3800 = vmatprep.mubr.bf16.mxu0 0
  %3801 = vmatmul.mubr.bf16.gmra.mxu0 %v1640
  %v3802 = vpop.f32.mrf.mxu0
  %v3803 = vadd.f32 %v3514, %v3802
  %v3804 = vpop.f32.mrf.mxu0
  %v3805 = vpop.f32.mrf.mxu0
  %v3806 = vadd.f32 %v3517, %v3805
  %v3807 = vpop.f32.mrf.mxu0
  %3808 = vmatprep.mubr.bf16.mxu0 0
  %3809 = vmatmul.mubr.bf16.gmra.mxu0 %v1649
  %v3810 = vpop.f32.mrf.mxu0
  %v3811 = vadd.f32 %v3522, %v3810
  %v3812 = vpop.f32.mrf.mxu0
  %v3813 = vpop.f32.mrf.mxu0
  %v3814 = vadd.f32 %v3525, %v3813
  %v3815 = vpop.f32.mrf.mxu0
  %3816 = vmatprep.mubr.bf16.mxu0 0
  %3817 = vmatmul.mubr.bf16.gmra.mxu0 %v1658
  %v3818 = vpop.f32.mrf.mxu0
  %v3819 = vadd.f32 %v3530, %v3818
  %v3820 = vpop.f32.mrf.mxu0
  %v3821 = vpop.f32.mrf.mxu0
  %v3822 = vadd.f32 %v3533, %v3821
  %v3823 = vpop.f32.mrf.mxu0
  %3824 = vmatprep.mubr.bf16.mxu0 0
  %3825 = vmatmul.mubr.bf16.gmra.mxu0 %v1667
  %v3826 = vpop.f32.mrf.mxu0
  %v3827 = vadd.f32 %v3538, %v3826
  %v3828 = vpop.f32.mrf.mxu0
  %v3829 = vpop.f32.mrf.mxu0
  %v3830 = vadd.f32 %v3541, %v3829
  %v3831 = vpop.f32.mrf.mxu0
  %3832 = vdwg.mxu0
  %v3833 = vmax.f32 %v3579, 0.0
  %v3834 = vmax.f32 %v3582, 0.0
  %v3835 = vmax.f32 %v3587, 0.0
  %v3836 = vmax.f32 %v3590, 0.0
  %v3837 = vmax.f32 %v3595, 0.0
  %v3838 = vmax.f32 %v3598, 0.0
  %v3839 = vmax.f32 %v3603, 0.0
  %v3840 = vmax.f32 %v3606, 0.0
  %v3841 = vmax.f32 %v3611, 0.0
  %v3842 = vmax.f32 %v3614, 0.0
  %v3843 = vmax.f32 %v3619, 0.0
  %v3844 = vmax.f32 %v3622, 0.0
  %v3845 = vmax.f32 %v3627, 0.0
  %v3846 = vmax.f32 %v3630, 0.0
  %v3847 = vmax.f32 %v3635, 0.0
  %v3848 = vmax.f32 %v3638, 0.0
  %v3849 = vmax.f32 %v3643, 0.0
  %v3850 = vmax.f32 %v3646, 0.0
  %v3851 = vmax.f32 %v3651, 0.0
  %v3852 = vmax.f32 %v3654, 0.0
  %v3853 = vmax.f32 %v3659, 0.0
  %v3854 = vmax.f32 %v3662, 0.0
  %v3855 = vmax.f32 %v3667, 0.0
  %v3856 = vmax.f32 %v3670, 0.0
  %v3857 = vmax.f32 %v3675, 0.0
  %v3858 = vmax.f32 %v3678, 0.0
  %v3859 = vmax.f32 %v3683, 0.0
  %v3860 = vmax.f32 %v3686, 0.0
  %v3861 = vmax.f32 %v3691, 0.0
  %v3862 = vmax.f32 %v3694, 0.0
  %v3863 = vmax.f32 %v3699, 0.0
  %v3864 = vmax.f32 %v3702, 0.0
  %v3865 = vmax.f32 %v3707, 0.0
  %v3866 = vmax.f32 %v3710, 0.0
  %v3867 = vmax.f32 %v3715, 0.0
  %v3868 = vmax.f32 %v3718, 0.0
  %v3869 = vmax.f32 %v3723, 0.0
  %v3870 = vmax.f32 %v3726, 0.0
  %v3871 = vmax.f32 %v3731, 0.0
  %v3872 = vmax.f32 %v3734, 0.0
  %v3873 = vmax.f32 %v3739, 0.0
  %v3874 = vmax.f32 %v3742, 0.0
  %v3875 = vmax.f32 %v3747, 0.0
  %v3876 = vmax.f32 %v3750, 0.0
  %v3877 = vmax.f32 %v3755, 0.0
  %v3878 = vmax.f32 %v3758, 0.0
  %v3879 = vmax.f32 %v3763, 0.0
  %v3880 = vmax.f32 %v3766, 0.0
  %v3881 = vmax.f32 %v3771, 0.0
  %v3882 = vmax.f32 %v3774, 0.0
  %v3883 = vmax.f32 %v3779, 0.0
  %v3884 = vmax.f32 %v3782, 0.0
  %v3885 = vmax.f32 %v3787, 0.0
  %v3886 = vmax.f32 %v3790, 0.0
  %v3887 = vmax.f32 %v3795, 0.0
  %v3888 = vmax.f32 %v3798, 0.0
  %v3889 = vmax.f32 %v3803, 0.0
  %v3890 = vmax.f32 %v3806, 0.0
  %v3891 = vmax.f32 %v3811, 0.0
  %v3892 = vmax.f32 %v3814, 0.0
  %v3893 = vmax.f32 %v3819, 0.0
  %v3894 = vmax.f32 %v3822, 0.0
  %v3895 = vmax.f32 %v3827, 0.0
  %v3896 = vmax.f32 %v3830, 0.0
  %v3897 = vadd.f32 %v3833, %v3834
  %v3898 = vadd.f32 %v3897, %v3835
  %v3899 = vadd.f32 %v3898, %v3836
  %v3900 = vadd.f32 %v3899, %v3837
  %v3901 = vadd.f32 %v3900, %v3838
  %v3902 = vadd.f32 %v3901, %v3839
  %v3903 = vadd.f32 %v3902, %v3840
  %v3904 = vadd.f32 %v3903, %v3841
  %v3905 = vadd.f32 %v3904, %v3842
  %v3906 = vadd.f32 %v3905, %v3843
  %v3907 = vadd.f32 %v3906, %v3844
  %v3908 = vadd.f32 %v3907, %v3845
  %v3909 = vadd.f32 %v3908, %v3846
  %v3910 = vadd.f32 %v3909, %v3847
  %v3911 = vadd.f32 %v3910, %v3848
  %v3912 = vadd.f32 %v3911, %v3849
  %v3913 = vadd.f32 %v3912, %v3850
  %v3914 = vadd.f32 %v3913, %v3851
  %v3915 = vadd.f32 %v3914, %v3852
  %v3916 = vadd.f32 %v3915, %v3853
  %v3917 = vadd.f32 %v3916, %v3854
  %v3918 = vadd.f32 %v3917, %v3855
  %v3919 = vadd.f32 %v3918, %v3856
  %v3920 = vadd.f32 %v3919, %v3857
  %v3921 = vadd.f32 %v3920, %v3858
  %v3922 = vadd.f32 %v3921, %v3859
  %v3923 = vadd.f32 %v3922, %v3860
  %v3924 = vadd.f32 %v3923, %v3861
  %v3925 = vadd.f32 %v3924, %v3862
  %v3926 = vadd.f32 %v3925, %v3863
  %v3927 = vadd.f32 %v3926, %v3864
  %v3928 = vadd.f32 %v3927, %v3865
  %v3929 = vadd.f32 %v3928, %v3866
  %v3930 = vadd.f32 %v3929, %v3867
  %v3931 = vadd.f32 %v3930, %v3868
  %v3932 = vadd.f32 %v3931, %v3869
  %v3933 = vadd.f32 %v3932, %v3870
  %v3934 = vadd.f32 %v3933, %v3871
  %v3935 = vadd.f32 %v3934, %v3872
  %v3936 = vadd.f32 %v3935, %v3873
  %v3937 = vadd.f32 %v3936, %v3874
  %v3938 = vadd.f32 %v3937, %v3875
  %v3939 = vadd.f32 %v3938, %v3876
  %v3940 = vadd.f32 %v3939, %v3877
  %v3941 = vadd.f32 %v3940, %v3878
  %v3942 = vadd.f32 %v3941, %v3879
  %v3943 = vadd.f32 %v3942, %v3880
  %v3944 = vadd.f32 %v3943, %v3881
  %v3945 = vadd.f32 %v3944, %v3882
  %v3946 = vadd.f32 %v3945, %v3883
  %v3947 = vadd.f32 %v3946, %v3884
  %v3948 = vadd.f32 %v3947, %v3885
  %v3949 = vadd.f32 %v3948, %v3886
  %v3950 = vadd.f32 %v3949, %v3887
  %v3951 = vadd.f32 %v3950, %v3888
  %v3952 = vadd.f32 %v3951, %v3889
  %v3953 = vadd.f32 %v3952, %v3890
  %v3954 = vadd.f32 %v3953, %v3891
  %v3955 = vadd.f32 %v3954, %v3892
  %v3956 = vadd.f32 %v3955, %v3893
  %v3957 = vadd.f32 %v3956, %v3894
  %v3958 = vadd.f32 %v3957, %v3895
  %v3959 = vadd.f32 %v3958, %v3896
  %v3960 = vrot.slane %v3959, 4
  %v3961 = vadd.f32 %v3959, %v3960
  %v3962 = vrot.slane %v3961, 2
  %v3963 = vadd.f32 %v3961, %v3962
  %v3964 = vrot.slane %v3963, 1
  %v3965 = vadd.f32 %v3963, %v3964
  %v3966 = vmul.f32 %v3833, %v3833
  %v3967 = vmul.f32 %v3834, %v3834
  %v3968 = vmul.f32 %v3835, %v3835
  %v3969 = vmul.f32 %v3836, %v3836
  %v3970 = vmul.f32 %v3837, %v3837
  %v3971 = vmul.f32 %v3838, %v3838
  %v3972 = vmul.f32 %v3839, %v3839
  %v3973 = vmul.f32 %v3840, %v3840
  %v3974 = vmul.f32 %v3841, %v3841
  %v3975 = vmul.f32 %v3842, %v3842
  %v3976 = vmul.f32 %v3843, %v3843
  %v3977 = vmul.f32 %v3844, %v3844
  %v3978 = vmul.f32 %v3845, %v3845
  %v3979 = vmul.f32 %v3846, %v3846
  %v3980 = vmul.f32 %v3847, %v3847
  %v3981 = vmul.f32 %v3848, %v3848
  %v3982 = vmul.f32 %v3849, %v3849
  %v3983 = vmul.f32 %v3850, %v3850
  %v3984 = vmul.f32 %v3851, %v3851
  %v3985 = vmul.f32 %v3852, %v3852
  %v3986 = vmul.f32 %v3853, %v3853
  %v3987 = vmul.f32 %v3854, %v3854
  %v3988 = vmul.f32 %v3855, %v3855
  %v3989 = vmul.f32 %v3856, %v3856
  %v3990 = vmul.f32 %v3857, %v3857
  %v3991 = vmul.f32 %v3858, %v3858
  %v3992 = vmul.f32 %v3859, %v3859
  %v3993 = vmul.f32 %v3860, %v3860
  %v3994 = vmul.f32 %v3861, %v3861
  %v3995 = vmul.f32 %v3862, %v3862
  %v3996 = vmul.f32 %v3863, %v3863
  %v3997 = vmul.f32 %v3864, %v3864
  %v3998 = vmul.f32 %v3865, %v3865
  %v3999 = vmul.f32 %v3866, %v3866
  %v4000 = vmul.f32 %v3867, %v3867
  %v4001 = vmul.f32 %v3868, %v3868
  %v4002 = vmul.f32 %v3869, %v3869
  %v4003 = vmul.f32 %v3870, %v3870
  %v4004 = vmul.f32 %v3871, %v3871
  %v4005 = vmul.f32 %v3872, %v3872
  %v4006 = vmul.f32 %v3873, %v3873
  %v4007 = vmul.f32 %v3874, %v3874
  %v4008 = vmul.f32 %v3875, %v3875
  %v4009 = vmul.f32 %v3876, %v3876
  %v4010 = vmul.f32 %v3877, %v3877
  %v4011 = vmul.f32 %v3878, %v3878
  %v4012 = vmul.f32 %v3879, %v3879
  %v4013 = vmul.f32 %v3880, %v3880
  %v4014 = vmul.f32 %v3881, %v3881
  %v4015 = vmul.f32 %v3882, %v3882
  %v4016 = vmul.f32 %v3883, %v3883
  %v4017 = vmul.f32 %v3884, %v3884
  %v4018 = vmul.f32 %v3885, %v3885
  %v4019 = vmul.f32 %v3886, %v3886
  %v4020 = vmul.f32 %v3887, %v3887
  %v4021 = vmul.f32 %v3888, %v3888
  %v4022 = vmul.f32 %v3889, %v3889
  %v4023 = vmul.f32 %v3890, %v3890
  %v4024 = vmul.f32 %v3891, %v3891
  %v4025 = vmul.f32 %v3892, %v3892
  %v4026 = vmul.f32 %v3893, %v3893
  %v4027 = vmul.f32 %v3894, %v3894
  %v4028 = vmul.f32 %v3895, %v3895
  %v4029 = vmul.f32 %v3896, %v3896
  %v4030 = vadd.f32 %v3966, %v3967
  %v4031 = vadd.f32 %v4030, %v3968
  %v4032 = vadd.f32 %v4031, %v3969
  %v4033 = vadd.f32 %v4032, %v3970
  %v4034 = vadd.f32 %v4033, %v3971
  %v4035 = vadd.f32 %v4034, %v3972
  %v4036 = vadd.f32 %v4035, %v3973
  %v4037 = vadd.f32 %v4036, %v3974
  %v4038 = vadd.f32 %v4037, %v3975
  %v4039 = vadd.f32 %v4038, %v3976
  %v4040 = vadd.f32 %v4039, %v3977
  %v4041 = vadd.f32 %v4040, %v3978
  %v4042 = vadd.f32 %v4041, %v3979
  %v4043 = vadd.f32 %v4042, %v3980
  %v4044 = vadd.f32 %v4043, %v3981
  %v4045 = vadd.f32 %v4044, %v3982
  %v4046 = vadd.f32 %v4045, %v3983
  %v4047 = vadd.f32 %v4046, %v3984
  %v4048 = vadd.f32 %v4047, %v3985
  %v4049 = vadd.f32 %v4048, %v3986
  %v4050 = vadd.f32 %v4049, %v3987
  %v4051 = vadd.f32 %v4050, %v3988
  %v4052 = vadd.f32 %v4051, %v3989
  %v4053 = vadd.f32 %v4052, %v3990
  %v4054 = vadd.f32 %v4053, %v3991
  %v4055 = vadd.f32 %v4054, %v3992
  %v4056 = vadd.f32 %v4055, %v3993
  %v4057 = vadd.f32 %v4056, %v3994
  %v4058 = vadd.f32 %v4057, %v3995
  %v4059 = vadd.f32 %v4058, %v3996
  %v4060 = vadd.f32 %v4059, %v3997
  %v4061 = vadd.f32 %v4060, %v3998
  %v4062 = vadd.f32 %v4061, %v3999
  %v4063 = vadd.f32 %v4062, %v4000
  %v4064 = vadd.f32 %v4063, %v4001
  %v4065 = vadd.f32 %v4064, %v4002
  %v4066 = vadd.f32 %v4065, %v4003
  %v4067 = vadd.f32 %v4066, %v4004
  %v4068 = vadd.f32 %v4067, %v4005
  %v4069 = vadd.f32 %v4068, %v4006
  %v4070 = vadd.f32 %v4069, %v4007
  %v4071 = vadd.f32 %v4070, %v4008
  %v4072 = vadd.f32 %v4071, %v4009
  %v4073 = vadd.f32 %v4072, %v4010
  %v4074 = vadd.f32 %v4073, %v4011
  %v4075 = vadd.f32 %v4074, %v4012
  %v4076 = vadd.f32 %v4075, %v4013
  %v4077 = vadd.f32 %v4076, %v4014
  %v4078 = vadd.f32 %v4077, %v4015
  %v4079 = vadd.f32 %v4078, %v4016
  %v4080 = vadd.f32 %v4079, %v4017
  %v4081 = vadd.f32 %v4080, %v4018
  %v4082 = vadd.f32 %v4081, %v4019
  %v4083 = vadd.f32 %v4082, %v4020
  %v4084 = vadd.f32 %v4083, %v4021
  %v4085 = vadd.f32 %v4084, %v4022
  %v4086 = vadd.f32 %v4085, %v4023
  %v4087 = vadd.f32 %v4086, %v4024
  %v4088 = vadd.f32 %v4087, %v4025
  %v4089 = vadd.f32 %v4088, %v4026
  %v4090 = vadd.f32 %v4089, %v4027
  %v4091 = vadd.f32 %v4090, %v4028
  %v4092 = vadd.f32 %v4091, %v4029
  %v4093 = vrot.slane %v4092, 4
  %v4094 = vadd.f32 %v4092, %v4093
  %v4095 = vrot.slane %v4094, 2
  %v4096 = vadd.f32 %v4094, %v4095
  %v4097 = vrot.slane %v4096, 1
  %v4098 = vadd.f32 %v4096, %v4097
  %v4099 = vmul.f32 %v3965, 0.001953125
  %v4100 = vmul.f32 %v4098, 0.001953125
  %v4101 = vmul.f32 %v4099, %v4099
  %v4102 = vsub.f32 %v4100, %v4101
  %v4103 = vmax.f32 %v4102, 0.0
  %v4104 = vadd.f32 %v4103, 1e-05
  %v4105 = vrsqrt.pop %v4104
  %v4106 = vmul.f32 %v479, %v4105
  %v4107 = vlaneseq
  %v4108 = vshrl.u32 %v4107, 7
  %v4109 = vsub.s32 1, %v4108
  %v4110 = vrot.slane %v4106, %v4109
  %v4111 = vmul.f32 %v3833, %v4110
  %v4112 = vmul.f32 %v3834, %v4110
  %v4113 = vmul.f32 %v3835, %v4110
  %v4114 = vmul.f32 %v3836, %v4110
  %v4115 = vmul.f32 %v3837, %v4110
  %v4116 = vmul.f32 %v3838, %v4110
  %v4117 = vmul.f32 %v3839, %v4110
  %v4118 = vmul.f32 %v3840, %v4110
  %v4119 = vmul.f32 %v3841, %v4110
  %v4120 = vmul.f32 %v3842, %v4110
  %v4121 = vmul.f32 %v3843, %v4110
  %v4122 = vmul.f32 %v3844, %v4110
  %v4123 = vmul.f32 %v3845, %v4110
  %v4124 = vmul.f32 %v3846, %v4110
  %v4125 = vmul.f32 %v3847, %v4110
  %v4126 = vmul.f32 %v3848, %v4110
  %v4127 = vmul.f32 %v3849, %v4110
  %v4128 = vmul.f32 %v3850, %v4110
  %v4129 = vmul.f32 %v3851, %v4110
  %v4130 = vmul.f32 %v3852, %v4110
  %v4131 = vmul.f32 %v3853, %v4110
  %v4132 = vmul.f32 %v3854, %v4110
  %v4133 = vmul.f32 %v3855, %v4110
  %v4134 = vmul.f32 %v3856, %v4110
  %v4135 = vmul.f32 %v3857, %v4110
  %v4136 = vmul.f32 %v3858, %v4110
  %v4137 = vmul.f32 %v3859, %v4110
  %v4138 = vmul.f32 %v3860, %v4110
  %v4139 = vmul.f32 %v3861, %v4110
  %v4140 = vmul.f32 %v3862, %v4110
  %v4141 = vmul.f32 %v3863, %v4110
  %v4142 = vmul.f32 %v3864, %v4110
  %v4143 = vmul.f32 %v3865, %v4110
  %v4144 = vmul.f32 %v3866, %v4110
  %v4145 = vmul.f32 %v3867, %v4110
  %v4146 = vmul.f32 %v3868, %v4110
  %v4147 = vmul.f32 %v3869, %v4110
  %v4148 = vmul.f32 %v3870, %v4110
  %v4149 = vmul.f32 %v3871, %v4110
  %v4150 = vmul.f32 %v3872, %v4110
  %v4151 = vmul.f32 %v3873, %v4110
  %v4152 = vmul.f32 %v3874, %v4110
  %v4153 = vmul.f32 %v3875, %v4110
  %v4154 = vmul.f32 %v3876, %v4110
  %v4155 = vmul.f32 %v3877, %v4110
  %v4156 = vmul.f32 %v3878, %v4110
  %v4157 = vmul.f32 %v3879, %v4110
  %v4158 = vmul.f32 %v3880, %v4110
  %v4159 = vmul.f32 %v3881, %v4110
  %v4160 = vmul.f32 %v3882, %v4110
  %v4161 = vmul.f32 %v3883, %v4110
  %v4162 = vmul.f32 %v3884, %v4110
  %v4163 = vmul.f32 %v3885, %v4110
  %v4164 = vmul.f32 %v3886, %v4110
  %v4165 = vmul.f32 %v3887, %v4110
  %v4166 = vmul.f32 %v3888, %v4110
  %v4167 = vmul.f32 %v3889, %v4110
  %v4168 = vmul.f32 %v3890, %v4110
  %v4169 = vmul.f32 %v3891, %v4110
  %v4170 = vmul.f32 %v3892, %v4110
  %v4171 = vmul.f32 %v3893, %v4110
  %v4172 = vmul.f32 %v3894, %v4110
  %v4173 = vmul.f32 %v3895, %v4110
  %v4174 = vmul.f32 %v3896, %v4110
  %v4175 = vmul.f32 %v4099, %v4106
  %v4177 = vrot.slane %v4175, 7
  %v4179 = vsub.f32 %v479, %v4177
  %v4180 = vlaneseq
  %v4181 = vshrl.u32 %v4180, 7
  %v4182 = vsub.s32 2, %v4181
  %v4183 = vrot.slane %v4179, %v4182
  %v4184 = vadd.f32 %v4111, %v4183
  %v4185 = vadd.f32 %v4112, %v4183
  %v4186 = vadd.f32 %v4113, %v4183
  %v4187 = vadd.f32 %v4114, %v4183
  %v4188 = vadd.f32 %v4115, %v4183
  %v4189 = vadd.f32 %v4116, %v4183
  %v4190 = vadd.f32 %v4117, %v4183
  %v4191 = vadd.f32 %v4118, %v4183
  %v4192 = vadd.f32 %v4119, %v4183
  %v4193 = vadd.f32 %v4120, %v4183
  %v4194 = vadd.f32 %v4121, %v4183
  %v4195 = vadd.f32 %v4122, %v4183
  %v4196 = vadd.f32 %v4123, %v4183
  %v4197 = vadd.f32 %v4124, %v4183
  %v4198 = vadd.f32 %v4125, %v4183
  %v4199 = vadd.f32 %v4126, %v4183
  %v4200 = vadd.f32 %v4127, %v4183
  %v4201 = vadd.f32 %v4128, %v4183
  %v4202 = vadd.f32 %v4129, %v4183
  %v4203 = vadd.f32 %v4130, %v4183
  %v4204 = vadd.f32 %v4131, %v4183
  %v4205 = vadd.f32 %v4132, %v4183
  %v4206 = vadd.f32 %v4133, %v4183
  %v4207 = vadd.f32 %v4134, %v4183
  %v4208 = vadd.f32 %v4135, %v4183
  %v4209 = vadd.f32 %v4136, %v4183
  %v4210 = vadd.f32 %v4137, %v4183
  %v4211 = vadd.f32 %v4138, %v4183
  %v4212 = vadd.f32 %v4139, %v4183
  %v4213 = vadd.f32 %v4140, %v4183
  %v4214 = vadd.f32 %v4141, %v4183
  %v4215 = vadd.f32 %v4142, %v4183
  %v4216 = vadd.f32 %v4143, %v4183
  %v4217 = vadd.f32 %v4144, %v4183
  %v4218 = vadd.f32 %v4145, %v4183
  %v4219 = vadd.f32 %v4146, %v4183
  %v4220 = vadd.f32 %v4147, %v4183
  %v4221 = vadd.f32 %v4148, %v4183
  %v4222 = vadd.f32 %v4149, %v4183
  %v4223 = vadd.f32 %v4150, %v4183
  %v4224 = vadd.f32 %v4151, %v4183
  %v4225 = vadd.f32 %v4152, %v4183
  %v4226 = vadd.f32 %v4153, %v4183
  %v4227 = vadd.f32 %v4154, %v4183
  %v4228 = vadd.f32 %v4155, %v4183
  %v4229 = vadd.f32 %v4156, %v4183
  %v4230 = vadd.f32 %v4157, %v4183
  %v4231 = vadd.f32 %v4158, %v4183
  %v4232 = vadd.f32 %v4159, %v4183
  %v4233 = vadd.f32 %v4160, %v4183
  %v4234 = vadd.f32 %v4161, %v4183
  %v4235 = vadd.f32 %v4162, %v4183
  %v4236 = vadd.f32 %v4163, %v4183
  %v4237 = vadd.f32 %v4164, %v4183
  %v4238 = vadd.f32 %v4165, %v4183
  %v4239 = vadd.f32 %v4166, %v4183
  %v4240 = vadd.f32 %v4167, %v4183
  %v4241 = vadd.f32 %v4168, %v4183
  %v4242 = vadd.f32 %v4169, %v4183
  %v4243 = vadd.f32 %v4170, %v4183
  %v4244 = vadd.f32 %v4171, %v4183
  %v4245 = vadd.f32 %v4172, %v4183
  %v4246 = vadd.f32 %v4173, %v4183
  %v4247 = vadd.f32 %v4174, %v4183
  %v4248 = vpack.c.bf16 %v4185, %v4184
  %v4249 = vpack.c.bf16 %v4187, %v4186
  %v4250 = vpack.c.bf16 %v4189, %v4188
  %v4251 = vpack.c.bf16 %v4191, %v4190
  %v4252 = vpack.c.bf16 %v4193, %v4192
  %v4253 = vpack.c.bf16 %v4195, %v4194
  %v4254 = vpack.c.bf16 %v4197, %v4196
  %v4255 = vpack.c.bf16 %v4199, %v4198
  %v4256 = vpack.c.bf16 %v4201, %v4200
  %v4257 = vpack.c.bf16 %v4203, %v4202
  %v4258 = vpack.c.bf16 %v4205, %v4204
  %v4259 = vpack.c.bf16 %v4207, %v4206
  %v4260 = vpack.c.bf16 %v4209, %v4208
  %v4261 = vpack.c.bf16 %v4211, %v4210
  %v4262 = vpack.c.bf16 %v4213, %v4212
  %v4263 = vpack.c.bf16 %v4215, %v4214
  %v4264 = vpack.c.bf16 %v4217, %v4216
  %v4265 = vpack.c.bf16 %v4219, %v4218
  %v4266 = vpack.c.bf16 %v4221, %v4220
  %v4267 = vpack.c.bf16 %v4223, %v4222
  %v4268 = vpack.c.bf16 %v4225, %v4224
  %v4269 = vpack.c.bf16 %v4227, %v4226
  %v4270 = vpack.c.bf16 %v4229, %v4228
  %v4271 = vpack.c.bf16 %v4231, %v4230
  %v4272 = vpack.c.bf16 %v4233, %v4232
  %v4273 = vpack.c.bf16 %v4235, %v4234
  %v4274 = vpack.c.bf16 %v4237, %v4236
  %v4275 = vpack.c.bf16 %v4239, %v4238
  %v4276 = vpack.c.bf16 %v4241, %v4240
  %v4277 = vpack.c.bf16 %v4243, %v4242
  %v4278 = vpack.c.bf16 %v4245, %v4244
  %v4279 = vpack.c.bf16 %v4247, %v4246
  %v4312 = vunpack.c.l.b16 %v4248
  %v4313 = vunpack.c.h.b16 %v4248
  %v4314 = vunpack.c.l.b16 %v4249
  %v4315 = vunpack.c.h.b16 %v4249
  %v4316 = vunpack.c.l.b16 %v4250
  %v4317 = vunpack.c.h.b16 %v4250
  %v4318 = vunpack.c.l.b16 %v4251
  %v4319 = vunpack.c.h.b16 %v4251
  %v4320 = vunpack.c.l.b16 %v4252
  %v4321 = vunpack.c.h.b16 %v4252
  %v4322 = vunpack.c.l.b16 %v4253
  %v4323 = vunpack.c.h.b16 %v4253
  %v4324 = vunpack.c.l.b16 %v4254
  %v4325 = vunpack.c.h.b16 %v4254
  %v4326 = vunpack.c.l.b16 %v4255
  %v4327 = vunpack.c.h.b16 %v4255
  %v4328 = vunpack.c.l.b16 %v4256
  %v4329 = vunpack.c.h.b16 %v4256
  %v4330 = vunpack.c.l.b16 %v4257
  %v4331 = vunpack.c.h.b16 %v4257
  %v4332 = vunpack.c.l.b16 %v4258
  %v4333 = vunpack.c.h.b16 %v4258
  %v4334 = vunpack.c.l.b16 %v4259
  %v4335 = vunpack.c.h.b16 %v4259
  %v4336 = vunpack.c.l.b16 %v4260
  %v4337 = vunpack.c.h.b16 %v4260
  %v4338 = vunpack.c.l.b16 %v4261
  %v4339 = vunpack.c.h.b16 %v4261
  %v4340 = vunpack.c.l.b16 %v4262
  %v4341 = vunpack.c.h.b16 %v4262
  %v4342 = vunpack.c.l.b16 %v4263
  %v4343 = vunpack.c.h.b16 %v4263
  %v4344 = vunpack.c.l.b16 %v4264
  %v4345 = vunpack.c.h.b16 %v4264
  %v4346 = vunpack.c.l.b16 %v4265
  %v4347 = vunpack.c.h.b16 %v4265
  %v4348 = vunpack.c.l.b16 %v4266
  %v4349 = vunpack.c.h.b16 %v4266
  %v4350 = vunpack.c.l.b16 %v4267
  %v4351 = vunpack.c.h.b16 %v4267
  %v4352 = vunpack.c.l.b16 %v4268
  %v4353 = vunpack.c.h.b16 %v4268
  %v4354 = vunpack.c.l.b16 %v4269
  %v4355 = vunpack.c.h.b16 %v4269
  %v4356 = vunpack.c.l.b16 %v4270
  %v4357 = vunpack.c.h.b16 %v4270
  %v4358 = vunpack.c.l.b16 %v4271
  %v4359 = vunpack.c.h.b16 %v4271
  %v4360 = vunpack.c.l.b16 %v4272
  %v4361 = vunpack.c.h.b16 %v4272
  %v4362 = vunpack.c.l.b16 %v4273
  %v4363 = vunpack.c.h.b16 %v4273
  %v4364 = vunpack.c.l.b16 %v4274
  %v4365 = vunpack.c.h.b16 %v4274
  %v4366 = vunpack.c.l.b16 %v4275
  %v4367 = vunpack.c.h.b16 %v4275
  %v4368 = vunpack.c.l.b16 %v4276
  %v4369 = vunpack.c.h.b16 %v4276
  %v4370 = vunpack.c.l.b16 %v4277
  %v4371 = vunpack.c.h.b16 %v4277
  %v4372 = vunpack.c.l.b16 %v4278
  %v4373 = vunpack.c.h.b16 %v4278
  %v4374 = vunpack.c.l.b16 %v4279
  %v4375 = vunpack.c.h.b16 %v4279
  %v4376 = vpack.c.b16 %v4312, %v4312
  %v4377 = vpack.c.b16 %v4313, %v4313
  %v4378 = vpack.c.b16 %v4314, %v4314
  %v4379 = vpack.c.b16 %v4315, %v4315
  %v4380 = vpack.c.b16 %v4316, %v4316
  %v4381 = vpack.c.b16 %v4317, %v4317
  %v4382 = vpack.c.b16 %v4318, %v4318
  %v4383 = vpack.c.b16 %v4319, %v4319
  %v4384 = vpack.c.b16 %v4320, %v4320
  %v4385 = vpack.c.b16 %v4321, %v4321
  %v4386 = vpack.c.b16 %v4322, %v4322
  %v4387 = vpack.c.b16 %v4323, %v4323
  %v4388 = vpack.c.b16 %v4324, %v4324
  %v4389 = vpack.c.b16 %v4325, %v4325
  %v4390 = vpack.c.b16 %v4326, %v4326
  %v4391 = vpack.c.b16 %v4327, %v4327
  %v4392 = vpack.c.b16 %v4328, %v4328
  %v4393 = vpack.c.b16 %v4329, %v4329
  %v4394 = vpack.c.b16 %v4330, %v4330
  %v4395 = vpack.c.b16 %v4331, %v4331
  %v4396 = vpack.c.b16 %v4332, %v4332
  %v4397 = vpack.c.b16 %v4333, %v4333
  %v4398 = vpack.c.b16 %v4334, %v4334
  %v4399 = vpack.c.b16 %v4335, %v4335
  %v4400 = vpack.c.b16 %v4336, %v4336
  %v4401 = vpack.c.b16 %v4337, %v4337
  %v4402 = vpack.c.b16 %v4338, %v4338
  %v4403 = vpack.c.b16 %v4339, %v4339
  %v4404 = vpack.c.b16 %v4340, %v4340
  %v4405 = vpack.c.b16 %v4341, %v4341
  %v4406 = vpack.c.b16 %v4342, %v4342
  %v4407 = vpack.c.b16 %v4343, %v4343
  %v4408 = vpack.c.b16 %v4344, %v4344
  %v4409 = vpack.c.b16 %v4345, %v4345
  %v4410 = vpack.c.b16 %v4346, %v4346
  %v4411 = vpack.c.b16 %v4347, %v4347
  %v4412 = vpack.c.b16 %v4348, %v4348
  %v4413 = vpack.c.b16 %v4349, %v4349
  %v4414 = vpack.c.b16 %v4350, %v4350
  %v4415 = vpack.c.b16 %v4351, %v4351
  %v4416 = vpack.c.b16 %v4352, %v4352
  %v4417 = vpack.c.b16 %v4353, %v4353
  %v4418 = vpack.c.b16 %v4354, %v4354
  %v4419 = vpack.c.b16 %v4355, %v4355
  %v4420 = vpack.c.b16 %v4356, %v4356
  %v4421 = vpack.c.b16 %v4357, %v4357
  %v4422 = vpack.c.b16 %v4358, %v4358
  %v4423 = vpack.c.b16 %v4359, %v4359
  %v4424 = vpack.c.b16 %v4360, %v4360
  %v4425 = vpack.c.b16 %v4361, %v4361
  %v4426 = vpack.c.b16 %v4362, %v4362
  %v4427 = vpack.c.b16 %v4363, %v4363
  %v4428 = vpack.c.b16 %v4364, %v4364
  %v4429 = vpack.c.b16 %v4365, %v4365
  %v4430 = vpack.c.b16 %v4366, %v4366
  %v4431 = vpack.c.b16 %v4367, %v4367
  %v4432 = vpack.c.b16 %v4368, %v4368
  %v4433 = vpack.c.b16 %v4369, %v4369
  %v4434 = vpack.c.b16 %v4370, %v4370
  %v4435 = vpack.c.b16 %v4371, %v4371
  %v4436 = vpack.c.b16 %v4372, %v4372
  %v4437 = vpack.c.b16 %v4373, %v4373
  %v4438 = vpack.c.b16 %v4374, %v4374
  %v4439 = vpack.c.b16 %v4375, %v4375
  %4504 = vst [vmem:[%s3] sm:$0xf] %v4376
  %4505 = vst [vmem:[%s3 + $0x4] sm:$0xf] %v4377
  %4506 = vst [vmem:[%s3 + $0x8] sm:$0xf] %v4378
  %4507 = vst [vmem:[%s3 + $0xc] sm:$0xf] %v4379
  %4508 = vst [vmem:[%s3 + $0x10] sm:$0xf] %v4380
  %4509 = vst [vmem:[%s3 + $0x14] sm:$0xf] %v4381
  %4510 = vst [vmem:[%s3 + $0x18] sm:$0xf] %v4382
  %4511 = vst [vmem:[%s3 + $0x1c] sm:$0xf] %v4383
  %4512 = vst [vmem:[%s3 + $0x20] sm:$0xf] %v4384
  %4513 = vst [vmem:[%s3 + $0x24] sm:$0xf] %v4385
  %4514 = vst [vmem:[%s3 + $0x28] sm:$0xf] %v4386
  %4515 = vst [vmem:[%s3 + $0x2c] sm:$0xf] %v4387
  %4516 = vst [vmem:[%s3 + $0x30] sm:$0xf] %v4388
  %4517 = vst [vmem:[%s3 + $0x34] sm:$0xf] %v4389
  %4518 = vst [vmem:[%s3 + $0x38] sm:$0xf] %v4390
  %4519 = vst [vmem:[%s3 + $0x3c] sm:$0xf] %v4391
  %4520 = vst [vmem:[%s3 + $0x40] sm:$0xf] %v4392
  %4521 = vst [vmem:[%s3 + $0x44] sm:$0xf] %v4393
  %4522 = vst [vmem:[%s3 + $0x48] sm:$0xf] %v4394
  %4523 = vst [vmem:[%s3 + $0x4c] sm:$0xf] %v4395
  %4524 = vst [vmem:[%s3 + $0x50] sm:$0xf] %v4396
  %4525 = vst [vmem:[%s3 + $0x54] sm:$0xf] %v4397
  %4526 = vst [vmem:[%s3 + $0x58] sm:$0xf] %v4398
  %4527 = vst [vmem:[%s3 + $0x5c] sm:$0xf] %v4399
  %4528 = vst [vmem:[%s3 + $0x60] sm:$0xf] %v4400
  %4529 = vst [vmem:[%s3 + $0x64] sm:$0xf] %v4401
  %4530 = vst [vmem:[%s3 + $0x68] sm:$0xf] %v4402
  %4531 = vst [vmem:[%s3 + $0x6c] sm:$0xf] %v4403
  %4532 = vst [vmem:[%s3 + $0x70] sm:$0xf] %v4404
  %4533 = vst [vmem:[%s3 + $0x74] sm:$0xf] %v4405
  %4534 = vst [vmem:[%s3 + $0x78] sm:$0xf] %v4406
  %4535 = vst [vmem:[%s3 + $0x7c] sm:$0xf] %v4407
  %4536 = vst [vmem:[%s3 + $0x80] sm:$0xf] %v4408
  %4537 = vst [vmem:[%s3 + $0x84] sm:$0xf] %v4409
  %4538 = vst [vmem:[%s3 + $0x88] sm:$0xf] %v4410
  %4539 = vst [vmem:[%s3 + $0x8c] sm:$0xf] %v4411
  %4540 = vst [vmem:[%s3 + $0x90] sm:$0xf] %v4412
  %4541 = vst [vmem:[%s3 + $0x94] sm:$0xf] %v4413
  %4542 = vst [vmem:[%s3 + $0x98] sm:$0xf] %v4414
  %4543 = vst [vmem:[%s3 + $0x9c] sm:$0xf] %v4415
  %4544 = vst [vmem:[%s3 + $0xa0] sm:$0xf] %v4416
  %4545 = vst [vmem:[%s3 + $0xa4] sm:$0xf] %v4417
  %4546 = vst [vmem:[%s3 + $0xa8] sm:$0xf] %v4418
  %4547 = vst [vmem:[%s3 + $0xac] sm:$0xf] %v4419
  %4548 = vst [vmem:[%s3 + $0xb0] sm:$0xf] %v4420
  %4549 = vst [vmem:[%s3 + $0xb4] sm:$0xf] %v4421
  %4550 = vst [vmem:[%s3 + $0xb8] sm:$0xf] %v4422
  %4551 = vst [vmem:[%s3 + $0xbc] sm:$0xf] %v4423
  %4552 = vst [vmem:[%s3 + $0xc0] sm:$0xf] %v4424
  %4553 = vst [vmem:[%s3 + $0xc4] sm:$0xf] %v4425
  %4554 = vst [vmem:[%s3 + $0xc8] sm:$0xf] %v4426
  %4555 = vst [vmem:[%s3 + $0xcc] sm:$0xf] %v4427
  %4556 = vst [vmem:[%s3 + $0xd0] sm:$0xf] %v4428
  %4557 = vst [vmem:[%s3 + $0xd4] sm:$0xf] %v4429
  %4558 = vst [vmem:[%s3 + $0xd8] sm:$0xf] %v4430
  %4559 = vst [vmem:[%s3 + $0xdc] sm:$0xf] %v4431
  %4560 = vst [vmem:[%s3 + $0xe0] sm:$0xf] %v4432
  %4561 = vst [vmem:[%s3 + $0xe4] sm:$0xf] %v4433
  %4562 = vst [vmem:[%s3 + $0xe8] sm:$0xf] %v4434
  %4563 = vst [vmem:[%s3 + $0xec] sm:$0xf] %v4435
  %4564 = vst [vmem:[%s3 + $0xf0] sm:$0xf] %v4436
  %4565 = vst [vmem:[%s3 + $0xf4] sm:$0xf] %v4437
  %4566 = vst [vmem:[%s3 + $0xf8] sm:$0xf] %v4438
  %4567 = vst [vmem:[%s3 + $0xfc] sm:$0xf] %v4439
  // Predicated region
  $region14: #{_lambda_.6} parent=0 // pred_check
    _
  $region15: #{_lambda_.6} parent=0 // pred_check_branch
    %4569 = sbr.rel (0) target = $region17
  $region16: #{_lambda_.6} parent=0 // pred_region
    _
  $region17: #{_lambda_.6} parent=0 // pred_fallthru
    _
  // Predicated region
  $region18: #{_lambda_.6} parent=0 // pred_check
    _
  $region19: #{_lambda_.6} parent=0 // pred_check_branch
    %4571 = sbr.rel (0) target = $region21
  $region20: #{_lambda_.6} parent=0 // pred_region
    _
  $region21: #{_lambda_.6} parent=0 // pred_fallthru
    _

// kernel: _lambda_.8
$region0: #{_lambda_.8}
  #allocation0 [shape = 'u32[]', space=smem, size = 0x4, offset = 0x4, fixed_abs, tag = 'smem constant byte address 0x4 - core index']
  #allocation1 [shape = 'u32[144,128]{1,0:T(1,128)}', space=vmem, size = 0x12000, scoped, tag = 'internal scratch']
  %s0 = inlined_call_operand.vmem [shape: bf16[128,1024], index: 0, kind: input, shape index: {}]
  %s1 = inlined_call_operand.vmem [shape: bf16[1024,256], index: 1, kind: input, shape index: {}]
  %s2 = inlined_call_operand.vmem [shape: f32[8,256], index: 2, kind: input, shape index: {}]
  %s3 = inlined_call_operand.vmem [shape: f32[256,256], index: 3, kind: input, shape index: {}]
  %s4 = inlined_call_operand.vmem [shape: bf16[128,256], index: 4, kind: output, shape index: {}]
  %s5 = sld [smem:[#allocation0]]
  $region26: #{_lambda_.8} parent=0
    _
  %s7 = ssub.s32 1, %s5
  %s8 = scalar_select 0, %s7, %s5
  // Predicated region
  $region2: #{_lambda_.8} parent=0 // pred_check
    _
  $region3: #{_lambda_.8} parent=0 // pred_check_branch
    %10 = sbr.rel (0) target = $region5
  $region4: #{_lambda_.8} parent=0 // pred_region
    _
  $region5: #{_lambda_.8} parent=0 // pred_fallthru
    _
  // Predicated region
  $region6: #{_lambda_.8} parent=0 // pred_check
    _
  $region7: #{_lambda_.8} parent=0 // pred_check_branch
    %12 = sbr.rel (0) target = $region9
  $region8: #{_lambda_.8} parent=0 // pred_region
    _
  $region9: #{_lambda_.8} parent=0 // pred_fallthru
    _
  // Predicated region
  $region10: #{_lambda_.8} parent=0 // pred_check
    _
  $region11: #{_lambda_.8} parent=0 // pred_check_branch
    %14 = sbr.rel (0) target = $region13
  $region12: #{_lambda_.8} parent=0 // pred_region
    _
  $region13: #{_lambda_.8} parent=0 // pred_fallthru
    _
  // Predicated region
  $region14: #{_lambda_.8} parent=0 // pred_check
    _
  $region15: #{_lambda_.8} parent=0 // pred_check_branch
    %16 = sbr.rel (0) target = $region17
  $region16: #{_lambda_.8} parent=0 // pred_region
    _
  $region17: #{_lambda_.8} parent=0 // pred_fallthru
    _
  %v17 = vld [vmem:[%s0] sm:$0xff]
  %v18 = vld [vmem:[%s0 + $0x8] sm:$0xff]
  %v19 = vld [vmem:[%s0 + $0x10] sm:$0xff]
  %v20 = vld [vmem:[%s0 + $0x18] sm:$0xff]
  %v21 = vld [vmem:[%s0 + $0x20] sm:$0xff]
  %v22 = vld [vmem:[%s0 + $0x28] sm:$0xff]
  %v23 = vld [vmem:[%s0 + $0x30] sm:$0xff]
  %v24 = vld [vmem:[%s0 + $0x38] sm:$0xff]
  %v25 = vld [vmem:[%s0 + $0x40] sm:$0xff]
  %v26 = vld [vmem:[%s0 + $0x48] sm:$0xff]
  %v27 = vld [vmem:[%s0 + $0x50] sm:$0xff]
  %v28 = vld [vmem:[%s0 + $0x58] sm:$0xff]
  %v29 = vld [vmem:[%s0 + $0x60] sm:$0xff]
  %v30 = vld [vmem:[%s0 + $0x68] sm:$0xff]
  %v31 = vld [vmem:[%s0 + $0x70] sm:$0xff]
  %v32 = vld [vmem:[%s0 + $0x78] sm:$0xff]
  %v33 = vld [vmem:[%s0 + $0x80] sm:$0xff]
  %v34 = vld [vmem:[%s0 + $0x88] sm:$0xff]
  %v35 = vld [vmem:[%s0 + $0x90] sm:$0xff]
  %v36 = vld [vmem:[%s0 + $0x98] sm:$0xff]
  %v37 = vld [vmem:[%s0 + $0xa0] sm:$0xff]
  %v38 = vld [vmem:[%s0 + $0xa8] sm:$0xff]
  %v39 = vld [vmem:[%s0 + $0xb0] sm:$0xff]
  %v40 = vld [vmem:[%s0 + $0xb8] sm:$0xff]
  %v41 = vld [vmem:[%s0 + $0xc0] sm:$0xff]
  %v42 = vld [vmem:[%s0 + $0xc8] sm:$0xff]
  %v43 = vld [vmem:[%s0 + $0xd0] sm:$0xff]
  %v44 = vld [vmem:[%s0 + $0xd8] sm:$0xff]
  %v45 = vld [vmem:[%s0 + $0xe0] sm:$0xff]
  %v46 = vld [vmem:[%s0 + $0xe8] sm:$0xff]
  %v47 = vld [vmem:[%s0 + $0xf0] sm:$0xff]
  %v48 = vld [vmem:[%s0 + $0xf8] sm:$0xff]
  %v49 = vld [vmem:[%s0 + $0x100] sm:$0xff]
  %v50 = vld [vmem:[%s0 + $0x108] sm:$0xff]
  %v51 = vld [vmem:[%s0 + $0x110] sm:$0xff]
  %v52 = vld [vmem:[%s0 + $0x118] sm:$0xff]
  %v53 = vld [vmem:[%s0 + $0x120] sm:$0xff]
  %v54 = vld [vmem:[%s0 + $0x128] sm:$0xff]
  %v55 = vld [vmem:[%s0 + $0x130] sm:$0xff]
  %v56 = vld [vmem:[%s0 + $0x138] sm:$0xff]
  %v57 = vld [vmem:[%s0 + $0x140] sm:$0xff]
  %v58 = vld [vmem:[%s0 + $0x148] sm:$0xff]
  %v59 = vld [vmem:[%s0 + $0x150] sm:$0xff]
  %v60 = vld [vmem:[%s0 + $0x158] sm:$0xff]
  %v61 = vld [vmem:[%s0 + $0x160] sm:$0xff]
  %v62 = vld [vmem:[%s0 + $0x168] sm:$0xff]
  %v63 = vld [vmem:[%s0 + $0x170] sm:$0xff]
  %v64 = vld [vmem:[%s0 + $0x178] sm:$0xff]
  %v65 = vld [vmem:[%s0 + $0x180] sm:$0xff]
  %v66 = vld [vmem:[%s0 + $0x188] sm:$0xff]
  %v67 = vld [vmem:[%s0 + $0x190] sm:$0xff]
  %v68 = vld [vmem:[%s0 + $0x198] sm:$0xff]
  %v69 = vld [vmem:[%s0 + $0x1a0] sm:$0xff]
  %v70 = vld [vmem:[%s0 + $0x1a8] sm:$0xff]
  %v71 = vld [vmem:[%s0 + $0x1b0] sm:$0xff]
  %v72 = vld [vmem:[%s0 + $0x1b8] sm:$0xff]
  %v73 = vld [vmem:[%s0 + $0x1c0] sm:$0xff]
  %v74 = vld [vmem:[%s0 + $0x1c8] sm:$0xff]
  %v75 = vld [vmem:[%s0 + $0x1d0] sm:$0xff]
  %v76 = vld [vmem:[%s0 + $0x1d8] sm:$0xff]
  %v77 = vld [vmem:[%s0 + $0x1e0] sm:$0xff]
  %v78 = vld [vmem:[%s0 + $0x1e8] sm:$0xff]
  %v79 = vld [vmem:[%s0 + $0x1f0] sm:$0xff]
  %v80 = vld [vmem:[%s0 + $0x1f8] sm:$0xff]
  %v81 = vld [vmem:[%s1] sm:$0xff]
  %v82 = vld [vmem:[%s1 + $0x8] sm:$0xff]
  %v83 = vld [vmem:[%s1 + $0x10] sm:$0xff]
  %v84 = vld [vmem:[%s1 + $0x18] sm:$0xff]
  %v85 = vld [vmem:[%s1 + $0x20] sm:$0xff]
  %v86 = vld [vmem:[%s1 + $0x28] sm:$0xff]
  %v87 = vld [vmem:[%s1 + $0x30] sm:$0xff]
  %v88 = vld [vmem:[%s1 + $0x38] sm:$0xff]
  %v89 = vld [vmem:[%s1 + $0x40] sm:$0xff]
  %v90 = vld [vmem:[%s1 + $0x48] sm:$0xff]
  %v91 = vld [vmem:[%s1 + $0x50] sm:$0xff]
  %v92 = vld [vmem:[%s1 + $0x58] sm:$0xff]
  %v93 = vld [vmem:[%s1 + $0x60] sm:$0xff]
  %v94 = vld [vmem:[%s1 + $0x68] sm:$0xff]
  %v95 = vld [vmem:[%s1 + $0x70] sm:$0xff]
  %v96 = vld [vmem:[%s1 + $0x78] sm:$0xff]
  %v97 = vld [vmem:[%s1 + $0x80] sm:$0xff]
  %v98 = vld [vmem:[%s1 + $0x88] sm:$0xff]
  %v99 = vld [vmem:[%s1 + $0x90] sm:$0xff]
  %v100 = vld [vmem:[%s1 + $0x98] sm:$0xff]
  %v101 = vld [vmem:[%s1 + $0xa0] sm:$0xff]
  %v102 = vld [vmem:[%s1 + $0xa8] sm:$0xff]
  %v103 = vld [vmem:[%s1 + $0xb0] sm:$0xff]
  %v104 = vld [vmem:[%s1 + $0xb8] sm:$0xff]
  %v105 = vld [vmem:[%s1 + $0xc0] sm:$0xff]
  %v106 = vld [vmem:[%s1 + $0xc8] sm:$0xff]
  %v107 = vld [vmem:[%s1 + $0xd0] sm:$0xff]
  %v108 = vld [vmem:[%s1 + $0xd8] sm:$0xff]
  %v109 = vld [vmem:[%s1 + $0xe0] sm:$0xff]
  %v110 = vld [vmem:[%s1 + $0xe8] sm:$0xff]
  %v111 = vld [vmem:[%s1 + $0xf0] sm:$0xff]
  %v112 = vld [vmem:[%s1 + $0xf8] sm:$0xff]
  %v113 = vld [vmem:[%s1 + $0x100] sm:$0xff]
  %v114 = vld [vmem:[%s1 + $0x108] sm:$0xff]
  %v115 = vld [vmem:[%s1 + $0x110] sm:$0xff]
  %v116 = vld [vmem:[%s1 + $0x118] sm:$0xff]
  %v117 = vld [vmem:[%s1 + $0x120] sm:$0xff]
  %v118 = vld [vmem:[%s1 + $0x128] sm:$0xff]
  %v119 = vld [vmem:[%s1 + $0x130] sm:$0xff]
  %v120 = vld [vmem:[%s1 + $0x138] sm:$0xff]
  %v121 = vld [vmem:[%s1 + $0x140] sm:$0xff]
  %v122 = vld [vmem:[%s1 + $0x148] sm:$0xff]
  %v123 = vld [vmem:[%s1 + $0x150] sm:$0xff]
  %v124 = vld [vmem:[%s1 + $0x158] sm:$0xff]
  %v125 = vld [vmem:[%s1 + $0x160] sm:$0xff]
  %v126 = vld [vmem:[%s1 + $0x168] sm:$0xff]
  %v127 = vld [vmem:[%s1 + $0x170] sm:$0xff]
  %v128 = vld [vmem:[%s1 + $0x178] sm:$0xff]
  %v129 = vld [vmem:[%s1 + $0x180] sm:$0xff]
  %v130 = vld [vmem:[%s1 + $0x188] sm:$0xff]
  %v131 = vld [vmem:[%s1 + $0x190] sm:$0xff]
  %v132 = vld [vmem:[%s1 + $0x198] sm:$0xff]
  %v133 = vld [vmem:[%s1 + $0x1a0] sm:$0xff]
  %v134 = vld [vmem:[%s1 + $0x1a8] sm:$0xff]
  %v135 = vld [vmem:[%s1 + $0x1b0] sm:$0xff]
  %v136 = vld [vmem:[%s1 + $0x1b8] sm:$0xff]
  %v137 = vld [vmem:[%s1 + $0x1c0] sm:$0xff]
  %v138 = vld [vmem:[%s1 + $0x1c8] sm:$0xff]
  %v139 = vld [vmem:[%s1 + $0x1d0] sm:$0xff]
  %v140 = vld [vmem:[%s1 + $0x1d8] sm:$0xff]
  %v141 = vld [vmem:[%s1 + $0x1e0] sm:$0xff]
  %v142 = vld [vmem:[%s1 + $0x1e8] sm:$0xff]
  %v143 = vld [vmem:[%s1 + $0x1f0] sm:$0xff]
  %v144 = vld [vmem:[%s1 + $0x1f8] sm:$0xff]
  %v145 = vld [vmem:[%s1 + $0x200] sm:$0xff]
  %v146 = vld [vmem:[%s1 + $0x208] sm:$0xff]
  %v147 = vld [vmem:[%s1 + $0x210] sm:$0xff]
  %v148 = vld [vmem:[%s1 + $0x218] sm:$0xff]
  %v149 = vld [vmem:[%s1 + $0x220] sm:$0xff]
  %v150 = vld [vmem:[%s1 + $0x228] sm:$0xff]
  %v151 = vld [vmem:[%s1 + $0x230] sm:$0xff]
  %v152 = vld [vmem:[%s1 + $0x238] sm:$0xff]
  %v153 = vld [vmem:[%s1 + $0x240] sm:$0xff]
  %v154 = vld [vmem:[%s1 + $0x248] sm:$0xff]
  %v155 = vld [vmem:[%s1 + $0x250] sm:$0xff]
  %v156 = vld [vmem:[%s1 + $0x258] sm:$0xff]
  %v157 = vld [vmem:[%s1 + $0x260] sm:$0xff]
  %v158 = vld [vmem:[%s1 + $0x268] sm:$0xff]
  %v159 = vld [vmem:[%s1 + $0x270] sm:$0xff]
  %v160 = vld [vmem:[%s1 + $0x278] sm:$0xff]
  %v161 = vld [vmem:[%s1 + $0x280] sm:$0xff]
  %v162 = vld [vmem:[%s1 + $0x288] sm:$0xff]
  %v163 = vld [vmem:[%s1 + $0x290] sm:$0xff]
  %v164 = vld [vmem:[%s1 + $0x298] sm:$0xff]
  %v165 = vld [vmem:[%s1 + $0x2a0] sm:$0xff]
  %v166 = vld [vmem:[%s1 + $0x2a8] sm:$0xff]
  %v167 = vld [vmem:[%s1 + $0x2b0] sm:$0xff]
  %v168 = vld [vmem:[%s1 + $0x2b8] sm:$0xff]
  %v169 = vld [vmem:[%s1 + $0x2c0] sm:$0xff]
  %v170 = vld [vmem:[%s1 + $0x2c8] sm:$0xff]
  %v171 = vld [vmem:[%s1 + $0x2d0] sm:$0xff]
  %v172 = vld [vmem:[%s1 + $0x2d8] sm:$0xff]
  %v173 = vld [vmem:[%s1 + $0x2e0] sm:$0xff]
  %v174 = vld [vmem:[%s1 + $0x2e8] sm:$0xff]
  %v175 = vld [vmem:[%s1 + $0x2f0] sm:$0xff]
  %v176 = vld [vmem:[%s1 + $0x2f8] sm:$0xff]
  %v177 = vld [vmem:[%s1 + $0x300] sm:$0xff]
  %v178 = vld [vmem:[%s1 + $0x308] sm:$0xff]
  %v179 = vld [vmem:[%s1 + $0x310] sm:$0xff]
  %v180 = vld [vmem:[%s1 + $0x318] sm:$0xff]
  %v181 = vld [vmem:[%s1 + $0x320] sm:$0xff]
  %v182 = vld [vmem:[%s1 + $0x328] sm:$0xff]
  %v183 = vld [vmem:[%s1 + $0x330] sm:$0xff]
  %v184 = vld [vmem:[%s1 + $0x338] sm:$0xff]
  %v185 = vld [vmem:[%s1 + $0x340] sm:$0xff]
  %v186 = vld [vmem:[%s1 + $0x348] sm:$0xff]
  %v187 = vld [vmem:[%s1 + $0x350] sm:$0xff]
  %v188 = vld [vmem:[%s1 + $0x358] sm:$0xff]
  %v189 = vld [vmem:[%s1 + $0x360] sm:$0xff]
  %v190 = vld [vmem:[%s1 + $0x368] sm:$0xff]
  %v191 = vld [vmem:[%s1 + $0x370] sm:$0xff]
  %v192 = vld [vmem:[%s1 + $0x378] sm:$0xff]
  %v193 = vld [vmem:[%s1 + $0x380] sm:$0xff]
  %v194 = vld [vmem:[%s1 + $0x388] sm:$0xff]
  %v195 = vld [vmem:[%s1 + $0x390] sm:$0xff]
  %v196 = vld [vmem:[%s1 + $0x398] sm:$0xff]
  %v197 = vld [vmem:[%s1 + $0x3a0] sm:$0xff]
  %v198 = vld [vmem:[%s1 + $0x3a8] sm:$0xff]
  %v199 = vld [vmem:[%s1 + $0x3b0] sm:$0xff]
  %v200 = vld [vmem:[%s1 + $0x3b8] sm:$0xff]
  %v201 = vld [vmem:[%s1 + $0x3c0] sm:$0xff]
  %v202 = vld [vmem:[%s1 + $0x3c8] sm:$0xff]
  %v203 = vld [vmem:[%s1 + $0x3d0] sm:$0xff]
  %v204 = vld [vmem:[%s1 + $0x3d8] sm:$0xff]
  %v205 = vld [vmem:[%s1 + $0x3e0] sm:$0xff]
  %v206 = vld [vmem:[%s1 + $0x3e8] sm:$0xff]
  %v207 = vld [vmem:[%s1 + $0x3f0] sm:$0xff]
  %v208 = vld [vmem:[%s1 + $0x3f8] sm:$0xff]
  %v209 = vld [vmem:[%s2] sm:$0xff]
  %v210 = vld [vmem:[%s2 + $0x8] sm:$0xff]
  %v211 = vlaneseq
  %v212 = vshrl.u32 %v211, 7
  %v213 = vsub.s32 0, %v212
  %v214 = vrot.slane %v209, %v213
  %v215 = vlaneseq
  %v216 = vshrl.u32 %v215, 7
  %v217 = vsub.s32 0, %v216
  %v218 = vrot.slane %v210, %v217
  %v283 = vunpack.c.l.b16 %v17
  %v284 = vunpack.c.h.b16 %v17
  %v285 = vunpack.c.l.b16 %v18
  %v286 = vunpack.c.h.b16 %v18
  %v287 = vunpack.c.l.b16 %v19
  %v288 = vunpack.c.h.b16 %v19
  %v289 = vunpack.c.l.b16 %v20
  %v290 = vunpack.c.h.b16 %v20
  %v291 = vunpack.c.l.b16 %v21
  %v292 = vunpack.c.h.b16 %v21
  %v293 = vunpack.c.l.b16 %v22
  %v294 = vunpack.c.h.b16 %v22
  %v295 = vunpack.c.l.b16 %v23
  %v296 = vunpack.c.h.b16 %v23
  %v297 = vunpack.c.l.b16 %v24
  %v298 = vunpack.c.h.b16 %v24
  %v299 = vunpack.c.l.b16 %v25
  %v300 = vunpack.c.h.b16 %v25
  %v301 = vunpack.c.l.b16 %v26
  %v302 = vunpack.c.h.b16 %v26
  %v303 = vunpack.c.l.b16 %v27
  %v304 = vunpack.c.h.b16 %v27
  %v305 = vunpack.c.l.b16 %v28
  %v306 = vunpack.c.h.b16 %v28
  %v307 = vunpack.c.l.b16 %v29
  %v308 = vunpack.c.h.b16 %v29
  %v309 = vunpack.c.l.b16 %v30
  %v310 = vunpack.c.h.b16 %v30
  %v311 = vunpack.c.l.b16 %v31
  %v312 = vunpack.c.h.b16 %v31
  %v313 = vunpack.c.l.b16 %v32
  %v314 = vunpack.c.h.b16 %v32
  %v315 = vunpack.c.l.b16 %v33
  %v316 = vunpack.c.h.b16 %v33
  %v317 = vunpack.c.l.b16 %v34
  %v318 = vunpack.c.h.b16 %v34
  %v319 = vunpack.c.l.b16 %v35
  %v320 = vunpack.c.h.b16 %v35
  %v321 = vunpack.c.l.b16 %v36
  %v322 = vunpack.c.h.b16 %v36
  %v323 = vunpack.c.l.b16 %v37
  %v324 = vunpack.c.h.b16 %v37
  %v325 = vunpack.c.l.b16 %v38
  %v326 = vunpack.c.h.b16 %v38
  %v327 = vunpack.c.l.b16 %v39
  %v328 = vunpack.c.h.b16 %v39
  %v329 = vunpack.c.l.b16 %v40
  %v330 = vunpack.c.h.b16 %v40
  %v331 = vunpack.c.l.b16 %v41
  %v332 = vunpack.c.h.b16 %v41
  %v333 = vunpack.c.l.b16 %v42
  %v334 = vunpack.c.h.b16 %v42
  %v335 = vunpack.c.l.b16 %v43
  %v336 = vunpack.c.h.b16 %v43
  %v337 = vunpack.c.l.b16 %v44
  %v338 = vunpack.c.h.b16 %v44
  %v339 = vunpack.c.l.b16 %v45
  %v340 = vunpack.c.h.b16 %v45
  %v341 = vunpack.c.l.b16 %v46
  %v342 = vunpack.c.h.b16 %v46
  %v343 = vunpack.c.l.b16 %v47
  %v344 = vunpack.c.h.b16 %v47
  %v345 = vunpack.c.l.b16 %v48
  %v346 = vunpack.c.h.b16 %v48
  %v347 = vunpack.c.l.b16 %v49
  %v348 = vunpack.c.h.b16 %v49
  %v349 = vunpack.c.l.b16 %v50
  %v350 = vunpack.c.h.b16 %v50
  %v351 = vunpack.c.l.b16 %v51
  %v352 = vunpack.c.h.b16 %v51
  %v353 = vunpack.c.l.b16 %v52
  %v354 = vunpack.c.h.b16 %v52
  %v355 = vunpack.c.l.b16 %v53
  %v356 = vunpack.c.h.b16 %v53
  %v357 = vunpack.c.l.b16 %v54
  %v358 = vunpack.c.h.b16 %v54
  %v359 = vunpack.c.l.b16 %v55
  %v360 = vunpack.c.h.b16 %v55
  %v361 = vunpack.c.l.b16 %v56
  %v362 = vunpack.c.h.b16 %v56
  %v363 = vunpack.c.l.b16 %v57
  %v364 = vunpack.c.h.b16 %v57
  %v365 = vunpack.c.l.b16 %v58
  %v366 = vunpack.c.h.b16 %v58
  %v367 = vunpack.c.l.b16 %v59
  %v368 = vunpack.c.h.b16 %v59
  %v369 = vunpack.c.l.b16 %v60
  %v370 = vunpack.c.h.b16 %v60
  %v371 = vunpack.c.l.b16 %v61
  %v372 = vunpack.c.h.b16 %v61
  %v373 = vunpack.c.l.b16 %v62
  %v374 = vunpack.c.h.b16 %v62
  %v375 = vunpack.c.l.b16 %v63
  %v376 = vunpack.c.h.b16 %v63
  %v377 = vunpack.c.l.b16 %v64
  %v378 = vunpack.c.h.b16 %v64
  %v379 = vunpack.c.l.b16 %v65
  %v380 = vunpack.c.h.b16 %v65
  %v381 = vunpack.c.l.b16 %v66
  %v382 = vunpack.c.h.b16 %v66
  %v383 = vunpack.c.l.b16 %v67
  %v384 = vunpack.c.h.b16 %v67
  %v385 = vunpack.c.l.b16 %v68
  %v386 = vunpack.c.h.b16 %v68
  %v387 = vunpack.c.l.b16 %v69
  %v388 = vunpack.c.h.b16 %v69
  %v389 = vunpack.c.l.b16 %v70
  %v390 = vunpack.c.h.b16 %v70
  %v391 = vunpack.c.l.b16 %v71
  %v392 = vunpack.c.h.b16 %v71
  %v393 = vunpack.c.l.b16 %v72
  %v394 = vunpack.c.h.b16 %v72
  %v395 = vunpack.c.l.b16 %v73
  %v396 = vunpack.c.h.b16 %v73
  %v397 = vunpack.c.l.b16 %v74
  %v398 = vunpack.c.h.b16 %v74
  %v399 = vunpack.c.l.b16 %v75
  %v400 = vunpack.c.h.b16 %v75
  %v401 = vunpack.c.l.b16 %v76
  %v402 = vunpack.c.h.b16 %v76
  %v403 = vunpack.c.l.b16 %v77
  %v404 = vunpack.c.h.b16 %v77
  %v405 = vunpack.c.l.b16 %v78
  %v406 = vunpack.c.h.b16 %v78
  %v407 = vunpack.c.l.b16 %v79
  %v408 = vunpack.c.h.b16 %v79
  %v409 = vunpack.c.l.b16 %v80
  %v410 = vunpack.c.h.b16 %v80
  %v411 = vpack.c.b16 %v291, %v283
  %v412 = vpack.c.b16 %v292, %v284
  %v413 = vpack.c.b16 %v293, %v285
  %v414 = vpack.c.b16 %v294, %v286
  %v415 = vpack.c.b16 %v295, %v287
  %v416 = vpack.c.b16 %v296, %v288
  %v417 = vpack.c.b16 %v297, %v289
  %v418 = vpack.c.b16 %v298, %v290
  %v419 = vpack.c.b16 %v307, %v299
  %v420 = vpack.c.b16 %v308, %v300
  %v421 = vpack.c.b16 %v309, %v301
  %v422 = vpack.c.b16 %v310, %v302
  %v423 = vpack.c.b16 %v311, %v303
  %v424 = vpack.c.b16 %v312, %v304
  %v425 = vpack.c.b16 %v313, %v305
  %v426 = vpack.c.b16 %v314, %v306
  %v427 = vpack.c.b16 %v323, %v315
  %v428 = vpack.c.b16 %v324, %v316
  %v429 = vpack.c.b16 %v325, %v317
  %v430 = vpack.c.b16 %v326, %v318
  %v431 = vpack.c.b16 %v327, %v319
  %v432 = vpack.c.b16 %v328, %v320
  %v433 = vpack.c.b16 %v329, %v321
  %v434 = vpack.c.b16 %v330, %v322
  %v435 = vpack.c.b16 %v339, %v331
  %v436 = vpack.c.b16 %v340, %v332
  %v437 = vpack.c.b16 %v341, %v333
  %v438 = vpack.c.b16 %v342, %v334
  %v439 = vpack.c.b16 %v343, %v335
  %v440 = vpack.c.b16 %v344, %v336
  %v441 = vpack.c.b16 %v345, %v337
  %v442 = vpack.c.b16 %v346, %v338
  %v443 = vpack.c.b16 %v355, %v347
  %v444 = vpack.c.b16 %v356, %v348
  %v445 = vpack.c.b16 %v357, %v349
  %v446 = vpack.c.b16 %v358, %v350
  %v447 = vpack.c.b16 %v359, %v351
  %v448 = vpack.c.b16 %v360, %v352
  %v449 = vpack.c.b16 %v361, %v353
  %v450 = vpack.c.b16 %v362, %v354
  %v451 = vpack.c.b16 %v371, %v363
  %v452 = vpack.c.b16 %v372, %v364
  %v453 = vpack.c.b16 %v373, %v365
  %v454 = vpack.c.b16 %v374, %v366
  %v455 = vpack.c.b16 %v375, %v367
  %v456 = vpack.c.b16 %v376, %v368
  %v457 = vpack.c.b16 %v377, %v369
  %v458 = vpack.c.b16 %v378, %v370
  %v459 = vpack.c.b16 %v387, %v379
  %v460 = vpack.c.b16 %v388, %v380
  %v461 = vpack.c.b16 %v389, %v381
  %v462 = vpack.c.b16 %v390, %v382
  %v463 = vpack.c.b16 %v391, %v383
  %v464 = vpack.c.b16 %v392, %v384
  %v465 = vpack.c.b16 %v393, %v385
  %v466 = vpack.c.b16 %v394, %v386
  %v467 = vpack.c.b16 %v403, %v395
  %v468 = vpack.c.b16 %v404, %v396
  %v469 = vpack.c.b16 %v405, %v397
  %v470 = vpack.c.b16 %v406, %v398
  %v471 = vpack.c.b16 %v407, %v399
  %v472 = vpack.c.b16 %v408, %v400
  %v473 = vpack.c.b16 %v409, %v401
  %v474 = vpack.c.b16 %v410, %v402
  %v667 = vunpack.c.l.b16 %v81
  %v668 = vunpack.c.h.b16 %v81
  %v669 = vunpack.c.l.b16 %v82
  %v670 = vunpack.c.h.b16 %v82
  %v671 = vunpack.c.l.b16 %v83
  %v672 = vunpack.c.h.b16 %v83
  %v673 = vunpack.c.l.b16 %v84
  %v674 = vunpack.c.h.b16 %v84
  %v675 = vunpack.c.l.b16 %v85
  %v676 = vunpack.c.h.b16 %v85
  %v677 = vunpack.c.l.b16 %v86
  %v678 = vunpack.c.h.b16 %v86
  %v679 = vunpack.c.l.b16 %v87
  %v680 = vunpack.c.h.b16 %v87
  %v681 = vunpack.c.l.b16 %v88
  %v682 = vunpack.c.h.b16 %v88
  %v683 = vunpack.c.l.b16 %v89
  %v684 = vunpack.c.h.b16 %v89
  %v685 = vunpack.c.l.b16 %v90
  %v686 = vunpack.c.h.b16 %v90
  %v687 = vunpack.c.l.b16 %v91
  %v688 = vunpack.c.h.b16 %v91
  %v689 = vunpack.c.l.b16 %v92
  %v690 = vunpack.c.h.b16 %v92
  %v691 = vunpack.c.l.b16 %v93
  %v692 = vunpack.c.h.b16 %v93
  %v693 = vunpack.c.l.b16 %v94
  %v694 = vunpack.c.h.b16 %v94
  %v695 = vunpack.c.l.b16 %v95
  %v696 = vunpack.c.h.b16 %v95
  %v697 = vunpack.c.l.b16 %v96
  %v698 = vunpack.c.h.b16 %v96
  %v699 = vunpack.c.l.b16 %v97
  %v700 = vunpack.c.h.b16 %v97
  %v701 = vunpack.c.l.b16 %v98
  %v702 = vunpack.c.h.b16 %v98
  %v703 = vunpack.c.l.b16 %v99
  %v704 = vunpack.c.h.b16 %v99
  %v705 = vunpack.c.l.b16 %v100
  %v706 = vunpack.c.h.b16 %v100
  %v707 = vunpack.c.l.b16 %v101
  %v708 = vunpack.c.h.b16 %v101
  %v709 = vunpack.c.l.b16 %v102
  %v710 = vunpack.c.h.b16 %v102
  %v711 = vunpack.c.l.b16 %v103
  %v712 = vunpack.c.h.b16 %v103
  %v713 = vunpack.c.l.b16 %v104
  %v714 = vunpack.c.h.b16 %v104
  %v715 = vunpack.c.l.b16 %v105
  %v716 = vunpack.c.h.b16 %v105
  %v717 = vunpack.c.l.b16 %v106
  %v718 = vunpack.c.h.b16 %v106
  %v719 = vunpack.c.l.b16 %v107
  %v720 = vunpack.c.h.b16 %v107
  %v721 = vunpack.c.l.b16 %v108
  %v722 = vunpack.c.h.b16 %v108
  %v723 = vunpack.c.l.b16 %v109
  %v724 = vunpack.c.h.b16 %v109
  %v725 = vunpack.c.l.b16 %v110
  %v726 = vunpack.c.h.b16 %v110
  %v727 = vunpack.c.l.b16 %v111
  %v728 = vunpack.c.h.b16 %v111
  %v729 = vunpack.c.l.b16 %v112
  %v730 = vunpack.c.h.b16 %v112
  %v731 = vunpack.c.l.b16 %v113
  %v732 = vunpack.c.h.b16 %v113
  %v733 = vunpack.c.l.b16 %v114
  %v734 = vunpack.c.h.b16 %v114
  %v735 = vunpack.c.l.b16 %v115
  %v736 = vunpack.c.h.b16 %v115
  %v737 = vunpack.c.l.b16 %v116
  %v738 = vunpack.c.h.b16 %v116
  %v739 = vunpack.c.l.b16 %v117
  %v740 = vunpack.c.h.b16 %v117
  %v741 = vunpack.c.l.b16 %v118
  %v742 = vunpack.c.h.b16 %v118
  %v743 = vunpack.c.l.b16 %v119
  %v744 = vunpack.c.h.b16 %v119
  %v745 = vunpack.c.l.b16 %v120
  %v746 = vunpack.c.h.b16 %v120
  %v747 = vunpack.c.l.b16 %v121
  %v748 = vunpack.c.h.b16 %v121
  %v749 = vunpack.c.l.b16 %v122
  %v750 = vunpack.c.h.b16 %v122
  %v751 = vunpack.c.l.b16 %v123
  %v752 = vunpack.c.h.b16 %v123
  %v753 = vunpack.c.l.b16 %v124
  %v754 = vunpack.c.h.b16 %v124
  %v755 = vunpack.c.l.b16 %v125
  %v756 = vunpack.c.h.b16 %v125
  %v757 = vunpack.c.l.b16 %v126
  %v758 = vunpack.c.h.b16 %v126
  %v759 = vunpack.c.l.b16 %v127
  %v760 = vunpack.c.h.b16 %v127
  %v761 = vunpack.c.l.b16 %v128
  %v762 = vunpack.c.h.b16 %v128
  %v763 = vunpack.c.l.b16 %v129
  %v764 = vunpack.c.h.b16 %v129
  %v765 = vunpack.c.l.b16 %v130
  %v766 = vunpack.c.h.b16 %v130
  %v767 = vunpack.c.l.b16 %v131
  %v768 = vunpack.c.h.b16 %v131
  %v769 = vunpack.c.l.b16 %v132
  %v770 = vunpack.c.h.b16 %v132
  %v771 = vunpack.c.l.b16 %v133
  %v772 = vunpack.c.h.b16 %v133
  %v773 = vunpack.c.l.b16 %v134
  %v774 = vunpack.c.h.b16 %v134
  %v775 = vunpack.c.l.b16 %v135
  %v776 = vunpack.c.h.b16 %v135
  %v777 = vunpack.c.l.b16 %v136
  %v778 = vunpack.c.h.b16 %v136
  %v779 = vunpack.c.l.b16 %v137
  %v780 = vunpack.c.h.b16 %v137
  %v781 = vunpack.c.l.b16 %v138
  %v782 = vunpack.c.h.b16 %v138
  %v783 = vunpack.c.l.b16 %v139
  %v784 = vunpack.c.h.b16 %v139
  %v785 = vunpack.c.l.b16 %v140
  %v786 = vunpack.c.h.b16 %v140
  %v787 = vunpack.c.l.b16 %v141
  %v788 = vunpack.c.h.b16 %v141
  %v789 = vunpack.c.l.b16 %v142
  %v790 = vunpack.c.h.b16 %v142
  %v791 = vunpack.c.l.b16 %v143
  %v792 = vunpack.c.h.b16 %v143
  %v793 = vunpack.c.l.b16 %v144
  %v794 = vunpack.c.h.b16 %v144
  %v795 = vunpack.c.l.b16 %v145
  %v796 = vunpack.c.h.b16 %v145
  %v797 = vunpack.c.l.b16 %v146
  %v798 = vunpack.c.h.b16 %v146
  %v799 = vunpack.c.l.b16 %v147
  %v800 = vunpack.c.h.b16 %v147
  %v801 = vunpack.c.l.b16 %v148
  %v802 = vunpack.c.h.b16 %v148
  %v803 = vunpack.c.l.b16 %v149
  %v804 = vunpack.c.h.b16 %v149
  %v805 = vunpack.c.l.b16 %v150
  %v806 = vunpack.c.h.b16 %v150
  %v807 = vunpack.c.l.b16 %v151
  %v808 = vunpack.c.h.b16 %v151
  %v809 = vunpack.c.l.b16 %v152
  %v810 = vunpack.c.h.b16 %v152
  %v811 = vunpack.c.l.b16 %v153
  %v812 = vunpack.c.h.b16 %v153
  %v813 = vunpack.c.l.b16 %v154
  %v814 = vunpack.c.h.b16 %v154
  %v815 = vunpack.c.l.b16 %v155
  %v816 = vunpack.c.h.b16 %v155
  %v817 = vunpack.c.l.b16 %v156
  %v818 = vunpack.c.h.b16 %v156
  %v819 = vunpack.c.l.b16 %v157
  %v820 = vunpack.c.h.b16 %v157
  %v821 = vunpack.c.l.b16 %v158
  %v822 = vunpack.c.h.b16 %v158
  %v823 = vunpack.c.l.b16 %v159
  %v824 = vunpack.c.h.b16 %v159
  %v825 = vunpack.c.l.b16 %v160
  %v826 = vunpack.c.h.b16 %v160
  %v827 = vunpack.c.l.b16 %v161
  %v828 = vunpack.c.h.b16 %v161
  %v829 = vunpack.c.l.b16 %v162
  %v830 = vunpack.c.h.b16 %v162
  %v831 = vunpack.c.l.b16 %v163
  %v832 = vunpack.c.h.b16 %v163
  %v833 = vunpack.c.l.b16 %v164
  %v834 = vunpack.c.h.b16 %v164
  %v835 = vunpack.c.l.b16 %v165
  %v836 = vunpack.c.h.b16 %v165
  %v837 = vunpack.c.l.b16 %v166
  %v838 = vunpack.c.h.b16 %v166
  %v839 = vunpack.c.l.b16 %v167
  %v840 = vunpack.c.h.b16 %v167
  %v841 = vunpack.c.l.b16 %v168
  %v842 = vunpack.c.h.b16 %v168
  %v843 = vunpack.c.l.b16 %v169
  %v844 = vunpack.c.h.b16 %v169
  %v845 = vunpack.c.l.b16 %v170
  %v846 = vunpack.c.h.b16 %v170
  %v847 = vunpack.c.l.b16 %v171
  %v848 = vunpack.c.h.b16 %v171
  %v849 = vunpack.c.l.b16 %v172
  %v850 = vunpack.c.h.b16 %v172
  %v851 = vunpack.c.l.b16 %v173
  %v852 = vunpack.c.h.b16 %v173
  %v853 = vunpack.c.l.b16 %v174
  %v854 = vunpack.c.h.b16 %v174
  %v855 = vunpack.c.l.b16 %v175
  %v856 = vunpack.c.h.b16 %v175
  %v857 = vunpack.c.l.b16 %v176
  %v858 = vunpack.c.h.b16 %v176
  %v859 = vunpack.c.l.b16 %v177
  %v860 = vunpack.c.h.b16 %v177
  %v861 = vunpack.c.l.b16 %v178
  %v862 = vunpack.c.h.b16 %v178
  %v863 = vunpack.c.l.b16 %v179
  %v864 = vunpack.c.h.b16 %v179
  %v865 = vunpack.c.l.b16 %v180
  %v866 = vunpack.c.h.b16 %v180
  %v867 = vunpack.c.l.b16 %v181
  %v868 = vunpack.c.h.b16 %v181
  %v869 = vunpack.c.l.b16 %v182
  %v870 = vunpack.c.h.b16 %v182
  %v871 = vunpack.c.l.b16 %v183
  %v872 = vunpack.c.h.b16 %v183
  %v873 = vunpack.c.l.b16 %v184
  %v874 = vunpack.c.h.b16 %v184
  %v875 = vunpack.c.l.b16 %v185
  %v876 = vunpack.c.h.b16 %v185
  %v877 = vunpack.c.l.b16 %v186
  %v878 = vunpack.c.h.b16 %v186
  %v879 = vunpack.c.l.b16 %v187
  %v880 = vunpack.c.h.b16 %v187
  %v881 = vunpack.c.l.b16 %v188
  %v882 = vunpack.c.h.b16 %v188
  %v883 = vunpack.c.l.b16 %v189
  %v884 = vunpack.c.h.b16 %v189
  %v885 = vunpack.c.l.b16 %v190
  %v886 = vunpack.c.h.b16 %v190
  %v887 = vunpack.c.l.b16 %v191
  %v888 = vunpack.c.h.b16 %v191
  %v889 = vunpack.c.l.b16 %v192
  %v890 = vunpack.c.h.b16 %v192
  %v891 = vunpack.c.l.b16 %v193
  %v892 = vunpack.c.h.b16 %v193
  %v893 = vunpack.c.l.b16 %v194
  %v894 = vunpack.c.h.b16 %v194
  %v895 = vunpack.c.l.b16 %v195
  %v896 = vunpack.c.h.b16 %v195
  %v897 = vunpack.c.l.b16 %v196
  %v898 = vunpack.c.h.b16 %v196
  %v899 = vunpack.c.l.b16 %v197
  %v900 = vunpack.c.h.b16 %v197
  %v901 = vunpack.c.l.b16 %v198
  %v902 = vunpack.c.h.b16 %v198
  %v903 = vunpack.c.l.b16 %v199
  %v904 = vunpack.c.h.b16 %v199
  %v905 = vunpack.c.l.b16 %v200
  %v906 = vunpack.c.h.b16 %v200
  %v907 = vunpack.c.l.b16 %v201
  %v908 = vunpack.c.h.b16 %v201
  %v909 = vunpack.c.l.b16 %v202
  %v910 = vunpack.c.h.b16 %v202
  %v911 = vunpack.c.l.b16 %v203
  %v912 = vunpack.c.h.b16 %v203
  %v913 = vunpack.c.l.b16 %v204
  %v914 = vunpack.c.h.b16 %v204
  %v915 = vunpack.c.l.b16 %v205
  %v916 = vunpack.c.h.b16 %v205
  %v917 = vunpack.c.l.b16 %v206
  %v918 = vunpack.c.h.b16 %v206
  %v919 = vunpack.c.l.b16 %v207
  %v920 = vunpack.c.h.b16 %v207
  %v921 = vunpack.c.l.b16 %v208
  %v922 = vunpack.c.h.b16 %v208
  %v923 = vpack.c.b16 %v669, %v667
  %v924 = vpack.c.b16 %v670, %v668
  %v925 = vpack.c.b16 %v673, %v671
  %v926 = vpack.c.b16 %v674, %v672
  %v927 = vpack.c.b16 %v677, %v675
  %v928 = vpack.c.b16 %v678, %v676
  %v929 = vpack.c.b16 %v681, %v679
  %v930 = vpack.c.b16 %v682, %v680
  %v931 = vpack.c.b16 %v685, %v683
  %v932 = vpack.c.b16 %v686, %v684
  %v933 = vpack.c.b16 %v689, %v687
  %v934 = vpack.c.b16 %v690, %v688
  %v935 = vpack.c.b16 %v693, %v691
  %v936 = vpack.c.b16 %v694, %v692
  %v937 = vpack.c.b16 %v697, %v695
  %v938 = vpack.c.b16 %v698, %v696
  %v939 = vpack.c.b16 %v701, %v699
  %v940 = vpack.c.b16 %v702, %v700
  %v941 = vpack.c.b16 %v705, %v703
  %v942 = vpack.c.b16 %v706, %v704
  %v943 = vpack.c.b16 %v709, %v707
  %v944 = vpack.c.b16 %v710, %v708
  %v945 = vpack.c.b16 %v713, %v711
  %v946 = vpack.c.b16 %v714, %v712
  %v947 = vpack.c.b16 %v717, %v715
  %v948 = vpack.c.b16 %v718, %v716
  %v949 = vpack.c.b16 %v721, %v719
  %v950 = vpack.c.b16 %v722, %v720
  %v951 = vpack.c.b16 %v725, %v723
  %v952 = vpack.c.b16 %v726, %v724
  %v953 = vpack.c.b16 %v729, %v727
  %v954 = vpack.c.b16 %v730, %v728
  %v955 = vpack.c.b16 %v733, %v731
  %v956 = vpack.c.b16 %v734, %v732
  %v957 = vpack.c.b16 %v737, %v735
  %v958 = vpack.c.b16 %v738, %v736
  %v959 = vpack.c.b16 %v741, %v739
  %v960 = vpack.c.b16 %v742, %v740
  %v961 = vpack.c.b16 %v745, %v743
  %v962 = vpack.c.b16 %v746, %v744
  %v963 = vpack.c.b16 %v749, %v747
  %v964 = vpack.c.b16 %v750, %v748
  %v965 = vpack.c.b16 %v753, %v751
  %v966 = vpack.c.b16 %v754, %v752
  %v967 = vpack.c.b16 %v757, %v755
  %v968 = vpack.c.b16 %v758, %v756
  %v969 = vpack.c.b16 %v761, %v759
  %v970 = vpack.c.b16 %v762, %v760
  %v971 = vpack.c.b16 %v765, %v763
  %v972 = vpack.c.b16 %v766, %v764
  %v973 = vpack.c.b16 %v769, %v767
  %v974 = vpack.c.b16 %v770, %v768
  %v975 = vpack.c.b16 %v773, %v771
  %v976 = vpack.c.b16 %v774, %v772
  %v977 = vpack.c.b16 %v777, %v775
  %v978 = vpack.c.b16 %v778, %v776
  %v979 = vpack.c.b16 %v781, %v779
  %v980 = vpack.c.b16 %v782, %v780
  %v981 = vpack.c.b16 %v785, %v783
  %v982 = vpack.c.b16 %v786, %v784
  %v983 = vpack.c.b16 %v789, %v787
  %v984 = vpack.c.b16 %v790, %v788
  %v985 = vpack.c.b16 %v793, %v791
  %v986 = vpack.c.b16 %v794, %v792
  %v987 = vpack.c.b16 %v797, %v795
  %v988 = vpack.c.b16 %v798, %v796
  %v989 = vpack.c.b16 %v801, %v799
  %v990 = vpack.c.b16 %v802, %v800
  %v991 = vpack.c.b16 %v805, %v803
  %v992 = vpack.c.b16 %v806, %v804
  %v993 = vpack.c.b16 %v809, %v807
  %v994 = vpack.c.b16 %v810, %v808
  %v995 = vpack.c.b16 %v813, %v811
  %v996 = vpack.c.b16 %v814, %v812
  %v997 = vpack.c.b16 %v817, %v815
  %v998 = vpack.c.b16 %v818, %v816
  %v999 = vpack.c.b16 %v821, %v819
  %v1000 = vpack.c.b16 %v822, %v820
  %v1001 = vpack.c.b16 %v825, %v823
  %v1002 = vpack.c.b16 %v826, %v824
  %v1003 = vpack.c.b16 %v829, %v827
  %v1004 = vpack.c.b16 %v830, %v828
  %v1005 = vpack.c.b16 %v833, %v831
  %v1006 = vpack.c.b16 %v834, %v832
  %v1007 = vpack.c.b16 %v837, %v835
  %v1008 = vpack.c.b16 %v838, %v836
  %v1009 = vpack.c.b16 %v841, %v839
  %v1010 = vpack.c.b16 %v842, %v840
  %v1011 = vpack.c.b16 %v845, %v843
  %v1012 = vpack.c.b16 %v846, %v844
  %v1013 = vpack.c.b16 %v849, %v847
  %v1014 = vpack.c.b16 %v850, %v848
  %v1015 = vpack.c.b16 %v853, %v851
  %v1016 = vpack.c.b16 %v854, %v852
  %v1017 = vpack.c.b16 %v857, %v855
  %v1018 = vpack.c.b16 %v858, %v856
  %v1019 = vpack.c.b16 %v861, %v859
  %v1020 = vpack.c.b16 %v862, %v860
  %v1021 = vpack.c.b16 %v865, %v863
  %v1022 = vpack.c.b16 %v866, %v864
  %v1023 = vpack.c.b16 %v869, %v867
  %v1024 = vpack.c.b16 %v870, %v868
  %v1025 = vpack.c.b16 %v873, %v871
  %v1026 = vpack.c.b16 %v874, %v872
  %v1027 = vpack.c.b16 %v877, %v875
  %v1028 = vpack.c.b16 %v878, %v876
  %v1029 = vpack.c.b16 %v881, %v879
  %v1030 = vpack.c.b16 %v882, %v880
  %v1031 = vpack.c.b16 %v885, %v883
  %v1032 = vpack.c.b16 %v886, %v884
  %v1033 = vpack.c.b16 %v889, %v887
  %v1034 = vpack.c.b16 %v890, %v888
  %v1035 = vpack.c.b16 %v893, %v891
  %v1036 = vpack.c.b16 %v894, %v892
  %v1037 = vpack.c.b16 %v897, %v895
  %v1038 = vpack.c.b16 %v898, %v896
  %v1039 = vpack.c.b16 %v901, %v899
  %v1040 = vpack.c.b16 %v902, %v900
  %v1041 = vpack.c.b16 %v905, %v903
  %v1042 = vpack.c.b16 %v906, %v904
  %v1043 = vpack.c.b16 %v909, %v907
  %v1044 = vpack.c.b16 %v910, %v908
  %v1045 = vpack.c.b16 %v913, %v911
  %v1046 = vpack.c.b16 %v914, %v912
  %v1047 = vpack.c.b16 %v917, %v915
  %v1048 = vpack.c.b16 %v918, %v916
  %v1049 = vpack.c.b16 %v921, %v919
  %v1050 = vpack.c.b16 %v922, %v920
  %1179 = vmatprep.subr.bf16.mxu0 %v938
  %1180 = vmatpush1.bf16.msra.mxu0 %v937
  %1181 = vmatprep.subr.bf16.mxu0 %v936
  %1182 = vmatpush1.bf16.msra.mxu0 %v935
  %1183 = vmatprep.subr.bf16.mxu0 %v934
  %1184 = vmatpush1.bf16.msra.mxu0 %v933
  %1185 = vmatprep.subr.bf16.mxu0 %v932
  %1186 = vmatpush1.bf16.msra.mxu0 %v931
  %1187 = vmatprep.subr.bf16.mxu0 %v930
  %1188 = vmatpush1.bf16.msra.mxu0 %v929
  %1189 = vmatprep.subr.bf16.mxu0 %v928
  %1190 = vmatpush1.bf16.msra.mxu0 %v927
  %1191 = vmatprep.subr.bf16.mxu0 %v926
  %1192 = vmatpush1.bf16.msra.mxu0 %v925
  %1193 = vmatprep.subr.bf16.mxu0 %v924
  %1194 = vmatpush1.bf16.msra.mxu0 %v923
  %1195 = vmatprep.subr.bf16.mxu0 %v954
  %1196 = vmatpush2.bf16.msra.mxu0 %v953
  %1197 = vmatprep.subr.bf16.mxu0 %v952
  %1198 = vmatpush2.bf16.msra.mxu0 %v951
  %1199 = vmatprep.subr.bf16.mxu0 %v950
  %1200 = vmatpush2.bf16.msra.mxu0 %v949
  %1201 = vmatprep.subr.bf16.mxu0 %v948
  %1202 = vmatpush2.bf16.msra.mxu0 %v947
  %1203 = vmatprep.subr.bf16.mxu0 %v946
  %1204 = vmatpush2.bf16.msra.mxu0 %v945
  %1205 = vmatprep.subr.bf16.mxu0 %v944
  %1206 = vmatpush2.bf16.msra.mxu0 %v943
  %1207 = vmatprep.subr.bf16.mxu0 %v942
  %1208 = vmatpush2.bf16.msra.mxu0 %v941
  %1209 = vmatprep.subr.bf16.mxu0 %v940
  %1210 = vmatpush2.bf16.msra.mxu0 %v939
  %1211 = vmatprep.mubr.bf16.mxu0 %v412
  %1212 = vmatmul.mubr.bf16.gmra.mxu0 %v411
  %v1213 = vpop.f32.mrf.mxu0
  %v1214 = vadd.f32 %v214, %v1213
  %v1215 = vpop.f32.mrf.mxu0
  %v1216 = vadd.f32 %v218, %v1215
  %v1217 = vpop.f32.mrf.mxu0
  %v1218 = vadd.f32 %v214, %v1217
  %v1219 = vpop.f32.mrf.mxu0
  %v1220 = vadd.f32 %v218, %v1219
  %1221 = vmatprep.mubr.bf16.mxu0 %v420
  %1222 = vmatmul.mubr.bf16.gmra.mxu0 %v419
  %v1223 = vpop.f32.mrf.mxu0
  %v1224 = vadd.f32 %v214, %v1223
  %v1225 = vpop.f32.mrf.mxu0
  %v1226 = vadd.f32 %v218, %v1225
  %v1227 = vpop.f32.mrf.mxu0
  %v1228 = vadd.f32 %v214, %v1227
  %v1229 = vpop.f32.mrf.mxu0
  %v1230 = vadd.f32 %v218, %v1229
  %1231 = vmatprep.mubr.bf16.mxu0 %v428
  %1232 = vmatmul.mubr.bf16.gmra.mxu0 %v427
  %v1233 = vpop.f32.mrf.mxu0
  %v1234 = vadd.f32 %v214, %v1233
  %v1235 = vpop.f32.mrf.mxu0
  %v1236 = vadd.f32 %v218, %v1235
  %v1237 = vpop.f32.mrf.mxu0
  %v1238 = vadd.f32 %v214, %v1237
  %v1239 = vpop.f32.mrf.mxu0
  %v1240 = vadd.f32 %v218, %v1239
  %1241 = vmatprep.mubr.bf16.mxu0 %v436
  %1242 = vmatmul.mubr.bf16.gmra.mxu0 %v435
  %v1243 = vpop.f32.mrf.mxu0
  %v1244 = vadd.f32 %v214, %v1243
  %v1245 = vpop.f32.mrf.mxu0
  %v1246 = vadd.f32 %v218, %v1245
  %v1247 = vpop.f32.mrf.mxu0
  %v1248 = vadd.f32 %v214, %v1247
  %v1249 = vpop.f32.mrf.mxu0
  %v1250 = vadd.f32 %v218, %v1249
  %1251 = vmatprep.mubr.bf16.mxu0 %v444
  %1252 = vmatmul.mubr.bf16.gmra.mxu0 %v443
  %v1253 = vpop.f32.mrf.mxu0
  %v1254 = vadd.f32 %v214, %v1253
  %v1255 = vpop.f32.mrf.mxu0
  %v1256 = vadd.f32 %v218, %v1255
  %v1257 = vpop.f32.mrf.mxu0
  %v1258 = vadd.f32 %v214, %v1257
  %v1259 = vpop.f32.mrf.mxu0
  %v1260 = vadd.f32 %v218, %v1259
  %1261 = vmatprep.mubr.bf16.mxu0 %v452
  %1262 = vmatmul.mubr.bf16.gmra.mxu0 %v451
  %v1263 = vpop.f32.mrf.mxu0
  %v1264 = vadd.f32 %v214, %v1263
  %v1265 = vpop.f32.mrf.mxu0
  %v1266 = vadd.f32 %v218, %v1265
  %v1267 = vpop.f32.mrf.mxu0
  %v1268 = vadd.f32 %v214, %v1267
  %v1269 = vpop.f32.mrf.mxu0
  %v1270 = vadd.f32 %v218, %v1269
  %1271 = vmatprep.mubr.bf16.mxu0 %v460
  %1272 = vmatmul.mubr.bf16.gmra.mxu0 %v459
  %v1273 = vpop.f32.mrf.mxu0
  %v1274 = vadd.f32 %v214, %v1273
  %v1275 = vpop.f32.mrf.mxu0
  %v1276 = vadd.f32 %v218, %v1275
  %v1277 = vpop.f32.mrf.mxu0
  %v1278 = vadd.f32 %v214, %v1277
  %v1279 = vpop.f32.mrf.mxu0
  %v1280 = vadd.f32 %v218, %v1279
  %1281 = vmatprep.mubr.bf16.mxu0 %v468
  %1282 = vmatmul.mubr.bf16.gmra.mxu0 %v467
  %v1283 = vpop.f32.mrf.mxu0
  %v1284 = vadd.f32 %v214, %v1283
  %v1285 = vpop.f32.mrf.mxu0
  %v1286 = vadd.f32 %v218, %v1285
  %v1287 = vpop.f32.mrf.mxu0
  %v1288 = vadd.f32 %v214, %v1287
  %v1289 = vpop.f32.mrf.mxu0
  %v1290 = vadd.f32 %v218, %v1289
  %1291 = vdwg.mxu0
  %1292 = vmatprep.subr.bf16.mxu0 %v970
  %1293 = vmatpush1.bf16.msra.mxu0 %v969
  %1294 = vmatprep.subr.bf16.mxu0 %v968
  %1295 = vmatpush1.bf16.msra.mxu0 %v967
  %1296 = vmatprep.subr.bf16.mxu0 %v966
  %1297 = vmatpush1.bf16.msra.mxu0 %v965
  %1298 = vmatprep.subr.bf16.mxu0 %v964
  %1299 = vmatpush1.bf16.msra.mxu0 %v963
  %1300 = vmatprep.subr.bf16.mxu0 %v962
  %1301 = vmatpush1.bf16.msra.mxu0 %v961
  %1302 = vmatprep.subr.bf16.mxu0 %v960
  %1303 = vmatpush1.bf16.msra.mxu0 %v959
  %1304 = vmatprep.subr.bf16.mxu0 %v958
  %1305 = vmatpush1.bf16.msra.mxu0 %v957
  %1306 = vmatprep.subr.bf16.mxu0 %v956
  %1307 = vmatpush1.bf16.msra.mxu0 %v955
  %1308 = vmatprep.subr.bf16.mxu0 %v986
  %1309 = vmatpush2.bf16.msra.mxu0 %v985
  %1310 = vmatprep.subr.bf16.mxu0 %v984
  %1311 = vmatpush2.bf16.msra.mxu0 %v983
  %1312 = vmatprep.subr.bf16.mxu0 %v982
  %1313 = vmatpush2.bf16.msra.mxu0 %v981
  %1314 = vmatprep.subr.bf16.mxu0 %v980
  %1315 = vmatpush2.bf16.msra.mxu0 %v979
  %1316 = vmatprep.subr.bf16.mxu0 %v978
  %1317 = vmatpush2.bf16.msra.mxu0 %v977
  %1318 = vmatprep.subr.bf16.mxu0 %v976
  %1319 = vmatpush2.bf16.msra.mxu0 %v975
  %1320 = vmatprep.subr.bf16.mxu0 %v974
  %1321 = vmatpush2.bf16.msra.mxu0 %v973
  %1322 = vmatprep.subr.bf16.mxu0 %v972
  %1323 = vmatpush2.bf16.msra.mxu0 %v971
  %1324 = vmatprep.mubr.bf16.mxu0 %v414
  %1325 = vmatmul.mubr.bf16.gmra.mxu0 %v413
  %v1326 = vpop.f32.mrf.mxu0
  %v1327 = vadd.f32 %v1214, %v1326
  %v1328 = vpop.f32.mrf.mxu0
  %v1329 = vadd.f32 %v1216, %v1328
  %v1330 = vpop.f32.mrf.mxu0
  %v1331 = vadd.f32 %v1218, %v1330
  %v1332 = vpop.f32.mrf.mxu0
  %v1333 = vadd.f32 %v1220, %v1332
  %1334 = vmatprep.mubr.bf16.mxu0 %v422
  %1335 = vmatmul.mubr.bf16.gmra.mxu0 %v421
  %v1336 = vpop.f32.mrf.mxu0
  %v1337 = vadd.f32 %v1224, %v1336
  %v1338 = vpop.f32.mrf.mxu0
  %v1339 = vadd.f32 %v1226, %v1338
  %v1340 = vpop.f32.mrf.mxu0
  %v1341 = vadd.f32 %v1228, %v1340
  %v1342 = vpop.f32.mrf.mxu0
  %v1343 = vadd.f32 %v1230, %v1342
  %1344 = vmatprep.mubr.bf16.mxu0 %v430
  %1345 = vmatmul.mubr.bf16.gmra.mxu0 %v429
  %v1346 = vpop.f32.mrf.mxu0
  %v1347 = vadd.f32 %v1234, %v1346
  %v1348 = vpop.f32.mrf.mxu0
  %v1349 = vadd.f32 %v1236, %v1348
  %v1350 = vpop.f32.mrf.mxu0
  %v1351 = vadd.f32 %v1238, %v1350
  %v1352 = vpop.f32.mrf.mxu0
  %v1353 = vadd.f32 %v1240, %v1352
  %1354 = vmatprep.mubr.bf16.mxu0 %v438
  %1355 = vmatmul.mubr.bf16.gmra.mxu0 %v437
  %v1356 = vpop.f32.mrf.mxu0
  %v1357 = vadd.f32 %v1244, %v1356
  %v1358 = vpop.f32.mrf.mxu0
  %v1359 = vadd.f32 %v1246, %v1358
  %v1360 = vpop.f32.mrf.mxu0
  %v1361 = vadd.f32 %v1248, %v1360
  %v1362 = vpop.f32.mrf.mxu0
  %v1363 = vadd.f32 %v1250, %v1362
  %1364 = vmatprep.mubr.bf16.mxu0 %v446
  %1365 = vmatmul.mubr.bf16.gmra.mxu0 %v445
  %v1366 = vpop.f32.mrf.mxu0
  %v1367 = vadd.f32 %v1254, %v1366
  %v1368 = vpop.f32.mrf.mxu0
  %v1369 = vadd.f32 %v1256, %v1368
  %v1370 = vpop.f32.mrf.mxu0
  %v1371 = vadd.f32 %v1258, %v1370
  %v1372 = vpop.f32.mrf.mxu0
  %v1373 = vadd.f32 %v1260, %v1372
  %1374 = vmatprep.mubr.bf16.mxu0 %v454
  %1375 = vmatmul.mubr.bf16.gmra.mxu0 %v453
  %v1376 = vpop.f32.mrf.mxu0
  %v1377 = vadd.f32 %v1264, %v1376
  %v1378 = vpop.f32.mrf.mxu0
  %v1379 = vadd.f32 %v1266, %v1378
  %v1380 = vpop.f32.mrf.mxu0
  %v1381 = vadd.f32 %v1268, %v1380
  %v1382 = vpop.f32.mrf.mxu0
  %v1383 = vadd.f32 %v1270, %v1382
  %1384 = vmatprep.mubr.bf16.mxu0 %v462
  %1385 = vmatmul.mubr.bf16.gmra.mxu0 %v461
  %v1386 = vpop.f32.mrf.mxu0
  %v1387 = vadd.f32 %v1274, %v1386
  %v1388 = vpop.f32.mrf.mxu0
  %v1389 = vadd.f32 %v1276, %v1388
  %v1390 = vpop.f32.mrf.mxu0
  %v1391 = vadd.f32 %v1278, %v1390
  %v1392 = vpop.f32.mrf.mxu0
  %v1393 = vadd.f32 %v1280, %v1392
  %1394 = vmatprep.mubr.bf16.mxu0 %v470
  %1395 = vmatmul.mubr.bf16.gmra.mxu0 %v469
  %v1396 = vpop.f32.mrf.mxu0
  %v1397 = vadd.f32 %v1284, %v1396
  %v1398 = vpop.f32.mrf.mxu0
  %v1399 = vadd.f32 %v1286, %v1398
  %v1400 = vpop.f32.mrf.mxu0
  %v1401 = vadd.f32 %v1288, %v1400
  %v1402 = vpop.f32.mrf.mxu0
  %v1403 = vadd.f32 %v1290, %v1402
  %1404 = vdwg.mxu0
  %1405 = vmatprep.subr.bf16.mxu0 %v1002
  %1406 = vmatpush1.bf16.msra.mxu0 %v1001
  %1407 = vmatprep.subr.bf16.mxu0 %v1000
  %1408 = vmatpush1.bf16.msra.mxu0 %v999
  %1409 = vmatprep.subr.bf16.mxu0 %v998
  %1410 = vmatpush1.bf16.msra.mxu0 %v997
  %1411 = vmatprep.subr.bf16.mxu0 %v996
  %1412 = vmatpush1.bf16.msra.mxu0 %v995
  %1413 = vmatprep.subr.bf16.mxu0 %v994
  %1414 = vmatpush1.bf16.msra.mxu0 %v993
  %1415 = vmatprep.subr.bf16.mxu0 %v992
  %1416 = vmatpush1.bf16.msra.mxu0 %v991
  %1417 = vmatprep.subr.bf16.mxu0 %v990
  %1418 = vmatpush1.bf16.msra.mxu0 %v989
  %1419 = vmatprep.subr.bf16.mxu0 %v988
  %1420 = vmatpush1.bf16.msra.mxu0 %v987
  %1421 = vmatprep.subr.bf16.mxu0 %v1018
  %1422 = vmatpush2.bf16.msra.mxu0 %v1017
  %1423 = vmatprep.subr.bf16.mxu0 %v1016
  %1424 = vmatpush2.bf16.msra.mxu0 %v1015
  %1425 = vmatprep.subr.bf16.mxu0 %v1014
  %1426 = vmatpush2.bf16.msra.mxu0 %v1013
  %1427 = vmatprep.subr.bf16.mxu0 %v1012
  %1428 = vmatpush2.bf16.msra.mxu0 %v1011
  %1429 = vmatprep.subr.bf16.mxu0 %v1010
  %1430 = vmatpush2.bf16.msra.mxu0 %v1009
  %1431 = vmatprep.subr.bf16.mxu0 %v1008
  %1432 = vmatpush2.bf16.msra.mxu0 %v1007
  %1433 = vmatprep.subr.bf16.mxu0 %v1006
  %1434 = vmatpush2.bf16.msra.mxu0 %v1005
  %1435 = vmatprep.subr.bf16.mxu0 %v1004
  %1436 = vmatpush2.bf16.msra.mxu0 %v1003
  %1437 = vmatprep.mubr.bf16.mxu0 %v416
  %1438 = vmatmul.mubr.bf16.gmra.mxu0 %v415
  %v1439 = vpop.f32.mrf.mxu0
  %v1440 = vadd.f32 %v1327, %v1439
  %v1441 = vpop.f32.mrf.mxu0
  %v1442 = vadd.f32 %v1329, %v1441
  %v1443 = vpop.f32.mrf.mxu0
  %v1444 = vadd.f32 %v1331, %v1443
  %v1445 = vpop.f32.mrf.mxu0
  %v1446 = vadd.f32 %v1333, %v1445
  %1447 = vmatprep.mubr.bf16.mxu0 %v424
  %1448 = vmatmul.mubr.bf16.gmra.mxu0 %v423
  %v1449 = vpop.f32.mrf.mxu0
  %v1450 = vadd.f32 %v1337, %v1449
  %v1451 = vpop.f32.mrf.mxu0
  %v1452 = vadd.f32 %v1339, %v1451
  %v1453 = vpop.f32.mrf.mxu0
  %v1454 = vadd.f32 %v1341, %v1453
  %v1455 = vpop.f32.mrf.mxu0
  %v1456 = vadd.f32 %v1343, %v1455
  %1457 = vmatprep.mubr.bf16.mxu0 %v432
  %1458 = vmatmul.mubr.bf16.gmra.mxu0 %v431
  %v1459 = vpop.f32.mrf.mxu0
  %v1460 = vadd.f32 %v1347, %v1459
  %v1461 = vpop.f32.mrf.mxu0
  %v1462 = vadd.f32 %v1349, %v1461
  %v1463 = vpop.f32.mrf.mxu0
  %v1464 = vadd.f32 %v1351, %v1463
  %v1465 = vpop.f32.mrf.mxu0
  %v1466 = vadd.f32 %v1353, %v1465
  %1467 = vmatprep.mubr.bf16.mxu0 %v440
  %1468 = vmatmul.mubr.bf16.gmra.mxu0 %v439
  %v1469 = vpop.f32.mrf.mxu0
  %v1470 = vadd.f32 %v1357, %v1469
  %v1471 = vpop.f32.mrf.mxu0
  %v1472 = vadd.f32 %v1359, %v1471
  %v1473 = vpop.f32.mrf.mxu0
  %v1474 = vadd.f32 %v1361, %v1473
  %v1475 = vpop.f32.mrf.mxu0
  %v1476 = vadd.f32 %v1363, %v1475
  %1477 = vmatprep.mubr.bf16.mxu0 %v448
  %1478 = vmatmul.mubr.bf16.gmra.mxu0 %v447
  %v1479 = vpop.f32.mrf.mxu0
  %v1480 = vadd.f32 %v1367, %v1479
  %v1481 = vpop.f32.mrf.mxu0
  %v1482 = vadd.f32 %v1369, %v1481
  %v1483 = vpop.f32.mrf.mxu0
  %v1484 = vadd.f32 %v1371, %v1483
  %v1485 = vpop.f32.mrf.mxu0
  %v1486 = vadd.f32 %v1373, %v1485
  %1487 = vmatprep.mubr.bf16.mxu0 %v456
  %1488 = vmatmul.mubr.bf16.gmra.mxu0 %v455
  %v1489 = vpop.f32.mrf.mxu0
  %v1490 = vadd.f32 %v1377, %v1489
  %v1491 = vpop.f32.mrf.mxu0
  %v1492 = vadd.f32 %v1379, %v1491
  %v1493 = vpop.f32.mrf.mxu0
  %v1494 = vadd.f32 %v1381, %v1493
  %v1495 = vpop.f32.mrf.mxu0
  %v1496 = vadd.f32 %v1383, %v1495
  %1497 = vmatprep.mubr.bf16.mxu0 %v464
  %1498 = vmatmul.mubr.bf16.gmra.mxu0 %v463
  %v1499 = vpop.f32.mrf.mxu0
  %v1500 = vadd.f32 %v1387, %v1499
  %v1501 = vpop.f32.mrf.mxu0
  %v1502 = vadd.f32 %v1389, %v1501
  %v1503 = vpop.f32.mrf.mxu0
  %v1504 = vadd.f32 %v1391, %v1503
  %v1505 = vpop.f32.mrf.mxu0
  %v1506 = vadd.f32 %v1393, %v1505
  %1507 = vmatprep.mubr.bf16.mxu0 %v472
  %1508 = vmatmul.mubr.bf16.gmra.mxu0 %v471
  %v1509 = vpop.f32.mrf.mxu0
  %v1510 = vadd.f32 %v1397, %v1509
  %v1511 = vpop.f32.mrf.mxu0
  %v1512 = vadd.f32 %v1399, %v1511
  %v1513 = vpop.f32.mrf.mxu0
  %v1514 = vadd.f32 %v1401, %v1513
  %v1515 = vpop.f32.mrf.mxu0
  %v1516 = vadd.f32 %v1403, %v1515
  %1517 = vdwg.mxu0
  %1518 = vmatprep.subr.bf16.mxu0 %v1034
  %1519 = vmatpush1.bf16.msra.mxu0 %v1033
  %1520 = vmatprep.subr.bf16.mxu0 %v1032
  %1521 = vmatpush1.bf16.msra.mxu0 %v1031
  %1522 = vmatprep.subr.bf16.mxu0 %v1030
  %1523 = vmatpush1.bf16.msra.mxu0 %v1029
  %1524 = vmatprep.subr.bf16.mxu0 %v1028
  %1525 = vmatpush1.bf16.msra.mxu0 %v1027
  %1526 = vmatprep.subr.bf16.mxu0 %v1026
  %1527 = vmatpush1.bf16.msra.mxu0 %v1025
  %1528 = vmatprep.subr.bf16.mxu0 %v1024
  %1529 = vmatpush1.bf16.msra.mxu0 %v1023
  %1530 = vmatprep.subr.bf16.mxu0 %v1022
  %1531 = vmatpush1.bf16.msra.mxu0 %v1021
  %1532 = vmatprep.subr.bf16.mxu0 %v1020
  %1533 = vmatpush1.bf16.msra.mxu0 %v1019
  %1534 = vmatprep.subr.bf16.mxu0 %v1050
  %1535 = vmatpush2.bf16.msra.mxu0 %v1049
  %1536 = vmatprep.subr.bf16.mxu0 %v1048
  %1537 = vmatpush2.bf16.msra.mxu0 %v1047
  %1538 = vmatprep.subr.bf16.mxu0 %v1046
  %1539 = vmatpush2.bf16.msra.mxu0 %v1045
  %1540 = vmatprep.subr.bf16.mxu0 %v1044
  %1541 = vmatpush2.bf16.msra.mxu0 %v1043
  %1542 = vmatprep.subr.bf16.mxu0 %v1042
  %1543 = vmatpush2.bf16.msra.mxu0 %v1041
  %1544 = vmatprep.subr.bf16.mxu0 %v1040
  %1545 = vmatpush2.bf16.msra.mxu0 %v1039
  %1546 = vmatprep.subr.bf16.mxu0 %v1038
  %1547 = vmatpush2.bf16.msra.mxu0 %v1037
  %1548 = vmatprep.subr.bf16.mxu0 %v1036
  %1549 = vmatpush2.bf16.msra.mxu0 %v1035
  %1550 = vmatprep.mubr.bf16.mxu0 %v418
  %1551 = vmatmul.mubr.bf16.gmra.mxu0 %v417
  %v1552 = vpop.f32.mrf.mxu0
  %v1553 = vadd.f32 %v1440, %v1552
  %v1554 = vpop.f32.mrf.mxu0
  %v1555 = vadd.f32 %v1442, %v1554
  %v1556 = vpop.f32.mrf.mxu0
  %v1557 = vadd.f32 %v1444, %v1556
  %v1558 = vpop.f32.mrf.mxu0
  %v1559 = vadd.f32 %v1446, %v1558
  %1560 = vmatprep.mubr.bf16.mxu0 %v426
  %1561 = vmatmul.mubr.bf16.gmra.mxu0 %v425
  %v1562 = vpop.f32.mrf.mxu0
  %v1563 = vadd.f32 %v1450, %v1562
  %v1564 = vpop.f32.mrf.mxu0
  %v1565 = vadd.f32 %v1452, %v1564
  %v1566 = vpop.f32.mrf.mxu0
  %v1567 = vadd.f32 %v1454, %v1566
  %v1568 = vpop.f32.mrf.mxu0
  %v1569 = vadd.f32 %v1456, %v1568
  %1570 = vmatprep.mubr.bf16.mxu0 %v434
  %1571 = vmatmul.mubr.bf16.gmra.mxu0 %v433
  %v1572 = vpop.f32.mrf.mxu0
  %v1573 = vadd.f32 %v1460, %v1572
  %v1574 = vpop.f32.mrf.mxu0
  %v1575 = vadd.f32 %v1462, %v1574
  %v1576 = vpop.f32.mrf.mxu0
  %v1577 = vadd.f32 %v1464, %v1576
  %v1578 = vpop.f32.mrf.mxu0
  %v1579 = vadd.f32 %v1466, %v1578
  %1580 = vmatprep.mubr.bf16.mxu0 %v442
  %1581 = vmatmul.mubr.bf16.gmra.mxu0 %v441
  %v1582 = vpop.f32.mrf.mxu0
  %v1583 = vadd.f32 %v1470, %v1582
  %v1584 = vpop.f32.mrf.mxu0
  %v1585 = vadd.f32 %v1472, %v1584
  %v1586 = vpop.f32.mrf.mxu0
  %v1587 = vadd.f32 %v1474, %v1586
  %v1588 = vpop.f32.mrf.mxu0
  %v1589 = vadd.f32 %v1476, %v1588
  %1590 = vmatprep.mubr.bf16.mxu0 %v450
  %1591 = vmatmul.mubr.bf16.gmra.mxu0 %v449
  %v1592 = vpop.f32.mrf.mxu0
  %v1593 = vadd.f32 %v1480, %v1592
  %v1594 = vpop.f32.mrf.mxu0
  %v1595 = vadd.f32 %v1482, %v1594
  %v1596 = vpop.f32.mrf.mxu0
  %v1597 = vadd.f32 %v1484, %v1596
  %v1598 = vpop.f32.mrf.mxu0
  %v1599 = vadd.f32 %v1486, %v1598
  %1600 = vmatprep.mubr.bf16.mxu0 %v458
  %1601 = vmatmul.mubr.bf16.gmra.mxu0 %v457
  %v1602 = vpop.f32.mrf.mxu0
  %v1603 = vadd.f32 %v1490, %v1602
  %v1604 = vpop.f32.mrf.mxu0
  %v1605 = vadd.f32 %v1492, %v1604
  %v1606 = vpop.f32.mrf.mxu0
  %v1607 = vadd.f32 %v1494, %v1606
  %v1608 = vpop.f32.mrf.mxu0
  %v1609 = vadd.f32 %v1496, %v1608
  %1610 = vmatprep.mubr.bf16.mxu0 %v466
  %1611 = vmatmul.mubr.bf16.gmra.mxu0 %v465
  %v1612 = vpop.f32.mrf.mxu0
  %v1613 = vadd.f32 %v1500, %v1612
  %v1614 = vpop.f32.mrf.mxu0
  %v1615 = vadd.f32 %v1502, %v1614
  %v1616 = vpop.f32.mrf.mxu0
  %v1617 = vadd.f32 %v1504, %v1616
  %v1618 = vpop.f32.mrf.mxu0
  %v1619 = vadd.f32 %v1506, %v1618
  %1620 = vmatprep.mubr.bf16.mxu0 %v474
  %1621 = vmatmul.mubr.bf16.gmra.mxu0 %v473
  %v1622 = vpop.f32.mrf.mxu0
  %v1623 = vadd.f32 %v1510, %v1622
  %v1624 = vpop.f32.mrf.mxu0
  %v1625 = vadd.f32 %v1512, %v1624
  %v1626 = vpop.f32.mrf.mxu0
  %v1627 = vadd.f32 %v1514, %v1626
  %v1628 = vpop.f32.mrf.mxu0
  %v1629 = vadd.f32 %v1516, %v1628
  %1630 = vdwg.mxu0
  %v1631 = vmax.f32 %v1553, 0.0
  %v1632 = vmax.f32 %v1555, 0.0
  %v1633 = vmax.f32 %v1557, 0.0
  %v1634 = vmax.f32 %v1559, 0.0
  %v1635 = vmax.f32 %v1563, 0.0
  %v1636 = vmax.f32 %v1565, 0.0
  %v1637 = vmax.f32 %v1567, 0.0
  %v1638 = vmax.f32 %v1569, 0.0
  %v1639 = vmax.f32 %v1573, 0.0
  %v1640 = vmax.f32 %v1575, 0.0
  %v1641 = vmax.f32 %v1577, 0.0
  %v1642 = vmax.f32 %v1579, 0.0
  %v1643 = vmax.f32 %v1583, 0.0
  %v1644 = vmax.f32 %v1585, 0.0
  %v1645 = vmax.f32 %v1587, 0.0
  %v1646 = vmax.f32 %v1589, 0.0
  %v1647 = vmax.f32 %v1593, 0.0
  %v1648 = vmax.f32 %v1595, 0.0
  %v1649 = vmax.f32 %v1597, 0.0
  %v1650 = vmax.f32 %v1599, 0.0
  %v1651 = vmax.f32 %v1603, 0.0
  %v1652 = vmax.f32 %v1605, 0.0
  %v1653 = vmax.f32 %v1607, 0.0
  %v1654 = vmax.f32 %v1609, 0.0
  %v1655 = vmax.f32 %v1613, 0.0
  %v1656 = vmax.f32 %v1615, 0.0
  %v1657 = vmax.f32 %v1617, 0.0
  %v1658 = vmax.f32 %v1619, 0.0
  %v1659 = vmax.f32 %v1623, 0.0
  %v1660 = vmax.f32 %v1625, 0.0
  %v1661 = vmax.f32 %v1627, 0.0
  %v1662 = vmax.f32 %v1629, 0.0
  %v1663 = vadd.f32 %v1631, %v1633
  %v1664 = vadd.f32 %v1663, %v1635
  %v1665 = vadd.f32 %v1664, %v1637
  %v1666 = vadd.f32 %v1665, %v1639
  %v1667 = vadd.f32 %v1666, %v1641
  %v1668 = vadd.f32 %v1667, %v1643
  %v1669 = vadd.f32 %v1668, %v1645
  %v1670 = vadd.f32 %v1669, %v1647
  %v1671 = vadd.f32 %v1670, %v1649
  %v1672 = vadd.f32 %v1671, %v1651
  %v1673 = vadd.f32 %v1672, %v1653
  %v1674 = vadd.f32 %v1673, %v1655
  %v1675 = vadd.f32 %v1674, %v1657
  %v1676 = vadd.f32 %v1675, %v1659
  %v1677 = vadd.f32 %v1676, %v1661
  %v1678 = vrot.slane %v1677, 4
  %v1679 = vadd.f32 %v1677, %v1678
  %v1680 = vrot.slane %v1679, 2
  %v1681 = vadd.f32 %v1679, %v1680
  %v1682 = vrot.slane %v1681, 1
  %v1683 = vadd.f32 %v1681, %v1682
  %v1684 = vadd.f32 %v1632, %v1634
  %v1685 = vadd.f32 %v1684, %v1636
  %v1686 = vadd.f32 %v1685, %v1638
  %v1687 = vadd.f32 %v1686, %v1640
  %v1688 = vadd.f32 %v1687, %v1642
  %v1689 = vadd.f32 %v1688, %v1644
  %v1690 = vadd.f32 %v1689, %v1646
  %v1691 = vadd.f32 %v1690, %v1648
  %v1692 = vadd.f32 %v1691, %v1650
  %v1693 = vadd.f32 %v1692, %v1652
  %v1694 = vadd.f32 %v1693, %v1654
  %v1695 = vadd.f32 %v1694, %v1656
  %v1696 = vadd.f32 %v1695, %v1658
  %v1697 = vadd.f32 %v1696, %v1660
  %v1698 = vadd.f32 %v1697, %v1662
  %v1699 = vrot.slane %v1698, 4
  %v1700 = vadd.f32 %v1698, %v1699
  %v1701 = vrot.slane %v1700, 2
  %v1702 = vadd.f32 %v1700, %v1701
  %v1703 = vrot.slane %v1702, 1
  %v1704 = vadd.f32 %v1702, %v1703
  %v1705 = vmul.f32 %v1631, %v1631
  %v1706 = vmul.f32 %v1632, %v1632
  %v1707 = vmul.f32 %v1633, %v1633
  %v1708 = vmul.f32 %v1634, %v1634
  %v1709 = vmul.f32 %v1635, %v1635
  %v1710 = vmul.f32 %v1636, %v1636
  %v1711 = vmul.f32 %v1637, %v1637
  %v1712 = vmul.f32 %v1638, %v1638
  %v1713 = vmul.f32 %v1639, %v1639
  %v1714 = vmul.f32 %v1640, %v1640
  %v1715 = vmul.f32 %v1641, %v1641
  %v1716 = vmul.f32 %v1642, %v1642
  %v1717 = vmul.f32 %v1643, %v1643
  %v1718 = vmul.f32 %v1644, %v1644
  %v1719 = vmul.f32 %v1645, %v1645
  %v1720 = vmul.f32 %v1646, %v1646
  %v1721 = vmul.f32 %v1647, %v1647
  %v1722 = vmul.f32 %v1648, %v1648
  %v1723 = vmul.f32 %v1649, %v1649
  %v1724 = vmul.f32 %v1650, %v1650
  %v1725 = vmul.f32 %v1651, %v1651
  %v1726 = vmul.f32 %v1652, %v1652
  %v1727 = vmul.f32 %v1653, %v1653
  %v1728 = vmul.f32 %v1654, %v1654
  %v1729 = vmul.f32 %v1655, %v1655
  %v1730 = vmul.f32 %v1656, %v1656
  %v1731 = vmul.f32 %v1657, %v1657
  %v1732 = vmul.f32 %v1658, %v1658
  %v1733 = vmul.f32 %v1659, %v1659
  %v1734 = vmul.f32 %v1660, %v1660
  %v1735 = vmul.f32 %v1661, %v1661
  %v1736 = vmul.f32 %v1662, %v1662
  %v1737 = vadd.f32 %v1705, %v1707
  %v1738 = vadd.f32 %v1737, %v1709
  %v1739 = vadd.f32 %v1738, %v1711
  %v1740 = vadd.f32 %v1739, %v1713
  %v1741 = vadd.f32 %v1740, %v1715
  %v1742 = vadd.f32 %v1741, %v1717
  %v1743 = vadd.f32 %v1742, %v1719
  %v1744 = vadd.f32 %v1743, %v1721
  %v1745 = vadd.f32 %v1744, %v1723
  %v1746 = vadd.f32 %v1745, %v1725
  %v1747 = vadd.f32 %v1746, %v1727
  %v1748 = vadd.f32 %v1747, %v1729
  %v1749 = vadd.f32 %v1748, %v1731
  %v1750 = vadd.f32 %v1749, %v1733
  %v1751 = vadd.f32 %v1750, %v1735
  %v1752 = vrot.slane %v1751, 4
  %v1753 = vadd.f32 %v1751, %v1752
  %v1754 = vrot.slane %v1753, 2
  %v1755 = vadd.f32 %v1753, %v1754
  %v1756 = vrot.slane %v1755, 1
  %v1757 = vadd.f32 %v1755, %v1756
  %v1758 = vadd.f32 %v1706, %v1708
  %v1759 = vadd.f32 %v1758, %v1710
  %v1760 = vadd.f32 %v1759, %v1712
  %v1761 = vadd.f32 %v1760, %v1714
  %v1762 = vadd.f32 %v1761, %v1716
  %v1763 = vadd.f32 %v1762, %v1718
  %v1764 = vadd.f32 %v1763, %v1720
  %v1765 = vadd.f32 %v1764, %v1722
  %v1766 = vadd.f32 %v1765, %v1724
  %v1767 = vadd.f32 %v1766, %v1726
  %v1768 = vadd.f32 %v1767, %v1728
  %v1769 = vadd.f32 %v1768, %v1730
  %v1770 = vadd.f32 %v1769, %v1732
  %v1771 = vadd.f32 %v1770, %v1734
  %v1772 = vadd.f32 %v1771, %v1736
  %v1773 = vrot.slane %v1772, 4
  %v1774 = vadd.f32 %v1772, %v1773
  %v1775 = vrot.slane %v1774, 2
  %v1776 = vadd.f32 %v1774, %v1775
  %v1777 = vrot.slane %v1776, 1
  %v1778 = vadd.f32 %v1776, %v1777
  %v1779 = vld [vmem:[%s3] sm:$0xff]
  %v1780 = vld [vmem:[%s3 + $0x8] sm:$0xff]
  %v1781 = vld [vmem:[%s3 + $0x10] sm:$0xff]
  %v1782 = vld [vmem:[%s3 + $0x18] sm:$0xff]
  %v1783 = vld [vmem:[%s3 + $0x20] sm:$0xff]
  %v1784 = vld [vmem:[%s3 + $0x28] sm:$0xff]
  %v1785 = vld [vmem:[%s3 + $0x30] sm:$0xff]
  %v1786 = vld [vmem:[%s3 + $0x38] sm:$0xff]
  %v1787 = vld [vmem:[%s3 + $0x40] sm:$0xff]
  %v1788 = vld [vmem:[%s3 + $0x48] sm:$0xff]
  %v1789 = vld [vmem:[%s3 + $0x50] sm:$0xff]
  %v1790 = vld [vmem:[%s3 + $0x58] sm:$0xff]
  %v1791 = vld [vmem:[%s3 + $0x60] sm:$0xff]
  %v1792 = vld [vmem:[%s3 + $0x68] sm:$0xff]
  %v1793 = vld [vmem:[%s3 + $0x70] sm:$0xff]
  %v1794 = vld [vmem:[%s3 + $0x78] sm:$0xff]
  %v1795 = vld [vmem:[%s3 + $0x80] sm:$0xff]
  %v1796 = vld [vmem:[%s3 + $0x88] sm:$0xff]
  %v1797 = vld [vmem:[%s3 + $0x90] sm:$0xff]
  %v1798 = vld [vmem:[%s3 + $0x98] sm:$0xff]
  %v1799 = vld [vmem:[%s3 + $0xa0] sm:$0xff]
  %v1800 = vld [vmem:[%s3 + $0xa8] sm:$0xff]
  %v1801 = vld [vmem:[%s3 + $0xb0] sm:$0xff]
  %v1802 = vld [vmem:[%s3 + $0xb8] sm:$0xff]
  %v1803 = vld [vmem:[%s3 + $0xc0] sm:$0xff]
  %v1804 = vld [vmem:[%s3 + $0xc8] sm:$0xff]
  %v1805 = vld [vmem:[%s3 + $0xd0] sm:$0xff]
  %v1806 = vld [vmem:[%s3 + $0xd8] sm:$0xff]
  %v1807 = vld [vmem:[%s3 + $0xe0] sm:$0xff]
  %v1808 = vld [vmem:[%s3 + $0xe8] sm:$0xff]
  %v1809 = vld [vmem:[%s3 + $0xf0] sm:$0xff]
  %v1810 = vld [vmem:[%s3 + $0xf8] sm:$0xff]
  %v1811 = vld [vmem:[%s3 + $0x100] sm:$0xff]
  %v1812 = vld [vmem:[%s3 + $0x108] sm:$0xff]
  %v1813 = vld [vmem:[%s3 + $0x110] sm:$0xff]
  %v1814 = vld [vmem:[%s3 + $0x118] sm:$0xff]
  %v1815 = vld [vmem:[%s3 + $0x120] sm:$0xff]
  %v1816 = vld [vmem:[%s3 + $0x128] sm:$0xff]
  %v1817 = vld [vmem:[%s3 + $0x130] sm:$0xff]
  %v1818 = vld [vmem:[%s3 + $0x138] sm:$0xff]
  %v1819 = vld [vmem:[%s3 + $0x140] sm:$0xff]
  %v1820 = vld [vmem:[%s3 + $0x148] sm:$0xff]
  %v1821 = vld [vmem:[%s3 + $0x150] sm:$0xff]
  %v1822 = vld [vmem:[%s3 + $0x158] sm:$0xff]
  %v1823 = vld [vmem:[%s3 + $0x160] sm:$0xff]
  %v1824 = vld [vmem:[%s3 + $0x168] sm:$0xff]
  %v1825 = vld [vmem:[%s3 + $0x170] sm:$0xff]
  %v1826 = vld [vmem:[%s3 + $0x178] sm:$0xff]
  %v1827 = vld [vmem:[%s3 + $0x180] sm:$0xff]
  %v1828 = vld [vmem:[%s3 + $0x188] sm:$0xff]
  %v1829 = vld [vmem:[%s3 + $0x190] sm:$0xff]
  %v1830 = vld [vmem:[%s3 + $0x198] sm:$0xff]
  %v1831 = vld [vmem:[%s3 + $0x1a0] sm:$0xff]
  %v1832 = vld [vmem:[%s3 + $0x1a8] sm:$0xff]
  %v1833 = vld [vmem:[%s3 + $0x1b0] sm:$0xff]
  %v1834 = vld [vmem:[%s3 + $0x1b8] sm:$0xff]
  %v1835 = vld [vmem:[%s3 + $0x1c0] sm:$0xff]
  %v1836 = vld [vmem:[%s3 + $0x1c8] sm:$0xff]
  %v1837 = vld [vmem:[%s3 + $0x1d0] sm:$0xff]
  %v1838 = vld [vmem:[%s3 + $0x1d8] sm:$0xff]
  %v1839 = vld [vmem:[%s3 + $0x1e0] sm:$0xff]
  %v1840 = vld [vmem:[%s3 + $0x1e8] sm:$0xff]
  %v1841 = vld [vmem:[%s3 + $0x1f0] sm:$0xff]
  %v1842 = vld [vmem:[%s3 + $0x1f8] sm:$0xff]
  %1843 = vmatprep.subr.mxu0 %v1810
  %1844 = vmatpush1.msra.mxu0 %v1809
  %1845 = vmatprep.subr.mxu0 %v1808
  %1846 = vmatpush1.msra.mxu0 %v1807
  %1847 = vmatprep.subr.mxu0 %v1806
  %1848 = vmatpush1.msra.mxu0 %v1805
  %1849 = vmatprep.subr.mxu0 %v1804
  %1850 = vmatpush1.msra.mxu0 %v1803
  %1851 = vmatprep.subr.mxu0 %v1802
  %1852 = vmatpush1.msra.mxu0 %v1801
  %1853 = vmatprep.subr.mxu0 %v1800
  %1854 = vmatpush1.msra.mxu0 %v1799
  %1855 = vmatprep.subr.mxu0 %v1798
  %1856 = vmatpush1.msra.mxu0 %v1797
  %1857 = vmatprep.subr.mxu0 %v1796
  %1858 = vmatpush1.msra.mxu0 %v1795
  %1859 = vmatprep.subr.mxu0 %v1794
  %1860 = vmatpush1.msra.mxu0 %v1793
  %1861 = vmatprep.subr.mxu0 %v1792
  %1862 = vmatpush1.msra.mxu0 %v1791
  %1863 = vmatprep.subr.mxu0 %v1790
  %1864 = vmatpush1.msra.mxu0 %v1789
  %1865 = vmatprep.subr.mxu0 %v1788
  %1866 = vmatpush1.msra.mxu0 %v1787
  %1867 = vmatprep.subr.mxu0 %v1786
  %1868 = vmatpush1.msra.mxu0 %v1785
  %1869 = vmatprep.subr.mxu0 %v1784
  %1870 = vmatpush1.msra.mxu0 %v1783
  %1871 = vmatprep.subr.mxu0 %v1782
  %1872 = vmatpush1.msra.mxu0 %v1781
  %1873 = vmatprep.subr.mxu0 %v1780
  %1874 = vmatpush1.msra.mxu0 %v1779
  %1875 = vmatprep.subr.mxu0 %v1842
  %1876 = vmatpush2.msra.mxu0 %v1841
  %1877 = vmatprep.subr.mxu0 %v1840
  %1878 = vmatpush2.msra.mxu0 %v1839
  %1879 = vmatprep.subr.mxu0 %v1838
  %1880 = vmatpush2.msra.mxu0 %v1837
  %1881 = vmatprep.subr.mxu0 %v1836
  %1882 = vmatpush2.msra.mxu0 %v1835
  %1883 = vmatprep.subr.mxu0 %v1834
  %1884 = vmatpush2.msra.mxu0 %v1833
  %1885 = vmatprep.subr.mxu0 %v1832
  %1886 = vmatpush2.msra.mxu0 %v1831
  %1887 = vmatprep.subr.mxu0 %v1830
  %1888 = vmatpush2.msra.mxu0 %v1829
  %1889 = vmatprep.subr.mxu0 %v1828
  %1890 = vmatpush2.msra.mxu0 %v1827
  %1891 = vmatprep.subr.mxu0 %v1826
  %1892 = vmatpush2.msra.mxu0 %v1825
  %1893 = vmatprep.subr.mxu0 %v1824
  %1894 = vmatpush2.msra.mxu0 %v1823
  %1895 = vmatprep.subr.mxu0 %v1822
  %1896 = vmatpush2.msra.mxu0 %v1821
  %1897 = vmatprep.subr.mxu0 %v1820
  %1898 = vmatpush2.msra.mxu0 %v1819
  %1899 = vmatprep.subr.mxu0 %v1818
  %1900 = vmatpush2.msra.mxu0 %v1817
  %1901 = vmatprep.subr.mxu0 %v1816
  %1902 = vmatpush2.msra.mxu0 %v1815
  %1903 = vmatprep.subr.mxu0 %v1814
  %1904 = vmatpush2.msra.mxu0 %v1813
  %1905 = vmatprep.subr.mxu0 %v1812
  %1906 = vmatpush2.msra.mxu0 %v1811
  %1907 = vmatprep.mubr.f32.mxu0 %v1704
  %1908 = vmatmul.mubr.f32.gmra.mxu0 %v1683
  %v1909 = vpop.f32.mrf.mxu0
  %v1910 = vadd.f32 0.0, %v1909
  %v1911 = vpop.f32.mrf.mxu0
  %v1912 = vadd.f32 0.0, %v1911
  %1913 = vdwg.mxu0
  %1914 = vmatprep.subr.mxu0 %v1810
  %1915 = vmatpush1.msra.mxu0 %v1809
  %1916 = vmatprep.subr.mxu0 %v1808
  %1917 = vmatpush1.msra.mxu0 %v1807
  %1918 = vmatprep.subr.mxu0 %v1806
  %1919 = vmatpush1.msra.mxu0 %v1805
  %1920 = vmatprep.subr.mxu0 %v1804
  %1921 = vmatpush1.msra.mxu0 %v1803
  %1922 = vmatprep.subr.mxu0 %v1802
  %1923 = vmatpush1.msra.mxu0 %v1801
  %1924 = vmatprep.subr.mxu0 %v1800
  %1925 = vmatpush1.msra.mxu0 %v1799
  %1926 = vmatprep.subr.mxu0 %v1798
  %1927 = vmatpush1.msra.mxu0 %v1797
  %1928 = vmatprep.subr.mxu0 %v1796
  %1929 = vmatpush1.msra.mxu0 %v1795
  %1930 = vmatprep.subr.mxu0 %v1794
  %1931 = vmatpush1.msra.mxu0 %v1793
  %1932 = vmatprep.subr.mxu0 %v1792
  %1933 = vmatpush1.msra.mxu0 %v1791
  %1934 = vmatprep.subr.mxu0 %v1790
  %1935 = vmatpush1.msra.mxu0 %v1789
  %1936 = vmatprep.subr.mxu0 %v1788
  %1937 = vmatpush1.msra.mxu0 %v1787
  %1938 = vmatprep.subr.mxu0 %v1786
  %1939 = vmatpush1.msra.mxu0 %v1785
  %1940 = vmatprep.subr.mxu0 %v1784
  %1941 = vmatpush1.msra.mxu0 %v1783
  %1942 = vmatprep.subr.mxu0 %v1782
  %1943 = vmatpush1.msra.mxu0 %v1781
  %1944 = vmatprep.subr.mxu0 %v1780
  %1945 = vmatpush1.msra.mxu0 %v1779
  %1946 = vmatprep.subr.mxu0 %v1842
  %1947 = vmatpush2.msra.mxu0 %v1841
  %1948 = vmatprep.subr.mxu0 %v1840
  %1949 = vmatpush2.msra.mxu0 %v1839
  %1950 = vmatprep.subr.mxu0 %v1838
  %1951 = vmatpush2.msra.mxu0 %v1837
  %1952 = vmatprep.subr.mxu0 %v1836
  %1953 = vmatpush2.msra.mxu0 %v1835
  %1954 = vmatprep.subr.mxu0 %v1834
  %1955 = vmatpush2.msra.mxu0 %v1833
  %1956 = vmatprep.subr.mxu0 %v1832
  %1957 = vmatpush2.msra.mxu0 %v1831
  %1958 = vmatprep.subr.mxu0 %v1830
  %1959 = vmatpush2.msra.mxu0 %v1829
  %1960 = vmatprep.subr.mxu0 %v1828
  %1961 = vmatpush2.msra.mxu0 %v1827
  %1962 = vmatprep.subr.mxu0 %v1826
  %1963 = vmatpush2.msra.mxu0 %v1825
  %1964 = vmatprep.subr.mxu0 %v1824
  %1965 = vmatpush2.msra.mxu0 %v1823
  %1966 = vmatprep.subr.mxu0 %v1822
  %1967 = vmatpush2.msra.mxu0 %v1821
  %1968 = vmatprep.subr.mxu0 %v1820
  %1969 = vmatpush2.msra.mxu0 %v1819
  %1970 = vmatprep.subr.mxu0 %v1818
  %1971 = vmatpush2.msra.mxu0 %v1817
  %1972 = vmatprep.subr.mxu0 %v1816
  %1973 = vmatpush2.msra.mxu0 %v1815
  %1974 = vmatprep.subr.mxu0 %v1814
  %1975 = vmatpush2.msra.mxu0 %v1813
  %1976 = vmatprep.subr.mxu0 %v1812
  %1977 = vmatpush2.msra.mxu0 %v1811
  %1978 = vmatprep.mubr.f32.mxu0 %v1778
  %1979 = vmatmul.mubr.f32.gmra.mxu0 %v1757
  %v1980 = vpop.f32.mrf.mxu0
  %v1981 = vadd.f32 0.0, %v1980
  %v1982 = vpop.f32.mrf.mxu0
  %v1983 = vadd.f32 0.0, %v1982
  %1984 = vdwg.mxu0
  %v1985 = vmul.f32 %v1910, 0.001953125
  %v1986 = vmul.f32 %v1912, 0.001953125
  %v1987 = vmul.f32 %v1981, 0.001953125
  %v1988 = vmul.f32 %v1983, 0.001953125
  %v1989 = vmul.f32 %v1985, %v1985
  %v1990 = vmul.f32 %v1986, %v1986
  %v1991 = vsub.f32 %v1987, %v1989
  %v1992 = vsub.f32 %v1988, %v1990
  %v1993 = vmax.f32 %v1991, 0.0
  %v1994 = vmax.f32 %v1992, 0.0
  %v1995 = vadd.f32 %v1993, 1e-05
  %v1996 = vadd.f32 %v1994, 1e-05
  %v1997 = vrsqrt.pop %v1995
  %v1998 = vrsqrt.pop %v1996
  %v2001 = vrot.slane %v1997, 7
  %v2002 = vrot.slane %v1998, 7
  %v2005 = vmul.f32 %v209, %v2001
  %v2006 = vmul.f32 %v210, %v2002
  %v2007 = vlaneseq
  %v2008 = vshrl.u32 %v2007, 7
  %v2009 = vsub.s32 1, %v2008
  %v2010 = vrot.slane %v2005, %v2009
  %v2011 = vlaneseq
  %v2012 = vshrl.u32 %v2011, 7
  %v2013 = vsub.s32 1, %v2012
  %v2014 = vrot.slane %v2006, %v2013
  %v2015 = vmul.f32 %v1631, %v2010
  %v2016 = vmul.f32 %v1632, %v2014
  %v2017 = vmul.f32 %v1633, %v2010
  %v2018 = vmul.f32 %v1634, %v2014
  %v2019 = vmul.f32 %v1635, %v2010
  %v2020 = vmul.f32 %v1636, %v2014
  %v2021 = vmul.f32 %v1637, %v2010
  %v2022 = vmul.f32 %v1638, %v2014
  %v2023 = vmul.f32 %v1639, %v2010
  %v2024 = vmul.f32 %v1640, %v2014
  %v2025 = vmul.f32 %v1641, %v2010
  %v2026 = vmul.f32 %v1642, %v2014
  %v2027 = vmul.f32 %v1643, %v2010
  %v2028 = vmul.f32 %v1644, %v2014
  %v2029 = vmul.f32 %v1645, %v2010
  %v2030 = vmul.f32 %v1646, %v2014
  %v2031 = vmul.f32 %v1647, %v2010
  %v2032 = vmul.f32 %v1648, %v2014
  %v2033 = vmul.f32 %v1649, %v2010
  %v2034 = vmul.f32 %v1650, %v2014
  %v2035 = vmul.f32 %v1651, %v2010
  %v2036 = vmul.f32 %v1652, %v2014
  %v2037 = vmul.f32 %v1653, %v2010
  %v2038 = vmul.f32 %v1654, %v2014
  %v2039 = vmul.f32 %v1655, %v2010
  %v2040 = vmul.f32 %v1656, %v2014
  %v2041 = vmul.f32 %v1657, %v2010
  %v2042 = vmul.f32 %v1658, %v2014
  %v2043 = vmul.f32 %v1659, %v2010
  %v2044 = vmul.f32 %v1660, %v2014
  %v2045 = vmul.f32 %v1661, %v2010
  %v2046 = vmul.f32 %v1662, %v2014
  %v2049 = vrot.slane %v2005, 1
  %v2050 = vrot.slane %v2006, 1
  %v2053 = vmul.f32 %v1985, %v2049
  %v2054 = vmul.f32 %v1986, %v2050
  %v2057 = vrot.slane %v2053, 6
  %v2058 = vrot.slane %v2054, 6
  %v2061 = vsub.f32 %v209, %v2057
  %v2062 = vsub.f32 %v210, %v2058
  %v2063 = vlaneseq
  %v2064 = vshrl.u32 %v2063, 7
  %v2065 = vsub.s32 2, %v2064
  %v2066 = vrot.slane %v2061, %v2065
  %v2067 = vlaneseq
  %v2068 = vshrl.u32 %v2067, 7
  %v2069 = vsub.s32 2, %v2068
  %v2070 = vrot.slane %v2062, %v2069
  %v2071 = vadd.f32 %v2015, %v2066
  %v2072 = vadd.f32 %v2016, %v2070
  %v2073 = vadd.f32 %v2017, %v2066
  %v2074 = vadd.f32 %v2018, %v2070
  %v2075 = vadd.f32 %v2019, %v2066
  %v2076 = vadd.f32 %v2020, %v2070
  %v2077 = vadd.f32 %v2021, %v2066
  %v2078 = vadd.f32 %v2022, %v2070
  %v2079 = vadd.f32 %v2023, %v2066
  %v2080 = vadd.f32 %v2024, %v2070
  %v2081 = vadd.f32 %v2025, %v2066
  %v2082 = vadd.f32 %v2026, %v2070
  %v2083 = vadd.f32 %v2027, %v2066
  %v2084 = vadd.f32 %v2028, %v2070
  %v2085 = vadd.f32 %v2029, %v2066
  %v2086 = vadd.f32 %v2030, %v2070
  %v2087 = vadd.f32 %v2031, %v2066
  %v2088 = vadd.f32 %v2032, %v2070
  %v2089 = vadd.f32 %v2033, %v2066
  %v2090 = vadd.f32 %v2034, %v2070
  %v2091 = vadd.f32 %v2035, %v2066
  %v2092 = vadd.f32 %v2036, %v2070
  %v2093 = vadd.f32 %v2037, %v2066
  %v2094 = vadd.f32 %v2038, %v2070
  %v2095 = vadd.f32 %v2039, %v2066
  %v2096 = vadd.f32 %v2040, %v2070
  %v2097 = vadd.f32 %v2041, %v2066
  %v2098 = vadd.f32 %v2042, %v2070
  %v2099 = vadd.f32 %v2043, %v2066
  %v2100 = vadd.f32 %v2044, %v2070
  %v2101 = vadd.f32 %v2045, %v2066
  %v2102 = vadd.f32 %v2046, %v2070
  %v2103 = vpack.c.bf16 %v2073, %v2071
  %v2104 = vpack.c.bf16 %v2074, %v2072
  %v2105 = vpack.c.bf16 %v2077, %v2075
  %v2106 = vpack.c.bf16 %v2078, %v2076
  %v2107 = vpack.c.bf16 %v2081, %v2079
  %v2108 = vpack.c.bf16 %v2082, %v2080
  %v2109 = vpack.c.bf16 %v2085, %v2083
  %v2110 = vpack.c.bf16 %v2086, %v2084
  %v2111 = vpack.c.bf16 %v2089, %v2087
  %v2112 = vpack.c.bf16 %v2090, %v2088
  %v2113 = vpack.c.bf16 %v2093, %v2091
  %v2114 = vpack.c.bf16 %v2094, %v2092
  %v2115 = vpack.c.bf16 %v2097, %v2095
  %v2116 = vpack.c.bf16 %v2098, %v2096
  %v2117 = vpack.c.bf16 %v2101, %v2099
  %v2118 = vpack.c.bf16 %v2102, %v2100
  %v2135 = vunpack.c.l.b16 %v2103
  %v2136 = vunpack.c.l.b16 %v2104
  %v2137 = vunpack.c.h.b16 %v2103
  %v2138 = vunpack.c.h.b16 %v2104
  %v2139 = vunpack.c.l.b16 %v2105
  %v2140 = vunpack.c.l.b16 %v2106
  %v2141 = vunpack.c.h.b16 %v2105
  %v2142 = vunpack.c.h.b16 %v2106
  %v2143 = vunpack.c.l.b16 %v2107
  %v2144 = vunpack.c.l.b16 %v2108
  %v2145 = vunpack.c.h.b16 %v2107
  %v2146 = vunpack.c.h.b16 %v2108
  %v2147 = vunpack.c.l.b16 %v2109
  %v2148 = vunpack.c.l.b16 %v2110
  %v2149 = vunpack.c.h.b16 %v2109
  %v2150 = vunpack.c.h.b16 %v2110
  %v2151 = vunpack.c.l.b16 %v2111
  %v2152 = vunpack.c.l.b16 %v2112
  %v2153 = vunpack.c.h.b16 %v2111
  %v2154 = vunpack.c.h.b16 %v2112
  %v2155 = vunpack.c.l.b16 %v2113
  %v2156 = vunpack.c.l.b16 %v2114
  %v2157 = vunpack.c.h.b16 %v2113
  %v2158 = vunpack.c.h.b16 %v2114
  %v2159 = vunpack.c.l.b16 %v2115
  %v2160 = vunpack.c.l.b16 %v2116
  %v2161 = vunpack.c.h.b16 %v2115
  %v2162 = vunpack.c.h.b16 %v2116
  %v2163 = vunpack.c.l.b16 %v2117
  %v2164 = vunpack.c.l.b16 %v2118
  %v2165 = vunpack.c.h.b16 %v2117
  %v2166 = vunpack.c.h.b16 %v2118
  %v2167 = vpack.c.b16 %v2136, %v2135
  %v2168 = vpack.c.b16 %v2138, %v2137
  %v2169 = vpack.c.b16 %v2140, %v2139
  %v2170 = vpack.c.b16 %v2142, %v2141
  %v2171 = vpack.c.b16 %v2144, %v2143
  %v2172 = vpack.c.b16 %v2146, %v2145
  %v2173 = vpack.c.b16 %v2148, %v2147
  %v2174 = vpack.c.b16 %v2150, %v2149
  %v2175 = vpack.c.b16 %v2152, %v2151
  %v2176 = vpack.c.b16 %v2154, %v2153
  %v2177 = vpack.c.b16 %v2156, %v2155
  %v2178 = vpack.c.b16 %v2158, %v2157
  %v2179 = vpack.c.b16 %v2160, %v2159
  %v2180 = vpack.c.b16 %v2162, %v2161
  %v2181 = vpack.c.b16 %v2164, %v2163
  %v2182 = vpack.c.b16 %v2166, %v2165
  %2199 = vst [vmem:[%s4] sm:$0xff] %v2167
  %2200 = vst [vmem:[%s4 + $0x8] sm:$0xff] %v2168
  %2201 = vst [vmem:[%s4 + $0x10] sm:$0xff] %v2169
  %2202 = vst [vmem:[%s4 + $0x18] sm:$0xff] %v2170
  %2203 = vst [vmem:[%s4 + $0x20] sm:$0xff] %v2171
  %2204 = vst [vmem:[%s4 + $0x28] sm:$0xff] %v2172
  %2205 = vst [vmem:[%s4 + $0x30] sm:$0xff] %v2173
  %2206 = vst [vmem:[%s4 + $0x38] sm:$0xff] %v2174
  %2207 = vst [vmem:[%s4 + $0x40] sm:$0xff] %v2175
  %2208 = vst [vmem:[%s4 + $0x48] sm:$0xff] %v2176
  %2209 = vst [vmem:[%s4 + $0x50] sm:$0xff] %v2177
  %2210 = vst [vmem:[%s4 + $0x58] sm:$0xff] %v2178
  %2211 = vst [vmem:[%s4 + $0x60] sm:$0xff] %v2179
  %2212 = vst [vmem:[%s4 + $0x68] sm:$0xff] %v2180
  %2213 = vst [vmem:[%s4 + $0x70] sm:$0xff] %v2181
  %2214 = vst [vmem:[%s4 + $0x78] sm:$0xff] %v2182
  // Predicated region
  $region18: #{_lambda_.8} parent=0 // pred_check
    _
  $region19: #{_lambda_.8} parent=0 // pred_check_branch
    %2216 = sbr.rel (0) target = $region21
  $region20: #{_lambda_.8} parent=0 // pred_region
    _
  $region21: #{_lambda_.8} parent=0 // pred_fallthru
    _
  // Predicated region
  $region22: #{_lambda_.8} parent=0 // pred_check
    _
  $region23: #{_lambda_.8} parent=0 // pred_check_branch
    %2218 = sbr.rel (0) target = $region25
  $region24: #{_lambda_.8} parent=0 // pred_region
    _
  $region25: #{_lambda_.8} parent=0 // pred_fallthru
    _

// kernel: _lambda_.9
$region0: #{_lambda_.9}
  #allocation0 [shape = 'u32[]', space=smem, size = 0x4, offset = 0x4, fixed_abs, tag = 'smem constant byte address 0x4 - core index']
  #allocation1 [shape = 'u32[144,128]{1,0:T(1,128)}', space=vmem, size = 0x12000, scoped, tag = 'internal scratch']
  %s0 = inlined_call_operand.vmem [shape: bf16[512,512], index: 0, kind: input, shape index: {}]
  %s1 = inlined_call_operand.vmem [shape: bf16[512,128], index: 1, kind: input, shape index: {}]
  %s2 = inlined_call_operand.vmem [shape: f32[8,128], index: 2, kind: input, shape index: {}]
  %s3 = inlined_call_operand.vmem [shape: f32[128,128], index: 3, kind: input, shape index: {}]
  %s4 = inlined_call_operand.vmem [shape: f32[512,128], index: 4, kind: output, shape index: {}]
  %s5 = sld [smem:[#allocation0]]
  $region26: #{_lambda_.9} parent=0
    _
  %s7 = ssub.s32 1, %s5
  %s8 = scalar_select 0, %s7, %s5
  // Predicated region
  $region2: #{_lambda_.9} parent=0 // pred_check
    _
  $region3: #{_lambda_.9} parent=0 // pred_check_branch
    %10 = sbr.rel (0) target = $region5
  $region4: #{_lambda_.9} parent=0 // pred_region
    _
  $region5: #{_lambda_.9} parent=0 // pred_fallthru
    _
  // Predicated region
  $region6: #{_lambda_.9} parent=0 // pred_check
    _
  $region7: #{_lambda_.9} parent=0 // pred_check_branch
    %12 = sbr.rel (0) target = $region9
  $region8: #{_lambda_.9} parent=0 // pred_region
    _
  $region9: #{_lambda_.9} parent=0 // pred_fallthru
    _
  // Predicated region
  $region10: #{_lambda_.9} parent=0 // pred_check
    _
  $region11: #{_lambda_.9} parent=0 // pred_check_branch
    %14 = sbr.rel (0) target = $region13
  $region12: #{_lambda_.9} parent=0 // pred_region
    _
  $region13: #{_lambda_.9} parent=0 // pred_fallthru
    _
  // Predicated region
  $region14: #{_lambda_.9} parent=0 // pred_check
    _
  $region15: #{_lambda_.9} parent=0 // pred_check_branch
    %16 = sbr.rel (0) target = $region17
  $region16: #{_lambda_.9} parent=0 // pred_region
    _
  $region17: #{_lambda_.9} parent=0 // pred_fallthru
    _
  %v18 = vld [vmem:[%s0] sm:$0xff]
  %v19 = vld [vmem:[%s0 + $0x8] sm:$0xff]
  %v20 = vld [vmem:[%s0 + $0x10] sm:$0xff]
  %v21 = vld [vmem:[%s0 + $0x18] sm:$0xff]
  %v22 = vld [vmem:[%s0 + $0x20] sm:$0xff]
  %v23 = vld [vmem:[%s0 + $0x28] sm:$0xff]
  %v24 = vld [vmem:[%s0 + $0x30] sm:$0xff]
  %v25 = vld [vmem:[%s0 + $0x38] sm:$0xff]
  %v26 = vld [vmem:[%s0 + $0x40] sm:$0xff]
  %v27 = vld [vmem:[%s0 + $0x48] sm:$0xff]
  %v28 = vld [vmem:[%s0 + $0x50] sm:$0xff]
  %v29 = vld [vmem:[%s0 + $0x58] sm:$0xff]
  %v30 = vld [vmem:[%s0 + $0x60] sm:$0xff]
  %v31 = vld [vmem:[%s0 + $0x68] sm:$0xff]
  %v32 = vld [vmem:[%s0 + $0x70] sm:$0xff]
  %v33 = vld [vmem:[%s0 + $0x78] sm:$0xff]
  %v34 = vld [vmem:[%s0 + $0x80] sm:$0xff]
  %v35 = vld [vmem:[%s0 + $0x88] sm:$0xff]
  %v36 = vld [vmem:[%s0 + $0x90] sm:$0xff]
  %v37 = vld [vmem:[%s0 + $0x98] sm:$0xff]
  %v38 = vld [vmem:[%s0 + $0xa0] sm:$0xff]
  %v39 = vld [vmem:[%s0 + $0xa8] sm:$0xff]
  %v40 = vld [vmem:[%s0 + $0xb0] sm:$0xff]
  %v41 = vld [vmem:[%s0 + $0xb8] sm:$0xff]
  %v42 = vld [vmem:[%s0 + $0xc0] sm:$0xff]
  %v43 = vld [vmem:[%s0 + $0xc8] sm:$0xff]
  %v44 = vld [vmem:[%s0 + $0xd0] sm:$0xff]
  %v45 = vld [vmem:[%s0 + $0xd8] sm:$0xff]
  %v46 = vld [vmem:[%s0 + $0xe0] sm:$0xff]
  %v47 = vld [vmem:[%s0 + $0xe8] sm:$0xff]
  %v48 = vld [vmem:[%s0 + $0xf0] sm:$0xff]
  %v49 = vld [vmem:[%s0 + $0xf8] sm:$0xff]
  %v50 = vld [vmem:[%s0 + $0x100] sm:$0xff]
  %v51 = vld [vmem:[%s0 + $0x108] sm:$0xff]
  %v52 = vld [vmem:[%s0 + $0x110] sm:$0xff]
  %v53 = vld [vmem:[%s0 + $0x118] sm:$0xff]
  %v54 = vld [vmem:[%s0 + $0x120] sm:$0xff]
  %v55 = vld [vmem:[%s0 + $0x128] sm:$0xff]
  %v56 = vld [vmem:[%s0 + $0x130] sm:$0xff]
  %v57 = vld [vmem:[%s0 + $0x138] sm:$0xff]
  %v58 = vld [vmem:[%s0 + $0x140] sm:$0xff]
  %v59 = vld [vmem:[%s0 + $0x148] sm:$0xff]
  %v60 = vld [vmem:[%s0 + $0x150] sm:$0xff]
  %v61 = vld [vmem:[%s0 + $0x158] sm:$0xff]
  %v62 = vld [vmem:[%s0 + $0x160] sm:$0xff]
  %v63 = vld [vmem:[%s0 + $0x168] sm:$0xff]
  %v64 = vld [vmem:[%s0 + $0x170] sm:$0xff]
  %v65 = vld [vmem:[%s0 + $0x178] sm:$0xff]
  %v66 = vld [vmem:[%s0 + $0x180] sm:$0xff]
  %v67 = vld [vmem:[%s0 + $0x188] sm:$0xff]
  %v68 = vld [vmem:[%s0 + $0x190] sm:$0xff]
  %v69 = vld [vmem:[%s0 + $0x198] sm:$0xff]
  %v70 = vld [vmem:[%s0 + $0x1a0] sm:$0xff]
  %v71 = vld [vmem:[%s0 + $0x1a8] sm:$0xff]
  %v72 = vld [vmem:[%s0 + $0x1b0] sm:$0xff]
  %v73 = vld [vmem:[%s0 + $0x1b8] sm:$0xff]
  %v74 = vld [vmem:[%s0 + $0x1c0] sm:$0xff]
  %v75 = vld [vmem:[%s0 + $0x1c8] sm:$0xff]
  %v76 = vld [vmem:[%s0 + $0x1d0] sm:$0xff]
  %v77 = vld [vmem:[%s0 + $0x1d8] sm:$0xff]
  %v78 = vld [vmem:[%s0 + $0x1e0] sm:$0xff]
  %v79 = vld [vmem:[%s0 + $0x1e8] sm:$0xff]
  %v80 = vld [vmem:[%s0 + $0x1f0] sm:$0xff]
  %v81 = vld [vmem:[%s0 + $0x1f8] sm:$0xff]
  %v82 = vld [vmem:[%s0 + $0x200] sm:$0xff]
  %v83 = vld [vmem:[%s0 + $0x208] sm:$0xff]
  %v84 = vld [vmem:[%s0 + $0x210] sm:$0xff]
  %v85 = vld [vmem:[%s0 + $0x218] sm:$0xff]
  %v86 = vld [vmem:[%s0 + $0x220] sm:$0xff]
  %v87 = vld [vmem:[%s0 + $0x228] sm:$0xff]
  %v88 = vld [vmem:[%s0 + $0x230] sm:$0xff]
  %v89 = vld [vmem:[%s0 + $0x238] sm:$0xff]
  %v90 = vld [vmem:[%s0 + $0x240] sm:$0xff]
  %v91 = vld [vmem:[%s0 + $0x248] sm:$0xff]
  %v92 = vld [vmem:[%s0 + $0x250] sm:$0xff]
  %v93 = vld [vmem:[%s0 + $0x258] sm:$0xff]
  %v94 = vld [vmem:[%s0 + $0x260] sm:$0xff]
  %v95 = vld [vmem:[%s0 + $0x268] sm:$0xff]
  %v96 = vld [vmem:[%s0 + $0x270] sm:$0xff]
  %v97 = vld [vmem:[%s0 + $0x278] sm:$0xff]
  %v98 = vld [vmem:[%s0 + $0x280] sm:$0xff]
  %v99 = vld [vmem:[%s0 + $0x288] sm:$0xff]
  %v100 = vld [vmem:[%s0 + $0x290] sm:$0xff]
  %v101 = vld [vmem:[%s0 + $0x298] sm:$0xff]
  %v102 = vld [vmem:[%s0 + $0x2a0] sm:$0xff]
  %v103 = vld [vmem:[%s0 + $0x2a8] sm:$0xff]
  %v104 = vld [vmem:[%s0 + $0x2b0] sm:$0xff]
  %v105 = vld [vmem:[%s0 + $0x2b8] sm:$0xff]
  %v106 = vld [vmem:[%s0 + $0x2c0] sm:$0xff]
  %v107 = vld [vmem:[%s0 + $0x2c8] sm:$0xff]
  %v108 = vld [vmem:[%s0 + $0x2d0] sm:$0xff]
  %v109 = vld [vmem:[%s0 + $0x2d8] sm:$0xff]
  %v110 = vld [vmem:[%s0 + $0x2e0] sm:$0xff]
  %v111 = vld [vmem:[%s0 + $0x2e8] sm:$0xff]
  %v112 = vld [vmem:[%s0 + $0x2f0] sm:$0xff]
  %v113 = vld [vmem:[%s0 + $0x2f8] sm:$0xff]
  %v114 = vld [vmem:[%s0 + $0x300] sm:$0xff]
  %v115 = vld [vmem:[%s0 + $0x308] sm:$0xff]
  %v116 = vld [vmem:[%s0 + $0x310] sm:$0xff]
  %v117 = vld [vmem:[%s0 + $0x318] sm:$0xff]
  %v118 = vld [vmem:[%s0 + $0x320] sm:$0xff]
  %v119 = vld [vmem:[%s0 + $0x328] sm:$0xff]
  %v120 = vld [vmem:[%s0 + $0x330] sm:$0xff]
  %v121 = vld [vmem:[%s0 + $0x338] sm:$0xff]
  %v122 = vld [vmem:[%s0 + $0x340] sm:$0xff]
  %v123 = vld [vmem:[%s0 + $0x348] sm:$0xff]
  %v124 = vld [vmem:[%s0 + $0x350] sm:$0xff]
  %v125 = vld [vmem:[%s0 + $0x358] sm:$0xff]
  %v126 = vld [vmem:[%s0 + $0x360] sm:$0xff]
  %v127 = vld [vmem:[%s0 + $0x368] sm:$0xff]
  %v128 = vld [vmem:[%s0 + $0x370] sm:$0xff]
  %v129 = vld [vmem:[%s0 + $0x378] sm:$0xff]
  %v130 = vld [vmem:[%s0 + $0x380] sm:$0xff]
  %v131 = vld [vmem:[%s0 + $0x388] sm:$0xff]
  %v132 = vld [vmem:[%s0 + $0x390] sm:$0xff]
  %v133 = vld [vmem:[%s0 + $0x398] sm:$0xff]
  %v134 = vld [vmem:[%s0 + $0x3a0] sm:$0xff]
  %v135 = vld [vmem:[%s0 + $0x3a8] sm:$0xff]
  %v136 = vld [vmem:[%s0 + $0x3b0] sm:$0xff]
  %v137 = vld [vmem:[%s0 + $0x3b8] sm:$0xff]
  %v138 = vld [vmem:[%s0 + $0x3c0] sm:$0xff]
  %v139 = vld [vmem:[%s0 + $0x3c8] sm:$0xff]
  %v140 = vld [vmem:[%s0 + $0x3d0] sm:$0xff]
  %v141 = vld [vmem:[%s0 + $0x3d8] sm:$0xff]
  %v142 = vld [vmem:[%s0 + $0x3e0] sm:$0xff]
  %v143 = vld [vmem:[%s0 + $0x3e8] sm:$0xff]
  %v144 = vld [vmem:[%s0 + $0x3f0] sm:$0xff]
  %v145 = vld [vmem:[%s0 + $0x3f8] sm:$0xff]
  %v146 = vld [vmem:[%s1] sm:$0xf]
  %v147 = vld [vmem:[%s1 + $0x4] sm:$0xf]
  %v148 = vld [vmem:[%s1 + $0x8] sm:$0xf]
  %v149 = vld [vmem:[%s1 + $0xc] sm:$0xf]
  %v150 = vld [vmem:[%s1 + $0x10] sm:$0xf]
  %v151 = vld [vmem:[%s1 + $0x14] sm:$0xf]
  %v152 = vld [vmem:[%s1 + $0x18] sm:$0xf]
  %v153 = vld [vmem:[%s1 + $0x1c] sm:$0xf]
  %v154 = vld [vmem:[%s1 + $0x20] sm:$0xf]
  %v155 = vld [vmem:[%s1 + $0x24] sm:$0xf]
  %v156 = vld [vmem:[%s1 + $0x28] sm:$0xf]
  %v157 = vld [vmem:[%s1 + $0x2c] sm:$0xf]
  %v158 = vld [vmem:[%s1 + $0x30] sm:$0xf]
  %v159 = vld [vmem:[%s1 + $0x34] sm:$0xf]
  %v160 = vld [vmem:[%s1 + $0x38] sm:$0xf]
  %v161 = vld [vmem:[%s1 + $0x3c] sm:$0xf]
  %v162 = vld [vmem:[%s1 + $0x40] sm:$0xf]
  %v163 = vld [vmem:[%s1 + $0x44] sm:$0xf]
  %v164 = vld [vmem:[%s1 + $0x48] sm:$0xf]
  %v165 = vld [vmem:[%s1 + $0x4c] sm:$0xf]
  %v166 = vld [vmem:[%s1 + $0x50] sm:$0xf]
  %v167 = vld [vmem:[%s1 + $0x54] sm:$0xf]
  %v168 = vld [vmem:[%s1 + $0x58] sm:$0xf]
  %v169 = vld [vmem:[%s1 + $0x5c] sm:$0xf]
  %v170 = vld [vmem:[%s1 + $0x60] sm:$0xf]
  %v171 = vld [vmem:[%s1 + $0x64] sm:$0xf]
  %v172 = vld [vmem:[%s1 + $0x68] sm:$0xf]
  %v173 = vld [vmem:[%s1 + $0x6c] sm:$0xf]
  %v174 = vld [vmem:[%s1 + $0x70] sm:$0xf]
  %v175 = vld [vmem:[%s1 + $0x74] sm:$0xf]
  %v176 = vld [vmem:[%s1 + $0x78] sm:$0xf]
  %v177 = vld [vmem:[%s1 + $0x7c] sm:$0xf]
  %v178 = vld [vmem:[%s1 + $0x80] sm:$0xf]
  %v179 = vld [vmem:[%s1 + $0x84] sm:$0xf]
  %v180 = vld [vmem:[%s1 + $0x88] sm:$0xf]
  %v181 = vld [vmem:[%s1 + $0x8c] sm:$0xf]
  %v182 = vld [vmem:[%s1 + $0x90] sm:$0xf]
  %v183 = vld [vmem:[%s1 + $0x94] sm:$0xf]
  %v184 = vld [vmem:[%s1 + $0x98] sm:$0xf]
  %v185 = vld [vmem:[%s1 + $0x9c] sm:$0xf]
  %v186 = vld [vmem:[%s1 + $0xa0] sm:$0xf]
  %v187 = vld [vmem:[%s1 + $0xa4] sm:$0xf]
  %v188 = vld [vmem:[%s1 + $0xa8] sm:$0xf]
  %v189 = vld [vmem:[%s1 + $0xac] sm:$0xf]
  %v190 = vld [vmem:[%s1 + $0xb0] sm:$0xf]
  %v191 = vld [vmem:[%s1 + $0xb4] sm:$0xf]
  %v192 = vld [vmem:[%s1 + $0xb8] sm:$0xf]
  %v193 = vld [vmem:[%s1 + $0xbc] sm:$0xf]
  %v194 = vld [vmem:[%s1 + $0xc0] sm:$0xf]
  %v195 = vld [vmem:[%s1 + $0xc4] sm:$0xf]
  %v196 = vld [vmem:[%s1 + $0xc8] sm:$0xf]
  %v197 = vld [vmem:[%s1 + $0xcc] sm:$0xf]
  %v198 = vld [vmem:[%s1 + $0xd0] sm:$0xf]
  %v199 = vld [vmem:[%s1 + $0xd4] sm:$0xf]
  %v200 = vld [vmem:[%s1 + $0xd8] sm:$0xf]
  %v201 = vld [vmem:[%s1 + $0xdc] sm:$0xf]
  %v202 = vld [vmem:[%s1 + $0xe0] sm:$0xf]
  %v203 = vld [vmem:[%s1 + $0xe4] sm:$0xf]
  %v204 = vld [vmem:[%s1 + $0xe8] sm:$0xf]
  %v205 = vld [vmem:[%s1 + $0xec] sm:$0xf]
  %v206 = vld [vmem:[%s1 + $0xf0] sm:$0xf]
  %v207 = vld [vmem:[%s1 + $0xf4] sm:$0xf]
  %v208 = vld [vmem:[%s1 + $0xf8] sm:$0xf]
  %v209 = vld [vmem:[%s1 + $0xfc] sm:$0xf]
  %v210 = vld [vmem:[%s2] sm:$0xff]
  %v211 = vlaneseq
  %v212 = vshrl.u32 %v211, 7
  %v213 = vsub.s32 0, %v212
  %v214 = vrot.slane %v210, %v213
  %v343 = vunpack.c.l.b16 %v18
  %v344 = vunpack.c.h.b16 %v18
  %v345 = vunpack.c.l.b16 %v19
  %v346 = vunpack.c.h.b16 %v19
  %v347 = vunpack.c.l.b16 %v20
  %v348 = vunpack.c.h.b16 %v20
  %v349 = vunpack.c.l.b16 %v21
  %v350 = vunpack.c.h.b16 %v21
  %v351 = vunpack.c.l.b16 %v22
  %v352 = vunpack.c.h.b16 %v22
  %v353 = vunpack.c.l.b16 %v23
  %v354 = vunpack.c.h.b16 %v23
  %v355 = vunpack.c.l.b16 %v24
  %v356 = vunpack.c.h.b16 %v24
  %v357 = vunpack.c.l.b16 %v25
  %v358 = vunpack.c.h.b16 %v25
  %v359 = vunpack.c.l.b16 %v26
  %v360 = vunpack.c.h.b16 %v26
  %v361 = vunpack.c.l.b16 %v27
  %v362 = vunpack.c.h.b16 %v27
  %v363 = vunpack.c.l.b16 %v28
  %v364 = vunpack.c.h.b16 %v28
  %v365 = vunpack.c.l.b16 %v29
  %v366 = vunpack.c.h.b16 %v29
  %v367 = vunpack.c.l.b16 %v30
  %v368 = vunpack.c.h.b16 %v30
  %v369 = vunpack.c.l.b16 %v31
  %v370 = vunpack.c.h.b16 %v31
  %v371 = vunpack.c.l.b16 %v32
  %v372 = vunpack.c.h.b16 %v32
  %v373 = vunpack.c.l.b16 %v33
  %v374 = vunpack.c.h.b16 %v33
  %v375 = vunpack.c.l.b16 %v34
  %v376 = vunpack.c.h.b16 %v34
  %v377 = vunpack.c.l.b16 %v35
  %v378 = vunpack.c.h.b16 %v35
  %v379 = vunpack.c.l.b16 %v36
  %v380 = vunpack.c.h.b16 %v36
  %v381 = vunpack.c.l.b16 %v37
  %v382 = vunpack.c.h.b16 %v37
  %v383 = vunpack.c.l.b16 %v38
  %v384 = vunpack.c.h.b16 %v38
  %v385 = vunpack.c.l.b16 %v39
  %v386 = vunpack.c.h.b16 %v39
  %v387 = vunpack.c.l.b16 %v40
  %v388 = vunpack.c.h.b16 %v40
  %v389 = vunpack.c.l.b16 %v41
  %v390 = vunpack.c.h.b16 %v41
  %v391 = vunpack.c.l.b16 %v42
  %v392 = vunpack.c.h.b16 %v42
  %v393 = vunpack.c.l.b16 %v43
  %v394 = vunpack.c.h.b16 %v43
  %v395 = vunpack.c.l.b16 %v44
  %v396 = vunpack.c.h.b16 %v44
  %v397 = vunpack.c.l.b16 %v45
  %v398 = vunpack.c.h.b16 %v45
  %v399 = vunpack.c.l.b16 %v46
  %v400 = vunpack.c.h.b16 %v46
  %v401 = vunpack.c.l.b16 %v47
  %v402 = vunpack.c.h.b16 %v47
  %v403 = vunpack.c.l.b16 %v48
  %v404 = vunpack.c.h.b16 %v48
  %v405 = vunpack.c.l.b16 %v49
  %v406 = vunpack.c.h.b16 %v49
  %v407 = vunpack.c.l.b16 %v50
  %v408 = vunpack.c.h.b16 %v50
  %v409 = vunpack.c.l.b16 %v51
  %v410 = vunpack.c.h.b16 %v51
  %v411 = vunpack.c.l.b16 %v52
  %v412 = vunpack.c.h.b16 %v52
  %v413 = vunpack.c.l.b16 %v53
  %v414 = vunpack.c.h.b16 %v53
  %v415 = vunpack.c.l.b16 %v54
  %v416 = vunpack.c.h.b16 %v54
  %v417 = vunpack.c.l.b16 %v55
  %v418 = vunpack.c.h.b16 %v55
  %v419 = vunpack.c.l.b16 %v56
  %v420 = vunpack.c.h.b16 %v56
  %v421 = vunpack.c.l.b16 %v57
  %v422 = vunpack.c.h.b16 %v57
  %v423 = vunpack.c.l.b16 %v58
  %v424 = vunpack.c.h.b16 %v58
  %v425 = vunpack.c.l.b16 %v59
  %v426 = vunpack.c.h.b16 %v59
  %v427 = vunpack.c.l.b16 %v60
  %v428 = vunpack.c.h.b16 %v60
  %v429 = vunpack.c.l.b16 %v61
  %v430 = vunpack.c.h.b16 %v61
  %v431 = vunpack.c.l.b16 %v62
  %v432 = vunpack.c.h.b16 %v62
  %v433 = vunpack.c.l.b16 %v63
  %v434 = vunpack.c.h.b16 %v63
  %v435 = vunpack.c.l.b16 %v64
  %v436 = vunpack.c.h.b16 %v64
  %v437 = vunpack.c.l.b16 %v65
  %v438 = vunpack.c.h.b16 %v65
  %v439 = vunpack.c.l.b16 %v66
  %v440 = vunpack.c.h.b16 %v66
  %v441 = vunpack.c.l.b16 %v67
  %v442 = vunpack.c.h.b16 %v67
  %v443 = vunpack.c.l.b16 %v68
  %v444 = vunpack.c.h.b16 %v68
  %v445 = vunpack.c.l.b16 %v69
  %v446 = vunpack.c.h.b16 %v69
  %v447 = vunpack.c.l.b16 %v70
  %v448 = vunpack.c.h.b16 %v70
  %v449 = vunpack.c.l.b16 %v71
  %v450 = vunpack.c.h.b16 %v71
  %v451 = vunpack.c.l.b16 %v72
  %v452 = vunpack.c.h.b16 %v72
  %v453 = vunpack.c.l.b16 %v73
  %v454 = vunpack.c.h.b16 %v73
  %v455 = vunpack.c.l.b16 %v74
  %v456 = vunpack.c.h.b16 %v74
  %v457 = vunpack.c.l.b16 %v75
  %v458 = vunpack.c.h.b16 %v75
  %v459 = vunpack.c.l.b16 %v76
  %v460 = vunpack.c.h.b16 %v76
  %v461 = vunpack.c.l.b16 %v77
  %v462 = vunpack.c.h.b16 %v77
  %v463 = vunpack.c.l.b16 %v78
  %v464 = vunpack.c.h.b16 %v78
  %v465 = vunpack.c.l.b16 %v79
  %v466 = vunpack.c.h.b16 %v79
  %v467 = vunpack.c.l.b16 %v80
  %v468 = vunpack.c.h.b16 %v80
  %v469 = vunpack.c.l.b16 %v81
  %v470 = vunpack.c.h.b16 %v81
  %v471 = vunpack.c.l.b16 %v82
  %v472 = vunpack.c.h.b16 %v82
  %v473 = vunpack.c.l.b16 %v83
  %v474 = vunpack.c.h.b16 %v83
  %v475 = vunpack.c.l.b16 %v84
  %v476 = vunpack.c.h.b16 %v84
  %v477 = vunpack.c.l.b16 %v85
  %v478 = vunpack.c.h.b16 %v85
  %v479 = vunpack.c.l.b16 %v86
  %v480 = vunpack.c.h.b16 %v86
  %v481 = vunpack.c.l.b16 %v87
  %v482 = vunpack.c.h.b16 %v87
  %v483 = vunpack.c.l.b16 %v88
  %v484 = vunpack.c.h.b16 %v88
  %v485 = vunpack.c.l.b16 %v89
  %v486 = vunpack.c.h.b16 %v89
  %v487 = vunpack.c.l.b16 %v90
  %v488 = vunpack.c.h.b16 %v90
  %v489 = vunpack.c.l.b16 %v91
  %v490 = vunpack.c.h.b16 %v91
  %v491 = vunpack.c.l.b16 %v92
  %v492 = vunpack.c.h.b16 %v92
  %v493 = vunpack.c.l.b16 %v93
  %v494 = vunpack.c.h.b16 %v93
  %v495 = vunpack.c.l.b16 %v94
  %v496 = vunpack.c.h.b16 %v94
  %v497 = vunpack.c.l.b16 %v95
  %v498 = vunpack.c.h.b16 %v95
  %v499 = vunpack.c.l.b16 %v96
  %v500 = vunpack.c.h.b16 %v96
  %v501 = vunpack.c.l.b16 %v97
  %v502 = vunpack.c.h.b16 %v97
  %v503 = vunpack.c.l.b16 %v98
  %v504 = vunpack.c.h.b16 %v98
  %v505 = vunpack.c.l.b16 %v99
  %v506 = vunpack.c.h.b16 %v99
  %v507 = vunpack.c.l.b16 %v100
  %v508 = vunpack.c.h.b16 %v100
  %v509 = vunpack.c.l.b16 %v101
  %v510 = vunpack.c.h.b16 %v101
  %v511 = vunpack.c.l.b16 %v102
  %v512 = vunpack.c.h.b16 %v102
  %v513 = vunpack.c.l.b16 %v103
  %v514 = vunpack.c.h.b16 %v103
  %v515 = vunpack.c.l.b16 %v104
  %v516 = vunpack.c.h.b16 %v104
  %v517 = vunpack.c.l.b16 %v105
  %v518 = vunpack.c.h.b16 %v105
  %v519 = vunpack.c.l.b16 %v106
  %v520 = vunpack.c.h.b16 %v106
  %v521 = vunpack.c.l.b16 %v107
  %v522 = vunpack.c.h.b16 %v107
  %v523 = vunpack.c.l.b16 %v108
  %v524 = vunpack.c.h.b16 %v108
  %v525 = vunpack.c.l.b16 %v109
  %v526 = vunpack.c.h.b16 %v109
  %v527 = vunpack.c.l.b16 %v110
  %v528 = vunpack.c.h.b16 %v110
  %v529 = vunpack.c.l.b16 %v111
  %v530 = vunpack.c.h.b16 %v111
  %v531 = vunpack.c.l.b16 %v112
  %v532 = vunpack.c.h.b16 %v112
  %v533 = vunpack.c.l.b16 %v113
  %v534 = vunpack.c.h.b16 %v113
  %v535 = vunpack.c.l.b16 %v114
  %v536 = vunpack.c.h.b16 %v114
  %v537 = vunpack.c.l.b16 %v115
  %v538 = vunpack.c.h.b16 %v115
  %v539 = vunpack.c.l.b16 %v116
  %v540 = vunpack.c.h.b16 %v116
  %v541 = vunpack.c.l.b16 %v117
  %v542 = vunpack.c.h.b16 %v117
  %v543 = vunpack.c.l.b16 %v118
  %v544 = vunpack.c.h.b16 %v118
  %v545 = vunpack.c.l.b16 %v119
  %v546 = vunpack.c.h.b16 %v119
  %v547 = vunpack.c.l.b16 %v120
  %v548 = vunpack.c.h.b16 %v120
  %v549 = vunpack.c.l.b16 %v121
  %v550 = vunpack.c.h.b16 %v121
  %v551 = vunpack.c.l.b16 %v122
  %v552 = vunpack.c.h.b16 %v122
  %v553 = vunpack.c.l.b16 %v123
  %v554 = vunpack.c.h.b16 %v123
  %v555 = vunpack.c.l.b16 %v124
  %v556 = vunpack.c.h.b16 %v124
  %v557 = vunpack.c.l.b16 %v125
  %v558 = vunpack.c.h.b16 %v125
  %v559 = vunpack.c.l.b16 %v126
  %v560 = vunpack.c.h.b16 %v126
  %v561 = vunpack.c.l.b16 %v127
  %v562 = vunpack.c.h.b16 %v127
  %v563 = vunpack.c.l.b16 %v128
  %v564 = vunpack.c.h.b16 %v128
  %v565 = vunpack.c.l.b16 %v129
  %v566 = vunpack.c.h.b16 %v129
  %v567 = vunpack.c.l.b16 %v130
  %v568 = vunpack.c.h.b16 %v130
  %v569 = vunpack.c.l.b16 %v131
  %v570 = vunpack.c.h.b16 %v131
  %v571 = vunpack.c.l.b16 %v132
  %v572 = vunpack.c.h.b16 %v132
  %v573 = vunpack.c.l.b16 %v133
  %v574 = vunpack.c.h.b16 %v133
  %v575 = vunpack.c.l.b16 %v134
  %v576 = vunpack.c.h.b16 %v134
  %v577 = vunpack.c.l.b16 %v135
  %v578 = vunpack.c.h.b16 %v135
  %v579 = vunpack.c.l.b16 %v136
  %v580 = vunpack.c.h.b16 %v136
  %v581 = vunpack.c.l.b16 %v137
  %v582 = vunpack.c.h.b16 %v137
  %v583 = vunpack.c.l.b16 %v138
  %v584 = vunpack.c.h.b16 %v138
  %v585 = vunpack.c.l.b16 %v139
  %v586 = vunpack.c.h.b16 %v139
  %v587 = vunpack.c.l.b16 %v140
  %v588 = vunpack.c.h.b16 %v140
  %v589 = vunpack.c.l.b16 %v141
  %v590 = vunpack.c.h.b16 %v141
  %v591 = vunpack.c.l.b16 %v142
  %v592 = vunpack.c.h.b16 %v142
  %v593 = vunpack.c.l.b16 %v143
  %v594 = vunpack.c.h.b16 %v143
  %v595 = vunpack.c.l.b16 %v144
  %v596 = vunpack.c.h.b16 %v144
  %v597 = vunpack.c.l.b16 %v145
  %v598 = vunpack.c.h.b16 %v145
  %v599 = vpack.c.b16 %v347, %v343
  %v600 = vpack.c.b16 %v348, %v344
  %v601 = vpack.c.b16 %v349, %v345
  %v602 = vpack.c.b16 %v350, %v346
  %v603 = vpack.c.b16 %v355, %v351
  %v604 = vpack.c.b16 %v356, %v352
  %v605 = vpack.c.b16 %v357, %v353
  %v606 = vpack.c.b16 %v358, %v354
  %v607 = vpack.c.b16 %v363, %v359
  %v608 = vpack.c.b16 %v364, %v360
  %v609 = vpack.c.b16 %v365, %v361
  %v610 = vpack.c.b16 %v366, %v362
  %v611 = vpack.c.b16 %v371, %v367
  %v612 = vpack.c.b16 %v372, %v368
  %v613 = vpack.c.b16 %v373, %v369
  %v614 = vpack.c.b16 %v374, %v370
  %v615 = vpack.c.b16 %v379, %v375
  %v616 = vpack.c.b16 %v380, %v376
  %v617 = vpack.c.b16 %v381, %v377
  %v618 = vpack.c.b16 %v382, %v378
  %v619 = vpack.c.b16 %v387, %v383
  %v620 = vpack.c.b16 %v388, %v384
  %v621 = vpack.c.b16 %v389, %v385
  %v622 = vpack.c.b16 %v390, %v386
  %v623 = vpack.c.b16 %v395, %v391
  %v624 = vpack.c.b16 %v396, %v392
  %v625 = vpack.c.b16 %v397, %v393
  %v626 = vpack.c.b16 %v398, %v394
  %v627 = vpack.c.b16 %v403, %v399
  %v628 = vpack.c.b16 %v404, %v400
  %v629 = vpack.c.b16 %v405, %v401
  %v630 = vpack.c.b16 %v406, %v402
  %v631 = vpack.c.b16 %v411, %v407
  %v632 = vpack.c.b16 %v412, %v408
  %v633 = vpack.c.b16 %v413, %v409
  %v634 = vpack.c.b16 %v414, %v410
  %v635 = vpack.c.b16 %v419, %v415
  %v636 = vpack.c.b16 %v420, %v416
  %v637 = vpack.c.b16 %v421, %v417
  %v638 = vpack.c.b16 %v422, %v418
  %v639 = vpack.c.b16 %v427, %v423
  %v640 = vpack.c.b16 %v428, %v424
  %v641 = vpack.c.b16 %v429, %v425
  %v642 = vpack.c.b16 %v430, %v426
  %v643 = vpack.c.b16 %v435, %v431
  %v644 = vpack.c.b16 %v436, %v432
  %v645 = vpack.c.b16 %v437, %v433
  %v646 = vpack.c.b16 %v438, %v434
  %v647 = vpack.c.b16 %v443, %v439
  %v648 = vpack.c.b16 %v444, %v440
  %v649 = vpack.c.b16 %v445, %v441
  %v650 = vpack.c.b16 %v446, %v442
  %v651 = vpack.c.b16 %v451, %v447
  %v652 = vpack.c.b16 %v452, %v448
  %v653 = vpack.c.b16 %v453, %v449
  %v654 = vpack.c.b16 %v454, %v450
  %v655 = vpack.c.b16 %v459, %v455
  %v656 = vpack.c.b16 %v460, %v456
  %v657 = vpack.c.b16 %v461, %v457
  %v658 = vpack.c.b16 %v462, %v458
  %v659 = vpack.c.b16 %v467, %v463
  %v660 = vpack.c.b16 %v468, %v464
  %v661 = vpack.c.b16 %v469, %v465
  %v662 = vpack.c.b16 %v470, %v466
  %v663 = vpack.c.b16 %v475, %v471
  %v664 = vpack.c.b16 %v476, %v472
  %v665 = vpack.c.b16 %v477, %v473
  %v666 = vpack.c.b16 %v478, %v474
  %v667 = vpack.c.b16 %v483, %v479
  %v668 = vpack.c.b16 %v484, %v480
  %v669 = vpack.c.b16 %v485, %v481
  %v670 = vpack.c.b16 %v486, %v482
  %v671 = vpack.c.b16 %v491, %v487
  %v672 = vpack.c.b16 %v492, %v488
  %v673 = vpack.c.b16 %v493, %v489
  %v674 = vpack.c.b16 %v494, %v490
  %v675 = vpack.c.b16 %v499, %v495
  %v676 = vpack.c.b16 %v500, %v496
  %v677 = vpack.c.b16 %v501, %v497
  %v678 = vpack.c.b16 %v502, %v498
  %v679 = vpack.c.b16 %v507, %v503
  %v680 = vpack.c.b16 %v508, %v504
  %v681 = vpack.c.b16 %v509, %v505
  %v682 = vpack.c.b16 %v510, %v506
  %v683 = vpack.c.b16 %v515, %v511
  %v684 = vpack.c.b16 %v516, %v512
  %v685 = vpack.c.b16 %v517, %v513
  %v686 = vpack.c.b16 %v518, %v514
  %v687 = vpack.c.b16 %v523, %v519
  %v688 = vpack.c.b16 %v524, %v520
  %v689 = vpack.c.b16 %v525, %v521
  %v690 = vpack.c.b16 %v526, %v522
  %v691 = vpack.c.b16 %v531, %v527
  %v692 = vpack.c.b16 %v532, %v528
  %v693 = vpack.c.b16 %v533, %v529
  %v694 = vpack.c.b16 %v534, %v530
  %v695 = vpack.c.b16 %v539, %v535
  %v696 = vpack.c.b16 %v540, %v536
  %v697 = vpack.c.b16 %v541, %v537
  %v698 = vpack.c.b16 %v542, %v538
  %v699 = vpack.c.b16 %v547, %v543
  %v700 = vpack.c.b16 %v548, %v544
  %v701 = vpack.c.b16 %v549, %v545
  %v702 = vpack.c.b16 %v550, %v546
  %v703 = vpack.c.b16 %v555, %v551
  %v704 = vpack.c.b16 %v556, %v552
  %v705 = vpack.c.b16 %v557, %v553
  %v706 = vpack.c.b16 %v558, %v554
  %v707 = vpack.c.b16 %v563, %v559
  %v708 = vpack.c.b16 %v564, %v560
  %v709 = vpack.c.b16 %v565, %v561
  %v710 = vpack.c.b16 %v566, %v562
  %v711 = vpack.c.b16 %v571, %v567
  %v712 = vpack.c.b16 %v572, %v568
  %v713 = vpack.c.b16 %v573, %v569
  %v714 = vpack.c.b16 %v574, %v570
  %v715 = vpack.c.b16 %v579, %v575
  %v716 = vpack.c.b16 %v580, %v576
  %v717 = vpack.c.b16 %v581, %v577
  %v718 = vpack.c.b16 %v582, %v578
  %v719 = vpack.c.b16 %v587, %v583
  %v720 = vpack.c.b16 %v588, %v584
  %v721 = vpack.c.b16 %v589, %v585
  %v722 = vpack.c.b16 %v590, %v586
  %v723 = vpack.c.b16 %v595, %v591
  %v724 = vpack.c.b16 %v596, %v592
  %v725 = vpack.c.b16 %v597, %v593
  %v726 = vpack.c.b16 %v598, %v594
  %v919 = vunpack.c.l.b16 %v146
  %v920 = vunpack.c.l.b16 %v147
  %v921 = vunpack.c.l.b16 %v148
  %v922 = vunpack.c.l.b16 %v149
  %v923 = vunpack.c.l.b16 %v150
  %v924 = vunpack.c.l.b16 %v151
  %v925 = vunpack.c.l.b16 %v152
  %v926 = vunpack.c.l.b16 %v153
  %v927 = vunpack.c.l.b16 %v154
  %v928 = vunpack.c.l.b16 %v155
  %v929 = vunpack.c.l.b16 %v156
  %v930 = vunpack.c.l.b16 %v157
  %v931 = vunpack.c.l.b16 %v158
  %v932 = vunpack.c.l.b16 %v159
  %v933 = vunpack.c.l.b16 %v160
  %v934 = vunpack.c.l.b16 %v161
  %v935 = vunpack.c.l.b16 %v162
  %v936 = vunpack.c.l.b16 %v163
  %v937 = vunpack.c.l.b16 %v164
  %v938 = vunpack.c.l.b16 %v165
  %v939 = vunpack.c.l.b16 %v166
  %v940 = vunpack.c.l.b16 %v167
  %v941 = vunpack.c.l.b16 %v168
  %v942 = vunpack.c.l.b16 %v169
  %v943 = vunpack.c.l.b16 %v170
  %v944 = vunpack.c.l.b16 %v171
  %v945 = vunpack.c.l.b16 %v172
  %v946 = vunpack.c.l.b16 %v173
  %v947 = vunpack.c.l.b16 %v174
  %v948 = vunpack.c.l.b16 %v175
  %v949 = vunpack.c.l.b16 %v176
  %v950 = vunpack.c.l.b16 %v177
  %v951 = vunpack.c.l.b16 %v178
  %v952 = vunpack.c.l.b16 %v179
  %v953 = vunpack.c.l.b16 %v180
  %v954 = vunpack.c.l.b16 %v181
  %v955 = vunpack.c.l.b16 %v182
  %v956 = vunpack.c.l.b16 %v183
  %v957 = vunpack.c.l.b16 %v184
  %v958 = vunpack.c.l.b16 %v185
  %v959 = vunpack.c.l.b16 %v186
  %v960 = vunpack.c.l.b16 %v187
  %v961 = vunpack.c.l.b16 %v188
  %v962 = vunpack.c.l.b16 %v189
  %v963 = vunpack.c.l.b16 %v190
  %v964 = vunpack.c.l.b16 %v191
  %v965 = vunpack.c.l.b16 %v192
  %v966 = vunpack.c.l.b16 %v193
  %v967 = vunpack.c.l.b16 %v194
  %v968 = vunpack.c.l.b16 %v195
  %v969 = vunpack.c.l.b16 %v196
  %v970 = vunpack.c.l.b16 %v197
  %v971 = vunpack.c.l.b16 %v198
  %v972 = vunpack.c.l.b16 %v199
  %v973 = vunpack.c.l.b16 %v200
  %v974 = vunpack.c.l.b16 %v201
  %v975 = vunpack.c.l.b16 %v202
  %v976 = vunpack.c.l.b16 %v203
  %v977 = vunpack.c.l.b16 %v204
  %v978 = vunpack.c.l.b16 %v205
  %v979 = vunpack.c.l.b16 %v206
  %v980 = vunpack.c.l.b16 %v207
  %v981 = vunpack.c.l.b16 %v208
  %v982 = vunpack.c.l.b16 %v209
  %v983 = vpack.c.b16 %v920, %v919
  %v984 = vpack.c.b16 %v922, %v921
  %v985 = vpack.c.b16 %v924, %v923
  %v986 = vpack.c.b16 %v926, %v925
  %v987 = vpack.c.b16 %v928, %v927
  %v988 = vpack.c.b16 %v930, %v929
  %v989 = vpack.c.b16 %v932, %v931
  %v990 = vpack.c.b16 %v934, %v933
  %v991 = vpack.c.b16 %v936, %v935
  %v992 = vpack.c.b16 %v938, %v937
  %v993 = vpack.c.b16 %v940, %v939
  %v994 = vpack.c.b16 %v942, %v941
  %v995 = vpack.c.b16 %v944, %v943
  %v996 = vpack.c.b16 %v946, %v945
  %v997 = vpack.c.b16 %v948, %v947
  %v998 = vpack.c.b16 %v950, %v949
  %v999 = vpack.c.b16 %v952, %v951
  %v1000 = vpack.c.b16 %v954, %v953
  %v1001 = vpack.c.b16 %v956, %v955
  %v1002 = vpack.c.b16 %v958, %v957
  %v1003 = vpack.c.b16 %v960, %v959
  %v1004 = vpack.c.b16 %v962, %v961
  %v1005 = vpack.c.b16 %v964, %v963
  %v1006 = vpack.c.b16 %v966, %v965
  %v1007 = vpack.c.b16 %v968, %v967
  %v1008 = vpack.c.b16 %v970, %v969
  %v1009 = vpack.c.b16 %v972, %v971
  %v1010 = vpack.c.b16 %v974, %v973
  %v1011 = vpack.c.b16 %v976, %v975
  %v1012 = vpack.c.b16 %v978, %v977
  %v1013 = vpack.c.b16 %v980, %v979
  %v1014 = vpack.c.b16 %v982, %v981
  %1047 = vmatprep.subr.bf16.mxu0 0
  %1048 = vmatpush1.bf16.msra.mxu0 %v990
  %1049 = vmatprep.subr.bf16.mxu0 0
  %1050 = vmatpush1.bf16.msra.mxu0 %v989
  %1051 = vmatprep.subr.bf16.mxu0 0
  %1052 = vmatpush1.bf16.msra.mxu0 %v988
  %1053 = vmatprep.subr.bf16.mxu0 0
  %1054 = vmatpush1.bf16.msra.mxu0 %v987
  %1055 = vmatprep.subr.bf16.mxu0 0
  %1056 = vmatpush1.bf16.msra.mxu0 %v986
  %1057 = vmatprep.subr.bf16.mxu0 0
  %1058 = vmatpush1.bf16.msra.mxu0 %v985
  %1059 = vmatprep.subr.bf16.mxu0 0
  %1060 = vmatpush1.bf16.msra.mxu0 %v984
  %1061 = vmatprep.subr.bf16.mxu0 0
  %1062 = vmatpush1.bf16.msra.mxu0 %v983
  %1063 = vmatprep.subr.bf16.mxu0 0
  %1064 = vmatpush2.bf16.msra.mxu0 %v998
  %1065 = vmatprep.subr.bf16.mxu0 0
  %1066 = vmatpush2.bf16.msra.mxu0 %v997
  %1067 = vmatprep.subr.bf16.mxu0 0
  %1068 = vmatpush2.bf16.msra.mxu0 %v996
  %1069 = vmatprep.subr.bf16.mxu0 0
  %1070 = vmatpush2.bf16.msra.mxu0 %v995
  %1071 = vmatprep.subr.bf16.mxu0 0
  %1072 = vmatpush2.bf16.msra.mxu0 %v994
  %1073 = vmatprep.subr.bf16.mxu0 0
  %1074 = vmatpush2.bf16.msra.mxu0 %v993
  %1075 = vmatprep.subr.bf16.mxu0 0
  %1076 = vmatpush2.bf16.msra.mxu0 %v992
  %1077 = vmatprep.subr.bf16.mxu0 0
  %1078 = vmatpush2.bf16.msra.mxu0 %v991
  %1079 = vmatprep.mubr.bf16.mxu0 %v600
  %1080 = vmatmul.mubr.bf16.gmra.mxu0 %v599
  %v1081 = vpop.f32.mrf.mxu0
  %v1082 = vadd.f32 %v214, %v1081
  %v1083 = vpop.f32.mrf.mxu0
  %v1084 = vpop.f32.mrf.mxu0
  %v1085 = vadd.f32 %v214, %v1084
  %v1086 = vpop.f32.mrf.mxu0
  %1087 = vmatprep.mubr.bf16.mxu0 %v604
  %1088 = vmatmul.mubr.bf16.gmra.mxu0 %v603
  %v1089 = vpop.f32.mrf.mxu0
  %v1090 = vadd.f32 %v214, %v1089
  %v1091 = vpop.f32.mrf.mxu0
  %v1092 = vpop.f32.mrf.mxu0
  %v1093 = vadd.f32 %v214, %v1092
  %v1094 = vpop.f32.mrf.mxu0
  %1095 = vmatprep.mubr.bf16.mxu0 %v608
  %1096 = vmatmul.mubr.bf16.gmra.mxu0 %v607
  %v1097 = vpop.f32.mrf.mxu0
  %v1098 = vadd.f32 %v214, %v1097
  %v1099 = vpop.f32.mrf.mxu0
  %v1100 = vpop.f32.mrf.mxu0
  %v1101 = vadd.f32 %v214, %v1100
  %v1102 = vpop.f32.mrf.mxu0
  %1103 = vmatprep.mubr.bf16.mxu0 %v612
  %1104 = vmatmul.mubr.bf16.gmra.mxu0 %v611
  %v1105 = vpop.f32.mrf.mxu0
  %v1106 = vadd.f32 %v214, %v1105
  %v1107 = vpop.f32.mrf.mxu0
  %v1108 = vpop.f32.mrf.mxu0
  %v1109 = vadd.f32 %v214, %v1108
  %v1110 = vpop.f32.mrf.mxu0
  %1111 = vmatprep.mubr.bf16.mxu0 %v616
  %1112 = vmatmul.mubr.bf16.gmra.mxu0 %v615
  %v1113 = vpop.f32.mrf.mxu0
  %v1114 = vadd.f32 %v214, %v1113
  %v1115 = vpop.f32.mrf.mxu0
  %v1116 = vpop.f32.mrf.mxu0
  %v1117 = vadd.f32 %v214, %v1116
  %v1118 = vpop.f32.mrf.mxu0
  %1119 = vmatprep.mubr.bf16.mxu0 %v620
  %1120 = vmatmul.mubr.bf16.gmra.mxu0 %v619
  %v1121 = vpop.f32.mrf.mxu0
  %v1122 = vadd.f32 %v214, %v1121
  %v1123 = vpop.f32.mrf.mxu0
  %v1124 = vpop.f32.mrf.mxu0
  %v1125 = vadd.f32 %v214, %v1124
  %v1126 = vpop.f32.mrf.mxu0
  %1127 = vmatprep.mubr.bf16.mxu0 %v624
  %1128 = vmatmul.mubr.bf16.gmra.mxu0 %v623
  %v1129 = vpop.f32.mrf.mxu0
  %v1130 = vadd.f32 %v214, %v1129
  %v1131 = vpop.f32.mrf.mxu0
  %v1132 = vpop.f32.mrf.mxu0
  %v1133 = vadd.f32 %v214, %v1132
  %v1134 = vpop.f32.mrf.mxu0
  %1135 = vmatprep.mubr.bf16.mxu0 %v628
  %1136 = vmatmul.mubr.bf16.gmra.mxu0 %v627
  %v1137 = vpop.f32.mrf.mxu0
  %v1138 = vadd.f32 %v214, %v1137
  %v1139 = vpop.f32.mrf.mxu0
  %v1140 = vpop.f32.mrf.mxu0
  %v1141 = vadd.f32 %v214, %v1140
  %v1142 = vpop.f32.mrf.mxu0
  %1143 = vmatprep.mubr.bf16.mxu0 %v632
  %1144 = vmatmul.mubr.bf16.gmra.mxu0 %v631
  %v1145 = vpop.f32.mrf.mxu0
  %v1146 = vadd.f32 %v214, %v1145
  %v1147 = vpop.f32.mrf.mxu0
  %v1148 = vpop.f32.mrf.mxu0
  %v1149 = vadd.f32 %v214, %v1148
  %v1150 = vpop.f32.mrf.mxu0
  %1151 = vmatprep.mubr.bf16.mxu0 %v636
  %1152 = vmatmul.mubr.bf16.gmra.mxu0 %v635
  %v1153 = vpop.f32.mrf.mxu0
  %v1154 = vadd.f32 %v214, %v1153
  %v1155 = vpop.f32.mrf.mxu0
  %v1156 = vpop.f32.mrf.mxu0
  %v1157 = vadd.f32 %v214, %v1156
  %v1158 = vpop.f32.mrf.mxu0
  %1159 = vmatprep.mubr.bf16.mxu0 %v640
  %1160 = vmatmul.mubr.bf16.gmra.mxu0 %v639
  %v1161 = vpop.f32.mrf.mxu0
  %v1162 = vadd.f32 %v214, %v1161
  %v1163 = vpop.f32.mrf.mxu0
  %v1164 = vpop.f32.mrf.mxu0
  %v1165 = vadd.f32 %v214, %v1164
  %v1166 = vpop.f32.mrf.mxu0
  %1167 = vmatprep.mubr.bf16.mxu0 %v644
  %1168 = vmatmul.mubr.bf16.gmra.mxu0 %v643
  %v1169 = vpop.f32.mrf.mxu0
  %v1170 = vadd.f32 %v214, %v1169
  %v1171 = vpop.f32.mrf.mxu0
  %v1172 = vpop.f32.mrf.mxu0
  %v1173 = vadd.f32 %v214, %v1172
  %v1174 = vpop.f32.mrf.mxu0
  %1175 = vmatprep.mubr.bf16.mxu0 %v648
  %1176 = vmatmul.mubr.bf16.gmra.mxu0 %v647
  %v1177 = vpop.f32.mrf.mxu0
  %v1178 = vadd.f32 %v214, %v1177
  %v1179 = vpop.f32.mrf.mxu0
  %v1180 = vpop.f32.mrf.mxu0
  %v1181 = vadd.f32 %v214, %v1180
  %v1182 = vpop.f32.mrf.mxu0
  %1183 = vmatprep.mubr.bf16.mxu0 %v652
  %1184 = vmatmul.mubr.bf16.gmra.mxu0 %v651
  %v1185 = vpop.f32.mrf.mxu0
  %v1186 = vadd.f32 %v214, %v1185
  %v1187 = vpop.f32.mrf.mxu0
  %v1188 = vpop.f32.mrf.mxu0
  %v1189 = vadd.f32 %v214, %v1188
  %v1190 = vpop.f32.mrf.mxu0
  %1191 = vmatprep.mubr.bf16.mxu0 %v656
  %1192 = vmatmul.mubr.bf16.gmra.mxu0 %v655
  %v1193 = vpop.f32.mrf.mxu0
  %v1194 = vadd.f32 %v214, %v1193
  %v1195 = vpop.f32.mrf.mxu0
  %v1196 = vpop.f32.mrf.mxu0
  %v1197 = vadd.f32 %v214, %v1196
  %v1198 = vpop.f32.mrf.mxu0
  %1199 = vmatprep.mubr.bf16.mxu0 %v660
  %1200 = vmatmul.mubr.bf16.gmra.mxu0 %v659
  %v1201 = vpop.f32.mrf.mxu0
  %v1202 = vadd.f32 %v214, %v1201
  %v1203 = vpop.f32.mrf.mxu0
  %v1204 = vpop.f32.mrf.mxu0
  %v1205 = vadd.f32 %v214, %v1204
  %v1206 = vpop.f32.mrf.mxu0
  %1207 = vmatprep.mubr.bf16.mxu0 %v664
  %1208 = vmatmul.mubr.bf16.gmra.mxu0 %v663
  %v1209 = vpop.f32.mrf.mxu0
  %v1210 = vadd.f32 %v214, %v1209
  %v1211 = vpop.f32.mrf.mxu0
  %v1212 = vpop.f32.mrf.mxu0
  %v1213 = vadd.f32 %v214, %v1212
  %v1214 = vpop.f32.mrf.mxu0
  %1215 = vmatprep.mubr.bf16.mxu0 %v668
  %1216 = vmatmul.mubr.bf16.gmra.mxu0 %v667
  %v1217 = vpop.f32.mrf.mxu0
  %v1218 = vadd.f32 %v214, %v1217
  %v1219 = vpop.f32.mrf.mxu0
  %v1220 = vpop.f32.mrf.mxu0
  %v1221 = vadd.f32 %v214, %v1220
  %v1222 = vpop.f32.mrf.mxu0
  %1223 = vmatprep.mubr.bf16.mxu0 %v672
  %1224 = vmatmul.mubr.bf16.gmra.mxu0 %v671
  %v1225 = vpop.f32.mrf.mxu0
  %v1226 = vadd.f32 %v214, %v1225
  %v1227 = vpop.f32.mrf.mxu0
  %v1228 = vpop.f32.mrf.mxu0
  %v1229 = vadd.f32 %v214, %v1228
  %v1230 = vpop.f32.mrf.mxu0
  %1231 = vmatprep.mubr.bf16.mxu0 %v676
  %1232 = vmatmul.mubr.bf16.gmra.mxu0 %v675
  %v1233 = vpop.f32.mrf.mxu0
  %v1234 = vadd.f32 %v214, %v1233
  %v1235 = vpop.f32.mrf.mxu0
  %v1236 = vpop.f32.mrf.mxu0
  %v1237 = vadd.f32 %v214, %v1236
  %v1238 = vpop.f32.mrf.mxu0
  %1239 = vmatprep.mubr.bf16.mxu0 %v680
  %1240 = vmatmul.mubr.bf16.gmra.mxu0 %v679
  %v1241 = vpop.f32.mrf.mxu0
  %v1242 = vadd.f32 %v214, %v1241
  %v1243 = vpop.f32.mrf.mxu0
  %v1244 = vpop.f32.mrf.mxu0
  %v1245 = vadd.f32 %v214, %v1244
  %v1246 = vpop.f32.mrf.mxu0
  %1247 = vmatprep.mubr.bf16.mxu0 %v684
  %1248 = vmatmul.mubr.bf16.gmra.mxu0 %v683
  %v1249 = vpop.f32.mrf.mxu0
  %v1250 = vadd.f32 %v214, %v1249
  %v1251 = vpop.f32.mrf.mxu0
  %v1252 = vpop.f32.mrf.mxu0
  %v1253 = vadd.f32 %v214, %v1252
  %v1254 = vpop.f32.mrf.mxu0
  %1255 = vmatprep.mubr.bf16.mxu0 %v688
  %1256 = vmatmul.mubr.bf16.gmra.mxu0 %v687
  %v1257 = vpop.f32.mrf.mxu0
  %v1258 = vadd.f32 %v214, %v1257
  %v1259 = vpop.f32.mrf.mxu0
  %v1260 = vpop.f32.mrf.mxu0
  %v1261 = vadd.f32 %v214, %v1260
  %v1262 = vpop.f32.mrf.mxu0
  %1263 = vmatprep.mubr.bf16.mxu0 %v692
  %1264 = vmatmul.mubr.bf16.gmra.mxu0 %v691
  %v1265 = vpop.f32.mrf.mxu0
  %v1266 = vadd.f32 %v214, %v1265
  %v1267 = vpop.f32.mrf.mxu0
  %v1268 = vpop.f32.mrf.mxu0
  %v1269 = vadd.f32 %v214, %v1268
  %v1270 = vpop.f32.mrf.mxu0
  %1271 = vmatprep.mubr.bf16.mxu0 %v696
  %1272 = vmatmul.mubr.bf16.gmra.mxu0 %v695
  %v1273 = vpop.f32.mrf.mxu0
  %v1274 = vadd.f32 %v214, %v1273
  %v1275 = vpop.f32.mrf.mxu0
  %v1276 = vpop.f32.mrf.mxu0
  %v1277 = vadd.f32 %v214, %v1276
  %v1278 = vpop.f32.mrf.mxu0
  %1279 = vmatprep.mubr.bf16.mxu0 %v700
  %1280 = vmatmul.mubr.bf16.gmra.mxu0 %v699
  %v1281 = vpop.f32.mrf.mxu0
  %v1282 = vadd.f32 %v214, %v1281
  %v1283 = vpop.f32.mrf.mxu0
  %v1284 = vpop.f32.mrf.mxu0
  %v1285 = vadd.f32 %v214, %v1284
  %v1286 = vpop.f32.mrf.mxu0
  %1287 = vmatprep.mubr.bf16.mxu0 %v704
  %1288 = vmatmul.mubr.bf16.gmra.mxu0 %v703
  %v1289 = vpop.f32.mrf.mxu0
  %v1290 = vadd.f32 %v214, %v1289
  %v1291 = vpop.f32.mrf.mxu0
  %v1292 = vpop.f32.mrf.mxu0
  %v1293 = vadd.f32 %v214, %v1292
  %v1294 = vpop.f32.mrf.mxu0
  %1295 = vmatprep.mubr.bf16.mxu0 %v708
  %1296 = vmatmul.mubr.bf16.gmra.mxu0 %v707
  %v1297 = vpop.f32.mrf.mxu0
  %v1298 = vadd.f32 %v214, %v1297
  %v1299 = vpop.f32.mrf.mxu0
  %v1300 = vpop.f32.mrf.mxu0
  %v1301 = vadd.f32 %v214, %v1300
  %v1302 = vpop.f32.mrf.mxu0
  %1303 = vmatprep.mubr.bf16.mxu0 %v712
  %1304 = vmatmul.mubr.bf16.gmra.mxu0 %v711
  %v1305 = vpop.f32.mrf.mxu0
  %v1306 = vadd.f32 %v214, %v1305
  %v1307 = vpop.f32.mrf.mxu0
  %v1308 = vpop.f32.mrf.mxu0
  %v1309 = vadd.f32 %v214, %v1308
  %v1310 = vpop.f32.mrf.mxu0
  %1311 = vmatprep.mubr.bf16.mxu0 %v716
  %1312 = vmatmul.mubr.bf16.gmra.mxu0 %v715
  %v1313 = vpop.f32.mrf.mxu0
  %v1314 = vadd.f32 %v214, %v1313
  %v1315 = vpop.f32.mrf.mxu0
  %v1316 = vpop.f32.mrf.mxu0
  %v1317 = vadd.f32 %v214, %v1316
  %v1318 = vpop.f32.mrf.mxu0
  %1319 = vmatprep.mubr.bf16.mxu0 %v720
  %1320 = vmatmul.mubr.bf16.gmra.mxu0 %v719
  %v1321 = vpop.f32.mrf.mxu0
  %v1322 = vadd.f32 %v214, %v1321
  %v1323 = vpop.f32.mrf.mxu0
  %v1324 = vpop.f32.mrf.mxu0
  %v1325 = vadd.f32 %v214, %v1324
  %v1326 = vpop.f32.mrf.mxu0
  %1327 = vmatprep.mubr.bf16.mxu0 %v724
  %1328 = vmatmul.mubr.bf16.gmra.mxu0 %v723
  %v1329 = vpop.f32.mrf.mxu0
  %v1330 = vadd.f32 %v214, %v1329
  %v1331 = vpop.f32.mrf.mxu0
  %v1332 = vpop.f32.mrf.mxu0
  %v1333 = vadd.f32 %v214, %v1332
  %v1334 = vpop.f32.mrf.mxu0
  %1335 = vdwg.mxu0
  %1336 = vmatprep.subr.bf16.mxu0 0
  %1337 = vmatpush1.bf16.msra.mxu0 %v1006
  %1338 = vmatprep.subr.bf16.mxu0 0
  %1339 = vmatpush1.bf16.msra.mxu0 %v1005
  %1340 = vmatprep.subr.bf16.mxu0 0
  %1341 = vmatpush1.bf16.msra.mxu0 %v1004
  %1342 = vmatprep.subr.bf16.mxu0 0
  %1343 = vmatpush1.bf16.msra.mxu0 %v1003
  %1344 = vmatprep.subr.bf16.mxu0 0
  %1345 = vmatpush1.bf16.msra.mxu0 %v1002
  %1346 = vmatprep.subr.bf16.mxu0 0
  %1347 = vmatpush1.bf16.msra.mxu0 %v1001
  %1348 = vmatprep.subr.bf16.mxu0 0
  %1349 = vmatpush1.bf16.msra.mxu0 %v1000
  %1350 = vmatprep.subr.bf16.mxu0 0
  %1351 = vmatpush1.bf16.msra.mxu0 %v999
  %1352 = vmatprep.subr.bf16.mxu0 0
  %1353 = vmatpush2.bf16.msra.mxu0 %v1014
  %1354 = vmatprep.subr.bf16.mxu0 0
  %1355 = vmatpush2.bf16.msra.mxu0 %v1013
  %1356 = vmatprep.subr.bf16.mxu0 0
  %1357 = vmatpush2.bf16.msra.mxu0 %v1012
  %1358 = vmatprep.subr.bf16.mxu0 0
  %1359 = vmatpush2.bf16.msra.mxu0 %v1011
  %1360 = vmatprep.subr.bf16.mxu0 0
  %1361 = vmatpush2.bf16.msra.mxu0 %v1010
  %1362 = vmatprep.subr.bf16.mxu0 0
  %1363 = vmatpush2.bf16.msra.mxu0 %v1009
  %1364 = vmatprep.subr.bf16.mxu0 0
  %1365 = vmatpush2.bf16.msra.mxu0 %v1008
  %1366 = vmatprep.subr.bf16.mxu0 0
  %1367 = vmatpush2.bf16.msra.mxu0 %v1007
  %1368 = vmatprep.mubr.bf16.mxu0 %v602
  %1369 = vmatmul.mubr.bf16.gmra.mxu0 %v601
  %v1370 = vpop.f32.mrf.mxu0
  %v1371 = vadd.f32 %v1082, %v1370
  %v1372 = vpop.f32.mrf.mxu0
  %v1373 = vpop.f32.mrf.mxu0
  %v1374 = vadd.f32 %v1085, %v1373
  %v1375 = vpop.f32.mrf.mxu0
  %1376 = vmatprep.mubr.bf16.mxu0 %v606
  %1377 = vmatmul.mubr.bf16.gmra.mxu0 %v605
  %v1378 = vpop.f32.mrf.mxu0
  %v1379 = vadd.f32 %v1090, %v1378
  %v1380 = vpop.f32.mrf.mxu0
  %v1381 = vpop.f32.mrf.mxu0
  %v1382 = vadd.f32 %v1093, %v1381
  %v1383 = vpop.f32.mrf.mxu0
  %1384 = vmatprep.mubr.bf16.mxu0 %v610
  %1385 = vmatmul.mubr.bf16.gmra.mxu0 %v609
  %v1386 = vpop.f32.mrf.mxu0
  %v1387 = vadd.f32 %v1098, %v1386
  %v1388 = vpop.f32.mrf.mxu0
  %v1389 = vpop.f32.mrf.mxu0
  %v1390 = vadd.f32 %v1101, %v1389
  %v1391 = vpop.f32.mrf.mxu0
  %1392 = vmatprep.mubr.bf16.mxu0 %v614
  %1393 = vmatmul.mubr.bf16.gmra.mxu0 %v613
  %v1394 = vpop.f32.mrf.mxu0
  %v1395 = vadd.f32 %v1106, %v1394
  %v1396 = vpop.f32.mrf.mxu0
  %v1397 = vpop.f32.mrf.mxu0
  %v1398 = vadd.f32 %v1109, %v1397
  %v1399 = vpop.f32.mrf.mxu0
  %1400 = vmatprep.mubr.bf16.mxu0 %v618
  %1401 = vmatmul.mubr.bf16.gmra.mxu0 %v617
  %v1402 = vpop.f32.mrf.mxu0
  %v1403 = vadd.f32 %v1114, %v1402
  %v1404 = vpop.f32.mrf.mxu0
  %v1405 = vpop.f32.mrf.mxu0
  %v1406 = vadd.f32 %v1117, %v1405
  %v1407 = vpop.f32.mrf.mxu0
  %1408 = vmatprep.mubr.bf16.mxu0 %v622
  %1409 = vmatmul.mubr.bf16.gmra.mxu0 %v621
  %v1410 = vpop.f32.mrf.mxu0
  %v1411 = vadd.f32 %v1122, %v1410
  %v1412 = vpop.f32.mrf.mxu0
  %v1413 = vpop.f32.mrf.mxu0
  %v1414 = vadd.f32 %v1125, %v1413
  %v1415 = vpop.f32.mrf.mxu0
  %1416 = vmatprep.mubr.bf16.mxu0 %v626
  %1417 = vmatmul.mubr.bf16.gmra.mxu0 %v625
  %v1418 = vpop.f32.mrf.mxu0
  %v1419 = vadd.f32 %v1130, %v1418
  %v1420 = vpop.f32.mrf.mxu0
  %v1421 = vpop.f32.mrf.mxu0
  %v1422 = vadd.f32 %v1133, %v1421
  %v1423 = vpop.f32.mrf.mxu0
  %1424 = vmatprep.mubr.bf16.mxu0 %v630
  %1425 = vmatmul.mubr.bf16.gmra.mxu0 %v629
  %v1426 = vpop.f32.mrf.mxu0
  %v1427 = vadd.f32 %v1138, %v1426
  %v1428 = vpop.f32.mrf.mxu0
  %v1429 = vpop.f32.mrf.mxu0
  %v1430 = vadd.f32 %v1141, %v1429
  %v1431 = vpop.f32.mrf.mxu0
  %1432 = vmatprep.mubr.bf16.mxu0 %v634
  %1433 = vmatmul.mubr.bf16.gmra.mxu0 %v633
  %v1434 = vpop.f32.mrf.mxu0
  %v1435 = vadd.f32 %v1146, %v1434
  %v1436 = vpop.f32.mrf.mxu0
  %v1437 = vpop.f32.mrf.mxu0
  %v1438 = vadd.f32 %v1149, %v1437
  %v1439 = vpop.f32.mrf.mxu0
  %1440 = vmatprep.mubr.bf16.mxu0 %v638
  %1441 = vmatmul.mubr.bf16.gmra.mxu0 %v637
  %v1442 = vpop.f32.mrf.mxu0
  %v1443 = vadd.f32 %v1154, %v1442
  %v1444 = vpop.f32.mrf.mxu0
  %v1445 = vpop.f32.mrf.mxu0
  %v1446 = vadd.f32 %v1157, %v1445
  %v1447 = vpop.f32.mrf.mxu0
  %1448 = vmatprep.mubr.bf16.mxu0 %v642
  %1449 = vmatmul.mubr.bf16.gmra.mxu0 %v641
  %v1450 = vpop.f32.mrf.mxu0
  %v1451 = vadd.f32 %v1162, %v1450
  %v1452 = vpop.f32.mrf.mxu0
  %v1453 = vpop.f32.mrf.mxu0
  %v1454 = vadd.f32 %v1165, %v1453
  %v1455 = vpop.f32.mrf.mxu0
  %1456 = vmatprep.mubr.bf16.mxu0 %v646
  %1457 = vmatmul.mubr.bf16.gmra.mxu0 %v645
  %v1458 = vpop.f32.mrf.mxu0
  %v1459 = vadd.f32 %v1170, %v1458
  %v1460 = vpop.f32.mrf.mxu0
  %v1461 = vpop.f32.mrf.mxu0
  %v1462 = vadd.f32 %v1173, %v1461
  %v1463 = vpop.f32.mrf.mxu0
  %1464 = vmatprep.mubr.bf16.mxu0 %v650
  %1465 = vmatmul.mubr.bf16.gmra.mxu0 %v649
  %v1466 = vpop.f32.mrf.mxu0
  %v1467 = vadd.f32 %v1178, %v1466
  %v1468 = vpop.f32.mrf.mxu0
  %v1469 = vpop.f32.mrf.mxu0
  %v1470 = vadd.f32 %v1181, %v1469
  %v1471 = vpop.f32.mrf.mxu0
  %1472 = vmatprep.mubr.bf16.mxu0 %v654
  %1473 = vmatmul.mubr.bf16.gmra.mxu0 %v653
  %v1474 = vpop.f32.mrf.mxu0
  %v1475 = vadd.f32 %v1186, %v1474
  %v1476 = vpop.f32.mrf.mxu0
  %v1477 = vpop.f32.mrf.mxu0
  %v1478 = vadd.f32 %v1189, %v1477
  %v1479 = vpop.f32.mrf.mxu0
  %1480 = vmatprep.mubr.bf16.mxu0 %v658
  %1481 = vmatmul.mubr.bf16.gmra.mxu0 %v657
  %v1482 = vpop.f32.mrf.mxu0
  %v1483 = vadd.f32 %v1194, %v1482
  %v1484 = vpop.f32.mrf.mxu0
  %v1485 = vpop.f32.mrf.mxu0
  %v1486 = vadd.f32 %v1197, %v1485
  %v1487 = vpop.f32.mrf.mxu0
  %1488 = vmatprep.mubr.bf16.mxu0 %v662
  %1489 = vmatmul.mubr.bf16.gmra.mxu0 %v661
  %v1490 = vpop.f32.mrf.mxu0
  %v1491 = vadd.f32 %v1202, %v1490
  %v1492 = vpop.f32.mrf.mxu0
  %v1493 = vpop.f32.mrf.mxu0
  %v1494 = vadd.f32 %v1205, %v1493
  %v1495 = vpop.f32.mrf.mxu0
  %1496 = vmatprep.mubr.bf16.mxu0 %v666
  %1497 = vmatmul.mubr.bf16.gmra.mxu0 %v665
  %v1498 = vpop.f32.mrf.mxu0
  %v1499 = vadd.f32 %v1210, %v1498
  %v1500 = vpop.f32.mrf.mxu0
  %v1501 = vpop.f32.mrf.mxu0
  %v1502 = vadd.f32 %v1213, %v1501
  %v1503 = vpop.f32.mrf.mxu0
  %1504 = vmatprep.mubr.bf16.mxu0 %v670
  %1505 = vmatmul.mubr.bf16.gmra.mxu0 %v669
  %v1506 = vpop.f32.mrf.mxu0
  %v1507 = vadd.f32 %v1218, %v1506
  %v1508 = vpop.f32.mrf.mxu0
  %v1509 = vpop.f32.mrf.mxu0
  %v1510 = vadd.f32 %v1221, %v1509
  %v1511 = vpop.f32.mrf.mxu0
  %1512 = vmatprep.mubr.bf16.mxu0 %v674
  %1513 = vmatmul.mubr.bf16.gmra.mxu0 %v673
  %v1514 = vpop.f32.mrf.mxu0
  %v1515 = vadd.f32 %v1226, %v1514
  %v1516 = vpop.f32.mrf.mxu0
  %v1517 = vpop.f32.mrf.mxu0
  %v1518 = vadd.f32 %v1229, %v1517
  %v1519 = vpop.f32.mrf.mxu0
  %1520 = vmatprep.mubr.bf16.mxu0 %v678
  %1521 = vmatmul.mubr.bf16.gmra.mxu0 %v677
  %v1522 = vpop.f32.mrf.mxu0
  %v1523 = vadd.f32 %v1234, %v1522
  %v1524 = vpop.f32.mrf.mxu0
  %v1525 = vpop.f32.mrf.mxu0
  %v1526 = vadd.f32 %v1237, %v1525
  %v1527 = vpop.f32.mrf.mxu0
  %1528 = vmatprep.mubr.bf16.mxu0 %v682
  %1529 = vmatmul.mubr.bf16.gmra.mxu0 %v681
  %v1530 = vpop.f32.mrf.mxu0
  %v1531 = vadd.f32 %v1242, %v1530
  %v1532 = vpop.f32.mrf.mxu0
  %v1533 = vpop.f32.mrf.mxu0
  %v1534 = vadd.f32 %v1245, %v1533
  %v1535 = vpop.f32.mrf.mxu0
  %1536 = vmatprep.mubr.bf16.mxu0 %v686
  %1537 = vmatmul.mubr.bf16.gmra.mxu0 %v685
  %v1538 = vpop.f32.mrf.mxu0
  %v1539 = vadd.f32 %v1250, %v1538
  %v1540 = vpop.f32.mrf.mxu0
  %v1541 = vpop.f32.mrf.mxu0
  %v1542 = vadd.f32 %v1253, %v1541
  %v1543 = vpop.f32.mrf.mxu0
  %1544 = vmatprep.mubr.bf16.mxu0 %v690
  %1545 = vmatmul.mubr.bf16.gmra.mxu0 %v689
  %v1546 = vpop.f32.mrf.mxu0
  %v1547 = vadd.f32 %v1258, %v1546
  %v1548 = vpop.f32.mrf.mxu0
  %v1549 = vpop.f32.mrf.mxu0
  %v1550 = vadd.f32 %v1261, %v1549
  %v1551 = vpop.f32.mrf.mxu0
  %1552 = vmatprep.mubr.bf16.mxu0 %v694
  %1553 = vmatmul.mubr.bf16.gmra.mxu0 %v693
  %v1554 = vpop.f32.mrf.mxu0
  %v1555 = vadd.f32 %v1266, %v1554
  %v1556 = vpop.f32.mrf.mxu0
  %v1557 = vpop.f32.mrf.mxu0
  %v1558 = vadd.f32 %v1269, %v1557
  %v1559 = vpop.f32.mrf.mxu0
  %1560 = vmatprep.mubr.bf16.mxu0 %v698
  %1561 = vmatmul.mubr.bf16.gmra.mxu0 %v697
  %v1562 = vpop.f32.mrf.mxu0
  %v1563 = vadd.f32 %v1274, %v1562
  %v1564 = vpop.f32.mrf.mxu0
  %v1565 = vpop.f32.mrf.mxu0
  %v1566 = vadd.f32 %v1277, %v1565
  %v1567 = vpop.f32.mrf.mxu0
  %1568 = vmatprep.mubr.bf16.mxu0 %v702
  %1569 = vmatmul.mubr.bf16.gmra.mxu0 %v701
  %v1570 = vpop.f32.mrf.mxu0
  %v1571 = vadd.f32 %v1282, %v1570
  %v1572 = vpop.f32.mrf.mxu0
  %v1573 = vpop.f32.mrf.mxu0
  %v1574 = vadd.f32 %v1285, %v1573
  %v1575 = vpop.f32.mrf.mxu0
  %1576 = vmatprep.mubr.bf16.mxu0 %v706
  %1577 = vmatmul.mubr.bf16.gmra.mxu0 %v705
  %v1578 = vpop.f32.mrf.mxu0
  %v1579 = vadd.f32 %v1290, %v1578
  %v1580 = vpop.f32.mrf.mxu0
  %v1581 = vpop.f32.mrf.mxu0
  %v1582 = vadd.f32 %v1293, %v1581
  %v1583 = vpop.f32.mrf.mxu0
  %1584 = vmatprep.mubr.bf16.mxu0 %v710
  %1585 = vmatmul.mubr.bf16.gmra.mxu0 %v709
  %v1586 = vpop.f32.mrf.mxu0
  %v1587 = vadd.f32 %v1298, %v1586
  %v1588 = vpop.f32.mrf.mxu0
  %v1589 = vpop.f32.mrf.mxu0
  %v1590 = vadd.f32 %v1301, %v1589
  %v1591 = vpop.f32.mrf.mxu0
  %1592 = vmatprep.mubr.bf16.mxu0 %v714
  %1593 = vmatmul.mubr.bf16.gmra.mxu0 %v713
  %v1594 = vpop.f32.mrf.mxu0
  %v1595 = vadd.f32 %v1306, %v1594
  %v1596 = vpop.f32.mrf.mxu0
  %v1597 = vpop.f32.mrf.mxu0
  %v1598 = vadd.f32 %v1309, %v1597
  %v1599 = vpop.f32.mrf.mxu0
  %1600 = vmatprep.mubr.bf16.mxu0 %v718
  %1601 = vmatmul.mubr.bf16.gmra.mxu0 %v717
  %v1602 = vpop.f32.mrf.mxu0
  %v1603 = vadd.f32 %v1314, %v1602
  %v1604 = vpop.f32.mrf.mxu0
  %v1605 = vpop.f32.mrf.mxu0
  %v1606 = vadd.f32 %v1317, %v1605
  %v1607 = vpop.f32.mrf.mxu0
  %1608 = vmatprep.mubr.bf16.mxu0 %v722
  %1609 = vmatmul.mubr.bf16.gmra.mxu0 %v721
  %v1610 = vpop.f32.mrf.mxu0
  %v1611 = vadd.f32 %v1322, %v1610
  %v1612 = vpop.f32.mrf.mxu0
  %v1613 = vpop.f32.mrf.mxu0
  %v1614 = vadd.f32 %v1325, %v1613
  %v1615 = vpop.f32.mrf.mxu0
  %1616 = vmatprep.mubr.bf16.mxu0 %v726
  %1617 = vmatmul.mubr.bf16.gmra.mxu0 %v725
  %v1618 = vpop.f32.mrf.mxu0
  %v1619 = vadd.f32 %v1330, %v1618
  %v1620 = vpop.f32.mrf.mxu0
  %v1621 = vpop.f32.mrf.mxu0
  %v1622 = vadd.f32 %v1333, %v1621
  %v1623 = vpop.f32.mrf.mxu0
  %1624 = vdwg.mxu0
  %v1625 = vmax.f32 %v1371, 0.0
  %v1626 = vmax.f32 %v1374, 0.0
  %v1627 = vmax.f32 %v1379, 0.0
  %v1628 = vmax.f32 %v1382, 0.0
  %v1629 = vmax.f32 %v1387, 0.0
  %v1630 = vmax.f32 %v1390, 0.0
  %v1631 = vmax.f32 %v1395, 0.0
  %v1632 = vmax.f32 %v1398, 0.0
  %v1633 = vmax.f32 %v1403, 0.0
  %v1634 = vmax.f32 %v1406, 0.0
  %v1635 = vmax.f32 %v1411, 0.0
  %v1636 = vmax.f32 %v1414, 0.0
  %v1637 = vmax.f32 %v1419, 0.0
  %v1638 = vmax.f32 %v1422, 0.0
  %v1639 = vmax.f32 %v1427, 0.0
  %v1640 = vmax.f32 %v1430, 0.0
  %v1641 = vmax.f32 %v1435, 0.0
  %v1642 = vmax.f32 %v1438, 0.0
  %v1643 = vmax.f32 %v1443, 0.0
  %v1644 = vmax.f32 %v1446, 0.0
  %v1645 = vmax.f32 %v1451, 0.0
  %v1646 = vmax.f32 %v1454, 0.0
  %v1647 = vmax.f32 %v1459, 0.0
  %v1648 = vmax.f32 %v1462, 0.0
  %v1649 = vmax.f32 %v1467, 0.0
  %v1650 = vmax.f32 %v1470, 0.0
  %v1651 = vmax.f32 %v1475, 0.0
  %v1652 = vmax.f32 %v1478, 0.0
  %v1653 = vmax.f32 %v1483, 0.0
  %v1654 = vmax.f32 %v1486, 0.0
  %v1655 = vmax.f32 %v1491, 0.0
  %v1656 = vmax.f32 %v1494, 0.0
  %v1657 = vmax.f32 %v1499, 0.0
  %v1658 = vmax.f32 %v1502, 0.0
  %v1659 = vmax.f32 %v1507, 0.0
  %v1660 = vmax.f32 %v1510, 0.0
  %v1661 = vmax.f32 %v1515, 0.0
  %v1662 = vmax.f32 %v1518, 0.0
  %v1663 = vmax.f32 %v1523, 0.0
  %v1664 = vmax.f32 %v1526, 0.0
  %v1665 = vmax.f32 %v1531, 0.0
  %v1666 = vmax.f32 %v1534, 0.0
  %v1667 = vmax.f32 %v1539, 0.0
  %v1668 = vmax.f32 %v1542, 0.0
  %v1669 = vmax.f32 %v1547, 0.0
  %v1670 = vmax.f32 %v1550, 0.0
  %v1671 = vmax.f32 %v1555, 0.0
  %v1672 = vmax.f32 %v1558, 0.0
  %v1673 = vmax.f32 %v1563, 0.0
  %v1674 = vmax.f32 %v1566, 0.0
  %v1675 = vmax.f32 %v1571, 0.0
  %v1676 = vmax.f32 %v1574, 0.0
  %v1677 = vmax.f32 %v1579, 0.0
  %v1678 = vmax.f32 %v1582, 0.0
  %v1679 = vmax.f32 %v1587, 0.0
  %v1680 = vmax.f32 %v1590, 0.0
  %v1681 = vmax.f32 %v1595, 0.0
  %v1682 = vmax.f32 %v1598, 0.0
  %v1683 = vmax.f32 %v1603, 0.0
  %v1684 = vmax.f32 %v1606, 0.0
  %v1685 = vmax.f32 %v1611, 0.0
  %v1686 = vmax.f32 %v1614, 0.0
  %v1687 = vmax.f32 %v1619, 0.0
  %v1688 = vmax.f32 %v1622, 0.0
  %v1689 = vadd.f32 %v1625, %v1626
  %v1690 = vadd.f32 %v1689, %v1627
  %v1691 = vadd.f32 %v1690, %v1628
  %v1692 = vadd.f32 %v1691, %v1629
  %v1693 = vadd.f32 %v1692, %v1630
  %v1694 = vadd.f32 %v1693, %v1631
  %v1695 = vadd.f32 %v1694, %v1632
  %v1696 = vadd.f32 %v1695, %v1633
  %v1697 = vadd.f32 %v1696, %v1634
  %v1698 = vadd.f32 %v1697, %v1635
  %v1699 = vadd.f32 %v1698, %v1636
  %v1700 = vadd.f32 %v1699, %v1637
  %v1701 = vadd.f32 %v1700, %v1638
  %v1702 = vadd.f32 %v1701, %v1639
  %v1703 = vadd.f32 %v1702, %v1640
  %v1704 = vadd.f32 %v1703, %v1641
  %v1705 = vadd.f32 %v1704, %v1642
  %v1706 = vadd.f32 %v1705, %v1643
  %v1707 = vadd.f32 %v1706, %v1644
  %v1708 = vadd.f32 %v1707, %v1645
  %v1709 = vadd.f32 %v1708, %v1646
  %v1710 = vadd.f32 %v1709, %v1647
  %v1711 = vadd.f32 %v1710, %v1648
  %v1712 = vadd.f32 %v1711, %v1649
  %v1713 = vadd.f32 %v1712, %v1650
  %v1714 = vadd.f32 %v1713, %v1651
  %v1715 = vadd.f32 %v1714, %v1652
  %v1716 = vadd.f32 %v1715, %v1653
  %v1717 = vadd.f32 %v1716, %v1654
  %v1718 = vadd.f32 %v1717, %v1655
  %v1719 = vadd.f32 %v1718, %v1656
  %v1720 = vadd.f32 %v1719, %v1657
  %v1721 = vadd.f32 %v1720, %v1658
  %v1722 = vadd.f32 %v1721, %v1659
  %v1723 = vadd.f32 %v1722, %v1660
  %v1724 = vadd.f32 %v1723, %v1661
  %v1725 = vadd.f32 %v1724, %v1662
  %v1726 = vadd.f32 %v1725, %v1663
  %v1727 = vadd.f32 %v1726, %v1664
  %v1728 = vadd.f32 %v1727, %v1665
  %v1729 = vadd.f32 %v1728, %v1666
  %v1730 = vadd.f32 %v1729, %v1667
  %v1731 = vadd.f32 %v1730, %v1668
  %v1732 = vadd.f32 %v1731, %v1669
  %v1733 = vadd.f32 %v1732, %v1670
  %v1734 = vadd.f32 %v1733, %v1671
  %v1735 = vadd.f32 %v1734, %v1672
  %v1736 = vadd.f32 %v1735, %v1673
  %v1737 = vadd.f32 %v1736, %v1674
  %v1738 = vadd.f32 %v1737, %v1675
  %v1739 = vadd.f32 %v1738, %v1676
  %v1740 = vadd.f32 %v1739, %v1677
  %v1741 = vadd.f32 %v1740, %v1678
  %v1742 = vadd.f32 %v1741, %v1679
  %v1743 = vadd.f32 %v1742, %v1680
  %v1744 = vadd.f32 %v1743, %v1681
  %v1745 = vadd.f32 %v1744, %v1682
  %v1746 = vadd.f32 %v1745, %v1683
  %v1747 = vadd.f32 %v1746, %v1684
  %v1748 = vadd.f32 %v1747, %v1685
  %v1749 = vadd.f32 %v1748, %v1686
  %v1750 = vadd.f32 %v1749, %v1687
  %v1751 = vadd.f32 %v1750, %v1688
  %v1752 = vrot.slane %v1751, 4
  %v1753 = vadd.f32 %v1751, %v1752
  %v1754 = vrot.slane %v1753, 2
  %v1755 = vadd.f32 %v1753, %v1754
  %v1756 = vrot.slane %v1755, 1
  %v1757 = vadd.f32 %v1755, %v1756
  %v1758 = vmul.f32 %v1625, %v1625
  %v1759 = vmul.f32 %v1626, %v1626
  %v1760 = vmul.f32 %v1627, %v1627
  %v1761 = vmul.f32 %v1628, %v1628
  %v1762 = vmul.f32 %v1629, %v1629
  %v1763 = vmul.f32 %v1630, %v1630
  %v1764 = vmul.f32 %v1631, %v1631
  %v1765 = vmul.f32 %v1632, %v1632
  %v1766 = vmul.f32 %v1633, %v1633
  %v1767 = vmul.f32 %v1634, %v1634
  %v1768 = vmul.f32 %v1635, %v1635
  %v1769 = vmul.f32 %v1636, %v1636
  %v1770 = vmul.f32 %v1637, %v1637
  %v1771 = vmul.f32 %v1638, %v1638
  %v1772 = vmul.f32 %v1639, %v1639
  %v1773 = vmul.f32 %v1640, %v1640
  %v1774 = vmul.f32 %v1641, %v1641
  %v1775 = vmul.f32 %v1642, %v1642
  %v1776 = vmul.f32 %v1643, %v1643
  %v1777 = vmul.f32 %v1644, %v1644
  %v1778 = vmul.f32 %v1645, %v1645
  %v1779 = vmul.f32 %v1646, %v1646
  %v1780 = vmul.f32 %v1647, %v1647
  %v1781 = vmul.f32 %v1648, %v1648
  %v1782 = vmul.f32 %v1649, %v1649
  %v1783 = vmul.f32 %v1650, %v1650
  %v1784 = vmul.f32 %v1651, %v1651
  %v1785 = vmul.f32 %v1652, %v1652
  %v1786 = vmul.f32 %v1653, %v1653
  %v1787 = vmul.f32 %v1654, %v1654
  %v1788 = vmul.f32 %v1655, %v1655
  %v1789 = vmul.f32 %v1656, %v1656
  %v1790 = vmul.f32 %v1657, %v1657
  %v1791 = vmul.f32 %v1658, %v1658
  %v1792 = vmul.f32 %v1659, %v1659
  %v1793 = vmul.f32 %v1660, %v1660
  %v1794 = vmul.f32 %v1661, %v1661
  %v1795 = vmul.f32 %v1662, %v1662
  %v1796 = vmul.f32 %v1663, %v1663
  %v1797 = vmul.f32 %v1664, %v1664
  %v1798 = vmul.f32 %v1665, %v1665
  %v1799 = vmul.f32 %v1666, %v1666
  %v1800 = vmul.f32 %v1667, %v1667
  %v1801 = vmul.f32 %v1668, %v1668
  %v1802 = vmul.f32 %v1669, %v1669
  %v1803 = vmul.f32 %v1670, %v1670
  %v1804 = vmul.f32 %v1671, %v1671
  %v1805 = vmul.f32 %v1672, %v1672
  %v1806 = vmul.f32 %v1673, %v1673
  %v1807 = vmul.f32 %v1674, %v1674
  %v1808 = vmul.f32 %v1675, %v1675
  %v1809 = vmul.f32 %v1676, %v1676
  %v1810 = vmul.f32 %v1677, %v1677
  %v1811 = vmul.f32 %v1678, %v1678
  %v1812 = vmul.f32 %v1679, %v1679
  %v1813 = vmul.f32 %v1680, %v1680
  %v1814 = vmul.f32 %v1681, %v1681
  %v1815 = vmul.f32 %v1682, %v1682
  %v1816 = vmul.f32 %v1683, %v1683
  %v1817 = vmul.f32 %v1684, %v1684
  %v1818 = vmul.f32 %v1685, %v1685
  %v1819 = vmul.f32 %v1686, %v1686
  %v1820 = vmul.f32 %v1687, %v1687
  %v1821 = vmul.f32 %v1688, %v1688
  %v1822 = vadd.f32 %v1758, %v1759
  %v1823 = vadd.f32 %v1822, %v1760
  %v1824 = vadd.f32 %v1823, %v1761
  %v1825 = vadd.f32 %v1824, %v1762
  %v1826 = vadd.f32 %v1825, %v1763
  %v1827 = vadd.f32 %v1826, %v1764
  %v1828 = vadd.f32 %v1827, %v1765
  %v1829 = vadd.f32 %v1828, %v1766
  %v1830 = vadd.f32 %v1829, %v1767
  %v1831 = vadd.f32 %v1830, %v1768
  %v1832 = vadd.f32 %v1831, %v1769
  %v1833 = vadd.f32 %v1832, %v1770
  %v1834 = vadd.f32 %v1833, %v1771
  %v1835 = vadd.f32 %v1834, %v1772
  %v1836 = vadd.f32 %v1835, %v1773
  %v1837 = vadd.f32 %v1836, %v1774
  %v1838 = vadd.f32 %v1837, %v1775
  %v1839 = vadd.f32 %v1838, %v1776
  %v1840 = vadd.f32 %v1839, %v1777
  %v1841 = vadd.f32 %v1840, %v1778
  %v1842 = vadd.f32 %v1841, %v1779
  %v1843 = vadd.f32 %v1842, %v1780
  %v1844 = vadd.f32 %v1843, %v1781
  %v1845 = vadd.f32 %v1844, %v1782
  %v1846 = vadd.f32 %v1845, %v1783
  %v1847 = vadd.f32 %v1846, %v1784
  %v1848 = vadd.f32 %v1847, %v1785
  %v1849 = vadd.f32 %v1848, %v1786
  %v1850 = vadd.f32 %v1849, %v1787
  %v1851 = vadd.f32 %v1850, %v1788
  %v1852 = vadd.f32 %v1851, %v1789
  %v1853 = vadd.f32 %v1852, %v1790
  %v1854 = vadd.f32 %v1853, %v1791
  %v1855 = vadd.f32 %v1854, %v1792
  %v1856 = vadd.f32 %v1855, %v1793
  %v1857 = vadd.f32 %v1856, %v1794
  %v1858 = vadd.f32 %v1857, %v1795
  %v1859 = vadd.f32 %v1858, %v1796
  %v1860 = vadd.f32 %v1859, %v1797
  %v1861 = vadd.f32 %v1860, %v1798
  %v1862 = vadd.f32 %v1861, %v1799
  %v1863 = vadd.f32 %v1862, %v1800
  %v1864 = vadd.f32 %v1863, %v1801
  %v1865 = vadd.f32 %v1864, %v1802
  %v1866 = vadd.f32 %v1865, %v1803
  %v1867 = vadd.f32 %v1866, %v1804
  %v1868 = vadd.f32 %v1867, %v1805
  %v1869 = vadd.f32 %v1868, %v1806
  %v1870 = vadd.f32 %v1869, %v1807
  %v1871 = vadd.f32 %v1870, %v1808
  %v1872 = vadd.f32 %v1871, %v1809
  %v1873 = vadd.f32 %v1872, %v1810
  %v1874 = vadd.f32 %v1873, %v1811
  %v1875 = vadd.f32 %v1874, %v1812
  %v1876 = vadd.f32 %v1875, %v1813
  %v1877 = vadd.f32 %v1876, %v1814
  %v1878 = vadd.f32 %v1877, %v1815
  %v1879 = vadd.f32 %v1878, %v1816
  %v1880 = vadd.f32 %v1879, %v1817
  %v1881 = vadd.f32 %v1880, %v1818
  %v1882 = vadd.f32 %v1881, %v1819
  %v1883 = vadd.f32 %v1882, %v1820
  %v1884 = vadd.f32 %v1883, %v1821
  %v1885 = vrot.slane %v1884, 4
  %v1886 = vadd.f32 %v1884, %v1885
  %v1887 = vrot.slane %v1886, 2
  %v1888 = vadd.f32 %v1886, %v1887
  %v1889 = vrot.slane %v1888, 1
  %v1890 = vadd.f32 %v1888, %v1889
  %v1891 = vld [vmem:[%s3] sm:$0xff]
  %v1892 = vld [vmem:[%s3 + $0x8] sm:$0xff]
  %v1893 = vld [vmem:[%s3 + $0x10] sm:$0xff]
  %v1894 = vld [vmem:[%s3 + $0x18] sm:$0xff]
  %v1895 = vld [vmem:[%s3 + $0x20] sm:$0xff]
  %v1896 = vld [vmem:[%s3 + $0x28] sm:$0xff]
  %v1897 = vld [vmem:[%s3 + $0x30] sm:$0xff]
  %v1898 = vld [vmem:[%s3 + $0x38] sm:$0xff]
  %v1899 = vld [vmem:[%s3 + $0x40] sm:$0xff]
  %v1900 = vld [vmem:[%s3 + $0x48] sm:$0xff]
  %v1901 = vld [vmem:[%s3 + $0x50] sm:$0xff]
  %v1902 = vld [vmem:[%s3 + $0x58] sm:$0xff]
  %v1903 = vld [vmem:[%s3 + $0x60] sm:$0xff]
  %v1904 = vld [vmem:[%s3 + $0x68] sm:$0xff]
  %v1905 = vld [vmem:[%s3 + $0x70] sm:$0xff]
  %v1906 = vld [vmem:[%s3 + $0x78] sm:$0xff]
  %1907 = vmatprep.subr.mxu0 0.0
  %1908 = vmatpush1.msra.mxu0 %v1906
  %1909 = vmatprep.subr.mxu0 0.0
  %1910 = vmatpush1.msra.mxu0 %v1905
  %1911 = vmatprep.subr.mxu0 0.0
  %1912 = vmatpush1.msra.mxu0 %v1904
  %1913 = vmatprep.subr.mxu0 0.0
  %1914 = vmatpush1.msra.mxu0 %v1903
  %1915 = vmatprep.subr.mxu0 0.0
  %1916 = vmatpush1.msra.mxu0 %v1902
  %1917 = vmatprep.subr.mxu0 0.0
  %1918 = vmatpush1.msra.mxu0 %v1901
  %1919 = vmatprep.subr.mxu0 0.0
  %1920 = vmatpush1.msra.mxu0 %v1900
  %1921 = vmatprep.subr.mxu0 0.0
  %1922 = vmatpush1.msra.mxu0 %v1899
  %1923 = vmatprep.subr.mxu0 0.0
  %1924 = vmatpush1.msra.mxu0 %v1898
  %1925 = vmatprep.subr.mxu0 0.0
  %1926 = vmatpush1.msra.mxu0 %v1897
  %1927 = vmatprep.subr.mxu0 0.0
  %1928 = vmatpush1.msra.mxu0 %v1896
  %1929 = vmatprep.subr.mxu0 0.0
  %1930 = vmatpush1.msra.mxu0 %v1895
  %1931 = vmatprep.subr.mxu0 0.0
  %1932 = vmatpush1.msra.mxu0 %v1894
  %1933 = vmatprep.subr.mxu0 0.0
  %1934 = vmatpush1.msra.mxu0 %v1893
  %1935 = vmatprep.subr.mxu0 0.0
  %1936 = vmatpush1.msra.mxu0 %v1892
  %1937 = vmatprep.subr.mxu0 0.0
  %1938 = vmatpush1.msra.mxu0 %v1891
  %1939 = vmatprep.subr.mxu0 0.0
  %1940 = vmatpush2.msra.mxu0 0.0
  %1941 = vmatprep.subr.mxu0 0.0
  %1942 = vmatpush2.msra.mxu0 0.0
  %1943 = vmatprep.subr.mxu0 0.0
  %1944 = vmatpush2.msra.mxu0 0.0
  %1945 = vmatprep.subr.mxu0 0.0
  %1946 = vmatpush2.msra.mxu0 0.0
  %1947 = vmatprep.subr.mxu0 0.0
  %1948 = vmatpush2.msra.mxu0 0.0
  %1949 = vmatprep.subr.mxu0 0.0
  %1950 = vmatpush2.msra.mxu0 0.0
  %1951 = vmatprep.subr.mxu0 0.0
  %1952 = vmatpush2.msra.mxu0 0.0
  %1953 = vmatprep.subr.mxu0 0.0
  %1954 = vmatpush2.msra.mxu0 0.0
  %1955 = vmatprep.subr.mxu0 0.0
  %1956 = vmatpush2.msra.mxu0 0.0
  %1957 = vmatprep.subr.mxu0 0.0
  %1958 = vmatpush2.msra.mxu0 0.0
  %1959 = vmatprep.subr.mxu0 0.0
  %1960 = vmatpush2.msra.mxu0 0.0
  %1961 = vmatprep.subr.mxu0 0.0
  %1962 = vmatpush2.msra.mxu0 0.0
  %1963 = vmatprep.subr.mxu0 0.0
  %1964 = vmatpush2.msra.mxu0 0.0
  %1965 = vmatprep.subr.mxu0 0.0
  %1966 = vmatpush2.msra.mxu0 0.0
  %1967 = vmatprep.subr.mxu0 0.0
  %1968 = vmatpush2.msra.mxu0 0.0
  %1969 = vmatprep.subr.mxu0 0.0
  %1970 = vmatpush2.msra.mxu0 0.0
  %1971 = vmatprep.mubr.f32.mxu0 0.0
  %1972 = vmatmul.mubr.f32.gmra.mxu0 %v1757
  %v1973 = vpop.f32.mrf.mxu0
  %v1974 = vadd.f32 0.0, %v1973
  %v1975 = vpop.f32.mrf.mxu0
  %1976 = vdwg.mxu0
  %1977 = vmatprep.subr.mxu0 0.0
  %1978 = vmatpush1.msra.mxu0 %v1906
  %1979 = vmatprep.subr.mxu0 0.0
  %1980 = vmatpush1.msra.mxu0 %v1905
  %1981 = vmatprep.subr.mxu0 0.0
  %1982 = vmatpush1.msra.mxu0 %v1904
  %1983 = vmatprep.subr.mxu0 0.0
  %1984 = vmatpush1.msra.mxu0 %v1903
  %1985 = vmatprep.subr.mxu0 0.0
  %1986 = vmatpush1.msra.mxu0 %v1902
  %1987 = vmatprep.subr.mxu0 0.0
  %1988 = vmatpush1.msra.mxu0 %v1901
  %1989 = vmatprep.subr.mxu0 0.0
  %1990 = vmatpush1.msra.mxu0 %v1900
  %1991 = vmatprep.subr.mxu0 0.0
  %1992 = vmatpush1.msra.mxu0 %v1899
  %1993 = vmatprep.subr.mxu0 0.0
  %1994 = vmatpush1.msra.mxu0 %v1898
  %1995 = vmatprep.subr.mxu0 0.0
  %1996 = vmatpush1.msra.mxu0 %v1897
  %1997 = vmatprep.subr.mxu0 0.0
  %1998 = vmatpush1.msra.mxu0 %v1896
  %1999 = vmatprep.subr.mxu0 0.0
  %2000 = vmatpush1.msra.mxu0 %v1895
  %2001 = vmatprep.subr.mxu0 0.0
  %2002 = vmatpush1.msra.mxu0 %v1894
  %2003 = vmatprep.subr.mxu0 0.0
  %2004 = vmatpush1.msra.mxu0 %v1893
  %2005 = vmatprep.subr.mxu0 0.0
  %2006 = vmatpush1.msra.mxu0 %v1892
  %2007 = vmatprep.subr.mxu0 0.0
  %2008 = vmatpush1.msra.mxu0 %v1891
  %2009 = vmatprep.subr.mxu0 0.0
  %2010 = vmatpush2.msra.mxu0 0.0
  %2011 = vmatprep.subr.mxu0 0.0
  %2012 = vmatpush2.msra.mxu0 0.0
  %2013 = vmatprep.subr.mxu0 0.0
  %2014 = vmatpush2.msra.mxu0 0.0
  %2015 = vmatprep.subr.mxu0 0.0
  %2016 = vmatpush2.msra.mxu0 0.0
  %2017 = vmatprep.subr.mxu0 0.0
  %2018 = vmatpush2.msra.mxu0 0.0
  %2019 = vmatprep.subr.mxu0 0.0
  %2020 = vmatpush2.msra.mxu0 0.0
  %2021 = vmatprep.subr.mxu0 0.0
  %2022 = vmatpush2.msra.mxu0 0.0
  %2023 = vmatprep.subr.mxu0 0.0
  %2024 = vmatpush2.msra.mxu0 0.0
  %2025 = vmatprep.subr.mxu0 0.0
  %2026 = vmatpush2.msra.mxu0 0.0
  %2027 = vmatprep.subr.mxu0 0.0
  %2028 = vmatpush2.msra.mxu0 0.0
  %2029 = vmatprep.subr.mxu0 0.0
  %2030 = vmatpush2.msra.mxu0 0.0
  %2031 = vmatprep.subr.mxu0 0.0
  %2032 = vmatpush2.msra.mxu0 0.0
  %2033 = vmatprep.subr.mxu0 0.0
  %2034 = vmatpush2.msra.mxu0 0.0
  %2035 = vmatprep.subr.mxu0 0.0
  %2036 = vmatpush2.msra.mxu0 0.0
  %2037 = vmatprep.subr.mxu0 0.0
  %2038 = vmatpush2.msra.mxu0 0.0
  %2039 = vmatprep.subr.mxu0 0.0
  %2040 = vmatpush2.msra.mxu0 0.0
  %2041 = vmatprep.mubr.f32.mxu0 0.0
  %2042 = vmatmul.mubr.f32.gmra.mxu0 %v1890
  %v2043 = vpop.f32.mrf.mxu0
  %v2044 = vadd.f32 0.0, %v2043
  %v2045 = vpop.f32.mrf.mxu0
  %2046 = vdwg.mxu0
  %v2047 = vmul.f32 %v1974, 0.00048828125
  %v2048 = vmul.f32 %v2044, 0.00048828125
  %v2049 = vmul.f32 %v2047, %v2047
  %v2050 = vsub.f32 %v2048, %v2049
  %v2051 = vmax.f32 %v2050, 0.0
  %v2052 = vadd.f32 %v2051, 1e-05
  %v2053 = vrsqrt.pop %v2052
  %v2055 = vrot.slane %v2053, 7
  %v2057 = vmul.f32 %v210, %v2055
  %v2058 = vlaneseq
  %v2059 = vshrl.u32 %v2058, 7
  %v2060 = vsub.s32 1, %v2059
  %v2061 = vrot.slane %v2057, %v2060
  %v2062 = vmul.f32 %v1625, %v2061
  %v2063 = vmul.f32 %v1626, %v2061
  %v2064 = vmul.f32 %v1627, %v2061
  %v2065 = vmul.f32 %v1628, %v2061
  %v2066 = vmul.f32 %v1629, %v2061
  %v2067 = vmul.f32 %v1630, %v2061
  %v2068 = vmul.f32 %v1631, %v2061
  %v2069 = vmul.f32 %v1632, %v2061
  %v2070 = vmul.f32 %v1633, %v2061
  %v2071 = vmul.f32 %v1634, %v2061
  %v2072 = vmul.f32 %v1635, %v2061
  %v2073 = vmul.f32 %v1636, %v2061
  %v2074 = vmul.f32 %v1637, %v2061
  %v2075 = vmul.f32 %v1638, %v2061
  %v2076 = vmul.f32 %v1639, %v2061
  %v2077 = vmul.f32 %v1640, %v2061
  %v2078 = vmul.f32 %v1641, %v2061
  %v2079 = vmul.f32 %v1642, %v2061
  %v2080 = vmul.f32 %v1643, %v2061
  %v2081 = vmul.f32 %v1644, %v2061
  %v2082 = vmul.f32 %v1645, %v2061
  %v2083 = vmul.f32 %v1646, %v2061
  %v2084 = vmul.f32 %v1647, %v2061
  %v2085 = vmul.f32 %v1648, %v2061
  %v2086 = vmul.f32 %v1649, %v2061
  %v2087 = vmul.f32 %v1650, %v2061
  %v2088 = vmul.f32 %v1651, %v2061
  %v2089 = vmul.f32 %v1652, %v2061
  %v2090 = vmul.f32 %v1653, %v2061
  %v2091 = vmul.f32 %v1654, %v2061
  %v2092 = vmul.f32 %v1655, %v2061
  %v2093 = vmul.f32 %v1656, %v2061
  %v2094 = vmul.f32 %v1657, %v2061
  %v2095 = vmul.f32 %v1658, %v2061
  %v2096 = vmul.f32 %v1659, %v2061
  %v2097 = vmul.f32 %v1660, %v2061
  %v2098 = vmul.f32 %v1661, %v2061
  %v2099 = vmul.f32 %v1662, %v2061
  %v2100 = vmul.f32 %v1663, %v2061
  %v2101 = vmul.f32 %v1664, %v2061
  %v2102 = vmul.f32 %v1665, %v2061
  %v2103 = vmul.f32 %v1666, %v2061
  %v2104 = vmul.f32 %v1667, %v2061
  %v2105 = vmul.f32 %v1668, %v2061
  %v2106 = vmul.f32 %v1669, %v2061
  %v2107 = vmul.f32 %v1670, %v2061
  %v2108 = vmul.f32 %v1671, %v2061
  %v2109 = vmul.f32 %v1672, %v2061
  %v2110 = vmul.f32 %v1673, %v2061
  %v2111 = vmul.f32 %v1674, %v2061
  %v2112 = vmul.f32 %v1675, %v2061
  %v2113 = vmul.f32 %v1676, %v2061
  %v2114 = vmul.f32 %v1677, %v2061
  %v2115 = vmul.f32 %v1678, %v2061
  %v2116 = vmul.f32 %v1679, %v2061
  %v2117 = vmul.f32 %v1680, %v2061
  %v2118 = vmul.f32 %v1681, %v2061
  %v2119 = vmul.f32 %v1682, %v2061
  %v2120 = vmul.f32 %v1683, %v2061
  %v2121 = vmul.f32 %v1684, %v2061
  %v2122 = vmul.f32 %v1685, %v2061
  %v2123 = vmul.f32 %v1686, %v2061
  %v2124 = vmul.f32 %v1687, %v2061
  %v2125 = vmul.f32 %v1688, %v2061
  %v2127 = vrot.slane %v2057, 1
  %v2129 = vmul.f32 %v2047, %v2127
  %v2131 = vrot.slane %v2129, 6
  %v2133 = vsub.f32 %v210, %v2131
  %v2134 = vlaneseq
  %v2135 = vshrl.u32 %v2134, 7
  %v2136 = vsub.s32 2, %v2135
  %v2137 = vrot.slane %v2133, %v2136
  %v2138 = vadd.f32 %v2062, %v2137
  %v2139 = vadd.f32 %v2063, %v2137
  %v2140 = vadd.f32 %v2064, %v2137
  %v2141 = vadd.f32 %v2065, %v2137
  %v2142 = vadd.f32 %v2066, %v2137
  %v2143 = vadd.f32 %v2067, %v2137
  %v2144 = vadd.f32 %v2068, %v2137
  %v2145 = vadd.f32 %v2069, %v2137
  %v2146 = vadd.f32 %v2070, %v2137
  %v2147 = vadd.f32 %v2071, %v2137
  %v2148 = vadd.f32 %v2072, %v2137
  %v2149 = vadd.f32 %v2073, %v2137
  %v2150 = vadd.f32 %v2074, %v2137
  %v2151 = vadd.f32 %v2075, %v2137
  %v2152 = vadd.f32 %v2076, %v2137
  %v2153 = vadd.f32 %v2077, %v2137
  %v2154 = vadd.f32 %v2078, %v2137
  %v2155 = vadd.f32 %v2079, %v2137
  %v2156 = vadd.f32 %v2080, %v2137
  %v2157 = vadd.f32 %v2081, %v2137
  %v2158 = vadd.f32 %v2082, %v2137
  %v2159 = vadd.f32 %v2083, %v2137
  %v2160 = vadd.f32 %v2084, %v2137
  %v2161 = vadd.f32 %v2085, %v2137
  %v2162 = vadd.f32 %v2086, %v2137
  %v2163 = vadd.f32 %v2087, %v2137
  %v2164 = vadd.f32 %v2088, %v2137
  %v2165 = vadd.f32 %v2089, %v2137
  %v2166 = vadd.f32 %v2090, %v2137
  %v2167 = vadd.f32 %v2091, %v2137
  %v2168 = vadd.f32 %v2092, %v2137
  %v2169 = vadd.f32 %v2093, %v2137
  %v2170 = vadd.f32 %v2094, %v2137
  %v2171 = vadd.f32 %v2095, %v2137
  %v2172 = vadd.f32 %v2096, %v2137
  %v2173 = vadd.f32 %v2097, %v2137
  %v2174 = vadd.f32 %v2098, %v2137
  %v2175 = vadd.f32 %v2099, %v2137
  %v2176 = vadd.f32 %v2100, %v2137
  %v2177 = vadd.f32 %v2101, %v2137
  %v2178 = vadd.f32 %v2102, %v2137
  %v2179 = vadd.f32 %v2103, %v2137
  %v2180 = vadd.f32 %v2104, %v2137
  %v2181 = vadd.f32 %v2105, %v2137
  %v2182 = vadd.f32 %v2106, %v2137
  %v2183 = vadd.f32 %v2107, %v2137
  %v2184 = vadd.f32 %v2108, %v2137
  %v2185 = vadd.f32 %v2109, %v2137
  %v2186 = vadd.f32 %v2110, %v2137
  %v2187 = vadd.f32 %v2111, %v2137
  %v2188 = vadd.f32 %v2112, %v2137
  %v2189 = vadd.f32 %v2113, %v2137
  %v2190 = vadd.f32 %v2114, %v2137
  %v2191 = vadd.f32 %v2115, %v2137
  %v2192 = vadd.f32 %v2116, %v2137
  %v2193 = vadd.f32 %v2117, %v2137
  %v2194 = vadd.f32 %v2118, %v2137
  %v2195 = vadd.f32 %v2119, %v2137
  %v2196 = vadd.f32 %v2120, %v2137
  %v2197 = vadd.f32 %v2121, %v2137
  %v2198 = vadd.f32 %v2122, %v2137
  %v2199 = vadd.f32 %v2123, %v2137
  %v2200 = vadd.f32 %v2124, %v2137
  %v2201 = vadd.f32 %v2125, %v2137
  %2202 = vst [vmem:[%s4] sm:$0xff] %v2138
  %2203 = vst [vmem:[%s4 + $0x8] sm:$0xff] %v2139
  %2204 = vst [vmem:[%s4 + $0x10] sm:$0xff] %v2140
  %2205 = vst [vmem:[%s4 + $0x18] sm:$0xff] %v2141
  %2206 = vst [vmem:[%s4 + $0x20] sm:$0xff] %v2142
  %2207 = vst [vmem:[%s4 + $0x28] sm:$0xff] %v2143
  %2208 = vst [vmem:[%s4 + $0x30] sm:$0xff] %v2144
  %2209 = vst [vmem:[%s4 + $0x38] sm:$0xff] %v2145
  %2210 = vst [vmem:[%s4 + $0x40] sm:$0xff] %v2146
  %2211 = vst [vmem:[%s4 + $0x48] sm:$0xff] %v2147
  %2212 = vst [vmem:[%s4 + $0x50] sm:$0xff] %v2148
  %2213 = vst [vmem:[%s4 + $0x58] sm:$0xff] %v2149
  %2214 = vst [vmem:[%s4 + $0x60] sm:$0xff] %v2150
  %2215 = vst [vmem:[%s4 + $0x68] sm:$0xff] %v2151
  %2216 = vst [vmem:[%s4 + $0x70] sm:$0xff] %v2152
  %2217 = vst [vmem:[%s4 + $0x78] sm:$0xff] %v2153
  %2218 = vst [vmem:[%s4 + $0x80] sm:$0xff] %v2154
  %2219 = vst [vmem:[%s4 + $0x88] sm:$0xff] %v2155
  %2220 = vst [vmem:[%s4 + $0x90] sm:$0xff] %v2156
  %2221 = vst [vmem:[%s4 + $0x98] sm:$0xff] %v2157
  %2222 = vst [vmem:[%s4 + $0xa0] sm:$0xff] %v2158
  %2223 = vst [vmem:[%s4 + $0xa8] sm:$0xff] %v2159
  %2224 = vst [vmem:[%s4 + $0xb0] sm:$0xff] %v2160
  %2225 = vst [vmem:[%s4 + $0xb8] sm:$0xff] %v2161
  %2226 = vst [vmem:[%s4 + $0xc0] sm:$0xff] %v2162
  %2227 = vst [vmem:[%s4 + $0xc8] sm:$0xff] %v2163
  %2228 = vst [vmem:[%s4 + $0xd0] sm:$0xff] %v2164
  %2229 = vst [vmem:[%s4 + $0xd8] sm:$0xff] %v2165
  %2230 = vst [vmem:[%s4 + $0xe0] sm:$0xff] %v2166
  %2231 = vst [vmem:[%s4 + $0xe8] sm:$0xff] %v2167
  %2232 = vst [vmem:[%s4 + $0xf0] sm:$0xff] %v2168
  %2233 = vst [vmem:[%s4 + $0xf8] sm:$0xff] %v2169
  %2234 = vst [vmem:[%s4 + $0x100] sm:$0xff] %v2170
  %2235 = vst [vmem:[%s4 + $0x108] sm:$0xff] %v2171
  %2236 = vst [vmem:[%s4 + $0x110] sm:$0xff] %v2172
  %2237 = vst [vmem:[%s4 + $0x118] sm:$0xff] %v2173
  %2238 = vst [vmem:[%s4 + $0x120] sm:$0xff] %v2174
  %2239 = vst [vmem:[%s4 + $0x128] sm:$0xff] %v2175
  %2240 = vst [vmem:[%s4 + $0x130] sm:$0xff] %v2176
  %2241 = vst [vmem:[%s4 + $0x138] sm:$0xff] %v2177
  %2242 = vst [vmem:[%s4 + $0x140] sm:$0xff] %v2178
  %2243 = vst [vmem:[%s4 + $0x148] sm:$0xff] %v2179
  %2244 = vst [vmem:[%s4 + $0x150] sm:$0xff] %v2180
  %2245 = vst [vmem:[%s4 + $0x158] sm:$0xff] %v2181
  %2246 = vst [vmem:[%s4 + $0x160] sm:$0xff] %v2182
  %2247 = vst [vmem:[%s4 + $0x168] sm:$0xff] %v2183
  %2248 = vst [vmem:[%s4 + $0x170] sm:$0xff] %v2184
  %2249 = vst [vmem:[%s4 + $0x178] sm:$0xff] %v2185
  %2250 = vst [vmem:[%s4 + $0x180] sm:$0xff] %v2186
  %2251 = vst [vmem:[%s4 + $0x188] sm:$0xff] %v2187
  %2252 = vst [vmem:[%s4 + $0x190] sm:$0xff] %v2188
  %2253 = vst [vmem:[%s4 + $0x198] sm:$0xff] %v2189
  %2254 = vst [vmem:[%s4 + $0x1a0] sm:$0xff] %v2190
  %2255 = vst [vmem:[%s4 + $0x1a8] sm:$0xff] %v2191
  %2256 = vst [vmem:[%s4 + $0x1b0] sm:$0xff] %v2192
  %2257 = vst [vmem:[%s4 + $0x1b8] sm:$0xff] %v2193
  %2258 = vst [vmem:[%s4 + $0x1c0] sm:$0xff] %v2194
  %2259 = vst [vmem:[%s4 + $0x1c8] sm:$0xff] %v2195
  %2260 = vst [vmem:[%s4 + $0x1d0] sm:$0xff] %v2196
  %2261 = vst [vmem:[%s4 + $0x1d8] sm:$0xff] %v2197
  %2262 = vst [vmem:[%s4 + $0x1e0] sm:$0xff] %v2198
  %2263 = vst [vmem:[%s4 + $0x1e8] sm:$0xff] %v2199
  %2264 = vst [vmem:[%s4 + $0x1f0] sm:$0xff] %v2200
  %2265 = vst [vmem:[%s4 + $0x1f8] sm:$0xff] %v2201
  // Predicated region
  $region18: #{_lambda_.9} parent=0 // pred_check
    _
  $region19: #{_lambda_.9} parent=0 // pred_check_branch
    %2267 = sbr.rel (0) target = $region21
  $region20: #{_lambda_.9} parent=0 // pred_region
    _
  $region21: #{_lambda_.9} parent=0 // pred_fallthru
    _
  // Predicated region
  $region22: #{_lambda_.9} parent=0 // pred_check
    _
  $region23: #{_lambda_.9} parent=0 // pred_check_branch
    %2269 = sbr.rel (0) target = $region25
  $region24: #{_lambda_.9} parent=0 // pred_region
    _
  $region25: #{_lambda_.9} parent=0 // pred_fallthru
    _

</llo_original>
